<compile_context>
chip_gen: v6e
topology: v6e:2x2x1
jax: 0.10.0
libtpu: 0.0.40
codegen_flags: <defaults>
</compile_context>

<pallas_src>
import functools

import jax
import jax.numpy as jnp
from jax import lax
from jax.experimental import pallas as pl
from jax.experimental.pallas import tpu as pltpu

RESOLUTION = 16     # small power-of-2 resolution for the example
LATENT_DIM = 32
BATCH = 2
K_SIZE = 4          # all conv / deconv blocks use kernel_size=4, stride=2, padding=1
BN_EPS = 1e-5
LRELU_SLOPE = 0.2

# parity r -> ConvTranspose kernel taps for window positions p=0,1 (see derivation below)
_SUBPIX_IDX = ((3, 1), (2, 0))


def _round_up(x, m):
    return (x + m - 1) // m * m


def _pick_tn(no, cap=512):
    """Lane-tile for the GEMM output: full when small, else a 128-multiple divisor."""
    if no <= cap:
        return no
    for t in (cap, 256, 128):
        if no % t == 0:
            return t
    return no


# ----------------------------- Pallas kernels -----------------------------

def _gemm_kernel(a_ref, b_ref, o_ref):
    """O = A @ B, bf16 inputs, fp32 MXU accumulation, full-K block (single reduce step)."""
    o_ref[...] = jnp.dot(a_ref[...], b_ref[...], preferred_element_type=jnp.float32)


def _gemm_bias_kernel(a_ref, b_ref, bias_ref, o_ref):
    """O = A @ B + bias (bias broadcast over rows); used only for the fc layers."""
    o_ref[...] = jnp.dot(a_ref[...], b_ref[...],
                         preferred_element_type=jnp.float32) + bias_ref[...]


def pallas_gemm(a, b, bias=None):
    """out = a @ b (+ bias).  a: (G?, Mo, K), b: (G?, K, No); bf16 inputs, fp32 output.

    Tiling: full Mo rows, full K (single reduction step), lane-tiled No.  Per-step VMEM
    (double-buffered bf16 inputs + fp32 output block) stays well under 8 MiB for every
    call in this model, comfortably inside the 32 MiB scoped default on v5e/v6e/v7x,
    so no vmem_limit_bytes override is needed.
    """
    squeeze = a.ndim == 2
    if squeeze:
        a, b = a[None], b[None]
    G, Mo, K = a.shape
    _, K2, No = b.shape
    assert K == K2

    a = a.astype(jnp.bfloat16)
    b = b.astype(jnp.bfloat16)

    # Pad tiny row counts (batch=2, Cout=1) up to 8 sublanes; the block then equals the
    # full (padded) dim, so the layout rule is always satisfied.  The big im2col matrix
    # (B operand) is never padded.
    Mo_p = _round_up(Mo, 8)
    if Mo_p != Mo:
        a = jnp.pad(a, ((0, 0), (0, Mo_p - Mo), (0, 0)))

    tn = _pick_tn(No)
    grid = (G, No // tn)

    in_specs = [
        pl.BlockSpec((None, Mo_p, K), lambda g, j: (g, 0, 0)),
        pl.BlockSpec((None, K, tn), lambda g, j: (g, 0, j)),
    ]
    args = [a, b]
    if bias is not None:
        in_specs.append(pl.BlockSpec((1, tn), lambda g, j: (0, j)))
        args.append(bias.astype(jnp.float32).reshape(1, No))
        kernel = _gemm_bias_kernel
    else:
        kernel = _gemm_kernel

    out = pl.pallas_call(
        kernel,
        out_shape=jax.ShapeDtypeStruct((G, Mo_p, No), jnp.float32),
        grid_spec=pltpu.PrefetchScalarGridSpec(
            num_scalar_prefetch=0,
            grid=grid,
            in_specs=in_specs,
            out_specs=pl.BlockSpec((None, Mo_p, tn), lambda g, j: (g, 0, j)),
        ),
        compiler_params=pltpu.CompilerParams(
            dimension_semantics=("parallel", "parallel")),
    )(*args)

    out = out[:, :Mo, :]
    return out[0] if squeeze else out


def _bn_act_kernel(x_ref, gamma_ref, beta_ref, o_ref, *, eps, slope, apply_sigmoid):
    """Training-mode BatchNorm3d (per-channel batch stats over all positions) + LeakyReLU
    (+ optional Sigmoid), fp32 math; layout is (channels, positions)."""
    x = x_ref[...]                                        # (tc, M) fp32
    mean = jnp.mean(x, axis=1, keepdims=True)
    var = jnp.mean((x - mean) ** 2, axis=1, keepdims=True)   # biased var, as PyTorch BN
    y = (x - mean) * lax.rsqrt(var + eps) * gamma_ref[...] + beta_ref[...]
    y = jnp.where(y >= 0, y, slope * y)                   # LeakyReLU(0.2)
    if apply_sigmoid:
        y = jax.nn.sigmoid(y)                             # model.final_activation
    o_ref[...] = y.astype(o_ref.dtype)


def pallas_bn_act(x, gamma, beta, *, apply_sigmoid=False, out_dtype=jnp.bfloat16):
    """x: (C, M) fp32 with M = N*D*H*W positions on lanes.  Channel-tiled grid."""
    # TODO(synk): for very large N*D*H*W a position-tiled two-pass (sum/sumsq reduce,
    # then normalize) kernel is needed to keep per-step VMEM bounded on v7x.
    C, M = x.shape
    tc = 16 if C % 16 == 0 else C
    kernel = functools.partial(_bn_act_kernel, eps=BN_EPS, slope=LRELU_SLOPE,
                               apply_sigmoid=apply_sigmoid)
    return pl.pallas_call(
        kernel,
        out_shape=jax.ShapeDtypeStruct((C, M), out_dtype),
        grid_spec=pltpu.PrefetchScalarGridSpec(
            num_scalar_prefetch=0,
            grid=(C // tc,),
            in_specs=[
                pl.BlockSpec((tc, M), lambda i: (i, 0)),
                pl.BlockSpec((tc, 1), lambda i: (i, 0)),
                pl.BlockSpec((tc, 1), lambda i: (i, 0)),
            ],
            out_specs=pl.BlockSpec((tc, M), lambda i: (i, 0)),
        ),
        compiler_params=pltpu.CompilerParams(dimension_semantics=("parallel",)),
    )(x.astype(jnp.float32), gamma, beta)


# ----------------------------- plain-JAX glue (layout only) -----------------------------

def _im2col_conv_cfirst(x, k, stride, pad):
    """x: (C, N, D, H, W) channels-first -> patches (C*k^3, N*OD*OH*OW).

    Row ordering is (ci, kd, kh, kw), matching PyTorch weight.reshape(Cout, -1); column
    ordering is (n, od, oh, ow)."""
    C, N, D, H, W = x.shape
    xp = jnp.pad(x, ((0, 0), (0, 0), (pad, pad), (pad, pad), (pad, pad)))
    OD = (D + 2 * pad - k) // stride + 1
    OH = (H + 2 * pad - k) // stride + 1
    OW = (W + 2 * pad - k) // stride + 1
    taps = []
    for kd in range(k):
        for kh in range(k):
            for kw in range(k):
                taps.append(xp[:, :,
                               kd: kd + OD * stride: stride,
                               kh: kh + OH * stride: stride,
                               kw: kw + OW * stride: stride])
    cols = jnp.stack(taps, axis=1)                       # (C, k^3, N, OD, OH, OW)
    return cols.reshape(C * k ** 3, N * OD * OH * OW), (N, OD, OH, OW)


def _im2col_deconv_subpixel(x):
    """Sub-pixel im2col for ConvTranspose3d(k=4, s=2, p=1) in channels-first layout.

    For output parity (rd, rh, rw) the deconv reduces to a stride-1 conv with a 2^3
    sub-kernel over the input padded by 1, windows starting at (m+rd, m+rh, m+rw).
    Returns (8, Cin*8, N*D*H*W), parity index = rd*4 + rh*2 + rw, row order (ci, pd, ph, pw).
    """
    C, N, D, H, W = x.shape
    xp = jnp.pad(x, ((0, 0), (0, 0), (1, 1), (1, 1), (1, 1)))
    groups = []
    for rd in range(2):
        for rh in range(2):
            for rw in range(2):
                taps = []
                for pd in range(2):
                    for ph in range(2):
                        for pw in range(2):
                            taps.append(xp[:, :,
                                           rd + pd: rd + pd + D,
                                           rh + ph: rh + ph + H,
                                           rw + pw: rw + pw + W])
                g = jnp.stack(taps, axis=1)              # (C, 8, N, D, H, W)
                groups.append(g.reshape(C * 8, N * D * H * W))
    return jnp.stack(groups, axis=0), (N, D, H, W)


def _deconv_subpixel_weights(w_t):
    """ConvTranspose3d weight (Cin, Cout, 4,4,4) -> (8, Cout, Cin*8) sub-pixel GEMM weights.

    out[2m+r] = sum_p in_pad[m+r+p] * w[_SUBPIX_IDX[r][p]] per spatial dim; column order
    (ci, pd, ph, pw) matches _im2col_deconv_subpixel row order.
    """
    cin, cout = w_t.shape[0], w_t.shape[1]
    mats = []
    for rd in range(2):
        for rh in range(2):
            for rw in range(2):
                taps = []
                for pd in range(2):
                    for ph in range(2):
                        for pw in range(2):
                            taps.append(w_t[:, :, _SUBPIX_IDX[rd][pd],
                                            _SUBPIX_IDX[rh][ph],
                                            _SUBPIX_IDX[rw][pw]])   # (Cin, Cout)
                sub = jnp.stack(taps, axis=-1)                       # (Cin, Cout, 8)
                mats.append(sub.transpose(1, 0, 2).reshape(cout, cin * 8))
    return jnp.stack(mats, axis=0)                                   # (8, Cout, Cin*8)


# ----------------------------- model -----------------------------

def build_params(key, resolution, latent_dim):
    num_layers = 0
    temp = resolution
    while temp > 4:
        num_layers += 1
        temp //= 2
    min_dim = resolution // 2 ** num_layers

    keys = iter(jax.random.split(key, 128))

    enc = []
    cin, cout = 1, 32
    for _ in range(num_layers):
        w = 0.05 * jax.random.normal(next(keys), (cout, cin, K_SIZE, K_SIZE, K_SIZE),
                                     jnp.float32)
        gamma = 1.0 + 0.1 * jax.random.normal(next(keys), (cout, 1), jnp.float32)
        beta = 0.05 * jax.random.normal(next(keys), (cout, 1), jnp.float32)
        # Conv3d bias omitted: it cancels exactly under training-mode BatchNorm.
        enc.append((w.reshape(cout, -1).astype(jnp.bfloat16), gamma, beta))
        cin = cout
        cout = min(cout * 2, 512)

    flatten_dim = cin * min_dim ** 3

    def linear(din, dout):
        w = 0.05 * jax.random.normal(next(keys), (dout, din), jnp.float32)
        b = 0.05 * jax.random.normal(next(keys), (dout,), jnp.float32)
        return w, b

    w_mu, b_mu = linear(flatten_dim, latent_dim)
    w_lv, b_lv = linear(flatten_dim, latent_dim)
    w_dec, b_dec = linear(latent_dim, flatten_dim)

    dec = []
    dcin = cin
    for i in range(num_layers):
        out = dcin // 2 if i < num_layers - 1 else 1
        out = max(out, 16)
        if i == num_layers - 1:
            out = 1
        # ConvTranspose3d weight layout: (in_channels, out_channels, k, k, k)
        w_t = 0.05 * jax.random.normal(next(keys), (dcin, out, K_SIZE, K_SIZE, K_SIZE),
                                       jnp.float32)
        gamma = 1.0 + 0.1 * jax.random.normal(next(keys), (out, 1), jnp.float32)
        beta = 0.05 * jax.random.normal(next(keys), (out, 1), jnp.float32)
        # ConvTranspose3d bias omitted: it also cancels under training-mode BatchNorm.
        dec.append((_deconv_subpixel_weights(w_t).astype(jnp.bfloat16), gamma, beta))
        dcin = out

    params = dict(
        enc=enc,
        # fc_mu and fc_logvar fused into one GEMM (shared read of the flat encoding).
        fc_mu_lv_wT=jnp.concatenate([w_mu, w_lv], axis=0).T.astype(jnp.bfloat16),
        fc_mu_lv_b=jnp.concatenate([b_mu, b_lv], axis=0),
        fc_decode_wT=w_dec.T.astype(jnp.bfloat16),
        fc_decode_b=b_dec,
        dec=dec,
    )
    return params, min_dim


def voxel_vae_forward(params, x, eps_noise, *, min_dim):
    """x: (N, 1, R, R, R) NCDHW -> (x_recon, mu, log_var)."""
    N = x.shape[0]

    # internal layout: channels-first (C, N, D, H, W), bf16 activations between layers
    h = jnp.transpose(x, (1, 0, 2, 3, 4)).astype(jnp.bfloat16)

    # ---- encoder: Conv3d(k=4,s=2,p=1) + BN + LeakyReLU via Pallas GEMM / BN kernels
    for (w_mat, gamma, beta) in params["enc"]:
        cout = w_mat.shape[0]
        cols, (n, od, oh, ow) = _im2col_conv_cfirst(h, K_SIZE, stride=2, pad=1)
        y = pallas_gemm(w_mat, cols)                       # (Cout, N*OD*OH*OW) fp32
        y = pallas_bn_act(y, gamma, beta, out_dtype=jnp.bfloat16)
        h = y.reshape(cout, n, od, oh, ow)

    c_enc = h.shape[0]
    # PyTorch x.view(B, -1) flattens (C, D, H, W) per sample
    flat = jnp.transpose(h, (1, 0, 2, 3, 4)).reshape(N, -1)

    mu_lv = pallas_gemm(flat, params["fc_mu_lv_wT"], bias=params["fc_mu_lv_b"])
    latent = mu_lv.shape[1] // 2
    mu, log_var = mu_lv[:, :latent], mu_lv[:, latent:]

    # ---- reparameterize (noise supplied explicitly to mirror torch.randn_like)
    z = mu + eps_noise * jnp.exp(0.5 * log_var)

    # ---- decoder
    d = pallas_gemm(z.astype(jnp.bfloat16), params["fc_decode_wT"],
                    bias=params["fc_decode_b"])            # (N, flatten_dim)
    h = d.reshape(N, c_enc, min_dim, min_dim, min_dim)
    h = jnp.transpose(h, (1, 0, 2, 3, 4)).astype(jnp.bfloat16)   # (C, N, d, d, d)

    n_dec = len(params["dec"])
    for i, (w_sub, gamma, beta) in enumerate(params["dec"]):
        cout = w_sub.shape[1]
        cols_b, (n, di, hi, wi) = _im2col_deconv_subpixel(h)     # (8, Cin*8, N*D*H*W)
        yb = pallas_gemm(w_sub, cols_b)                          # (8, Cout, N*D*H*W) fp32
        # reassemble the 8 parity classes: out[co, n, 2md+rd, 2mh+rh, 2mw+rw]
        y = yb.reshape(2, 2, 2, cout, n, di, hi, wi)
        y = y.transpose(3, 4, 5, 0, 6, 1, 7, 2)
        y = y.reshape(cout, n * (2 * di) * (2 * hi) * (2 * wi))
        last = i == n_dec - 1
        y = pallas_bn_act(y, gamma, beta, apply_sigmoid=last,
                          out_dtype=jnp.float32 if last else jnp.bfloat16)
        h = y.reshape(cout, n, 2 * di, 2 * hi, 2 * wi)

    # F.interpolate branch of decode() never triggers: min_dim * 2**num_layers equals the
    # resolution for any power-of-2 resolution, so the spatial size is already correct.
    x_recon = jnp.transpose(h, (1, 0, 2, 3, 4))            # back to NCDHW, fp32
    return x_recon, mu, log_var


if __name__ == "__main__":
    key = jax.random.PRNGKey(0)
    k_param, k_x, k_eps = jax.random.split(key, 3)

    params, min_dim = build_params(k_param, RESOLUTION, LATENT_DIM)
    x = jax.random.normal(k_x, (BATCH, 1, RESOLUTION, RESOLUTION, RESOLUTION), jnp.float32)
    eps_noise = jax.random.normal(k_eps, (BATCH, LATENT_DIM), jnp.float32)

    fwd = jax.jit(functools.partial(voxel_vae_forward, min_dim=min_dim))
    x_recon, mu, log_var = fwd(params, x, eps_noise)
    jax.block_until_ready((x_recon, mu, log_var))

    assert x_recon.shape == (BATCH, 1, RESOLUTION, RESOLUTION, RESOLUTION), x_recon.shape
    assert mu.shape == (BATCH, LATENT_DIM), mu.shape
    assert log_var.shape == (BATCH, LATENT_DIM), log_var.shape
    assert bool(jnp.all(jnp.isfinite(x_recon)))
    assert bool(jnp.all(jnp.isfinite(mu))) and bool(jnp.all(jnp.isfinite(log_var)))
    print("KERNEL_OK")
</pallas_src>

<mosaic_0001>
module attributes {stable_mosaic.version = 11 : i64} {
  func.func @_gemm_kernel(%arg0: i32, %arg1: i32, %arg2: memref<1x32x64xbf16, #tpu.memory_space<vmem>>, %arg3: memref<1x64x512xbf16, #tpu.memory_space<vmem>>, %arg4: memref<1x32x512xf32, #tpu.memory_space<vmem>>) attributes {dimension_semantics = [#tpu.dimension_semantics<parallel>, #tpu.dimension_semantics<parallel>], iteration_bounds = array<i64: 1, 2>, scalar_prefetch = 0 : i64, scratch_operands = 0 : i64, tpu.core_type = #tpu.core_type<tc>, window_params = [{transform_indices = @transform_0, window_bounds = array<i64: 1, 32, 64>}, {transform_indices = @transform_1, window_bounds = array<i64: 1, 64, 512>}, {transform_indices = @transform_2, window_bounds = array<i64: 1, 32, 512>}]} {
    %c0 = arith.constant 0 : index
    %c0_0 = arith.constant 0 : index
    %c0_1 = arith.constant 0 : index
    %0 = vector.load %arg2[%c0, %c0_0, %c0_1] : memref<1x32x64xbf16, #tpu.memory_space<vmem>>, vector<1x32x64xbf16>
    %1 = vector.shape_cast %0 : vector<1x32x64xbf16> to vector<32x64xbf16>
    %c0_2 = arith.constant 0 : index
    %c0_3 = arith.constant 0 : index
    %c0_4 = arith.constant 0 : index
    %2 = vector.load %arg3[%c0_2, %c0_3, %c0_4] : memref<1x64x512xbf16, #tpu.memory_space<vmem>>, vector<1x64x512xbf16>
    %3 = vector.shape_cast %2 : vector<1x64x512xbf16> to vector<64x512xbf16>
    %cst = arith.constant dense<0.000000e+00> : vector<32x512xf32>
    %4 = tpu.matmul %1, %3, %cst {dimension_numbers = #tpu.dot_dimension_numbers<[1], [0], [0], [1], [0, 0, 1, 1], [], []>} : vector<32x64xbf16>, vector<64x512xbf16>, vector<32x512xf32> -> vector<32x512xf32>
    %c0_5 = arith.constant 0 : index
    %c0_6 = arith.constant 0 : index
    %c0_7 = arith.constant 0 : index
    %5 = vector.load %arg4[%c0_5, %c0_6, %c0_7] : memref<1x32x512xf32, #tpu.memory_space<vmem>>, vector<1x32x512xf32>
    %6 = vector.shape_cast %5 : vector<1x32x512xf32> to vector<32x512xf32>
    %7 = vector.shape_cast %4 : vector<32x512xf32> to vector<1x32x512xf32>
    tpu.vector_store %arg4[%c0_5, %c0_6, %c0_7], %7 {strides = array<i32>} : memref<1x32x512xf32, #tpu.memory_space<vmem>>, vector<1x32x512xf32>,
    return
  }
  func.func @transform_0(%arg0: i32, %arg1: i32) -> (i32, i32, i32) {
    %c0_i32 = arith.constant 0 : i32
    %c0_i32_0 = arith.constant 0 : i32
    %c0_i32_1 = arith.constant 0 : i32
    return %arg0, %c0_i32, %c0_i32_0 : i32, i32, i32
  }
  func.func @transform_1(%arg0: i32, %arg1: i32) -> (i32, i32, i32) {
    %c0_i32 = arith.constant 0 : i32
    %c0_i32_0 = arith.constant 0 : i32
    return %arg0, %c0_i32, %arg1 : i32, i32, i32
  }
  func.func @transform_2(%arg0: i32, %arg1: i32) -> (i32, i32, i32) {
    %c0_i32 = arith.constant 0 : i32
    %c0_i32_0 = arith.constant 0 : i32
    return %arg0, %c0_i32, %arg1 : i32, i32, i32
  }
}

module attributes {stable_mosaic.version = 11 : i64} {
  func.func @_bn_act_kernel(%arg0: i32, %arg1: memref<16x1024xf32, #tpu.memory_space<vmem>>, %arg2: memref<16x1xf32, #tpu.memory_space<vmem>>, %arg3: memref<16x1xf32, #tpu.memory_space<vmem>>, %arg4: memref<16x1024xbf16, #tpu.memory_space<vmem>>) attributes {dimension_semantics = [#tpu.dimension_semantics<parallel>], iteration_bounds = array<i64: 2>, scalar_prefetch = 0 : i64, scratch_operands = 0 : i64, tpu.core_type = #tpu.core_type<tc>, window_params = [{transform_indices = @transform_0, window_bounds = array<i64: 16, 1024>}, {transform_indices = @transform_1, window_bounds = array<i64: 16, 1>}, {transform_indices = @transform_2, window_bounds = array<i64: 16, 1>}, {transform_indices = @transform_3, window_bounds = array<i64: 16, 1024>}]} {
    %c0 = arith.constant 0 : index
    %c0_0 = arith.constant 0 : index
    %0 = vector.load %arg1[%c0, %c0_0] : memref<16x1024xf32, #tpu.memory_space<vmem>>, vector<16x1024xf32>
    %cst = arith.constant dense<0.000000e+00> : vector<16xf32>
    %1 = vector.multi_reduction <add>, %0, %cst [1] : vector<16x1024xf32> to vector<16xf32>
    %2 = vector.shape_cast %1 : vector<16xf32> to vector<16x1xf32>
    %cst_1 = arith.constant 1.024000e+03 : f32
    %3 = vector.broadcast %cst_1 : f32 to vector<16x1xf32>
    %4 = arith.divf %2, %3 : vector<16x1xf32>
    %5 = vector.broadcast %4 : vector<16x1xf32> to vector<16x1024xf32>
    %6 = arith.subf %0, %5 : vector<16x1024xf32>
    %7 = arith.mulf %6, %6 : vector<16x1024xf32>
    %cst_2 = arith.constant dense<0.000000e+00> : vector<16xf32>
    %8 = vector.multi_reduction <add>, %7, %cst_2 [1] : vector<16x1024xf32> to vector<16xf32>
    %9 = vector.shape_cast %8 : vector<16xf32> to vector<16x1xf32>
    %cst_3 = arith.constant 1.024000e+03 : f32
    %10 = vector.broadcast %cst_3 : f32 to vector<16x1xf32>
    %11 = arith.divf %9, %10 : vector<16x1xf32>
    %12 = vector.broadcast %4 : vector<16x1xf32> to vector<16x1024xf32>
    %13 = arith.subf %0, %12 : vector<16x1024xf32>
    %cst_4 = arith.constant 9.99999974E-6 : f32
    %14 = vector.broadcast %cst_4 : f32 to vector<16x1xf32>
    %15 = arith.addf %11, %14 : vector<16x1xf32>
    %16 = math.rsqrt %15 : vector<16x1xf32>
    %17 = vector.broadcast %16 : vector<16x1xf32> to vector<16x1024xf32>
    %18 = arith.mulf %13, %17 : vector<16x1024xf32>
    %c0_5 = arith.constant 0 : index
    %c0_6 = arith.constant 0 : index
    %19 = vector.load %arg2[%c0_5, %c0_6] : memref<16x1xf32, #tpu.memory_space<vmem>>, vector<16x1xf32>
    %20 = vector.broadcast %19 : vector<16x1xf32> to vector<16x1024xf32>
    %21 = arith.mulf %18, %20 : vector<16x1024xf32>
    %c0_7 = arith.constant 0 : index
    %c0_8 = arith.constant 0 : index
    %22 = vector.load %arg3[%c0_7, %c0_8] : memref<16x1xf32, #tpu.memory_space<vmem>>, vector<16x1xf32>
    %23 = vector.broadcast %22 : vector<16x1xf32> to vector<16x1024xf32>
    %24 = arith.addf %21, %23 : vector<16x1024xf32>
    %cst_9 = arith.constant 0.000000e+00 : f32
    %25 = vector.broadcast %cst_9 : f32 to vector<16x1024xf32>
    %26 = arith.cmpf oge, %24, %25 : vector<16x1024xf32>
    %cst_10 = arith.constant 2.000000e-01 : f32
    %27 = vector.broadcast %cst_10 : f32 to vector<16x1024xf32>
    %28 = arith.mulf %27, %24 : vector<16x1024xf32>
    %29 = arith.select %26, %24, %28 : vector<16x1024xi1>, vector<16x1024xf32>
    %30 = arith.truncf %29 : vector<16x1024xf32> to vector<16x1024xbf16>
    %c0_11 = arith.constant 0 : index
    %c0_12 = arith.constant 0 : index
    %31 = vector.load %arg4[%c0_11, %c0_12] : memref<16x1024xbf16, #tpu.memory_space<vmem>>, vector<16x1024xbf16>
    tpu.vector_store %arg4[%c0_11, %c0_12], %30 {strides = array<i32>} : memref<16x1024xbf16, #tpu.memory_space<vmem>>, vector<16x1024xbf16>,
    return
  }
  func.func @transform_0(%arg0: i32) -> (i32, i32) {
    %c0_i32 = arith.constant 0 : i32
    %c0_i32_0 = arith.constant 0 : i32
    return %arg0, %c0_i32 : i32, i32
  }
  func.func @transform_1(%arg0: i32) -> (i32, i32) {
    %c0_i32 = arith.constant 0 : i32
    %c0_i32_0 = arith.constant 0 : i32
    return %arg0, %c0_i32 : i32, i32
  }
  func.func @transform_2(%arg0: i32) -> (i32, i32) {
    %c0_i32 = arith.constant 0 : i32
    %c0_i32_0 = arith.constant 0 : i32
    return %arg0, %c0_i32 : i32, i32
  }
  func.func @transform_3(%arg0: i32) -> (i32, i32) {
    %c0_i32 = arith.constant 0 : i32
    %c0_i32_0 = arith.constant 0 : i32
    return %arg0, %c0_i32 : i32, i32
  }
}

module attributes {stable_mosaic.version = 11 : i64} {
  func.func @_gemm_kernel(%arg0: i32, %arg1: i32, %arg2: memref<1x64x2048xbf16, #tpu.memory_space<vmem>>, %arg3: memref<1x2048x128xbf16, #tpu.memory_space<vmem>>, %arg4: memref<1x64x128xf32, #tpu.memory_space<vmem>>) attributes {dimension_semantics = [#tpu.dimension_semantics<parallel>, #tpu.dimension_semantics<parallel>], iteration_bounds = array<i64: 1, 1>, scalar_prefetch = 0 : i64, scratch_operands = 0 : i64, tpu.core_type = #tpu.core_type<tc>, window_params = [{transform_indices = @transform_0, window_bounds = array<i64: 1, 64, 2048>}, {transform_indices = @transform_1, window_bounds = array<i64: 1, 2048, 128>}, {transform_indices = @transform_2, window_bounds = array<i64: 1, 64, 128>}]} {
    %c0 = arith.constant 0 : index
    %c0_0 = arith.constant 0 : index
    %c0_1 = arith.constant 0 : index
    %0 = vector.load %arg2[%c0, %c0_0, %c0_1] : memref<1x64x2048xbf16, #tpu.memory_space<vmem>>, vector<1x64x2048xbf16>
    %1 = vector.shape_cast %0 : vector<1x64x2048xbf16> to vector<64x2048xbf16>
    %c0_2 = arith.constant 0 : index
    %c0_3 = arith.constant 0 : index
    %c0_4 = arith.constant 0 : index
    %2 = vector.load %arg3[%c0_2, %c0_3, %c0_4] : memref<1x2048x128xbf16, #tpu.memory_space<vmem>>, vector<1x2048x128xbf16>
    %3 = vector.shape_cast %2 : vector<1x2048x128xbf16> to vector<2048x128xbf16>
    %cst = arith.constant dense<0.000000e+00> : vector<64x128xf32>
    %4 = tpu.matmul %1, %3, %cst {dimension_numbers = #tpu.dot_dimension_numbers<[1], [0], [0], [1], [0, 0, 1, 1], [], []>} : vector<64x2048xbf16>, vector<2048x128xbf16>, vector<64x128xf32> -> vector<64x128xf32>
    %c0_5 = arith.constant 0 : index
    %c0_6 = arith.constant 0 : index
    %c0_7 = arith.constant 0 : index
    %5 = vector.load %arg4[%c0_5, %c0_6, %c0_7] : memref<1x64x128xf32, #tpu.memory_space<vmem>>, vector<1x64x128xf32>
    %6 = vector.shape_cast %5 : vector<1x64x128xf32> to vector<64x128xf32>
    %7 = vector.shape_cast %4 : vector<64x128xf32> to vector<1x64x128xf32>
    tpu.vector_store %arg4[%c0_5, %c0_6, %c0_7], %7 {strides = array<i32>} : memref<1x64x128xf32, #tpu.memory_space<vmem>>, vector<1x64x128xf32>,
    return
  }
  func.func @transform_0(%arg0: i32, %arg1: i32) -> (i32, i32, i32) {
    %c0_i32 = arith.constant 0 : i32
    %c0_i32_0 = arith.constant 0 : i32
    %c0_i32_1 = arith.constant 0 : i32
    return %arg0, %c0_i32, %c0_i32_0 : i32, i32, i32
  }
  func.func @transform_1(%arg0: i32, %arg1: i32) -> (i32, i32, i32) {
    %c0_i32 = arith.constant 0 : i32
    %c0_i32_0 = arith.constant 0 : i32
    return %arg0, %c0_i32, %arg1 : i32, i32, i32
  }
  func.func @transform_2(%arg0: i32, %arg1: i32) -> (i32, i32, i32) {
    %c0_i32 = arith.constant 0 : i32
    %c0_i32_0 = arith.constant 0 : i32
    return %arg0, %c0_i32, %arg1 : i32, i32, i32
  }
}

module attributes {stable_mosaic.version = 11 : i64} {
  func.func @_bn_act_kernel(%arg0: i32, %arg1: memref<16x128xf32, #tpu.memory_space<vmem>>, %arg2: memref<16x1xf32, #tpu.memory_space<vmem>>, %arg3: memref<16x1xf32, #tpu.memory_space<vmem>>, %arg4: memref<16x128xbf16, #tpu.memory_space<vmem>>) attributes {dimension_semantics = [#tpu.dimension_semantics<parallel>], iteration_bounds = array<i64: 4>, scalar_prefetch = 0 : i64, scratch_operands = 0 : i64, tpu.core_type = #tpu.core_type<tc>, window_params = [{transform_indices = @transform_0, window_bounds = array<i64: 16, 128>}, {transform_indices = @transform_1, window_bounds = array<i64: 16, 1>}, {transform_indices = @transform_2, window_bounds = array<i64: 16, 1>}, {transform_indices = @transform_3, window_bounds = array<i64: 16, 128>}]} {
    %c0 = arith.constant 0 : index
    %c0_0 = arith.constant 0 : index
    %0 = vector.load %arg1[%c0, %c0_0] : memref<16x128xf32, #tpu.memory_space<vmem>>, vector<16x128xf32>
    %cst = arith.constant dense<0.000000e+00> : vector<16xf32>
    %1 = vector.multi_reduction <add>, %0, %cst [1] : vector<16x128xf32> to vector<16xf32>
    %2 = vector.shape_cast %1 : vector<16xf32> to vector<16x1xf32>
    %cst_1 = arith.constant 1.280000e+02 : f32
    %3 = vector.broadcast %cst_1 : f32 to vector<16x1xf32>
    %4 = arith.divf %2, %3 : vector<16x1xf32>
    %5 = vector.broadcast %4 : vector<16x1xf32> to vector<16x128xf32>
    %6 = arith.subf %0, %5 : vector<16x128xf32>
    %7 = arith.mulf %6, %6 : vector<16x128xf32>
    %cst_2 = arith.constant dense<0.000000e+00> : vector<16xf32>
    %8 = vector.multi_reduction <add>, %7, %cst_2 [1] : vector<16x128xf32> to vector<16xf32>
    %9 = vector.shape_cast %8 : vector<16xf32> to vector<16x1xf32>
    %cst_3 = arith.constant 1.280000e+02 : f32
    %10 = vector.broadcast %cst_3 : f32 to vector<16x1xf32>
    %11 = arith.divf %9, %10 : vector<16x1xf32>
    %12 = vector.broadcast %4 : vector<16x1xf32> to vector<16x128xf32>
    %13 = arith.subf %0, %12 : vector<16x128xf32>
    %cst_4 = arith.constant 9.99999974E-6 : f32
    %14 = vector.broadcast %cst_4 : f32 to vector<16x1xf32>
    %15 = arith.addf %11, %14 : vector<16x1xf32>
    %16 = math.rsqrt %15 : vector<16x1xf32>
    %17 = vector.broadcast %16 : vector<16x1xf32> to vector<16x128xf32>
    %18 = arith.mulf %13, %17 : vector<16x128xf32>
    %c0_5 = arith.constant 0 : index
    %c0_6 = arith.constant 0 : index
    %19 = vector.load %arg2[%c0_5, %c0_6] : memref<16x1xf32, #tpu.memory_space<vmem>>, vector<16x1xf32>
    %20 = vector.broadcast %19 : vector<16x1xf32> to vector<16x128xf32>
    %21 = arith.mulf %18, %20 : vector<16x128xf32>
    %c0_7 = arith.constant 0 : index
    %c0_8 = arith.constant 0 : index
    %22 = vector.load %arg3[%c0_7, %c0_8] : memref<16x1xf32, #tpu.memory_space<vmem>>, vector<16x1xf32>
    %23 = vector.broadcast %22 : vector<16x1xf32> to vector<16x128xf32>
    %24 = arith.addf %21, %23 : vector<16x128xf32>
    %cst_9 = arith.constant 0.000000e+00 : f32
    %25 = vector.broadcast %cst_9 : f32 to vector<16x128xf32>
    %26 = arith.cmpf oge, %24, %25 : vector<16x128xf32>
    %cst_10 = arith.constant 2.000000e-01 : f32
    %27 = vector.broadcast %cst_10 : f32 to vector<16x128xf32>
    %28 = arith.mulf %27, %24 : vector<16x128xf32>
    %29 = arith.select %26, %24, %28 : vector<16x128xi1>, vector<16x128xf32>
    %30 = arith.truncf %29 : vector<16x128xf32> to vector<16x128xbf16>
    %c0_11 = arith.constant 0 : index
    %c0_12 = arith.constant 0 : index
    %31 = vector.load %arg4[%c0_11, %c0_12] : memref<16x128xbf16, #tpu.memory_space<vmem>>, vector<16x128xbf16>
    tpu.vector_store %arg4[%c0_11, %c0_12], %30 {strides = array<i32>} : memref<16x128xbf16, #tpu.memory_space<vmem>>, vector<16x128xbf16>,
    return
  }
  func.func @transform_0(%arg0: i32) -> (i32, i32) {
    %c0_i32 = arith.constant 0 : i32
    %c0_i32_0 = arith.constant 0 : i32
    return %arg0, %c0_i32 : i32, i32
  }
  func.func @transform_1(%arg0: i32) -> (i32, i32) {
    %c0_i32 = arith.constant 0 : i32
    %c0_i32_0 = arith.constant 0 : i32
    return %arg0, %c0_i32 : i32, i32
  }
  func.func @transform_2(%arg0: i32) -> (i32, i32) {
    %c0_i32 = arith.constant 0 : i32
    %c0_i32_0 = arith.constant 0 : i32
    return %arg0, %c0_i32 : i32, i32
  }
  func.func @transform_3(%arg0: i32) -> (i32, i32) {
    %c0_i32 = arith.constant 0 : i32
    %c0_i32_0 = arith.constant 0 : i32
    return %arg0, %c0_i32 : i32, i32
  }
}

module attributes {stable_mosaic.version = 11 : i64} {
  func.func @_gemm_bias_kernel(%arg0: i32, %arg1: i32, %arg2: memref<1x8x4096xbf16, #tpu.memory_space<vmem>>, %arg3: memref<1x4096x64xbf16, #tpu.memory_space<vmem>>, %arg4: memref<1x64xf32, #tpu.memory_space<vmem>>, %arg5: memref<1x8x64xf32, #tpu.memory_space<vmem>>) attributes {dimension_semantics = [#tpu.dimension_semantics<parallel>, #tpu.dimension_semantics<parallel>], iteration_bounds = array<i64: 1, 1>, scalar_prefetch = 0 : i64, scratch_operands = 0 : i64, tpu.core_type = #tpu.core_type<tc>, window_params = [{transform_indices = @transform_0, window_bounds = array<i64: 1, 8, 4096>}, {transform_indices = @transform_1, window_bounds = array<i64: 1, 4096, 64>}, {transform_indices = @transform_2, window_bounds = array<i64: 1, 64>}, {transform_indices = @transform_3, window_bounds = array<i64: 1, 8, 64>}]} {
    %c0 = arith.constant 0 : index
    %c0_0 = arith.constant 0 : index
    %c0_1 = arith.constant 0 : index
    %0 = vector.load %arg2[%c0, %c0_0, %c0_1] : memref<1x8x4096xbf16, #tpu.memory_space<vmem>>, vector<1x8x4096xbf16>
    %1 = vector.shape_cast %0 : vector<1x8x4096xbf16> to vector<8x4096xbf16>
    %c0_2 = arith.constant 0 : index
    %c0_3 = arith.constant 0 : index
    %c0_4 = arith.constant 0 : index
    %2 = vector.load %arg3[%c0_2, %c0_3, %c0_4] : memref<1x4096x64xbf16, #tpu.memory_space<vmem>>, vector<1x4096x64xbf16>
    %3 = vector.shape_cast %2 : vector<1x4096x64xbf16> to vector<4096x64xbf16>
    %cst = arith.constant dense<0.000000e+00> : vector<8x64xf32>
    %4 = tpu.matmul %1, %3, %cst {dimension_numbers = #tpu.dot_dimension_numbers<[1], [0], [0], [1], [0, 0, 1, 1], [], []>} : vector<8x4096xbf16>, vector<4096x64xbf16>, vector<8x64xf32> -> vector<8x64xf32>
    %c0_5 = arith.constant 0 : index
    %c0_6 = arith.constant 0 : index
    %5 = vector.load %arg4[%c0_5, %c0_6] : memref<1x64xf32, #tpu.memory_space<vmem>>, vector<1x64xf32>
    %6 = vector.broadcast %5 : vector<1x64xf32> to vector<8x64xf32>
    %7 = arith.addf %4, %6 : vector<8x64xf32>
    %c0_7 = arith.constant 0 : index
    %c0_8 = arith.constant 0 : index
    %c0_9 = arith.constant 0 : index
    %8 = vector.load %arg5[%c0_7, %c0_8, %c0_9] : memref<1x8x64xf32, #tpu.memory_space<vmem>>, vector<1x8x64xf32>
    %9 = vector.shape_cast %8 : vector<1x8x64xf32> to vector<8x64xf32>
    %10 = vector.shape_cast %7 : vector<8x64xf32> to vector<1x8x64xf32>
    tpu.vector_store %arg5[%c0_7, %c0_8, %c0_9], %10 {strides = array<i32>} : memref<1x8x64xf32, #tpu.memory_space<vmem>>, vector<1x8x64xf32>,
    return
  }
  func.func @transform_0(%arg0: i32, %arg1: i32) -> (i32, i32, i32) {
    %c0_i32 = arith.constant 0 : i32
    %c0_i32_0 = arith.constant 0 : i32
    %c0_i32_1 = arith.constant 0 : i32
    return %arg0, %c0_i32, %c0_i32_0 : i32, i32, i32
  }
  func.func @transform_1(%arg0: i32, %arg1: i32) -> (i32, i32, i32) {
    %c0_i32 = arith.constant 0 : i32
    %c0_i32_0 = arith.constant 0 : i32
    return %arg0, %c0_i32, %arg1 : i32, i32, i32
  }
  func.func @transform_2(%arg0: i32, %arg1: i32) -> (i32, i32) {
    %c0_i32 = arith.constant 0 : i32
    %c0_i32_0 = arith.constant 0 : i32
    return %c0_i32, %arg1 : i32, i32
  }
  func.func @transform_3(%arg0: i32, %arg1: i32) -> (i32, i32, i32) {
    %c0_i32 = arith.constant 0 : i32
    %c0_i32_0 = arith.constant 0 : i32
    return %arg0, %c0_i32, %arg1 : i32, i32, i32
  }
}

module attributes {stable_mosaic.version = 11 : i64} {
  func.func @_gemm_bias_kernel(%arg0: i32, %arg1: i32, %arg2: memref<1x8x32xbf16, #tpu.memory_space<vmem>>, %arg3: memref<1x32x512xbf16, #tpu.memory_space<vmem>>, %arg4: memref<1x512xf32, #tpu.memory_space<vmem>>, %arg5: memref<1x8x512xf32, #tpu.memory_space<vmem>>) attributes {dimension_semantics = [#tpu.dimension_semantics<parallel>, #tpu.dimension_semantics<parallel>], iteration_bounds = array<i64: 1, 8>, scalar_prefetch = 0 : i64, scratch_operands = 0 : i64, tpu.core_type = #tpu.core_type<tc>, window_params = [{transform_indices = @transform_0, window_bounds = array<i64: 1, 8, 32>}, {transform_indices = @transform_1, window_bounds = array<i64: 1, 32, 512>}, {transform_indices = @transform_2, window_bounds = array<i64: 1, 512>}, {transform_indices = @transform_3, window_bounds = array<i64: 1, 8, 512>}]} {
    %c0 = arith.constant 0 : index
    %c0_0 = arith.constant 0 : index
    %c0_1 = arith.constant 0 : index
    %0 = vector.load %arg2[%c0, %c0_0, %c0_1] : memref<1x8x32xbf16, #tpu.memory_space<vmem>>, vector<1x8x32xbf16>
    %1 = vector.shape_cast %0 : vector<1x8x32xbf16> to vector<8x32xbf16>
    %c0_2 = arith.constant 0 : index
    %c0_3 = arith.constant 0 : index
    %c0_4 = arith.constant 0 : index
    %2 = vector.load %arg3[%c0_2, %c0_3, %c0_4] : memref<1x32x512xbf16, #tpu.memory_space<vmem>>, vector<1x32x512xbf16>
    %3 = vector.shape_cast %2 : vector<1x32x512xbf16> to vector<32x512xbf16>
    %cst = arith.constant dense<0.000000e+00> : vector<8x512xf32>
    %4 = tpu.matmul %1, %3, %cst {dimension_numbers = #tpu.dot_dimension_numbers<[1], [0], [0], [1], [0, 0, 1, 1], [], []>} : vector<8x32xbf16>, vector<32x512xbf16>, vector<8x512xf32> -> vector<8x512xf32>
    %c0_5 = arith.constant 0 : index
    %c0_6 = arith.constant 0 : index
    %5 = vector.load %arg4[%c0_5, %c0_6] : memref<1x512xf32, #tpu.memory_space<vmem>>, vector<1x512xf32>
    %6 = vector.broadcast %5 : vector<1x512xf32> to vector<8x512xf32>
    %7 = arith.addf %4, %6 : vector<8x512xf32>
    %c0_7 = arith.constant 0 : index
    %c0_8 = arith.constant 0 : index
    %c0_9 = arith.constant 0 : index
    %8 = vector.load %arg5[%c0_7, %c0_8, %c0_9] : memref<1x8x512xf32, #tpu.memory_space<vmem>>, vector<1x8x512xf32>
    %9 = vector.shape_cast %8 : vector<1x8x512xf32> to vector<8x512xf32>
    %10 = vector.shape_cast %7 : vector<8x512xf32> to vector<1x8x512xf32>
    tpu.vector_store %arg5[%c0_7, %c0_8, %c0_9], %10 {strides = array<i32>} : memref<1x8x512xf32, #tpu.memory_space<vmem>>, vector<1x8x512xf32>,
    return
  }
  func.func @transform_0(%arg0: i32, %arg1: i32) -> (i32, i32, i32) {
    %c0_i32 = arith.constant 0 : i32
    %c0_i32_0 = arith.constant 0 : i32
    %c0_i32_1 = arith.constant 0 : i32
    return %arg0, %c0_i32, %c0_i32_0 : i32, i32, i32
  }
  func.func @transform_1(%arg0: i32, %arg1: i32) -> (i32, i32, i32) {
    %c0_i32 = arith.constant 0 : i32
    %c0_i32_0 = arith.constant 0 : i32
    return %arg0, %c0_i32, %arg1 : i32, i32, i32
  }
  func.func @transform_2(%arg0: i32, %arg1: i32) -> (i32, i32) {
    %c0_i32 = arith.constant 0 : i32
    %c0_i32_0 = arith.constant 0 : i32
    return %c0_i32, %arg1 : i32, i32
  }
  func.func @transform_3(%arg0: i32, %arg1: i32) -> (i32, i32, i32) {
    %c0_i32 = arith.constant 0 : i32
    %c0_i32_0 = arith.constant 0 : i32
    return %arg0, %c0_i32, %arg1 : i32, i32, i32
  }
}

module attributes {stable_mosaic.version = 11 : i64} {
  func.func @_gemm_kernel(%arg0: i32, %arg1: i32, %arg2: memref<1x32x512xbf16, #tpu.memory_space<vmem>>, %arg3: memref<1x512x128xbf16, #tpu.memory_space<vmem>>, %arg4: memref<1x32x128xf32, #tpu.memory_space<vmem>>) attributes {dimension_semantics = [#tpu.dimension_semantics<parallel>, #tpu.dimension_semantics<parallel>], iteration_bounds = array<i64: 8, 1>, scalar_prefetch = 0 : i64, scratch_operands = 0 : i64, tpu.core_type = #tpu.core_type<tc>, window_params = [{transform_indices = @transform_0, window_bounds = array<i64: 1, 32, 512>}, {transform_indices = @transform_1, window_bounds = array<i64: 1, 512, 128>}, {transform_indices = @transform_2, window_bounds = array<i64: 1, 32, 128>}]} {
    %c0 = arith.constant 0 : index
    %c0_0 = arith.constant 0 : index
    %c0_1 = arith.constant 0 : index
    %0 = vector.load %arg2[%c0, %c0_0, %c0_1] : memref<1x32x512xbf16, #tpu.memory_space<vmem>>, vector<1x32x512xbf16>
    %1 = vector.shape_cast %0 : vector<1x32x512xbf16> to vector<32x512xbf16>
    %c0_2 = arith.constant 0 : index
    %c0_3 = arith.constant 0 : index
    %c0_4 = arith.constant 0 : index
    %2 = vector.load %arg3[%c0_2, %c0_3, %c0_4] : memref<1x512x128xbf16, #tpu.memory_space<vmem>>, vector<1x512x128xbf16>
    %3 = vector.shape_cast %2 : vector<1x512x128xbf16> to vector<512x128xbf16>
    %cst = arith.constant dense<0.000000e+00> : vector<32x128xf32>
    %4 = tpu.matmul %1, %3, %cst {dimension_numbers = #tpu.dot_dimension_numbers<[1], [0], [0], [1], [0, 0, 1, 1], [], []>} : vector<32x512xbf16>, vector<512x128xbf16>, vector<32x128xf32> -> vector<32x128xf32>
    %c0_5 = arith.constant 0 : index
    %c0_6 = arith.constant 0 : index
    %c0_7 = arith.constant 0 : index
    %5 = vector.load %arg4[%c0_5, %c0_6, %c0_7] : memref<1x32x128xf32, #tpu.memory_space<vmem>>, vector<1x32x128xf32>
    %6 = vector.shape_cast %5 : vector<1x32x128xf32> to vector<32x128xf32>
    %7 = vector.shape_cast %4 : vector<32x128xf32> to vector<1x32x128xf32>
    tpu.vector_store %arg4[%c0_5, %c0_6, %c0_7], %7 {strides = array<i32>} : memref<1x32x128xf32, #tpu.memory_space<vmem>>, vector<1x32x128xf32>,
    return
  }
  func.func @transform_0(%arg0: i32, %arg1: i32) -> (i32, i32, i32) {
    %c0_i32 = arith.constant 0 : i32
    %c0_i32_0 = arith.constant 0 : i32
    %c0_i32_1 = arith.constant 0 : i32
    return %arg0, %c0_i32, %c0_i32_0 : i32, i32, i32
  }
  func.func @transform_1(%arg0: i32, %arg1: i32) -> (i32, i32, i32) {
    %c0_i32 = arith.constant 0 : i32
    %c0_i32_0 = arith.constant 0 : i32
    return %arg0, %c0_i32, %arg1 : i32, i32, i32
  }
  func.func @transform_2(%arg0: i32, %arg1: i32) -> (i32, i32, i32) {
    %c0_i32 = arith.constant 0 : i32
    %c0_i32_0 = arith.constant 0 : i32
    return %arg0, %c0_i32, %arg1 : i32, i32, i32
  }
}

module attributes {stable_mosaic.version = 11 : i64} {
  func.func @_gemm_kernel(%arg0: i32, %arg1: i32, %arg2: memref<1x8x256xbf16, #tpu.memory_space<vmem>>, %arg3: memref<1x256x512xbf16, #tpu.memory_space<vmem>>, %arg4: memref<1x8x512xf32, #tpu.memory_space<vmem>>) attributes {dimension_semantics = [#tpu.dimension_semantics<parallel>, #tpu.dimension_semantics<parallel>], iteration_bounds = array<i64: 8, 2>, scalar_prefetch = 0 : i64, scratch_operands = 0 : i64, tpu.core_type = #tpu.core_type<tc>, window_params = [{transform_indices = @transform_0, window_bounds = array<i64: 1, 8, 256>}, {transform_indices = @transform_1, window_bounds = array<i64: 1, 256, 512>}, {transform_indices = @transform_2, window_bounds = array<i64: 1, 8, 512>}]} {
    %c0 = arith.constant 0 : index
    %c0_0 = arith.constant 0 : index
    %c0_1 = arith.constant 0 : index
    %0 = vector.load %arg2[%c0, %c0_0, %c0_1] : memref<1x8x256xbf16, #tpu.memory_space<vmem>>, vector<1x8x256xbf16>
    %1 = vector.shape_cast %0 : vector<1x8x256xbf16> to vector<8x256xbf16>
    %c0_2 = arith.constant 0 : index
    %c0_3 = arith.constant 0 : index
    %c0_4 = arith.constant 0 : index
    %2 = vector.load %arg3[%c0_2, %c0_3, %c0_4] : memref<1x256x512xbf16, #tpu.memory_space<vmem>>, vector<1x256x512xbf16>
    %3 = vector.shape_cast %2 : vector<1x256x512xbf16> to vector<256x512xbf16>
    %cst = arith.constant dense<0.000000e+00> : vector<8x512xf32>
    %4 = tpu.matmul %1, %3, %cst {dimension_numbers = #tpu.dot_dimension_numbers<[1], [0], [0], [1], [0, 0, 1, 1], [], []>} : vector<8x256xbf16>, vector<256x512xbf16>, vector<8x512xf32> -> vector<8x512xf32>
    %c0_5 = arith.constant 0 : index
    %c0_6 = arith.constant 0 : index
    %c0_7 = arith.constant 0 : index
    %5 = vector.load %arg4[%c0_5, %c0_6, %c0_7] : memref<1x8x512xf32, #tpu.memory_space<vmem>>, vector<1x8x512xf32>
    %6 = vector.shape_cast %5 : vector<1x8x512xf32> to vector<8x512xf32>
    %7 = vector.shape_cast %4 : vector<8x512xf32> to vector<1x8x512xf32>
    tpu.vector_store %arg4[%c0_5, %c0_6, %c0_7], %7 {strides = array<i32>} : memref<1x8x512xf32, #tpu.memory_space<vmem>>, vector<1x8x512xf32>,
    return
  }
  func.func @transform_0(%arg0: i32, %arg1: i32) -> (i32, i32, i32) {
    %c0_i32 = arith.constant 0 : i32
    %c0_i32_0 = arith.constant 0 : i32
    %c0_i32_1 = arith.constant 0 : i32
    return %arg0, %c0_i32, %c0_i32_0 : i32, i32, i32
  }
  func.func @transform_1(%arg0: i32, %arg1: i32) -> (i32, i32, i32) {
    %c0_i32 = arith.constant 0 : i32
    %c0_i32_0 = arith.constant 0 : i32
    return %arg0, %c0_i32, %arg1 : i32, i32, i32
  }
  func.func @transform_2(%arg0: i32, %arg1: i32) -> (i32, i32, i32) {
    %c0_i32 = arith.constant 0 : i32
    %c0_i32_0 = arith.constant 0 : i32
    return %arg0, %c0_i32, %arg1 : i32, i32, i32
  }
}

module attributes {stable_mosaic.version = 11 : i64} {
  func.func @_bn_act_kernel(%arg0: i32, %arg1: memref<1x8192xf32, #tpu.memory_space<vmem>>, %arg2: memref<1x1xf32, #tpu.memory_space<vmem>>, %arg3: memref<1x1xf32, #tpu.memory_space<vmem>>, %arg4: memref<1x8192xf32, #tpu.memory_space<vmem>>) attributes {dimension_semantics = [#tpu.dimension_semantics<parallel>], iteration_bounds = array<i64: 1>, scalar_prefetch = 0 : i64, scratch_operands = 0 : i64, tpu.core_type = #tpu.core_type<tc>, window_params = [{transform_indices = @transform_0, window_bounds = array<i64: 1, 8192>}, {transform_indices = @transform_1, window_bounds = array<i64: 1, 1>}, {transform_indices = @transform_2, window_bounds = array<i64: 1, 1>}, {transform_indices = @transform_3, window_bounds = array<i64: 1, 8192>}]} {
    %c0 = arith.constant 0 : index
    %c0_0 = arith.constant 0 : index
    %0 = vector.load %arg1[%c0, %c0_0] : memref<1x8192xf32, #tpu.memory_space<vmem>>, vector<1x8192xf32>
    %cst = arith.constant dense<0.000000e+00> : vector<1xf32>
    %1 = vector.multi_reduction <add>, %0, %cst [1] : vector<1x8192xf32> to vector<1xf32>
    %2 = vector.shape_cast %1 : vector<1xf32> to vector<1x1xf32>
    %cst_1 = arith.constant 8.192000e+03 : f32
    %3 = vector.broadcast %cst_1 : f32 to vector<1x1xf32>
    %4 = arith.divf %2, %3 : vector<1x1xf32>
    %5 = vector.broadcast %4 : vector<1x1xf32> to vector<1x8192xf32>
    %6 = arith.subf %0, %5 : vector<1x8192xf32>
    %7 = arith.mulf %6, %6 : vector<1x8192xf32>
    %cst_2 = arith.constant dense<0.000000e+00> : vector<1xf32>
    %8 = vector.multi_reduction <add>, %7, %cst_2 [1] : vector<1x8192xf32> to vector<1xf32>
    %9 = vector.shape_cast %8 : vector<1xf32> to vector<1x1xf32>
    %cst_3 = arith.constant 8.192000e+03 : f32
    %10 = vector.broadcast %cst_3 : f32 to vector<1x1xf32>
    %11 = arith.divf %9, %10 : vector<1x1xf32>
    %12 = vector.broadcast %4 : vector<1x1xf32> to vector<1x8192xf32>
    %13 = arith.subf %0, %12 : vector<1x8192xf32>
    %cst_4 = arith.constant 9.99999974E-6 : f32
    %14 = vector.broadcast %cst_4 : f32 to vector<1x1xf32>
    %15 = arith.addf %11, %14 : vector<1x1xf32>
    %16 = math.rsqrt %15 : vector<1x1xf32>
    %17 = vector.broadcast %16 : vector<1x1xf32> to vector<1x8192xf32>
    %18 = arith.mulf %13, %17 : vector<1x8192xf32>
    %c0_5 = arith.constant 0 : index
    %c0_6 = arith.constant 0 : index
    %19 = vector.load %arg2[%c0_5, %c0_6] : memref<1x1xf32, #tpu.memory_space<vmem>>, vector<1x1xf32>
    %20 = vector.broadcast %19 : vector<1x1xf32> to vector<1x8192xf32>
    %21 = arith.mulf %18, %20 : vector<1x8192xf32>
    %c0_7 = arith.constant 0 : index
    %c0_8 = arith.constant 0 : index
    %22 = vector.load %arg3[%c0_7, %c0_8] : memref<1x1xf32, #tpu.memory_space<vmem>>, vector<1x1xf32>
    %23 = vector.broadcast %22 : vector<1x1xf32> to vector<1x8192xf32>
    %24 = arith.addf %21, %23 : vector<1x8192xf32>
    %cst_9 = arith.constant 0.000000e+00 : f32
    %25 = vector.broadcast %cst_9 : f32 to vector<1x8192xf32>
    %26 = arith.cmpf oge, %24, %25 : vector<1x8192xf32>
    %cst_10 = arith.constant 2.000000e-01 : f32
    %27 = vector.broadcast %cst_10 : f32 to vector<1x8192xf32>
    %28 = arith.mulf %27, %24 : vector<1x8192xf32>
    %29 = arith.select %26, %24, %28 : vector<1x8192xi1>, vector<1x8192xf32>
    %30 = arith.negf %29 : vector<1x8192xf32>
    %31 = math.exp %30 : vector<1x8192xf32>
    %cst_11 = arith.constant 1.000000e+00 : f32
    %32 = vector.broadcast %cst_11 : f32 to vector<1x8192xf32>
    %33 = arith.addf %32, %31 : vector<1x8192xf32>
    %34 = arith.divf %32, %33 : vector<1x8192xf32>
    %c0_12 = arith.constant 0 : index
    %c0_13 = arith.constant 0 : index
    %35 = vector.load %arg4[%c0_12, %c0_13] : memref<1x8192xf32, #tpu.memory_space<vmem>>, vector<1x8192xf32>
    tpu.vector_store %arg4[%c0_12, %c0_13], %34 {strides = array<i32>} : memref<1x8192xf32, #tpu.memory_space<vmem>>, vector<1x8192xf32>,
    return
  }
  func.func @transform_0(%arg0: i32) -> (i32, i32) {
    %c0_i32 = arith.constant 0 : i32
    %c0_i32_0 = arith.constant 0 : i32
    return %arg0, %c0_i32 : i32, i32
  }
  func.func @transform_1(%arg0: i32) -> (i32, i32) {
    %c0_i32 = arith.constant 0 : i32
    %c0_i32_0 = arith.constant 0 : i32
    return %arg0, %c0_i32 : i32, i32
  }
  func.func @transform_2(%arg0: i32) -> (i32, i32) {
    %c0_i32 = arith.constant 0 : i32
    %c0_i32_0 = arith.constant 0 : i32
    return %arg0, %c0_i32 : i32, i32
  }
  func.func @transform_3(%arg0: i32) -> (i32, i32) {
    %c0_i32 = arith.constant 0 : i32
    %c0_i32_0 = arith.constant 0 : i32
    return %arg0, %c0_i32 : i32, i32
  }
}

</mosaic_0001>

<llo_original>
// kernel: voxel_vae_forward.10
$region0: #{voxel_vae_forward.10}
  #allocation0 [shape = 'u32[]', space=smem, size = 0x4, offset = 0x4, fixed_abs, tag = 'smem constant byte address 0x4 - core index']
  #allocation1 [shape = 'u32[144,128]{1,0:T(1,128)}', space=vmem, size = 0x12000, scoped, tag = 'internal scratch']
  %s0 = inlined_call_operand.vmem [shape: bf16[1,32,64], index: 0, kind: input, shape index: {}]
  %s1 = inlined_call_operand.vmem [shape: bf16[1,64,1024], index: 1, kind: input, shape index: {}]
  %s2 = inlined_call_operand.vmem [shape: f32[1,32,1024], index: 2, kind: output, shape index: {}]
  %s3 = sld [smem:[#allocation0]]
  $region83: #{voxel_vae_forward.10} parent=0
    _
  %s5 = ssub.s32 1, %s3
  %s6 = scalar_select 0, %s5, %s3
  $region1: #{voxel_vae_forward.10} parent=0
    #allocation2 [shape = 'u8[131072]{0}', space=vmem, size = 0x20000, scoped, tag = 'input window, operand 1']
    #allocation3 [shape = 'u8[131072]{0}', space=vmem, size = 0x20000, scoped, tag = 'output window, operand 0']
    loop: start=0, step=1, limit=4
    $region2: #{voxel_vae_forward.10} parent=1 // loop_pre_header
      _
    $region3: #{voxel_vae_forward.10} parent=1 // loop_header
      %s8 = sphi 0, %s12
      %p9 = scmp.ge.s32.totalorder %s8, 4
      %s15 = sphi 0, %s27
      %s16 = sphi 0, %s23
      %s17 = sphi 0, %s15
      %s18 = sphi 0, %s16
      %s19 = sphi 0, %s17
      %s20 = sphi 0, %s18
      %s30 = sphi 0, %s32
      %s33 = sphi 0, %s30
      %s34 = sphi 0, %s33
      %s50 = sphi 0, %s34
      %s58 = sphi 0, %s60
      %s61 = sphi 0, %s58
      %s62 = sphi 0, %s61
      %s78 = sphi 0, %s62
      %s86 = sphi 0, %s88
      %s89 = sphi 0, %s86
      %s90 = sphi 0, %s89
      %s106 = sphi 0, %s90
    $region4: #{voxel_vae_forward.10} parent=1 // loop_header_branch
      %11 = sbr.rel (%p9) target = $region8
    $region5: #{voxel_vae_forward.10} parent=1 // loop_body
      %s13 = ssub.s32 %s8, 1
      %s14 = ssub.s32 %s8, 2
      %s21 = sadd.s32 1, %s16
      %p22 = scmp.ge.s32.totalorder %s21, 2
      %s23 = scalar_select %p22, 0, %s21
      %s24 = sadd.s32 1, %s15
      %s25 = scalar_select %p22, %s24, %s15
      %p26 = scmp.ge.s32.totalorder %s25, 1
      %s27 = scalar_select %p26, 0, %s25
      %s28 = ssub.s32 %s15, %s27
      %p29 = scmp.eq.s32.totalorder %s28, 0
      %s31 = sadd.s32 %s30, 1
      %s32 = scalar_select %p29, %s30, %s31
      %p35 = pneg %p29
      %p36 = scmp.eq.s32.totalorder %s8, 1
      %p37 = por %p35, %p36
      %p38 = scmp.ne.s32.totalorder %s30, %s33
      %p39 = scmp.eq.s32.totalorder %s8, 0
      %p40 = por %p38, %p39
      %p41 = scmp.ne.s32.totalorder %s30, %s33
      %p42 = scmp.eq.s32.totalorder %s13, 1
      %p43 = por %p41, %p42
      %p44 = scmp.ne.s32.totalorder %s33, %s34
      %p45 = scmp.eq.s32.totalorder %s13, 0
      %p46 = por %p44, %p45
      %p47 = scmp.ne.s32.totalorder %s33, %s34
      %p48 = scmp.eq.s32.totalorder %s14, 1
      %p49 = por %p47, %p48
      %p51 = scmp.ne.s32.totalorder %s34, %s50
      %p52 = scmp.eq.s32.totalorder %s14, 0
      %p53 = por %p51, %p52
      %s54 = ssub.s32 %s15, %s27
      %s55 = ssub.s32 %s16, %s23
      %s56 = sor.u32 %s54, %s55
      %p57 = scmp.eq.s32.totalorder %s56, 0
      %s59 = sadd.s32 %s58, 1
      %s60 = scalar_select %p57, %s58, %s59
      %p63 = pneg %p57
      %p64 = scmp.eq.s32.totalorder %s8, 1
      %p65 = por %p63, %p64
      %p66 = scmp.ne.s32.totalorder %s58, %s61
      %p67 = scmp.eq.s32.totalorder %s8, 0
      %p68 = por %p66, %p67
      %p69 = scmp.ne.s32.totalorder %s58, %s61
      %p70 = scmp.eq.s32.totalorder %s13, 1
      %p71 = por %p69, %p70
      %p72 = scmp.ne.s32.totalorder %s61, %s62
      %p73 = scmp.eq.s32.totalorder %s13, 0
      %p74 = por %p72, %p73
      %p75 = scmp.ne.s32.totalorder %s61, %s62
      %p76 = scmp.eq.s32.totalorder %s14, 1
      %p77 = por %p75, %p76
      %p79 = scmp.ne.s32.totalorder %s62, %s78
      %p80 = scmp.eq.s32.totalorder %s14, 0
      %p81 = por %p79, %p80
      %s82 = ssub.s32 %s15, %s27
      %s83 = ssub.s32 %s16, %s23
      %s84 = sor.u32 %s82, %s83
      %p85 = scmp.eq.s32.totalorder %s84, 0
      %s87 = sadd.s32 %s86, 1
      %s88 = scalar_select %p85, %s86, %s87
      %p91 = pneg %p85
      %p92 = scmp.eq.s32.totalorder %s8, 1
      %p93 = por %p91, %p92
      %p94 = scmp.ne.s32.totalorder %s86, %s89
      %p95 = scmp.eq.s32.totalorder %s8, 0
      %p96 = por %p94, %p95
      %p97 = scmp.ne.s32.totalorder %s86, %s89
      %p98 = scmp.eq.s32.totalorder %s13, 1
      %p99 = por %p97, %p98
      %p100 = scmp.ne.s32.totalorder %s89, %s90
      %p101 = scmp.eq.s32.totalorder %s13, 0
      %p102 = por %p100, %p101
      %p103 = scmp.ne.s32.totalorder %s89, %s90
      %p104 = scmp.eq.s32.totalorder %s14, 1
      %p105 = por %p103, %p104
      %p107 = scmp.ne.s32.totalorder %s90, %s106
      %p108 = scmp.eq.s32.totalorder %s14, 0
      %p109 = por %p107, %p108
      %p110 = scmp.le.s32.totalorder 1, %s8
      %p111 = scmp.lt.s32.totalorder %s8, 3
      %p112 = pnand %p110, %p111
      %p113 = pneg %p112
      // Predicated region
      $region9: #{voxel_vae_forward.10} parent=5 // pred_check
        _
      $region10: #{voxel_vae_forward.10} parent=5 // pred_check_branch
        %115 = sbr.rel (%p112) target = $region12
      $region11: #{voxel_vae_forward.10} parent=5 // pred_region
        %s116 = ssub.s32 %s8, 1
        // Predicated region
        $region13: #{voxel_vae_forward.10} parent=11 // pred_check
          %p117 = pneg %p46
        $region14: #{voxel_vae_forward.10} parent=11 // pred_check_branch
          %119 = sbr.rel (%p117) target = $region16
        $region15: #{voxel_vae_forward.10} parent=11 // pred_region
          %p120 = scmp.lt.s32.totalorder %s17, 0
          %s121 = scalar_select %p120, %s17, 0
          %s122 = smul.addr %s121, 4
          %s123 = smul.addr %s122, 4
          %s124 = scalar_lea.vmem %s0, %s123
        $region16: #{voxel_vae_forward.10} parent=11 // pred_fallthru
          _
      $region12: #{voxel_vae_forward.10} parent=5 // pred_fallthru
        _
      %p125 = scmp.lt.s32.totalorder %s8, 2
      // Predicated region
      $region17: #{voxel_vae_forward.10} parent=5 // pred_check
        %p126 = pneg %p125
      $region18: #{voxel_vae_forward.10} parent=5 // pred_check_branch
        %128 = sbr.rel (%p126) target = $region20
      $region19: #{voxel_vae_forward.10} parent=5 // pred_region
        // Predicated region
        $region21: #{voxel_vae_forward.10} parent=19 // pred_check
          %p129 = pneg %p68
        $region22: #{voxel_vae_forward.10} parent=19 // pred_check_branch
          %131 = sbr.rel (%p129) target = $region24
        $region23: #{voxel_vae_forward.10} parent=19 // pred_region
          %s132 = sand.u32 %s58, 1
          %s133 = sand.u32 %s58, 1
          %s134 = smul.addr %s133, 128
          %s135 = scalar_lea.vmem [#allocation2], %s134
          %s136 = smul.u32 4, %s16
          %s137 = smul.addr %s15, 64
          %s138 = sadd.s32 %s136, %s137
          %s139 = smul.addr %s138, 4
          %s140 = scalar_lea.vmem %s1, %s139
          // Predicated region
          $region25: #{voxel_vae_forward.10} parent=23 // pred_check
            _
          $region26: #{voxel_vae_forward.10} parent=23 // pred_check_branch
            %142 = sbr.rel (0) target = $region28
          $region27: #{voxel_vae_forward.10} parent=23 // pred_region
            // Predicated region
            $region29: #{voxel_vae_forward.10} parent=27 // pred_check
              _
            $region30: #{voxel_vae_forward.10} parent=27 // pred_check_branch
              %144 = sbr.rel (0) target = $region32
            $region31: #{voxel_vae_forward.10} parent=27 // pred_region
              loop: start=0, step=1, limit=1
              $region33: #{voxel_vae_forward.10} parent=31 // loop_pre_header
                _
              $region34: #{voxel_vae_forward.10} parent=31 // loop_header
                %s146 = sphi 0, %s150
                %p147 = scmp.ge.s32.totalorder %s146, 1
                %s151 = sphi %s140, %s140
                %s152 = sphi %s135, %s135
              $region35: #{voxel_vae_forward.10} parent=31 // loop_header_branch
                %149 = sbr.rel (%p147) target = $region39
              $region36: #{voxel_vae_forward.10} parent=31 // loop_body
                %v153 = vld [vmem:[%s151] sm:$0xff]
                %154 = vst [vmem:[%s152] sm:$0xff] %v153
                %v155 = vld [vmem:[%s151 + $0x8] sm:$0xff]
                %156 = vst [vmem:[%s152 + $0x8] sm:$0xff] %v155
                %v157 = vld [vmem:[%s151 + $0x20] sm:$0xff]
                %158 = vst [vmem:[%s152 + $0x10] sm:$0xff] %v157
                %v159 = vld [vmem:[%s151 + $0x28] sm:$0xff]
                %160 = vst [vmem:[%s152 + $0x18] sm:$0xff] %v159
                %v161 = vld [vmem:[%s151 + $0x40] sm:$0xff]
                %162 = vst [vmem:[%s152 + $0x20] sm:$0xff] %v161
                %v163 = vld [vmem:[%s151 + $0x48] sm:$0xff]
                %164 = vst [vmem:[%s152 + $0x28] sm:$0xff] %v163
                %v165 = vld [vmem:[%s151 + $0x60] sm:$0xff]
                %166 = vst [vmem:[%s152 + $0x30] sm:$0xff] %v165
                %v167 = vld [vmem:[%s151 + $0x68] sm:$0xff]
                %168 = vst [vmem:[%s152 + $0x38] sm:$0xff] %v167
                %v169 = vld [vmem:[%s151 + $0x80] sm:$0xff]
                %170 = vst [vmem:[%s152 + $0x40] sm:$0xff] %v169
                %v171 = vld [vmem:[%s151 + $0x88] sm:$0xff]
                %172 = vst [vmem:[%s152 + $0x48] sm:$0xff] %v171
                %v173 = vld [vmem:[%s151 + $0xa0] sm:$0xff]
                %174 = vst [vmem:[%s152 + $0x50] sm:$0xff] %v173
                %v175 = vld [vmem:[%s151 + $0xa8] sm:$0xff]
                %176 = vst [vmem:[%s152 + $0x58] sm:$0xff] %v175
                %v177 = vld [vmem:[%s151 + $0xc0] sm:$0xff]
                %178 = vst [vmem:[%s152 + $0x60] sm:$0xff] %v177
                %v179 = vld [vmem:[%s151 + $0xc8] sm:$0xff]
                %180 = vst [vmem:[%s152 + $0x68] sm:$0xff] %v179
                %v181 = vld [vmem:[%s151 + $0xe0] sm:$0xff]
                %182 = vst [vmem:[%s152 + $0x70] sm:$0xff] %v181
                %v183 = vld [vmem:[%s151 + $0xe8] sm:$0xff]
                %184 = vst [vmem:[%s152 + $0x78] sm:$0xff] %v183
              $region37: #{voxel_vae_forward.10} parent=31 // loop_footer
                %s150 = sadd.s32 1, %s146
              $region38: #{voxel_vae_forward.10} parent=31 // loop_footer_branch
                %145 = sbr.rel target = $region34
              $region39: #{voxel_vae_forward.10} parent=31 // loop_exit
                _
            $region32: #{voxel_vae_forward.10} parent=27 // pred_fallthru
              _
            // Predicated region
            $region40: #{voxel_vae_forward.10} parent=27 // pred_check
              _
            $region41: #{voxel_vae_forward.10} parent=27 // pred_check_branch
              %186 = sbr.rel target = $region43
            $region42: #{voxel_vae_forward.10} parent=27 // pred_region
              _
            $region43: #{voxel_vae_forward.10} parent=27 // pred_fallthru
              _
          $region28: #{voxel_vae_forward.10} parent=23 // pred_fallthru
            _
          %187 = vnop
        $region24: #{voxel_vae_forward.10} parent=19 // pred_fallthru
          _
      $region20: #{voxel_vae_forward.10} parent=5 // pred_fallthru
        _
      %p188 = scmp.le.s32.totalorder 1, %s8
      %p189 = scmp.lt.s32.totalorder %s8, 3
      %p190 = pnand %p188, %p189
      %p191 = pneg %p190
      // Predicated region
      $region44: #{voxel_vae_forward.10} parent=5 // pred_check
        _
      $region45: #{voxel_vae_forward.10} parent=5 // pred_check_branch
        %193 = sbr.rel (%p190) target = $region47
      $region46: #{voxel_vae_forward.10} parent=5 // pred_region
        %s194 = ssub.s32 %s8, 1
        %s195 = sand.u32 %s61, 1
        %s196 = sand.u32 %s61, 1
        %s197 = smul.addr %s196, 128
        %s198 = scalar_lea.vmem [#allocation2], %s197
        // Predicated region
        $region48: #{voxel_vae_forward.10} parent=46 // pred_check
          %p199 = pneg %p74
        $region49: #{voxel_vae_forward.10} parent=46 // pred_check_branch
          %201 = sbr.rel (%p199) target = $region51
        $region50: #{voxel_vae_forward.10} parent=46 // pred_region
          _
        $region51: #{voxel_vae_forward.10} parent=46 // pred_fallthru
          _
        %p202 = scmp.lt.s32.totalorder %s17, 0
        %s203 = scalar_select %p202, %s17, 0
        %s204 = smul.addr %s203, 4
        %s205 = smul.addr %s204, 4
        %s206 = scalar_lea.vmem %s0, %s205
        %p207 = pneg %p46
        %p208 = pneg %p43
        %s209 = sand.u32 %s61, 1
        %s210 = sand.u32 %s61, 1
        %s211 = smul.addr %s210, 128
        %s212 = scalar_lea.vmem [#allocation2], %s211
        %p213 = pneg %p74
        %p214 = pneg %p71
        %p215 = pneg %p102
        %p216 = pneg %p99
        %s217 = sand.u32 %s89, 1
        %s218 = sand.u32 %s89, 1
        %s219 = smul.addr %s218, 128
        %s220 = scalar_lea.vmem [#allocation3], %s219
        %p221 = scmp.lt.s32.totalorder %s17, 0
        %s222 = scalar_select %p221, %s17, 0
        %s223 = smul.addr %s222, 4
        %s224 = smul.addr %s223, 4
        %s225 = scalar_lea.vmem %s0, %s224
        %s226 = smul.u32 4, %s18
        %s227 = smul.u32 4, %s18
        %v229 = vld [vmem:[%s225] sm:$0xf]
        %v230 = vld [vmem:[%s225 + $0x4] sm:$0xf]
        %v231 = vld [vmem:[%s225 + $0x8] sm:$0xf]
        %v232 = vld [vmem:[%s225 + $0xc] sm:$0xf]
        %v233 = vld [vmem:[%s198] sm:$0xff]
        %v234 = vld [vmem:[%s198 + $0x8] sm:$0xff]
        %v235 = vld [vmem:[%s198 + $0x10] sm:$0xff]
        %v236 = vld [vmem:[%s198 + $0x18] sm:$0xff]
        %v237 = vld [vmem:[%s198 + $0x20] sm:$0xff]
        %v238 = vld [vmem:[%s198 + $0x28] sm:$0xff]
        %v239 = vld [vmem:[%s198 + $0x30] sm:$0xff]
        %v240 = vld [vmem:[%s198 + $0x38] sm:$0xff]
        %v241 = vld [vmem:[%s198 + $0x40] sm:$0xff]
        %v242 = vld [vmem:[%s198 + $0x48] sm:$0xff]
        %v243 = vld [vmem:[%s198 + $0x50] sm:$0xff]
        %v244 = vld [vmem:[%s198 + $0x58] sm:$0xff]
        %v245 = vld [vmem:[%s198 + $0x60] sm:$0xff]
        %v246 = vld [vmem:[%s198 + $0x68] sm:$0xff]
        %v247 = vld [vmem:[%s198 + $0x70] sm:$0xff]
        %v248 = vld [vmem:[%s198 + $0x78] sm:$0xff]
        %v253 = vunpack.c.l.b16 %v229
        %v254 = vunpack.c.l.b16 %v230
        %v255 = vunpack.c.l.b16 %v231
        %v256 = vunpack.c.l.b16 %v232
        %v257 = vpack.c.b16 %v254, %v253
        %v258 = vpack.c.b16 %v256, %v255
        %v275 = vunpack.c.l.b16 %v233
        %v276 = vunpack.c.h.b16 %v233
        %v277 = vunpack.c.l.b16 %v234
        %v278 = vunpack.c.h.b16 %v234
        %v279 = vunpack.c.l.b16 %v235
        %v280 = vunpack.c.h.b16 %v235
        %v281 = vunpack.c.l.b16 %v236
        %v282 = vunpack.c.h.b16 %v236
        %v283 = vunpack.c.l.b16 %v237
        %v284 = vunpack.c.h.b16 %v237
        %v285 = vunpack.c.l.b16 %v238
        %v286 = vunpack.c.h.b16 %v238
        %v287 = vunpack.c.l.b16 %v239
        %v288 = vunpack.c.h.b16 %v239
        %v289 = vunpack.c.l.b16 %v240
        %v290 = vunpack.c.h.b16 %v240
        %v291 = vunpack.c.l.b16 %v241
        %v292 = vunpack.c.h.b16 %v241
        %v293 = vunpack.c.l.b16 %v242
        %v294 = vunpack.c.h.b16 %v242
        %v295 = vunpack.c.l.b16 %v243
        %v296 = vunpack.c.h.b16 %v243
        %v297 = vunpack.c.l.b16 %v244
        %v298 = vunpack.c.h.b16 %v244
        %v299 = vunpack.c.l.b16 %v245
        %v300 = vunpack.c.h.b16 %v245
        %v301 = vunpack.c.l.b16 %v246
        %v302 = vunpack.c.h.b16 %v246
        %v303 = vunpack.c.l.b16 %v247
        %v304 = vunpack.c.h.b16 %v247
        %v305 = vunpack.c.l.b16 %v248
        %v306 = vunpack.c.h.b16 %v248
        %v307 = vpack.c.b16 %v279, %v275
        %v308 = vpack.c.b16 %v280, %v276
        %v309 = vpack.c.b16 %v281, %v277
        %v310 = vpack.c.b16 %v282, %v278
        %v311 = vpack.c.b16 %v287, %v283
        %v312 = vpack.c.b16 %v288, %v284
        %v313 = vpack.c.b16 %v289, %v285
        %v314 = vpack.c.b16 %v290, %v286
        %v315 = vpack.c.b16 %v295, %v291
        %v316 = vpack.c.b16 %v296, %v292
        %v317 = vpack.c.b16 %v297, %v293
        %v318 = vpack.c.b16 %v298, %v294
        %v319 = vpack.c.b16 %v303, %v299
        %v320 = vpack.c.b16 %v304, %v300
        %v321 = vpack.c.b16 %v305, %v301
        %v322 = vpack.c.b16 %v306, %v302
        %vm339 = vcmask 523264
        %v341 = vsel %vm339, %v257, 0
        %v344 = vsel %vm339, %v258, 0
        %346 = vmatprep.subr.bf16.mxu0 0
        %347 = vmatpush1.bf16.msra.mxu0 0
        %348 = vmatprep.subr.bf16.mxu0 0
        %349 = vmatpush1.bf16.msra.mxu0 0
        %350 = vmatprep.subr.bf16.mxu0 0
        %351 = vmatpush1.bf16.msra.mxu0 0
        %352 = vmatprep.subr.bf16.mxu0 0
        %353 = vmatpush1.bf16.msra.mxu0 0
        %354 = vmatprep.subr.bf16.mxu0 %v320
        %355 = vmatpush1.bf16.msra.mxu0 %v319
        %356 = vmatprep.subr.bf16.mxu0 %v316
        %357 = vmatpush1.bf16.msra.mxu0 %v315
        %358 = vmatprep.subr.bf16.mxu0 %v312
        %359 = vmatpush1.bf16.msra.mxu0 %v311
        %360 = vmatprep.subr.bf16.mxu0 %v308
        %361 = vmatpush1.bf16.msra.mxu0 %v307
        %362 = vmatprep.subr.bf16.mxu0 0
        %363 = vmatpush2.bf16.msra.mxu0 0
        %364 = vmatprep.subr.bf16.mxu0 0
        %365 = vmatpush2.bf16.msra.mxu0 0
        %366 = vmatprep.subr.bf16.mxu0 0
        %367 = vmatpush2.bf16.msra.mxu0 0
        %368 = vmatprep.subr.bf16.mxu0 0
        %369 = vmatpush2.bf16.msra.mxu0 0
        %370 = vmatprep.subr.bf16.mxu0 0
        %371 = vmatpush2.bf16.msra.mxu0 0
        %372 = vmatprep.subr.bf16.mxu0 0
        %373 = vmatpush2.bf16.msra.mxu0 0
        %374 = vmatprep.subr.bf16.mxu0 0
        %375 = vmatpush2.bf16.msra.mxu0 0
        %376 = vmatprep.subr.bf16.mxu0 0
        %377 = vmatpush2.bf16.msra.mxu0 0
        %378 = vmatprep.mubr.bf16.mxu0 0
        %379 = vmatmul.mubr.bf16.gmra.mxu0 %v341
        %v380 = vpop.f32.mrf.mxu0
        %v381 = vadd.f32 0.0, %v380
        %v382 = vpop.f32.mrf.mxu0
        %v383 = vadd.f32 0.0, %v382
        %v384 = vpop.f32.mrf.mxu0
        %v385 = vadd.f32 0.0, %v384
        %v386 = vpop.f32.mrf.mxu0
        %v387 = vadd.f32 0.0, %v386
        %388 = vmatprep.mubr.bf16.mxu0 0
        %389 = vmatmul.mubr.bf16.gmra.mxu0 %v344
        %v390 = vpop.f32.mrf.mxu0
        %v391 = vadd.f32 0.0, %v390
        %v392 = vpop.f32.mrf.mxu0
        %v393 = vadd.f32 0.0, %v392
        %v394 = vpop.f32.mrf.mxu0
        %v395 = vadd.f32 0.0, %v394
        %v396 = vpop.f32.mrf.mxu0
        %v397 = vadd.f32 0.0, %v396
        %398 = vdwg.mxu0
        %399 = vmatprep.subr.bf16.mxu0 0
        %400 = vmatpush1.bf16.msra.mxu0 0
        %401 = vmatprep.subr.bf16.mxu0 0
        %402 = vmatpush1.bf16.msra.mxu0 0
        %403 = vmatprep.subr.bf16.mxu0 0
        %404 = vmatpush1.bf16.msra.mxu0 0
        %405 = vmatprep.subr.bf16.mxu0 0
        %406 = vmatpush1.bf16.msra.mxu0 0
        %407 = vmatprep.subr.bf16.mxu0 %v322
        %408 = vmatpush1.bf16.msra.mxu0 %v321
        %409 = vmatprep.subr.bf16.mxu0 %v318
        %410 = vmatpush1.bf16.msra.mxu0 %v317
        %411 = vmatprep.subr.bf16.mxu0 %v314
        %412 = vmatpush1.bf16.msra.mxu0 %v313
        %413 = vmatprep.subr.bf16.mxu0 %v310
        %414 = vmatpush1.bf16.msra.mxu0 %v309
        %415 = vmatprep.subr.bf16.mxu0 0
        %416 = vmatpush2.bf16.msra.mxu0 0
        %417 = vmatprep.subr.bf16.mxu0 0
        %418 = vmatpush2.bf16.msra.mxu0 0
        %419 = vmatprep.subr.bf16.mxu0 0
        %420 = vmatpush2.bf16.msra.mxu0 0
        %421 = vmatprep.subr.bf16.mxu0 0
        %422 = vmatpush2.bf16.msra.mxu0 0
        %423 = vmatprep.subr.bf16.mxu0 0
        %424 = vmatpush2.bf16.msra.mxu0 0
        %425 = vmatprep.subr.bf16.mxu0 0
        %426 = vmatpush2.bf16.msra.mxu0 0
        %427 = vmatprep.subr.bf16.mxu0 0
        %428 = vmatpush2.bf16.msra.mxu0 0
        %429 = vmatprep.subr.bf16.mxu0 0
        %430 = vmatpush2.bf16.msra.mxu0 0
        %431 = vmatprep.mubr.bf16.mxu0 0
        %432 = vmatmul.mubr.bf16.gmra.mxu0 %v341
        %v433 = vpop.f32.mrf.mxu0
        %v434 = vadd.f32 0.0, %v433
        %v435 = vpop.f32.mrf.mxu0
        %v436 = vadd.f32 0.0, %v435
        %v437 = vpop.f32.mrf.mxu0
        %v438 = vadd.f32 0.0, %v437
        %v439 = vpop.f32.mrf.mxu0
        %v440 = vadd.f32 0.0, %v439
        %441 = vmatprep.mubr.bf16.mxu0 0
        %442 = vmatmul.mubr.bf16.gmra.mxu0 %v344
        %v443 = vpop.f32.mrf.mxu0
        %v444 = vadd.f32 0.0, %v443
        %v445 = vpop.f32.mrf.mxu0
        %v446 = vadd.f32 0.0, %v445
        %v447 = vpop.f32.mrf.mxu0
        %v448 = vadd.f32 0.0, %v447
        %v449 = vpop.f32.mrf.mxu0
        %v450 = vadd.f32 0.0, %v449
        %451 = vdwg.mxu0
        %452 = vst [vmem:[%s220] sm:$0xff] %v381
        %453 = vst [vmem:[%s220 + $0x8] sm:$0xff] %v383
        %454 = vst [vmem:[%s220 + $0x10] sm:$0xff] %v434
        %455 = vst [vmem:[%s220 + $0x18] sm:$0xff] %v436
        %456 = vst [vmem:[%s220 + $0x20] sm:$0xff] %v385
        %457 = vst [vmem:[%s220 + $0x28] sm:$0xff] %v387
        %458 = vst [vmem:[%s220 + $0x30] sm:$0xff] %v438
        %459 = vst [vmem:[%s220 + $0x38] sm:$0xff] %v440
        %460 = vst [vmem:[%s220 + $0x40] sm:$0xff] %v391
        %461 = vst [vmem:[%s220 + $0x48] sm:$0xff] %v393
        %462 = vst [vmem:[%s220 + $0x50] sm:$0xff] %v444
        %463 = vst [vmem:[%s220 + $0x58] sm:$0xff] %v446
        %464 = vst [vmem:[%s220 + $0x60] sm:$0xff] %v395
        %465 = vst [vmem:[%s220 + $0x68] sm:$0xff] %v397
        %466 = vst [vmem:[%s220 + $0x70] sm:$0xff] %v448
        %467 = vst [vmem:[%s220 + $0x78] sm:$0xff] %v450
        %s468 = sand.u32 %s89, 1
        %s469 = sand.u32 %s89, 1
        %s470 = smul.addr %s469, 128
        %s471 = scalar_lea.vmem [#allocation3], %s470
        // Predicated region
        $region52: #{voxel_vae_forward.10} parent=46 // pred_check
          %p472 = pneg %p99
        $region53: #{voxel_vae_forward.10} parent=46 // pred_check_branch
          %474 = sbr.rel (%p472) target = $region55
        $region54: #{voxel_vae_forward.10} parent=46 // pred_region
          %s475 = smul.u32 4, %s18
          %s476 = smul.addr %s17, 32
          %s477 = sadd.s32 %s475, %s476
          %s478 = smul.addr %s477, 8
          %s479 = scalar_lea.vmem %s2, %s478
          // Predicated region
          $region56: #{voxel_vae_forward.10} parent=54 // pred_check
            _
          $region57: #{voxel_vae_forward.10} parent=54 // pred_check_branch
            %481 = sbr.rel (0) target = $region59
          $region58: #{voxel_vae_forward.10} parent=54 // pred_region
            // Predicated region
            $region60: #{voxel_vae_forward.10} parent=58 // pred_check
              _
            $region61: #{voxel_vae_forward.10} parent=58 // pred_check_branch
              %483 = sbr.rel (0) target = $region63
            $region62: #{voxel_vae_forward.10} parent=58 // pred_region
              loop: start=0, step=1, limit=1
              $region64: #{voxel_vae_forward.10} parent=62 // loop_pre_header
                _
              $region65: #{voxel_vae_forward.10} parent=62 // loop_header
                %s485 = sphi 0, %s489
                %p486 = scmp.ge.s32.totalorder %s485, 1
                %s490 = sphi %s471, %s471
                %s491 = sphi %s479, %s479
              $region66: #{voxel_vae_forward.10} parent=62 // loop_header_branch
                %488 = sbr.rel (%p486) target = $region70
              $region67: #{voxel_vae_forward.10} parent=62 // loop_body
                %v492 = vld [vmem:[%s490] sm:$0xff]
                %493 = vst [vmem:[%s491] sm:$0xff] %v492
                %v494 = vld [vmem:[%s490 + $0x8] sm:$0xff]
                %495 = vst [vmem:[%s491 + $0x8] sm:$0xff] %v494
                %v496 = vld [vmem:[%s490 + $0x10] sm:$0xff]
                %497 = vst [vmem:[%s491 + $0x10] sm:$0xff] %v496
                %v498 = vld [vmem:[%s490 + $0x18] sm:$0xff]
                %499 = vst [vmem:[%s491 + $0x18] sm:$0xff] %v498
                %v500 = vld [vmem:[%s490 + $0x20] sm:$0xff]
                %501 = vst [vmem:[%s491 + $0x40] sm:$0xff] %v500
                %v502 = vld [vmem:[%s490 + $0x28] sm:$0xff]
                %503 = vst [vmem:[%s491 + $0x48] sm:$0xff] %v502
                %v504 = vld [vmem:[%s490 + $0x30] sm:$0xff]
                %505 = vst [vmem:[%s491 + $0x50] sm:$0xff] %v504
                %v506 = vld [vmem:[%s490 + $0x38] sm:$0xff]
                %507 = vst [vmem:[%s491 + $0x58] sm:$0xff] %v506
                %v508 = vld [vmem:[%s490 + $0x40] sm:$0xff]
                %509 = vst [vmem:[%s491 + $0x80] sm:$0xff] %v508
                %v510 = vld [vmem:[%s490 + $0x48] sm:$0xff]
                %511 = vst [vmem:[%s491 + $0x88] sm:$0xff] %v510
                %v512 = vld [vmem:[%s490 + $0x50] sm:$0xff]
                %513 = vst [vmem:[%s491 + $0x90] sm:$0xff] %v512
                %v514 = vld [vmem:[%s490 + $0x58] sm:$0xff]
                %515 = vst [vmem:[%s491 + $0x98] sm:$0xff] %v514
                %v516 = vld [vmem:[%s490 + $0x60] sm:$0xff]
                %517 = vst [vmem:[%s491 + $0xc0] sm:$0xff] %v516
                %v518 = vld [vmem:[%s490 + $0x68] sm:$0xff]
                %519 = vst [vmem:[%s491 + $0xc8] sm:$0xff] %v518
                %v520 = vld [vmem:[%s490 + $0x70] sm:$0xff]
                %521 = vst [vmem:[%s491 + $0xd0] sm:$0xff] %v520
                %v522 = vld [vmem:[%s490 + $0x78] sm:$0xff]
                %523 = vst [vmem:[%s491 + $0xd8] sm:$0xff] %v522
              $region68: #{voxel_vae_forward.10} parent=62 // loop_footer
                %s489 = sadd.s32 1, %s485
              $region69: #{voxel_vae_forward.10} parent=62 // loop_footer_branch
                %484 = sbr.rel target = $region65
              $region70: #{voxel_vae_forward.10} parent=62 // loop_exit
                _
            $region63: #{voxel_vae_forward.10} parent=58 // pred_fallthru
              _
            // Predicated region
            $region71: #{voxel_vae_forward.10} parent=58 // pred_check
              _
            $region72: #{voxel_vae_forward.10} parent=58 // pred_check_branch
              %525 = sbr.rel target = $region74
            $region73: #{voxel_vae_forward.10} parent=58 // pred_region
              _
            $region74: #{voxel_vae_forward.10} parent=58 // pred_fallthru
              _
          $region59: #{voxel_vae_forward.10} parent=54 // pred_fallthru
            _
          %526 = vnop
        $region55: #{voxel_vae_forward.10} parent=46 // pred_fallthru
          _
      $region47: #{voxel_vae_forward.10} parent=5 // pred_fallthru
        _
      %p527 = scmp.le.s32.totalorder 2, %s8
      // Predicated region
      $region75: #{voxel_vae_forward.10} parent=5 // pred_check
        %p528 = pneg %p527
      $region76: #{voxel_vae_forward.10} parent=5 // pred_check_branch
        %530 = sbr.rel (%p528) target = $region78
      $region77: #{voxel_vae_forward.10} parent=5 // pred_region
        %s531 = ssub.s32 %s8, 2
        // Predicated region
        $region79: #{voxel_vae_forward.10} parent=77 // pred_check
          %p532 = pneg %p105
        $region80: #{voxel_vae_forward.10} parent=77 // pred_check_branch
          %534 = sbr.rel (%p532) target = $region82
        $region81: #{voxel_vae_forward.10} parent=77 // pred_region
          %s535 = sand.u32 %s90, 1
          %s536 = sand.u32 %s90, 1
          %s537 = smul.addr %s536, 128
          %s538 = scalar_lea.vmem [#allocation3], %s537
        $region82: #{voxel_vae_forward.10} parent=77 // pred_fallthru
          _
      $region78: #{voxel_vae_forward.10} parent=5 // pred_fallthru
        _
    $region6: #{voxel_vae_forward.10} parent=1 // loop_footer
      %s12 = sadd.s32 1, %s8
    $region7: #{voxel_vae_forward.10} parent=1 // loop_footer_branch
      %7 = sbr.rel target = $region3
    $region8: #{voxel_vae_forward.10} parent=1 // loop_exit
      _

// kernel: voxel_vae_forward.11
$region0: #{voxel_vae_forward.11}
  #allocation0 [shape = 'u32[]', space=smem, size = 0x4, offset = 0x4, fixed_abs, tag = 'smem constant byte address 0x4 - core index']
  #allocation1 [shape = 'u32[144,128]{1,0:T(1,128)}', space=vmem, size = 0x12000, scoped, tag = 'internal scratch']
  %s0 = inlined_call_operand.vmem [shape: f32[32,1024], index: 0, kind: input, shape index: {}]
  %s1 = inlined_call_operand.vmem [shape: f32[32,1], index: 1, kind: input, shape index: {}]
  %s2 = inlined_call_operand.vmem [shape: f32[32,1], index: 2, kind: input, shape index: {}]
  %s3 = inlined_call_operand.vmem [shape: bf16[32,1024], index: 3, kind: output, shape index: {}]
  %s4 = sld [smem:[#allocation0]]
  $region45: #{voxel_vae_forward.11} parent=0
    _
  %s6 = ssub.s32 1, %s4
  %s7 = scalar_select 0, %s6, %s4
  loop: start=0, step=1, limit=4
  $region2: #{voxel_vae_forward.11} parent=0 // loop_pre_header
    _
  $region3: #{voxel_vae_forward.11} parent=0 // loop_header
    %s9 = sphi 0, %s13
    %p10 = scmp.ge.s32.totalorder %s9, 4
    %s19 = sphi 0, %s21
    %s22 = sphi 0, %s19
    %s23 = sphi 0, %s22
    %s39 = sphi 0, %s23
    %s45 = sphi 0, %s47
    %s48 = sphi 0, %s45
    %s49 = sphi 0, %s48
    %s65 = sphi 0, %s49
    %s71 = sphi 0, %s73
    %s74 = sphi 0, %s71
    %s75 = sphi 0, %s74
    %s91 = sphi 0, %s75
    %s97 = sphi 0, %s99
    %s100 = sphi 0, %s97
    %s101 = sphi 0, %s100
    %s117 = sphi 0, %s101
  $region4: #{voxel_vae_forward.11} parent=0 // loop_header_branch
    %12 = sbr.rel (%p10) target = $region8
  $region5: #{voxel_vae_forward.11} parent=0 // loop_body
    %s14 = ssub.s32 %s9, 1
    %s15 = ssub.s32 %s9, 2
    %s16 = sadd.s32 %s9, 1
    %s17 = ssub.s32 %s9, %s16
    %p18 = scmp.eq.s32.totalorder %s17, 0
    %s20 = sadd.s32 %s19, 1
    %s21 = scalar_select %p18, %s19, %s20
    %p24 = pneg %p18
    %p25 = scmp.eq.s32.totalorder %s9, 1
    %p26 = por %p24, %p25
    %p27 = scmp.ne.s32.totalorder %s19, %s22
    %p28 = scmp.eq.s32.totalorder %s9, 0
    %p29 = por %p27, %p28
    %p30 = scmp.ne.s32.totalorder %s19, %s22
    %p31 = scmp.eq.s32.totalorder %s14, 1
    %p32 = por %p30, %p31
    %p33 = scmp.ne.s32.totalorder %s22, %s23
    %p34 = scmp.eq.s32.totalorder %s14, 0
    %p35 = por %p33, %p34
    %p36 = scmp.ne.s32.totalorder %s22, %s23
    %p37 = scmp.eq.s32.totalorder %s15, 1
    %p38 = por %p36, %p37
    %p40 = scmp.ne.s32.totalorder %s23, %s39
    %p41 = scmp.eq.s32.totalorder %s15, 0
    %p42 = por %p40, %p41
    %s43 = ssub.s32 %s9, %s16
    %p44 = scmp.eq.s32.totalorder %s43, 0
    %s46 = sadd.s32 %s45, 1
    %s47 = scalar_select %p44, %s45, %s46
    %p50 = pneg %p44
    %p51 = scmp.eq.s32.totalorder %s9, 1
    %p52 = por %p50, %p51
    %p53 = scmp.ne.s32.totalorder %s45, %s48
    %p54 = scmp.eq.s32.totalorder %s9, 0
    %p55 = por %p53, %p54
    %p56 = scmp.ne.s32.totalorder %s45, %s48
    %p57 = scmp.eq.s32.totalorder %s14, 1
    %p58 = por %p56, %p57
    %p59 = scmp.ne.s32.totalorder %s48, %s49
    %p60 = scmp.eq.s32.totalorder %s14, 0
    %p61 = por %p59, %p60
    %p62 = scmp.ne.s32.totalorder %s48, %s49
    %p63 = scmp.eq.s32.totalorder %s15, 1
    %p64 = por %p62, %p63
    %p66 = scmp.ne.s32.totalorder %s49, %s65
    %p67 = scmp.eq.s32.totalorder %s15, 0
    %p68 = por %p66, %p67
    %s69 = ssub.s32 %s9, %s16
    %p70 = scmp.eq.s32.totalorder %s69, 0
    %s72 = sadd.s32 %s71, 1
    %s73 = scalar_select %p70, %s71, %s72
    %p76 = pneg %p70
    %p77 = scmp.eq.s32.totalorder %s9, 1
    %p78 = por %p76, %p77
    %p79 = scmp.ne.s32.totalorder %s71, %s74
    %p80 = scmp.eq.s32.totalorder %s9, 0
    %p81 = por %p79, %p80
    %p82 = scmp.ne.s32.totalorder %s71, %s74
    %p83 = scmp.eq.s32.totalorder %s14, 1
    %p84 = por %p82, %p83
    %p85 = scmp.ne.s32.totalorder %s74, %s75
    %p86 = scmp.eq.s32.totalorder %s14, 0
    %p87 = por %p85, %p86
    %p88 = scmp.ne.s32.totalorder %s74, %s75
    %p89 = scmp.eq.s32.totalorder %s15, 1
    %p90 = por %p88, %p89
    %p92 = scmp.ne.s32.totalorder %s75, %s91
    %p93 = scmp.eq.s32.totalorder %s15, 0
    %p94 = por %p92, %p93
    %s95 = ssub.s32 %s9, %s16
    %p96 = scmp.eq.s32.totalorder %s95, 0
    %s98 = sadd.s32 %s97, 1
    %s99 = scalar_select %p96, %s97, %s98
    %p102 = pneg %p96
    %p103 = scmp.eq.s32.totalorder %s9, 1
    %p104 = por %p102, %p103
    %p105 = scmp.ne.s32.totalorder %s97, %s100
    %p106 = scmp.eq.s32.totalorder %s9, 0
    %p107 = por %p105, %p106
    %p108 = scmp.ne.s32.totalorder %s97, %s100
    %p109 = scmp.eq.s32.totalorder %s14, 1
    %p110 = por %p108, %p109
    %p111 = scmp.ne.s32.totalorder %s100, %s101
    %p112 = scmp.eq.s32.totalorder %s14, 0
    %p113 = por %p111, %p112
    %p114 = scmp.ne.s32.totalorder %s100, %s101
    %p115 = scmp.eq.s32.totalorder %s15, 1
    %p116 = por %p114, %p115
    %p118 = scmp.ne.s32.totalorder %s101, %s117
    %p119 = scmp.eq.s32.totalorder %s15, 0
    %p120 = por %p118, %p119
    %p121 = scmp.le.s32.totalorder 1, %s9
    %p122 = scmp.lt.s32.totalorder %s9, 3
    %p123 = pnand %p121, %p122
    %p124 = pneg %p123
    // Predicated region
    $region9: #{voxel_vae_forward.11} parent=5 // pred_check
      _
    $region10: #{voxel_vae_forward.11} parent=5 // pred_check_branch
      %126 = sbr.rel (%p123) target = $region12
    $region11: #{voxel_vae_forward.11} parent=5 // pred_region
      %s127 = ssub.s32 %s9, 1
    $region12: #{voxel_vae_forward.11} parent=5 // pred_fallthru
      _
    %p128 = scmp.lt.s32.totalorder %s9, 2
    // Predicated region
    $region13: #{voxel_vae_forward.11} parent=5 // pred_check
      %p129 = pneg %p128
    $region14: #{voxel_vae_forward.11} parent=5 // pred_check_branch
      %131 = sbr.rel (%p129) target = $region16
    $region15: #{voxel_vae_forward.11} parent=5 // pred_region
      // Predicated region
      $region17: #{voxel_vae_forward.11} parent=15 // pred_check
        %p132 = pneg %p29
      $region18: #{voxel_vae_forward.11} parent=15 // pred_check_branch
        %134 = sbr.rel (%p132) target = $region20
      $region19: #{voxel_vae_forward.11} parent=15 // pred_region
        %s135 = smul.u32 2, %s9
        %p136 = scmp.lt.s32.totalorder %s135, 3
        %s137 = scalar_select %p136, %s135, 3
        %s138 = smul.addr %s137, 8
        %s139 = smul.addr %s138, 8
        %s140 = scalar_lea.vmem %s0, %s139
        %s141 = smul.u32 2, %s9
      $region20: #{voxel_vae_forward.11} parent=15 // pred_fallthru
        _
      // Predicated region
      $region21: #{voxel_vae_forward.11} parent=15 // pred_check
        %p142 = pneg %p55
      $region22: #{voxel_vae_forward.11} parent=15 // pred_check_branch
        %144 = sbr.rel (%p142) target = $region24
      $region23: #{voxel_vae_forward.11} parent=15 // pred_region
        %s145 = smul.u32 2, %s9
        %p146 = scmp.lt.s32.totalorder %s145, 3
        %s147 = scalar_select %p146, %s145, 3
        %s148 = smul.addr %s147, 8
        %s149 = scalar_lea.vmem %s1, %s148
        %s150 = smul.u32 2, %s9
      $region24: #{voxel_vae_forward.11} parent=15 // pred_fallthru
        _
      // Predicated region
      $region25: #{voxel_vae_forward.11} parent=15 // pred_check
        %p151 = pneg %p81
      $region26: #{voxel_vae_forward.11} parent=15 // pred_check_branch
        %153 = sbr.rel (%p151) target = $region28
      $region27: #{voxel_vae_forward.11} parent=15 // pred_region
        %s154 = smul.u32 2, %s9
        %p155 = scmp.lt.s32.totalorder %s154, 3
        %s156 = scalar_select %p155, %s154, 3
        %s157 = smul.addr %s156, 8
        %s158 = scalar_lea.vmem %s2, %s157
        %s159 = smul.u32 2, %s9
      $region28: #{voxel_vae_forward.11} parent=15 // pred_fallthru
        _
    $region16: #{voxel_vae_forward.11} parent=5 // pred_fallthru
      _
    %p160 = scmp.le.s32.totalorder 1, %s9
    %p161 = scmp.lt.s32.totalorder %s9, 3
    %p162 = pnand %p160, %p161
    %p163 = pneg %p162
    // Predicated region
    $region29: #{voxel_vae_forward.11} parent=5 // pred_check
      _
    $region30: #{voxel_vae_forward.11} parent=5 // pred_check_branch
      %165 = sbr.rel (%p162) target = $region32
    $region31: #{voxel_vae_forward.11} parent=5 // pred_region
      %s166 = ssub.s32 %s9, 1
      %s167 = smul.u32 2, %s14
      %p168 = scmp.lt.s32.totalorder %s167, 3
      %s169 = scalar_select %p168, %s167, 3
      %s170 = smul.addr %s169, 8
      %s171 = smul.addr %s170, 8
      %s172 = scalar_lea.vmem %s0, %s171
      %p173 = pneg %p35
      %p174 = pneg %p32
      %s175 = smul.u32 2, %s14
      %p176 = scmp.lt.s32.totalorder %s175, 3
      %s177 = scalar_select %p176, %s175, 3
      %s178 = smul.addr %s177, 8
      %s179 = scalar_lea.vmem %s1, %s178
      %p180 = pneg %p61
      %p181 = pneg %p58
      %s182 = smul.u32 2, %s14
      %p183 = scmp.lt.s32.totalorder %s182, 3
      %s184 = scalar_select %p183, %s182, 3
      %s185 = smul.addr %s184, 8
      %s186 = scalar_lea.vmem %s2, %s185
      %p187 = pneg %p87
      %p188 = pneg %p84
      %p189 = pneg %p113
      %p190 = pneg %p110
      %s191 = smul.u32 2, %s14
      %p192 = scmp.lt.s32.totalorder %s191, 3
      %s193 = scalar_select %p192, %s191, 3
      %s194 = smul.addr %s193, 8
      %s195 = smul.addr %s194, 4
      %s196 = scalar_lea.vmem %s3, %s195
      %s197 = smul.u32 2, %s14
      %p198 = scmp.lt.s32.totalorder %s197, 3
      %s199 = scalar_select %p198, %s197, 3
      %s200 = smul.addr %s199, 8
      %s201 = smul.addr %s200, 8
      %s202 = scalar_lea.vmem %s0, %s201
      %s203 = smul.u32 2, %s14
      %s204 = smul.u32 2, %s14
      %p205 = scmp.lt.s32.totalorder %s204, 3
      %s206 = scalar_select %p205, %s204, 3
      %s207 = smul.addr %s206, 8
      %s208 = scalar_lea.vmem %s1, %s207
      %s209 = smul.u32 2, %s14
      %s210 = smul.u32 2, %s14
      %p211 = scmp.lt.s32.totalorder %s210, 3
      %s212 = scalar_select %p211, %s210, 3
      %s213 = smul.addr %s212, 8
      %s214 = scalar_lea.vmem %s2, %s213
      %s215 = smul.u32 2, %s14
      %s216 = smul.u32 2, %s14
      %p217 = scmp.lt.s32.totalorder %s216, 3
      %s218 = scalar_select %p217, %s216, 3
      %s219 = smul.addr %s218, 8
      %s220 = smul.addr %s219, 4
      %s221 = scalar_lea.vmem %s3, %s220
      %s222 = smul.u32 2, %s14
      %v223 = vld [vmem:[%s202] sm:$0xff]
      %v224 = vld [vmem:[%s202 + $0x8] sm:$0xff]
      %v225 = vld [vmem:[%s202 + $0x10] sm:$0xff]
      %v226 = vld [vmem:[%s202 + $0x18] sm:$0xff]
      %v227 = vld [vmem:[%s202 + $0x20] sm:$0xff]
      %v228 = vld [vmem:[%s202 + $0x28] sm:$0xff]
      %v229 = vld [vmem:[%s202 + $0x30] sm:$0xff]
      %v230 = vld [vmem:[%s202 + $0x38] sm:$0xff]
      %v231 = vld [vmem:[%s202 + $0x40] sm:$0xff]
      %v232 = vld [vmem:[%s202 + $0x48] sm:$0xff]
      %v233 = vld [vmem:[%s202 + $0x50] sm:$0xff]
      %v234 = vld [vmem:[%s202 + $0x58] sm:$0xff]
      %v235 = vld [vmem:[%s202 + $0x60] sm:$0xff]
      %v236 = vld [vmem:[%s202 + $0x68] sm:$0xff]
      %v237 = vld [vmem:[%s202 + $0x70] sm:$0xff]
      %v238 = vld [vmem:[%s202 + $0x78] sm:$0xff]
      %v239 = vadd.f32 %v223, %v224
      %v240 = vadd.f32 %v239, %v225
      %v241 = vadd.f32 %v240, %v226
      %v242 = vadd.f32 %v241, %v227
      %v243 = vadd.f32 %v242, %v228
      %v244 = vadd.f32 %v243, %v229
      %v245 = vadd.f32 %v244, %v230
      %246 = vadd.xlane.f32.xlu0 %v245
      %v247 = vpop.xlane.xlu0 %246
      %v248 = vadd.f32 %v231, %v232
      %v249 = vadd.f32 %v248, %v233
      %v250 = vadd.f32 %v249, %v234
      %v251 = vadd.f32 %v250, %v235
      %v252 = vadd.f32 %v251, %v236
      %v253 = vadd.f32 %v252, %v237
      %v254 = vadd.f32 %v253, %v238
      %255 = vadd.xlane.f32.xlu0 %v254
      %v256 = vpop.xlane.xlu0 %255
      %v257 = vrcp.pop 1024.0
      %v258 = vmul.f32 %v247, %v257
      %v259 = vmul.f32 %v256, %v257
      %v260 = vsub.f32 %v223, %v258
      %v261 = vsub.f32 %v224, %v258
      %v262 = vsub.f32 %v225, %v258
      %v263 = vsub.f32 %v226, %v258
      %v264 = vsub.f32 %v227, %v258
      %v265 = vsub.f32 %v228, %v258
      %v266 = vsub.f32 %v229, %v258
      %v267 = vsub.f32 %v230, %v258
      %v268 = vsub.f32 %v231, %v259
      %v269 = vsub.f32 %v232, %v259
      %v270 = vsub.f32 %v233, %v259
      %v271 = vsub.f32 %v234, %v259
      %v272 = vsub.f32 %v235, %v259
      %v273 = vsub.f32 %v236, %v259
      %v274 = vsub.f32 %v237, %v259
      %v275 = vsub.f32 %v238, %v259
      %v276 = vmul.f32 %v260, %v260
      %v277 = vmul.f32 %v261, %v261
      %v278 = vmul.f32 %v262, %v262
      %v279 = vmul.f32 %v263, %v263
      %v280 = vmul.f32 %v264, %v264
      %v281 = vmul.f32 %v265, %v265
      %v282 = vmul.f32 %v266, %v266
      %v283 = vmul.f32 %v267, %v267
      %v284 = vmul.f32 %v268, %v268
      %v285 = vmul.f32 %v269, %v269
      %v286 = vmul.f32 %v270, %v270
      %v287 = vmul.f32 %v271, %v271
      %v288 = vmul.f32 %v272, %v272
      %v289 = vmul.f32 %v273, %v273
      %v290 = vmul.f32 %v274, %v274
      %v291 = vmul.f32 %v275, %v275
      %v292 = vadd.f32 %v276, %v277
      %v293 = vadd.f32 %v292, %v278
      %v294 = vadd.f32 %v293, %v279
      %v295 = vadd.f32 %v294, %v280
      %v296 = vadd.f32 %v295, %v281
      %v297 = vadd.f32 %v296, %v282
      %v298 = vadd.f32 %v297, %v283
      %299 = vadd.xlane.f32.xlu0 %v298
      %v300 = vpop.xlane.xlu0 %299
      %v301 = vadd.f32 %v284, %v285
      %v302 = vadd.f32 %v301, %v286
      %v303 = vadd.f32 %v302, %v287
      %v304 = vadd.f32 %v303, %v288
      %v305 = vadd.f32 %v304, %v289
      %v306 = vadd.f32 %v305, %v290
      %v307 = vadd.f32 %v306, %v291
      %308 = vadd.xlane.f32.xlu0 %v307
      %v309 = vpop.xlane.xlu0 %308
      %v310 = vmul.f32 %v300, %v257
      %v311 = vmul.f32 %v309, %v257
      %v312 = vadd.f32 %v310, 1e-05
      %v313 = vadd.f32 %v311, 1e-05
      %v314 = vrsqrt.pop %v312
      %v315 = vrsqrt.pop %v313
      %v316 = vmul.f32 %v260, %v314
      %v317 = vmul.f32 %v261, %v314
      %v318 = vmul.f32 %v262, %v314
      %v319 = vmul.f32 %v263, %v314
      %v320 = vmul.f32 %v264, %v314
      %v321 = vmul.f32 %v265, %v314
      %v322 = vmul.f32 %v266, %v314
      %v323 = vmul.f32 %v267, %v314
      %v324 = vmul.f32 %v268, %v315
      %v325 = vmul.f32 %v269, %v315
      %v326 = vmul.f32 %v270, %v315
      %v327 = vmul.f32 %v271, %v315
      %v328 = vmul.f32 %v272, %v315
      %v329 = vmul.f32 %v273, %v315
      %v330 = vmul.f32 %v274, %v315
      %v331 = vmul.f32 %v275, %v315
      %v332 = vld [vmem:[%s208] sm:$0xff]
      %v333 = vld [vmem:[%s208 + $0x8] sm:$0xff]
      %335 = vset.pattern.permute.xlu0 0
      %336 = vperm.xlu0 %335, %v332
      %v337 = vpop.permute.xlu0 %336
      %340 = vset.pattern.permute.xlu0 0
      %341 = vperm.xlu0 %340, %v333
      %v342 = vpop.permute.xlu0 %341
      %v344 = vmul.f32 %v316, %v337
      %v345 = vmul.f32 %v317, %v337
      %v346 = vmul.f32 %v318, %v337
      %v347 = vmul.f32 %v319, %v337
      %v348 = vmul.f32 %v320, %v337
      %v349 = vmul.f32 %v321, %v337
      %v350 = vmul.f32 %v322, %v337
      %v351 = vmul.f32 %v323, %v337
      %v352 = vmul.f32 %v324, %v342
      %v353 = vmul.f32 %v325, %v342
      %v354 = vmul.f32 %v326, %v342
      %v355 = vmul.f32 %v327, %v342
      %v356 = vmul.f32 %v328, %v342
      %v357 = vmul.f32 %v329, %v342
      %v358 = vmul.f32 %v330, %v342
      %v359 = vmul.f32 %v331, %v342
      %v360 = vld [vmem:[%s214] sm:$0xff]
      %v361 = vld [vmem:[%s214 + $0x8] sm:$0xff]
      %363 = vset.pattern.permute.xlu0 0
      %364 = vperm.xlu0 %363, %v360
      %v365 = vpop.permute.xlu0 %364
      %368 = vset.pattern.permute.xlu0 0
      %369 = vperm.xlu0 %368, %v361
      %v370 = vpop.permute.xlu0 %369
      %v372 = vadd.f32 %v344, %v365
      %v373 = vadd.f32 %v345, %v365
      %v374 = vadd.f32 %v346, %v365
      %v375 = vadd.f32 %v347, %v365
      %v376 = vadd.f32 %v348, %v365
      %v377 = vadd.f32 %v349, %v365
      %v378 = vadd.f32 %v350, %v365
      %v379 = vadd.f32 %v351, %v365
      %v380 = vadd.f32 %v352, %v370
      %v381 = vadd.f32 %v353, %v370
      %v382 = vadd.f32 %v354, %v370
      %v383 = vadd.f32 %v355, %v370
      %v384 = vadd.f32 %v356, %v370
      %v385 = vadd.f32 %v357, %v370
      %v386 = vadd.f32 %v358, %v370
      %v387 = vadd.f32 %v359, %v370
      %vm388 = vcmp.ge.f32.partialorder %v372, 0.0
      %vm389 = vcmp.ge.f32.partialorder %v373, 0.0
      %vm390 = vcmp.ge.f32.partialorder %v374, 0.0
      %vm391 = vcmp.ge.f32.partialorder %v375, 0.0
      %vm392 = vcmp.ge.f32.partialorder %v376, 0.0
      %vm393 = vcmp.ge.f32.partialorder %v377, 0.0
      %vm394 = vcmp.ge.f32.partialorder %v378, 0.0
      %vm395 = vcmp.ge.f32.partialorder %v379, 0.0
      %vm396 = vcmp.ge.f32.partialorder %v380, 0.0
      %vm397 = vcmp.ge.f32.partialorder %v381, 0.0
      %vm398 = vcmp.ge.f32.partialorder %v382, 0.0
      %vm399 = vcmp.ge.f32.partialorder %v383, 0.0
      %vm400 = vcmp.ge.f32.partialorder %v384, 0.0
      %vm401 = vcmp.ge.f32.partialorder %v385, 0.0
      %vm402 = vcmp.ge.f32.partialorder %v386, 0.0
      %vm403 = vcmp.ge.f32.partialorder %v387, 0.0
      %v404 = vmul.f32 %v372, 0.2
      %v405 = vmul.f32 %v373, 0.2
      %v406 = vmul.f32 %v374, 0.2
      %v407 = vmul.f32 %v375, 0.2
      %v408 = vmul.f32 %v376, 0.2
      %v409 = vmul.f32 %v377, 0.2
      %v410 = vmul.f32 %v378, 0.2
      %v411 = vmul.f32 %v379, 0.2
      %v412 = vmul.f32 %v380, 0.2
      %v413 = vmul.f32 %v381, 0.2
      %v414 = vmul.f32 %v382, 0.2
      %v415 = vmul.f32 %v383, 0.2
      %v416 = vmul.f32 %v384, 0.2
      %v417 = vmul.f32 %v385, 0.2
      %v418 = vmul.f32 %v386, 0.2
      %v419 = vmul.f32 %v387, 0.2
      %v420 = vsel %vm388, %v372, %v404
      %v421 = vsel %vm389, %v373, %v405
      %v422 = vsel %vm390, %v374, %v406
      %v423 = vsel %vm391, %v375, %v407
      %v424 = vsel %vm392, %v376, %v408
      %v425 = vsel %vm393, %v377, %v409
      %v426 = vsel %vm394, %v378, %v410
      %v427 = vsel %vm395, %v379, %v411
      %v428 = vsel %vm396, %v380, %v412
      %v429 = vsel %vm397, %v381, %v413
      %v430 = vsel %vm398, %v382, %v414
      %v431 = vsel %vm399, %v383, %v415
      %v432 = vsel %vm400, %v384, %v416
      %v433 = vsel %vm401, %v385, %v417
      %v434 = vsel %vm402, %v386, %v418
      %v435 = vsel %vm403, %v387, %v419
      %v436 = vpack.c.bf16 %v428, %v420
      %v437 = vpack.c.bf16 %v429, %v421
      %v438 = vpack.c.bf16 %v430, %v422
      %v439 = vpack.c.bf16 %v431, %v423
      %v440 = vpack.c.bf16 %v432, %v424
      %v441 = vpack.c.bf16 %v433, %v425
      %v442 = vpack.c.bf16 %v434, %v426
      %v443 = vpack.c.bf16 %v435, %v427
      %v452 = vunpack.c.l.b16 %v436
      %v453 = vunpack.c.l.b16 %v437
      %v454 = vunpack.c.l.b16 %v438
      %v455 = vunpack.c.l.b16 %v439
      %v456 = vunpack.c.l.b16 %v440
      %v457 = vunpack.c.l.b16 %v441
      %v458 = vunpack.c.l.b16 %v442
      %v459 = vunpack.c.l.b16 %v443
      %v460 = vunpack.c.h.b16 %v436
      %v461 = vunpack.c.h.b16 %v437
      %v462 = vunpack.c.h.b16 %v438
      %v463 = vunpack.c.h.b16 %v439
      %v464 = vunpack.c.h.b16 %v440
      %v465 = vunpack.c.h.b16 %v441
      %v466 = vunpack.c.h.b16 %v442
      %v467 = vunpack.c.h.b16 %v443
      %v468 = vpack.c.b16 %v453, %v452
      %v469 = vpack.c.b16 %v455, %v454
      %v470 = vpack.c.b16 %v457, %v456
      %v471 = vpack.c.b16 %v459, %v458
      %v472 = vpack.c.b16 %v461, %v460
      %v473 = vpack.c.b16 %v463, %v462
      %v474 = vpack.c.b16 %v465, %v464
      %v475 = vpack.c.b16 %v467, %v466
      %484 = vst [vmem:[%s221] sm:$0xff] %v468
      %485 = vst [vmem:[%s221 + $0x8] sm:$0xff] %v469
      %486 = vst [vmem:[%s221 + $0x10] sm:$0xff] %v470
      %487 = vst [vmem:[%s221 + $0x18] sm:$0xff] %v471
      %488 = vst [vmem:[%s221 + $0x20] sm:$0xff] %v472
      %489 = vst [vmem:[%s221 + $0x28] sm:$0xff] %v473
      %490 = vst [vmem:[%s221 + $0x30] sm:$0xff] %v474
      %491 = vst [vmem:[%s221 + $0x38] sm:$0xff] %v475
      %s492 = smul.u32 2, %s14
      %p493 = scmp.lt.s32.totalorder %s492, 3
      %s494 = scalar_select %p493, %s492, 3
      %s495 = smul.addr %s494, 8
      %s496 = smul.addr %s495, 4
      %s497 = scalar_lea.vmem %s3, %s496
      // Predicated region
      $region33: #{voxel_vae_forward.11} parent=31 // pred_check
        %p498 = pneg %p110
      $region34: #{voxel_vae_forward.11} parent=31 // pred_check_branch
        %500 = sbr.rel (%p498) target = $region36
      $region35: #{voxel_vae_forward.11} parent=31 // pred_region
        %s501 = smul.u32 2, %s14
      $region36: #{voxel_vae_forward.11} parent=31 // pred_fallthru
        _
    $region32: #{voxel_vae_forward.11} parent=5 // pred_fallthru
      _
    %p502 = scmp.le.s32.totalorder 2, %s9
    // Predicated region
    $region37: #{voxel_vae_forward.11} parent=5 // pred_check
      %p503 = pneg %p502
    $region38: #{voxel_vae_forward.11} parent=5 // pred_check_branch
      %505 = sbr.rel (%p503) target = $region40
    $region39: #{voxel_vae_forward.11} parent=5 // pred_region
      %s506 = ssub.s32 %s9, 2
      // Predicated region
      $region41: #{voxel_vae_forward.11} parent=39 // pred_check
        %p507 = pneg %p116
      $region42: #{voxel_vae_forward.11} parent=39 // pred_check_branch
        %509 = sbr.rel (%p507) target = $region44
      $region43: #{voxel_vae_forward.11} parent=39 // pred_region
        %s510 = smul.u32 2, %s15
        %p511 = scmp.lt.s32.totalorder %s510, 3
        %s512 = scalar_select %p511, %s510, 3
        %s513 = smul.addr %s512, 8
        %s514 = smul.addr %s513, 4
        %s515 = scalar_lea.vmem %s3, %s514
      $region44: #{voxel_vae_forward.11} parent=39 // pred_fallthru
        _
    $region40: #{voxel_vae_forward.11} parent=5 // pred_fallthru
      _
  $region6: #{voxel_vae_forward.11} parent=0 // loop_footer
    %s13 = sadd.s32 1, %s9
  $region7: #{voxel_vae_forward.11} parent=0 // loop_footer_branch
    %8 = sbr.rel target = $region3
  $region8: #{voxel_vae_forward.11} parent=0 // loop_exit
    _

// kernel: voxel_vae_forward.12
$region0: #{voxel_vae_forward.12}
  #allocation0 [shape = 'u32[]', space=smem, size = 0x4, offset = 0x4, fixed_abs, tag = 'smem constant byte address 0x4 - core index']
  #allocation1 [shape = 'u32[144,128]{1,0:T(1,128)}', space=vmem, size = 0x12000, scoped, tag = 'internal scratch']
  %s0 = inlined_call_operand.vmem [shape: bf16[1,64,2048], index: 0, kind: input, shape index: {}]
  %s1 = inlined_call_operand.vmem [shape: bf16[1,2048,128], index: 1, kind: input, shape index: {}]
  %s2 = inlined_call_operand.vmem [shape: f32[1,64,128], index: 2, kind: output, shape index: {}]
  %s3 = sld [smem:[#allocation0]]
  $region18: #{voxel_vae_forward.12} parent=0
    _
  %s5 = ssub.s32 1, %s3
  %s6 = scalar_select 0, %s5, %s3
  // Predicated region
  $region2: #{voxel_vae_forward.12} parent=0 // pred_check
    _
  $region3: #{voxel_vae_forward.12} parent=0 // pred_check_branch
    %8 = sbr.rel (0) target = $region5
  $region4: #{voxel_vae_forward.12} parent=0 // pred_region
    _
  $region5: #{voxel_vae_forward.12} parent=0 // pred_fallthru
    _
  // Predicated region
  $region6: #{voxel_vae_forward.12} parent=0 // pred_check
    _
  $region7: #{voxel_vae_forward.12} parent=0 // pred_check_branch
    %10 = sbr.rel (0) target = $region9
  $region8: #{voxel_vae_forward.12} parent=0 // pred_region
    _
  $region9: #{voxel_vae_forward.12} parent=0 // pred_fallthru
    _
  %v12 = vld [vmem:[%s0] sm:$0xff]
  %v13 = vld [vmem:[%s0 + $0x8] sm:$0xff]
  %v14 = vld [vmem:[%s0 + $0x10] sm:$0xff]
  %v15 = vld [vmem:[%s0 + $0x18] sm:$0xff]
  %v16 = vld [vmem:[%s0 + $0x20] sm:$0xff]
  %v17 = vld [vmem:[%s0 + $0x28] sm:$0xff]
  %v18 = vld [vmem:[%s0 + $0x30] sm:$0xff]
  %v19 = vld [vmem:[%s0 + $0x38] sm:$0xff]
  %v20 = vld [vmem:[%s0 + $0x40] sm:$0xff]
  %v21 = vld [vmem:[%s0 + $0x48] sm:$0xff]
  %v22 = vld [vmem:[%s0 + $0x50] sm:$0xff]
  %v23 = vld [vmem:[%s0 + $0x58] sm:$0xff]
  %v24 = vld [vmem:[%s0 + $0x60] sm:$0xff]
  %v25 = vld [vmem:[%s0 + $0x68] sm:$0xff]
  %v26 = vld [vmem:[%s0 + $0x70] sm:$0xff]
  %v27 = vld [vmem:[%s0 + $0x78] sm:$0xff]
  %v28 = vld [vmem:[%s0 + $0x80] sm:$0xff]
  %v29 = vld [vmem:[%s0 + $0x88] sm:$0xff]
  %v30 = vld [vmem:[%s0 + $0x90] sm:$0xff]
  %v31 = vld [vmem:[%s0 + $0x98] sm:$0xff]
  %v32 = vld [vmem:[%s0 + $0xa0] sm:$0xff]
  %v33 = vld [vmem:[%s0 + $0xa8] sm:$0xff]
  %v34 = vld [vmem:[%s0 + $0xb0] sm:$0xff]
  %v35 = vld [vmem:[%s0 + $0xb8] sm:$0xff]
  %v36 = vld [vmem:[%s0 + $0xc0] sm:$0xff]
  %v37 = vld [vmem:[%s0 + $0xc8] sm:$0xff]
  %v38 = vld [vmem:[%s0 + $0xd0] sm:$0xff]
  %v39 = vld [vmem:[%s0 + $0xd8] sm:$0xff]
  %v40 = vld [vmem:[%s0 + $0xe0] sm:$0xff]
  %v41 = vld [vmem:[%s0 + $0xe8] sm:$0xff]
  %v42 = vld [vmem:[%s0 + $0xf0] sm:$0xff]
  %v43 = vld [vmem:[%s0 + $0xf8] sm:$0xff]
  %v44 = vld [vmem:[%s0 + $0x100] sm:$0xff]
  %v45 = vld [vmem:[%s0 + $0x108] sm:$0xff]
  %v46 = vld [vmem:[%s0 + $0x110] sm:$0xff]
  %v47 = vld [vmem:[%s0 + $0x118] sm:$0xff]
  %v48 = vld [vmem:[%s0 + $0x120] sm:$0xff]
  %v49 = vld [vmem:[%s0 + $0x128] sm:$0xff]
  %v50 = vld [vmem:[%s0 + $0x130] sm:$0xff]
  %v51 = vld [vmem:[%s0 + $0x138] sm:$0xff]
  %v52 = vld [vmem:[%s0 + $0x140] sm:$0xff]
  %v53 = vld [vmem:[%s0 + $0x148] sm:$0xff]
  %v54 = vld [vmem:[%s0 + $0x150] sm:$0xff]
  %v55 = vld [vmem:[%s0 + $0x158] sm:$0xff]
  %v56 = vld [vmem:[%s0 + $0x160] sm:$0xff]
  %v57 = vld [vmem:[%s0 + $0x168] sm:$0xff]
  %v58 = vld [vmem:[%s0 + $0x170] sm:$0xff]
  %v59 = vld [vmem:[%s0 + $0x178] sm:$0xff]
  %v60 = vld [vmem:[%s0 + $0x180] sm:$0xff]
  %v61 = vld [vmem:[%s0 + $0x188] sm:$0xff]
  %v62 = vld [vmem:[%s0 + $0x190] sm:$0xff]
  %v63 = vld [vmem:[%s0 + $0x198] sm:$0xff]
  %v64 = vld [vmem:[%s0 + $0x1a0] sm:$0xff]
  %v65 = vld [vmem:[%s0 + $0x1a8] sm:$0xff]
  %v66 = vld [vmem:[%s0 + $0x1b0] sm:$0xff]
  %v67 = vld [vmem:[%s0 + $0x1b8] sm:$0xff]
  %v68 = vld [vmem:[%s0 + $0x1c0] sm:$0xff]
  %v69 = vld [vmem:[%s0 + $0x1c8] sm:$0xff]
  %v70 = vld [vmem:[%s0 + $0x1d0] sm:$0xff]
  %v71 = vld [vmem:[%s0 + $0x1d8] sm:$0xff]
  %v72 = vld [vmem:[%s0 + $0x1e0] sm:$0xff]
  %v73 = vld [vmem:[%s0 + $0x1e8] sm:$0xff]
  %v74 = vld [vmem:[%s0 + $0x1f0] sm:$0xff]
  %v75 = vld [vmem:[%s0 + $0x1f8] sm:$0xff]
  %v76 = vld [vmem:[%s1] sm:$0xf]
  %v77 = vld [vmem:[%s1 + $0x4] sm:$0xf]
  %v78 = vld [vmem:[%s1 + $0x8] sm:$0xf]
  %v79 = vld [vmem:[%s1 + $0xc] sm:$0xf]
  %v80 = vld [vmem:[%s1 + $0x10] sm:$0xf]
  %v81 = vld [vmem:[%s1 + $0x14] sm:$0xf]
  %v82 = vld [vmem:[%s1 + $0x18] sm:$0xf]
  %v83 = vld [vmem:[%s1 + $0x1c] sm:$0xf]
  %v84 = vld [vmem:[%s1 + $0x20] sm:$0xf]
  %v85 = vld [vmem:[%s1 + $0x24] sm:$0xf]
  %v86 = vld [vmem:[%s1 + $0x28] sm:$0xf]
  %v87 = vld [vmem:[%s1 + $0x2c] sm:$0xf]
  %v88 = vld [vmem:[%s1 + $0x30] sm:$0xf]
  %v89 = vld [vmem:[%s1 + $0x34] sm:$0xf]
  %v90 = vld [vmem:[%s1 + $0x38] sm:$0xf]
  %v91 = vld [vmem:[%s1 + $0x3c] sm:$0xf]
  %v92 = vld [vmem:[%s1 + $0x40] sm:$0xf]
  %v93 = vld [vmem:[%s1 + $0x44] sm:$0xf]
  %v94 = vld [vmem:[%s1 + $0x48] sm:$0xf]
  %v95 = vld [vmem:[%s1 + $0x4c] sm:$0xf]
  %v96 = vld [vmem:[%s1 + $0x50] sm:$0xf]
  %v97 = vld [vmem:[%s1 + $0x54] sm:$0xf]
  %v98 = vld [vmem:[%s1 + $0x58] sm:$0xf]
  %v99 = vld [vmem:[%s1 + $0x5c] sm:$0xf]
  %v100 = vld [vmem:[%s1 + $0x60] sm:$0xf]
  %v101 = vld [vmem:[%s1 + $0x64] sm:$0xf]
  %v102 = vld [vmem:[%s1 + $0x68] sm:$0xf]
  %v103 = vld [vmem:[%s1 + $0x6c] sm:$0xf]
  %v104 = vld [vmem:[%s1 + $0x70] sm:$0xf]
  %v105 = vld [vmem:[%s1 + $0x74] sm:$0xf]
  %v106 = vld [vmem:[%s1 + $0x78] sm:$0xf]
  %v107 = vld [vmem:[%s1 + $0x7c] sm:$0xf]
  %v108 = vld [vmem:[%s1 + $0x80] sm:$0xf]
  %v109 = vld [vmem:[%s1 + $0x84] sm:$0xf]
  %v110 = vld [vmem:[%s1 + $0x88] sm:$0xf]
  %v111 = vld [vmem:[%s1 + $0x8c] sm:$0xf]
  %v112 = vld [vmem:[%s1 + $0x90] sm:$0xf]
  %v113 = vld [vmem:[%s1 + $0x94] sm:$0xf]
  %v114 = vld [vmem:[%s1 + $0x98] sm:$0xf]
  %v115 = vld [vmem:[%s1 + $0x9c] sm:$0xf]
  %v116 = vld [vmem:[%s1 + $0xa0] sm:$0xf]
  %v117 = vld [vmem:[%s1 + $0xa4] sm:$0xf]
  %v118 = vld [vmem:[%s1 + $0xa8] sm:$0xf]
  %v119 = vld [vmem:[%s1 + $0xac] sm:$0xf]
  %v120 = vld [vmem:[%s1 + $0xb0] sm:$0xf]
  %v121 = vld [vmem:[%s1 + $0xb4] sm:$0xf]
  %v122 = vld [vmem:[%s1 + $0xb8] sm:$0xf]
  %v123 = vld [vmem:[%s1 + $0xbc] sm:$0xf]
  %v124 = vld [vmem:[%s1 + $0xc0] sm:$0xf]
  %v125 = vld [vmem:[%s1 + $0xc4] sm:$0xf]
  %v126 = vld [vmem:[%s1 + $0xc8] sm:$0xf]
  %v127 = vld [vmem:[%s1 + $0xcc] sm:$0xf]
  %v128 = vld [vmem:[%s1 + $0xd0] sm:$0xf]
  %v129 = vld [vmem:[%s1 + $0xd4] sm:$0xf]
  %v130 = vld [vmem:[%s1 + $0xd8] sm:$0xf]
  %v131 = vld [vmem:[%s1 + $0xdc] sm:$0xf]
  %v132 = vld [vmem:[%s1 + $0xe0] sm:$0xf]
  %v133 = vld [vmem:[%s1 + $0xe4] sm:$0xf]
  %v134 = vld [vmem:[%s1 + $0xe8] sm:$0xf]
  %v135 = vld [vmem:[%s1 + $0xec] sm:$0xf]
  %v136 = vld [vmem:[%s1 + $0xf0] sm:$0xf]
  %v137 = vld [vmem:[%s1 + $0xf4] sm:$0xf]
  %v138 = vld [vmem:[%s1 + $0xf8] sm:$0xf]
  %v139 = vld [vmem:[%s1 + $0xfc] sm:$0xf]
  %v140 = vld [vmem:[%s1 + $0x100] sm:$0xf]
  %v141 = vld [vmem:[%s1 + $0x104] sm:$0xf]
  %v142 = vld [vmem:[%s1 + $0x108] sm:$0xf]
  %v143 = vld [vmem:[%s1 + $0x10c] sm:$0xf]
  %v144 = vld [vmem:[%s1 + $0x110] sm:$0xf]
  %v145 = vld [vmem:[%s1 + $0x114] sm:$0xf]
  %v146 = vld [vmem:[%s1 + $0x118] sm:$0xf]
  %v147 = vld [vmem:[%s1 + $0x11c] sm:$0xf]
  %v148 = vld [vmem:[%s1 + $0x120] sm:$0xf]
  %v149 = vld [vmem:[%s1 + $0x124] sm:$0xf]
  %v150 = vld [vmem:[%s1 + $0x128] sm:$0xf]
  %v151 = vld [vmem:[%s1 + $0x12c] sm:$0xf]
  %v152 = vld [vmem:[%s1 + $0x130] sm:$0xf]
  %v153 = vld [vmem:[%s1 + $0x134] sm:$0xf]
  %v154 = vld [vmem:[%s1 + $0x138] sm:$0xf]
  %v155 = vld [vmem:[%s1 + $0x13c] sm:$0xf]
  %v156 = vld [vmem:[%s1 + $0x140] sm:$0xf]
  %v157 = vld [vmem:[%s1 + $0x144] sm:$0xf]
  %v158 = vld [vmem:[%s1 + $0x148] sm:$0xf]
  %v159 = vld [vmem:[%s1 + $0x14c] sm:$0xf]
  %v160 = vld [vmem:[%s1 + $0x150] sm:$0xf]
  %v161 = vld [vmem:[%s1 + $0x154] sm:$0xf]
  %v162 = vld [vmem:[%s1 + $0x158] sm:$0xf]
  %v163 = vld [vmem:[%s1 + $0x15c] sm:$0xf]
  %v164 = vld [vmem:[%s1 + $0x160] sm:$0xf]
  %v165 = vld [vmem:[%s1 + $0x164] sm:$0xf]
  %v166 = vld [vmem:[%s1 + $0x168] sm:$0xf]
  %v167 = vld [vmem:[%s1 + $0x16c] sm:$0xf]
  %v168 = vld [vmem:[%s1 + $0x170] sm:$0xf]
  %v169 = vld [vmem:[%s1 + $0x174] sm:$0xf]
  %v170 = vld [vmem:[%s1 + $0x178] sm:$0xf]
  %v171 = vld [vmem:[%s1 + $0x17c] sm:$0xf]
  %v172 = vld [vmem:[%s1 + $0x180] sm:$0xf]
  %v173 = vld [vmem:[%s1 + $0x184] sm:$0xf]
  %v174 = vld [vmem:[%s1 + $0x188] sm:$0xf]
  %v175 = vld [vmem:[%s1 + $0x18c] sm:$0xf]
  %v176 = vld [vmem:[%s1 + $0x190] sm:$0xf]
  %v177 = vld [vmem:[%s1 + $0x194] sm:$0xf]
  %v178 = vld [vmem:[%s1 + $0x198] sm:$0xf]
  %v179 = vld [vmem:[%s1 + $0x19c] sm:$0xf]
  %v180 = vld [vmem:[%s1 + $0x1a0] sm:$0xf]
  %v181 = vld [vmem:[%s1 + $0x1a4] sm:$0xf]
  %v182 = vld [vmem:[%s1 + $0x1a8] sm:$0xf]
  %v183 = vld [vmem:[%s1 + $0x1ac] sm:$0xf]
  %v184 = vld [vmem:[%s1 + $0x1b0] sm:$0xf]
  %v185 = vld [vmem:[%s1 + $0x1b4] sm:$0xf]
  %v186 = vld [vmem:[%s1 + $0x1b8] sm:$0xf]
  %v187 = vld [vmem:[%s1 + $0x1bc] sm:$0xf]
  %v188 = vld [vmem:[%s1 + $0x1c0] sm:$0xf]
  %v189 = vld [vmem:[%s1 + $0x1c4] sm:$0xf]
  %v190 = vld [vmem:[%s1 + $0x1c8] sm:$0xf]
  %v191 = vld [vmem:[%s1 + $0x1cc] sm:$0xf]
  %v192 = vld [vmem:[%s1 + $0x1d0] sm:$0xf]
  %v193 = vld [vmem:[%s1 + $0x1d4] sm:$0xf]
  %v194 = vld [vmem:[%s1 + $0x1d8] sm:$0xf]
  %v195 = vld [vmem:[%s1 + $0x1dc] sm:$0xf]
  %v196 = vld [vmem:[%s1 + $0x1e0] sm:$0xf]
  %v197 = vld [vmem:[%s1 + $0x1e4] sm:$0xf]
  %v198 = vld [vmem:[%s1 + $0x1e8] sm:$0xf]
  %v199 = vld [vmem:[%s1 + $0x1ec] sm:$0xf]
  %v200 = vld [vmem:[%s1 + $0x1f0] sm:$0xf]
  %v201 = vld [vmem:[%s1 + $0x1f4] sm:$0xf]
  %v202 = vld [vmem:[%s1 + $0x1f8] sm:$0xf]
  %v203 = vld [vmem:[%s1 + $0x1fc] sm:$0xf]
  %v204 = vld [vmem:[%s1 + $0x200] sm:$0xf]
  %v205 = vld [vmem:[%s1 + $0x204] sm:$0xf]
  %v206 = vld [vmem:[%s1 + $0x208] sm:$0xf]
  %v207 = vld [vmem:[%s1 + $0x20c] sm:$0xf]
  %v208 = vld [vmem:[%s1 + $0x210] sm:$0xf]
  %v209 = vld [vmem:[%s1 + $0x214] sm:$0xf]
  %v210 = vld [vmem:[%s1 + $0x218] sm:$0xf]
  %v211 = vld [vmem:[%s1 + $0x21c] sm:$0xf]
  %v212 = vld [vmem:[%s1 + $0x220] sm:$0xf]
  %v213 = vld [vmem:[%s1 + $0x224] sm:$0xf]
  %v214 = vld [vmem:[%s1 + $0x228] sm:$0xf]
  %v215 = vld [vmem:[%s1 + $0x22c] sm:$0xf]
  %v216 = vld [vmem:[%s1 + $0x230] sm:$0xf]
  %v217 = vld [vmem:[%s1 + $0x234] sm:$0xf]
  %v218 = vld [vmem:[%s1 + $0x238] sm:$0xf]
  %v219 = vld [vmem:[%s1 + $0x23c] sm:$0xf]
  %v220 = vld [vmem:[%s1 + $0x240] sm:$0xf]
  %v221 = vld [vmem:[%s1 + $0x244] sm:$0xf]
  %v222 = vld [vmem:[%s1 + $0x248] sm:$0xf]
  %v223 = vld [vmem:[%s1 + $0x24c] sm:$0xf]
  %v224 = vld [vmem:[%s1 + $0x250] sm:$0xf]
  %v225 = vld [vmem:[%s1 + $0x254] sm:$0xf]
  %v226 = vld [vmem:[%s1 + $0x258] sm:$0xf]
  %v227 = vld [vmem:[%s1 + $0x25c] sm:$0xf]
  %v228 = vld [vmem:[%s1 + $0x260] sm:$0xf]
  %v229 = vld [vmem:[%s1 + $0x264] sm:$0xf]
  %v230 = vld [vmem:[%s1 + $0x268] sm:$0xf]
  %v231 = vld [vmem:[%s1 + $0x26c] sm:$0xf]
  %v232 = vld [vmem:[%s1 + $0x270] sm:$0xf]
  %v233 = vld [vmem:[%s1 + $0x274] sm:$0xf]
  %v234 = vld [vmem:[%s1 + $0x278] sm:$0xf]
  %v235 = vld [vmem:[%s1 + $0x27c] sm:$0xf]
  %v236 = vld [vmem:[%s1 + $0x280] sm:$0xf]
  %v237 = vld [vmem:[%s1 + $0x284] sm:$0xf]
  %v238 = vld [vmem:[%s1 + $0x288] sm:$0xf]
  %v239 = vld [vmem:[%s1 + $0x28c] sm:$0xf]
  %v240 = vld [vmem:[%s1 + $0x290] sm:$0xf]
  %v241 = vld [vmem:[%s1 + $0x294] sm:$0xf]
  %v242 = vld [vmem:[%s1 + $0x298] sm:$0xf]
  %v243 = vld [vmem:[%s1 + $0x29c] sm:$0xf]
  %v244 = vld [vmem:[%s1 + $0x2a0] sm:$0xf]
  %v245 = vld [vmem:[%s1 + $0x2a4] sm:$0xf]
  %v246 = vld [vmem:[%s1 + $0x2a8] sm:$0xf]
  %v247 = vld [vmem:[%s1 + $0x2ac] sm:$0xf]
  %v248 = vld [vmem:[%s1 + $0x2b0] sm:$0xf]
  %v249 = vld [vmem:[%s1 + $0x2b4] sm:$0xf]
  %v250 = vld [vmem:[%s1 + $0x2b8] sm:$0xf]
  %v251 = vld [vmem:[%s1 + $0x2bc] sm:$0xf]
  %v252 = vld [vmem:[%s1 + $0x2c0] sm:$0xf]
  %v253 = vld [vmem:[%s1 + $0x2c4] sm:$0xf]
  %v254 = vld [vmem:[%s1 + $0x2c8] sm:$0xf]
  %v255 = vld [vmem:[%s1 + $0x2cc] sm:$0xf]
  %v256 = vld [vmem:[%s1 + $0x2d0] sm:$0xf]
  %v257 = vld [vmem:[%s1 + $0x2d4] sm:$0xf]
  %v258 = vld [vmem:[%s1 + $0x2d8] sm:$0xf]
  %v259 = vld [vmem:[%s1 + $0x2dc] sm:$0xf]
  %v260 = vld [vmem:[%s1 + $0x2e0] sm:$0xf]
  %v261 = vld [vmem:[%s1 + $0x2e4] sm:$0xf]
  %v262 = vld [vmem:[%s1 + $0x2e8] sm:$0xf]
  %v263 = vld [vmem:[%s1 + $0x2ec] sm:$0xf]
  %v264 = vld [vmem:[%s1 + $0x2f0] sm:$0xf]
  %v265 = vld [vmem:[%s1 + $0x2f4] sm:$0xf]
  %v266 = vld [vmem:[%s1 + $0x2f8] sm:$0xf]
  %v267 = vld [vmem:[%s1 + $0x2fc] sm:$0xf]
  %v268 = vld [vmem:[%s1 + $0x300] sm:$0xf]
  %v269 = vld [vmem:[%s1 + $0x304] sm:$0xf]
  %v270 = vld [vmem:[%s1 + $0x308] sm:$0xf]
  %v271 = vld [vmem:[%s1 + $0x30c] sm:$0xf]
  %v272 = vld [vmem:[%s1 + $0x310] sm:$0xf]
  %v273 = vld [vmem:[%s1 + $0x314] sm:$0xf]
  %v274 = vld [vmem:[%s1 + $0x318] sm:$0xf]
  %v275 = vld [vmem:[%s1 + $0x31c] sm:$0xf]
  %v276 = vld [vmem:[%s1 + $0x320] sm:$0xf]
  %v277 = vld [vmem:[%s1 + $0x324] sm:$0xf]
  %v278 = vld [vmem:[%s1 + $0x328] sm:$0xf]
  %v279 = vld [vmem:[%s1 + $0x32c] sm:$0xf]
  %v280 = vld [vmem:[%s1 + $0x330] sm:$0xf]
  %v281 = vld [vmem:[%s1 + $0x334] sm:$0xf]
  %v282 = vld [vmem:[%s1 + $0x338] sm:$0xf]
  %v283 = vld [vmem:[%s1 + $0x33c] sm:$0xf]
  %v284 = vld [vmem:[%s1 + $0x340] sm:$0xf]
  %v285 = vld [vmem:[%s1 + $0x344] sm:$0xf]
  %v286 = vld [vmem:[%s1 + $0x348] sm:$0xf]
  %v287 = vld [vmem:[%s1 + $0x34c] sm:$0xf]
  %v288 = vld [vmem:[%s1 + $0x350] sm:$0xf]
  %v289 = vld [vmem:[%s1 + $0x354] sm:$0xf]
  %v290 = vld [vmem:[%s1 + $0x358] sm:$0xf]
  %v291 = vld [vmem:[%s1 + $0x35c] sm:$0xf]
  %v292 = vld [vmem:[%s1 + $0x360] sm:$0xf]
  %v293 = vld [vmem:[%s1 + $0x364] sm:$0xf]
  %v294 = vld [vmem:[%s1 + $0x368] sm:$0xf]
  %v295 = vld [vmem:[%s1 + $0x36c] sm:$0xf]
  %v296 = vld [vmem:[%s1 + $0x370] sm:$0xf]
  %v297 = vld [vmem:[%s1 + $0x374] sm:$0xf]
  %v298 = vld [vmem:[%s1 + $0x378] sm:$0xf]
  %v299 = vld [vmem:[%s1 + $0x37c] sm:$0xf]
  %v300 = vld [vmem:[%s1 + $0x380] sm:$0xf]
  %v301 = vld [vmem:[%s1 + $0x384] sm:$0xf]
  %v302 = vld [vmem:[%s1 + $0x388] sm:$0xf]
  %v303 = vld [vmem:[%s1 + $0x38c] sm:$0xf]
  %v304 = vld [vmem:[%s1 + $0x390] sm:$0xf]
  %v305 = vld [vmem:[%s1 + $0x394] sm:$0xf]
  %v306 = vld [vmem:[%s1 + $0x398] sm:$0xf]
  %v307 = vld [vmem:[%s1 + $0x39c] sm:$0xf]
  %v308 = vld [vmem:[%s1 + $0x3a0] sm:$0xf]
  %v309 = vld [vmem:[%s1 + $0x3a4] sm:$0xf]
  %v310 = vld [vmem:[%s1 + $0x3a8] sm:$0xf]
  %v311 = vld [vmem:[%s1 + $0x3ac] sm:$0xf]
  %v312 = vld [vmem:[%s1 + $0x3b0] sm:$0xf]
  %v313 = vld [vmem:[%s1 + $0x3b4] sm:$0xf]
  %v314 = vld [vmem:[%s1 + $0x3b8] sm:$0xf]
  %v315 = vld [vmem:[%s1 + $0x3bc] sm:$0xf]
  %v316 = vld [vmem:[%s1 + $0x3c0] sm:$0xf]
  %v317 = vld [vmem:[%s1 + $0x3c4] sm:$0xf]
  %v318 = vld [vmem:[%s1 + $0x3c8] sm:$0xf]
  %v319 = vld [vmem:[%s1 + $0x3cc] sm:$0xf]
  %v320 = vld [vmem:[%s1 + $0x3d0] sm:$0xf]
  %v321 = vld [vmem:[%s1 + $0x3d4] sm:$0xf]
  %v322 = vld [vmem:[%s1 + $0x3d8] sm:$0xf]
  %v323 = vld [vmem:[%s1 + $0x3dc] sm:$0xf]
  %v324 = vld [vmem:[%s1 + $0x3e0] sm:$0xf]
  %v325 = vld [vmem:[%s1 + $0x3e4] sm:$0xf]
  %v326 = vld [vmem:[%s1 + $0x3e8] sm:$0xf]
  %v327 = vld [vmem:[%s1 + $0x3ec] sm:$0xf]
  %v328 = vld [vmem:[%s1 + $0x3f0] sm:$0xf]
  %v329 = vld [vmem:[%s1 + $0x3f4] sm:$0xf]
  %v330 = vld [vmem:[%s1 + $0x3f8] sm:$0xf]
  %v331 = vld [vmem:[%s1 + $0x3fc] sm:$0xf]
  %v396 = vunpack.c.l.b16 %v12
  %v397 = vunpack.c.h.b16 %v12
  %v398 = vunpack.c.l.b16 %v13
  %v399 = vunpack.c.h.b16 %v13
  %v400 = vunpack.c.l.b16 %v14
  %v401 = vunpack.c.h.b16 %v14
  %v402 = vunpack.c.l.b16 %v15
  %v403 = vunpack.c.h.b16 %v15
  %v404 = vunpack.c.l.b16 %v16
  %v405 = vunpack.c.h.b16 %v16
  %v406 = vunpack.c.l.b16 %v17
  %v407 = vunpack.c.h.b16 %v17
  %v408 = vunpack.c.l.b16 %v18
  %v409 = vunpack.c.h.b16 %v18
  %v410 = vunpack.c.l.b16 %v19
  %v411 = vunpack.c.h.b16 %v19
  %v412 = vunpack.c.l.b16 %v20
  %v413 = vunpack.c.h.b16 %v20
  %v414 = vunpack.c.l.b16 %v21
  %v415 = vunpack.c.h.b16 %v21
  %v416 = vunpack.c.l.b16 %v22
  %v417 = vunpack.c.h.b16 %v22
  %v418 = vunpack.c.l.b16 %v23
  %v419 = vunpack.c.h.b16 %v23
  %v420 = vunpack.c.l.b16 %v24
  %v421 = vunpack.c.h.b16 %v24
  %v422 = vunpack.c.l.b16 %v25
  %v423 = vunpack.c.h.b16 %v25
  %v424 = vunpack.c.l.b16 %v26
  %v425 = vunpack.c.h.b16 %v26
  %v426 = vunpack.c.l.b16 %v27
  %v427 = vunpack.c.h.b16 %v27
  %v428 = vunpack.c.l.b16 %v28
  %v429 = vunpack.c.h.b16 %v28
  %v430 = vunpack.c.l.b16 %v29
  %v431 = vunpack.c.h.b16 %v29
  %v432 = vunpack.c.l.b16 %v30
  %v433 = vunpack.c.h.b16 %v30
  %v434 = vunpack.c.l.b16 %v31
  %v435 = vunpack.c.h.b16 %v31
  %v436 = vunpack.c.l.b16 %v32
  %v437 = vunpack.c.h.b16 %v32
  %v438 = vunpack.c.l.b16 %v33
  %v439 = vunpack.c.h.b16 %v33
  %v440 = vunpack.c.l.b16 %v34
  %v441 = vunpack.c.h.b16 %v34
  %v442 = vunpack.c.l.b16 %v35
  %v443 = vunpack.c.h.b16 %v35
  %v444 = vunpack.c.l.b16 %v36
  %v445 = vunpack.c.h.b16 %v36
  %v446 = vunpack.c.l.b16 %v37
  %v447 = vunpack.c.h.b16 %v37
  %v448 = vunpack.c.l.b16 %v38
  %v449 = vunpack.c.h.b16 %v38
  %v450 = vunpack.c.l.b16 %v39
  %v451 = vunpack.c.h.b16 %v39
  %v452 = vunpack.c.l.b16 %v40
  %v453 = vunpack.c.h.b16 %v40
  %v454 = vunpack.c.l.b16 %v41
  %v455 = vunpack.c.h.b16 %v41
  %v456 = vunpack.c.l.b16 %v42
  %v457 = vunpack.c.h.b16 %v42
  %v458 = vunpack.c.l.b16 %v43
  %v459 = vunpack.c.h.b16 %v43
  %v460 = vunpack.c.l.b16 %v44
  %v461 = vunpack.c.h.b16 %v44
  %v462 = vunpack.c.l.b16 %v45
  %v463 = vunpack.c.h.b16 %v45
  %v464 = vunpack.c.l.b16 %v46
  %v465 = vunpack.c.h.b16 %v46
  %v466 = vunpack.c.l.b16 %v47
  %v467 = vunpack.c.h.b16 %v47
  %v468 = vunpack.c.l.b16 %v48
  %v469 = vunpack.c.h.b16 %v48
  %v470 = vunpack.c.l.b16 %v49
  %v471 = vunpack.c.h.b16 %v49
  %v472 = vunpack.c.l.b16 %v50
  %v473 = vunpack.c.h.b16 %v50
  %v474 = vunpack.c.l.b16 %v51
  %v475 = vunpack.c.h.b16 %v51
  %v476 = vunpack.c.l.b16 %v52
  %v477 = vunpack.c.h.b16 %v52
  %v478 = vunpack.c.l.b16 %v53
  %v479 = vunpack.c.h.b16 %v53
  %v480 = vunpack.c.l.b16 %v54
  %v481 = vunpack.c.h.b16 %v54
  %v482 = vunpack.c.l.b16 %v55
  %v483 = vunpack.c.h.b16 %v55
  %v484 = vunpack.c.l.b16 %v56
  %v485 = vunpack.c.h.b16 %v56
  %v486 = vunpack.c.l.b16 %v57
  %v487 = vunpack.c.h.b16 %v57
  %v488 = vunpack.c.l.b16 %v58
  %v489 = vunpack.c.h.b16 %v58
  %v490 = vunpack.c.l.b16 %v59
  %v491 = vunpack.c.h.b16 %v59
  %v492 = vunpack.c.l.b16 %v60
  %v493 = vunpack.c.h.b16 %v60
  %v494 = vunpack.c.l.b16 %v61
  %v495 = vunpack.c.h.b16 %v61
  %v496 = vunpack.c.l.b16 %v62
  %v497 = vunpack.c.h.b16 %v62
  %v498 = vunpack.c.l.b16 %v63
  %v499 = vunpack.c.h.b16 %v63
  %v500 = vunpack.c.l.b16 %v64
  %v501 = vunpack.c.h.b16 %v64
  %v502 = vunpack.c.l.b16 %v65
  %v503 = vunpack.c.h.b16 %v65
  %v504 = vunpack.c.l.b16 %v66
  %v505 = vunpack.c.h.b16 %v66
  %v506 = vunpack.c.l.b16 %v67
  %v507 = vunpack.c.h.b16 %v67
  %v508 = vunpack.c.l.b16 %v68
  %v509 = vunpack.c.h.b16 %v68
  %v510 = vunpack.c.l.b16 %v69
  %v511 = vunpack.c.h.b16 %v69
  %v512 = vunpack.c.l.b16 %v70
  %v513 = vunpack.c.h.b16 %v70
  %v514 = vunpack.c.l.b16 %v71
  %v515 = vunpack.c.h.b16 %v71
  %v516 = vunpack.c.l.b16 %v72
  %v517 = vunpack.c.h.b16 %v72
  %v518 = vunpack.c.l.b16 %v73
  %v519 = vunpack.c.h.b16 %v73
  %v520 = vunpack.c.l.b16 %v74
  %v521 = vunpack.c.h.b16 %v74
  %v522 = vunpack.c.l.b16 %v75
  %v523 = vunpack.c.h.b16 %v75
  %v524 = vpack.c.b16 %v412, %v396
  %v525 = vpack.c.b16 %v413, %v397
  %v526 = vpack.c.b16 %v414, %v398
  %v527 = vpack.c.b16 %v415, %v399
  %v528 = vpack.c.b16 %v416, %v400
  %v529 = vpack.c.b16 %v417, %v401
  %v530 = vpack.c.b16 %v418, %v402
  %v531 = vpack.c.b16 %v419, %v403
  %v532 = vpack.c.b16 %v420, %v404
  %v533 = vpack.c.b16 %v421, %v405
  %v534 = vpack.c.b16 %v422, %v406
  %v535 = vpack.c.b16 %v423, %v407
  %v536 = vpack.c.b16 %v424, %v408
  %v537 = vpack.c.b16 %v425, %v409
  %v538 = vpack.c.b16 %v426, %v410
  %v539 = vpack.c.b16 %v427, %v411
  %v540 = vpack.c.b16 %v444, %v428
  %v541 = vpack.c.b16 %v445, %v429
  %v542 = vpack.c.b16 %v446, %v430
  %v543 = vpack.c.b16 %v447, %v431
  %v544 = vpack.c.b16 %v448, %v432
  %v545 = vpack.c.b16 %v449, %v433
  %v546 = vpack.c.b16 %v450, %v434
  %v547 = vpack.c.b16 %v451, %v435
  %v548 = vpack.c.b16 %v452, %v436
  %v549 = vpack.c.b16 %v453, %v437
  %v550 = vpack.c.b16 %v454, %v438
  %v551 = vpack.c.b16 %v455, %v439
  %v552 = vpack.c.b16 %v456, %v440
  %v553 = vpack.c.b16 %v457, %v441
  %v554 = vpack.c.b16 %v458, %v442
  %v555 = vpack.c.b16 %v459, %v443
  %v556 = vpack.c.b16 %v476, %v460
  %v557 = vpack.c.b16 %v477, %v461
  %v558 = vpack.c.b16 %v478, %v462
  %v559 = vpack.c.b16 %v479, %v463
  %v560 = vpack.c.b16 %v480, %v464
  %v561 = vpack.c.b16 %v481, %v465
  %v562 = vpack.c.b16 %v482, %v466
  %v563 = vpack.c.b16 %v483, %v467
  %v564 = vpack.c.b16 %v484, %v468
  %v565 = vpack.c.b16 %v485, %v469
  %v566 = vpack.c.b16 %v486, %v470
  %v567 = vpack.c.b16 %v487, %v471
  %v568 = vpack.c.b16 %v488, %v472
  %v569 = vpack.c.b16 %v489, %v473
  %v570 = vpack.c.b16 %v490, %v474
  %v571 = vpack.c.b16 %v491, %v475
  %v572 = vpack.c.b16 %v508, %v492
  %v573 = vpack.c.b16 %v509, %v493
  %v574 = vpack.c.b16 %v510, %v494
  %v575 = vpack.c.b16 %v511, %v495
  %v576 = vpack.c.b16 %v512, %v496
  %v577 = vpack.c.b16 %v513, %v497
  %v578 = vpack.c.b16 %v514, %v498
  %v579 = vpack.c.b16 %v515, %v499
  %v580 = vpack.c.b16 %v516, %v500
  %v581 = vpack.c.b16 %v517, %v501
  %v582 = vpack.c.b16 %v518, %v502
  %v583 = vpack.c.b16 %v519, %v503
  %v584 = vpack.c.b16 %v520, %v504
  %v585 = vpack.c.b16 %v521, %v505
  %v586 = vpack.c.b16 %v522, %v506
  %v587 = vpack.c.b16 %v523, %v507
  %v908 = vunpack.c.l.b16 %v76
  %v909 = vunpack.c.l.b16 %v77
  %v910 = vunpack.c.l.b16 %v78
  %v911 = vunpack.c.l.b16 %v79
  %v912 = vunpack.c.l.b16 %v80
  %v913 = vunpack.c.l.b16 %v81
  %v914 = vunpack.c.l.b16 %v82
  %v915 = vunpack.c.l.b16 %v83
  %v916 = vunpack.c.l.b16 %v84
  %v917 = vunpack.c.l.b16 %v85
  %v918 = vunpack.c.l.b16 %v86
  %v919 = vunpack.c.l.b16 %v87
  %v920 = vunpack.c.l.b16 %v88
  %v921 = vunpack.c.l.b16 %v89
  %v922 = vunpack.c.l.b16 %v90
  %v923 = vunpack.c.l.b16 %v91
  %v924 = vunpack.c.l.b16 %v92
  %v925 = vunpack.c.l.b16 %v93
  %v926 = vunpack.c.l.b16 %v94
  %v927 = vunpack.c.l.b16 %v95
  %v928 = vunpack.c.l.b16 %v96
  %v929 = vunpack.c.l.b16 %v97
  %v930 = vunpack.c.l.b16 %v98
  %v931 = vunpack.c.l.b16 %v99
  %v932 = vunpack.c.l.b16 %v100
  %v933 = vunpack.c.l.b16 %v101
  %v934 = vunpack.c.l.b16 %v102
  %v935 = vunpack.c.l.b16 %v103
  %v936 = vunpack.c.l.b16 %v104
  %v937 = vunpack.c.l.b16 %v105
  %v938 = vunpack.c.l.b16 %v106
  %v939 = vunpack.c.l.b16 %v107
  %v940 = vunpack.c.l.b16 %v108
  %v941 = vunpack.c.l.b16 %v109
  %v942 = vunpack.c.l.b16 %v110
  %v943 = vunpack.c.l.b16 %v111
  %v944 = vunpack.c.l.b16 %v112
  %v945 = vunpack.c.l.b16 %v113
  %v946 = vunpack.c.l.b16 %v114
  %v947 = vunpack.c.l.b16 %v115
  %v948 = vunpack.c.l.b16 %v116
  %v949 = vunpack.c.l.b16 %v117
  %v950 = vunpack.c.l.b16 %v118
  %v951 = vunpack.c.l.b16 %v119
  %v952 = vunpack.c.l.b16 %v120
  %v953 = vunpack.c.l.b16 %v121
  %v954 = vunpack.c.l.b16 %v122
  %v955 = vunpack.c.l.b16 %v123
  %v956 = vunpack.c.l.b16 %v124
  %v957 = vunpack.c.l.b16 %v125
  %v958 = vunpack.c.l.b16 %v126
  %v959 = vunpack.c.l.b16 %v127
  %v960 = vunpack.c.l.b16 %v128
  %v961 = vunpack.c.l.b16 %v129
  %v962 = vunpack.c.l.b16 %v130
  %v963 = vunpack.c.l.b16 %v131
  %v964 = vunpack.c.l.b16 %v132
  %v965 = vunpack.c.l.b16 %v133
  %v966 = vunpack.c.l.b16 %v134
  %v967 = vunpack.c.l.b16 %v135
  %v968 = vunpack.c.l.b16 %v136
  %v969 = vunpack.c.l.b16 %v137
  %v970 = vunpack.c.l.b16 %v138
  %v971 = vunpack.c.l.b16 %v139
  %v972 = vunpack.c.l.b16 %v140
  %v973 = vunpack.c.l.b16 %v141
  %v974 = vunpack.c.l.b16 %v142
  %v975 = vunpack.c.l.b16 %v143
  %v976 = vunpack.c.l.b16 %v144
  %v977 = vunpack.c.l.b16 %v145
  %v978 = vunpack.c.l.b16 %v146
  %v979 = vunpack.c.l.b16 %v147
  %v980 = vunpack.c.l.b16 %v148
  %v981 = vunpack.c.l.b16 %v149
  %v982 = vunpack.c.l.b16 %v150
  %v983 = vunpack.c.l.b16 %v151
  %v984 = vunpack.c.l.b16 %v152
  %v985 = vunpack.c.l.b16 %v153
  %v986 = vunpack.c.l.b16 %v154
  %v987 = vunpack.c.l.b16 %v155
  %v988 = vunpack.c.l.b16 %v156
  %v989 = vunpack.c.l.b16 %v157
  %v990 = vunpack.c.l.b16 %v158
  %v991 = vunpack.c.l.b16 %v159
  %v992 = vunpack.c.l.b16 %v160
  %v993 = vunpack.c.l.b16 %v161
  %v994 = vunpack.c.l.b16 %v162
  %v995 = vunpack.c.l.b16 %v163
  %v996 = vunpack.c.l.b16 %v164
  %v997 = vunpack.c.l.b16 %v165
  %v998 = vunpack.c.l.b16 %v166
  %v999 = vunpack.c.l.b16 %v167
  %v1000 = vunpack.c.l.b16 %v168
  %v1001 = vunpack.c.l.b16 %v169
  %v1002 = vunpack.c.l.b16 %v170
  %v1003 = vunpack.c.l.b16 %v171
  %v1004 = vunpack.c.l.b16 %v172
  %v1005 = vunpack.c.l.b16 %v173
  %v1006 = vunpack.c.l.b16 %v174
  %v1007 = vunpack.c.l.b16 %v175
  %v1008 = vunpack.c.l.b16 %v176
  %v1009 = vunpack.c.l.b16 %v177
  %v1010 = vunpack.c.l.b16 %v178
  %v1011 = vunpack.c.l.b16 %v179
  %v1012 = vunpack.c.l.b16 %v180
  %v1013 = vunpack.c.l.b16 %v181
  %v1014 = vunpack.c.l.b16 %v182
  %v1015 = vunpack.c.l.b16 %v183
  %v1016 = vunpack.c.l.b16 %v184
  %v1017 = vunpack.c.l.b16 %v185
  %v1018 = vunpack.c.l.b16 %v186
  %v1019 = vunpack.c.l.b16 %v187
  %v1020 = vunpack.c.l.b16 %v188
  %v1021 = vunpack.c.l.b16 %v189
  %v1022 = vunpack.c.l.b16 %v190
  %v1023 = vunpack.c.l.b16 %v191
  %v1024 = vunpack.c.l.b16 %v192
  %v1025 = vunpack.c.l.b16 %v193
  %v1026 = vunpack.c.l.b16 %v194
  %v1027 = vunpack.c.l.b16 %v195
  %v1028 = vunpack.c.l.b16 %v196
  %v1029 = vunpack.c.l.b16 %v197
  %v1030 = vunpack.c.l.b16 %v198
  %v1031 = vunpack.c.l.b16 %v199
  %v1032 = vunpack.c.l.b16 %v200
  %v1033 = vunpack.c.l.b16 %v201
  %v1034 = vunpack.c.l.b16 %v202
  %v1035 = vunpack.c.l.b16 %v203
  %v1036 = vunpack.c.l.b16 %v204
  %v1037 = vunpack.c.l.b16 %v205
  %v1038 = vunpack.c.l.b16 %v206
  %v1039 = vunpack.c.l.b16 %v207
  %v1040 = vunpack.c.l.b16 %v208
  %v1041 = vunpack.c.l.b16 %v209
  %v1042 = vunpack.c.l.b16 %v210
  %v1043 = vunpack.c.l.b16 %v211
  %v1044 = vunpack.c.l.b16 %v212
  %v1045 = vunpack.c.l.b16 %v213
  %v1046 = vunpack.c.l.b16 %v214
  %v1047 = vunpack.c.l.b16 %v215
  %v1048 = vunpack.c.l.b16 %v216
  %v1049 = vunpack.c.l.b16 %v217
  %v1050 = vunpack.c.l.b16 %v218
  %v1051 = vunpack.c.l.b16 %v219
  %v1052 = vunpack.c.l.b16 %v220
  %v1053 = vunpack.c.l.b16 %v221
  %v1054 = vunpack.c.l.b16 %v222
  %v1055 = vunpack.c.l.b16 %v223
  %v1056 = vunpack.c.l.b16 %v224
  %v1057 = vunpack.c.l.b16 %v225
  %v1058 = vunpack.c.l.b16 %v226
  %v1059 = vunpack.c.l.b16 %v227
  %v1060 = vunpack.c.l.b16 %v228
  %v1061 = vunpack.c.l.b16 %v229
  %v1062 = vunpack.c.l.b16 %v230
  %v1063 = vunpack.c.l.b16 %v231
  %v1064 = vunpack.c.l.b16 %v232
  %v1065 = vunpack.c.l.b16 %v233
  %v1066 = vunpack.c.l.b16 %v234
  %v1067 = vunpack.c.l.b16 %v235
  %v1068 = vunpack.c.l.b16 %v236
  %v1069 = vunpack.c.l.b16 %v237
  %v1070 = vunpack.c.l.b16 %v238
  %v1071 = vunpack.c.l.b16 %v239
  %v1072 = vunpack.c.l.b16 %v240
  %v1073 = vunpack.c.l.b16 %v241
  %v1074 = vunpack.c.l.b16 %v242
  %v1075 = vunpack.c.l.b16 %v243
  %v1076 = vunpack.c.l.b16 %v244
  %v1077 = vunpack.c.l.b16 %v245
  %v1078 = vunpack.c.l.b16 %v246
  %v1079 = vunpack.c.l.b16 %v247
  %v1080 = vunpack.c.l.b16 %v248
  %v1081 = vunpack.c.l.b16 %v249
  %v1082 = vunpack.c.l.b16 %v250
  %v1083 = vunpack.c.l.b16 %v251
  %v1084 = vunpack.c.l.b16 %v252
  %v1085 = vunpack.c.l.b16 %v253
  %v1086 = vunpack.c.l.b16 %v254
  %v1087 = vunpack.c.l.b16 %v255
  %v1088 = vunpack.c.l.b16 %v256
  %v1089 = vunpack.c.l.b16 %v257
  %v1090 = vunpack.c.l.b16 %v258
  %v1091 = vunpack.c.l.b16 %v259
  %v1092 = vunpack.c.l.b16 %v260
  %v1093 = vunpack.c.l.b16 %v261
  %v1094 = vunpack.c.l.b16 %v262
  %v1095 = vunpack.c.l.b16 %v263
  %v1096 = vunpack.c.l.b16 %v264
  %v1097 = vunpack.c.l.b16 %v265
  %v1098 = vunpack.c.l.b16 %v266
  %v1099 = vunpack.c.l.b16 %v267
  %v1100 = vunpack.c.l.b16 %v268
  %v1101 = vunpack.c.l.b16 %v269
  %v1102 = vunpack.c.l.b16 %v270
  %v1103 = vunpack.c.l.b16 %v271
  %v1104 = vunpack.c.l.b16 %v272
  %v1105 = vunpack.c.l.b16 %v273
  %v1106 = vunpack.c.l.b16 %v274
  %v1107 = vunpack.c.l.b16 %v275
  %v1108 = vunpack.c.l.b16 %v276
  %v1109 = vunpack.c.l.b16 %v277
  %v1110 = vunpack.c.l.b16 %v278
  %v1111 = vunpack.c.l.b16 %v279
  %v1112 = vunpack.c.l.b16 %v280
  %v1113 = vunpack.c.l.b16 %v281
  %v1114 = vunpack.c.l.b16 %v282
  %v1115 = vunpack.c.l.b16 %v283
  %v1116 = vunpack.c.l.b16 %v284
  %v1117 = vunpack.c.l.b16 %v285
  %v1118 = vunpack.c.l.b16 %v286
  %v1119 = vunpack.c.l.b16 %v287
  %v1120 = vunpack.c.l.b16 %v288
  %v1121 = vunpack.c.l.b16 %v289
  %v1122 = vunpack.c.l.b16 %v290
  %v1123 = vunpack.c.l.b16 %v291
  %v1124 = vunpack.c.l.b16 %v292
  %v1125 = vunpack.c.l.b16 %v293
  %v1126 = vunpack.c.l.b16 %v294
  %v1127 = vunpack.c.l.b16 %v295
  %v1128 = vunpack.c.l.b16 %v296
  %v1129 = vunpack.c.l.b16 %v297
  %v1130 = vunpack.c.l.b16 %v298
  %v1131 = vunpack.c.l.b16 %v299
  %v1132 = vunpack.c.l.b16 %v300
  %v1133 = vunpack.c.l.b16 %v301
  %v1134 = vunpack.c.l.b16 %v302
  %v1135 = vunpack.c.l.b16 %v303
  %v1136 = vunpack.c.l.b16 %v304
  %v1137 = vunpack.c.l.b16 %v305
  %v1138 = vunpack.c.l.b16 %v306
  %v1139 = vunpack.c.l.b16 %v307
  %v1140 = vunpack.c.l.b16 %v308
  %v1141 = vunpack.c.l.b16 %v309
  %v1142 = vunpack.c.l.b16 %v310
  %v1143 = vunpack.c.l.b16 %v311
  %v1144 = vunpack.c.l.b16 %v312
  %v1145 = vunpack.c.l.b16 %v313
  %v1146 = vunpack.c.l.b16 %v314
  %v1147 = vunpack.c.l.b16 %v315
  %v1148 = vunpack.c.l.b16 %v316
  %v1149 = vunpack.c.l.b16 %v317
  %v1150 = vunpack.c.l.b16 %v318
  %v1151 = vunpack.c.l.b16 %v319
  %v1152 = vunpack.c.l.b16 %v320
  %v1153 = vunpack.c.l.b16 %v321
  %v1154 = vunpack.c.l.b16 %v322
  %v1155 = vunpack.c.l.b16 %v323
  %v1156 = vunpack.c.l.b16 %v324
  %v1157 = vunpack.c.l.b16 %v325
  %v1158 = vunpack.c.l.b16 %v326
  %v1159 = vunpack.c.l.b16 %v327
  %v1160 = vunpack.c.l.b16 %v328
  %v1161 = vunpack.c.l.b16 %v329
  %v1162 = vunpack.c.l.b16 %v330
  %v1163 = vunpack.c.l.b16 %v331
  %v1164 = vpack.c.b16 %v909, %v908
  %v1165 = vpack.c.b16 %v911, %v910
  %v1166 = vpack.c.b16 %v913, %v912
  %v1167 = vpack.c.b16 %v915, %v914
  %v1168 = vpack.c.b16 %v917, %v916
  %v1169 = vpack.c.b16 %v919, %v918
  %v1170 = vpack.c.b16 %v921, %v920
  %v1171 = vpack.c.b16 %v923, %v922
  %v1172 = vpack.c.b16 %v925, %v924
  %v1173 = vpack.c.b16 %v927, %v926
  %v1174 = vpack.c.b16 %v929, %v928
  %v1175 = vpack.c.b16 %v931, %v930
  %v1176 = vpack.c.b16 %v933, %v932
  %v1177 = vpack.c.b16 %v935, %v934
  %v1178 = vpack.c.b16 %v937, %v936
  %v1179 = vpack.c.b16 %v939, %v938
  %v1180 = vpack.c.b16 %v941, %v940
  %v1181 = vpack.c.b16 %v943, %v942
  %v1182 = vpack.c.b16 %v945, %v944
  %v1183 = vpack.c.b16 %v947, %v946
  %v1184 = vpack.c.b16 %v949, %v948
  %v1185 = vpack.c.b16 %v951, %v950
  %v1186 = vpack.c.b16 %v953, %v952
  %v1187 = vpack.c.b16 %v955, %v954
  %v1188 = vpack.c.b16 %v957, %v956
  %v1189 = vpack.c.b16 %v959, %v958
  %v1190 = vpack.c.b16 %v961, %v960
  %v1191 = vpack.c.b16 %v963, %v962
  %v1192 = vpack.c.b16 %v965, %v964
  %v1193 = vpack.c.b16 %v967, %v966
  %v1194 = vpack.c.b16 %v969, %v968
  %v1195 = vpack.c.b16 %v971, %v970
  %v1196 = vpack.c.b16 %v973, %v972
  %v1197 = vpack.c.b16 %v975, %v974
  %v1198 = vpack.c.b16 %v977, %v976
  %v1199 = vpack.c.b16 %v979, %v978
  %v1200 = vpack.c.b16 %v981, %v980
  %v1201 = vpack.c.b16 %v983, %v982
  %v1202 = vpack.c.b16 %v985, %v984
  %v1203 = vpack.c.b16 %v987, %v986
  %v1204 = vpack.c.b16 %v989, %v988
  %v1205 = vpack.c.b16 %v991, %v990
  %v1206 = vpack.c.b16 %v993, %v992
  %v1207 = vpack.c.b16 %v995, %v994
  %v1208 = vpack.c.b16 %v997, %v996
  %v1209 = vpack.c.b16 %v999, %v998
  %v1210 = vpack.c.b16 %v1001, %v1000
  %v1211 = vpack.c.b16 %v1003, %v1002
  %v1212 = vpack.c.b16 %v1005, %v1004
  %v1213 = vpack.c.b16 %v1007, %v1006
  %v1214 = vpack.c.b16 %v1009, %v1008
  %v1215 = vpack.c.b16 %v1011, %v1010
  %v1216 = vpack.c.b16 %v1013, %v1012
  %v1217 = vpack.c.b16 %v1015, %v1014
  %v1218 = vpack.c.b16 %v1017, %v1016
  %v1219 = vpack.c.b16 %v1019, %v1018
  %v1220 = vpack.c.b16 %v1021, %v1020
  %v1221 = vpack.c.b16 %v1023, %v1022
  %v1222 = vpack.c.b16 %v1025, %v1024
  %v1223 = vpack.c.b16 %v1027, %v1026
  %v1224 = vpack.c.b16 %v1029, %v1028
  %v1225 = vpack.c.b16 %v1031, %v1030
  %v1226 = vpack.c.b16 %v1033, %v1032
  %v1227 = vpack.c.b16 %v1035, %v1034
  %v1228 = vpack.c.b16 %v1037, %v1036
  %v1229 = vpack.c.b16 %v1039, %v1038
  %v1230 = vpack.c.b16 %v1041, %v1040
  %v1231 = vpack.c.b16 %v1043, %v1042
  %v1232 = vpack.c.b16 %v1045, %v1044
  %v1233 = vpack.c.b16 %v1047, %v1046
  %v1234 = vpack.c.b16 %v1049, %v1048
  %v1235 = vpack.c.b16 %v1051, %v1050
  %v1236 = vpack.c.b16 %v1053, %v1052
  %v1237 = vpack.c.b16 %v1055, %v1054
  %v1238 = vpack.c.b16 %v1057, %v1056
  %v1239 = vpack.c.b16 %v1059, %v1058
  %v1240 = vpack.c.b16 %v1061, %v1060
  %v1241 = vpack.c.b16 %v1063, %v1062
  %v1242 = vpack.c.b16 %v1065, %v1064
  %v1243 = vpack.c.b16 %v1067, %v1066
  %v1244 = vpack.c.b16 %v1069, %v1068
  %v1245 = vpack.c.b16 %v1071, %v1070
  %v1246 = vpack.c.b16 %v1073, %v1072
  %v1247 = vpack.c.b16 %v1075, %v1074
  %v1248 = vpack.c.b16 %v1077, %v1076
  %v1249 = vpack.c.b16 %v1079, %v1078
  %v1250 = vpack.c.b16 %v1081, %v1080
  %v1251 = vpack.c.b16 %v1083, %v1082
  %v1252 = vpack.c.b16 %v1085, %v1084
  %v1253 = vpack.c.b16 %v1087, %v1086
  %v1254 = vpack.c.b16 %v1089, %v1088
  %v1255 = vpack.c.b16 %v1091, %v1090
  %v1256 = vpack.c.b16 %v1093, %v1092
  %v1257 = vpack.c.b16 %v1095, %v1094
  %v1258 = vpack.c.b16 %v1097, %v1096
  %v1259 = vpack.c.b16 %v1099, %v1098
  %v1260 = vpack.c.b16 %v1101, %v1100
  %v1261 = vpack.c.b16 %v1103, %v1102
  %v1262 = vpack.c.b16 %v1105, %v1104
  %v1263 = vpack.c.b16 %v1107, %v1106
  %v1264 = vpack.c.b16 %v1109, %v1108
  %v1265 = vpack.c.b16 %v1111, %v1110
  %v1266 = vpack.c.b16 %v1113, %v1112
  %v1267 = vpack.c.b16 %v1115, %v1114
  %v1268 = vpack.c.b16 %v1117, %v1116
  %v1269 = vpack.c.b16 %v1119, %v1118
  %v1270 = vpack.c.b16 %v1121, %v1120
  %v1271 = vpack.c.b16 %v1123, %v1122
  %v1272 = vpack.c.b16 %v1125, %v1124
  %v1273 = vpack.c.b16 %v1127, %v1126
  %v1274 = vpack.c.b16 %v1129, %v1128
  %v1275 = vpack.c.b16 %v1131, %v1130
  %v1276 = vpack.c.b16 %v1133, %v1132
  %v1277 = vpack.c.b16 %v1135, %v1134
  %v1278 = vpack.c.b16 %v1137, %v1136
  %v1279 = vpack.c.b16 %v1139, %v1138
  %v1280 = vpack.c.b16 %v1141, %v1140
  %v1281 = vpack.c.b16 %v1143, %v1142
  %v1282 = vpack.c.b16 %v1145, %v1144
  %v1283 = vpack.c.b16 %v1147, %v1146
  %v1284 = vpack.c.b16 %v1149, %v1148
  %v1285 = vpack.c.b16 %v1151, %v1150
  %v1286 = vpack.c.b16 %v1153, %v1152
  %v1287 = vpack.c.b16 %v1155, %v1154
  %v1288 = vpack.c.b16 %v1157, %v1156
  %v1289 = vpack.c.b16 %v1159, %v1158
  %v1290 = vpack.c.b16 %v1161, %v1160
  %v1291 = vpack.c.b16 %v1163, %v1162
  %1420 = vmatprep.subr.bf16.mxu0 0
  %1421 = vmatpush1.bf16.msra.mxu0 %v1171
  %1422 = vmatprep.subr.bf16.mxu0 0
  %1423 = vmatpush1.bf16.msra.mxu0 %v1170
  %1424 = vmatprep.subr.bf16.mxu0 0
  %1425 = vmatpush1.bf16.msra.mxu0 %v1169
  %1426 = vmatprep.subr.bf16.mxu0 0
  %1427 = vmatpush1.bf16.msra.mxu0 %v1168
  %1428 = vmatprep.subr.bf16.mxu0 0
  %1429 = vmatpush1.bf16.msra.mxu0 %v1167
  %1430 = vmatprep.subr.bf16.mxu0 0
  %1431 = vmatpush1.bf16.msra.mxu0 %v1166
  %1432 = vmatprep.subr.bf16.mxu0 0
  %1433 = vmatpush1.bf16.msra.mxu0 %v1165
  %1434 = vmatprep.subr.bf16.mxu0 0
  %1435 = vmatpush1.bf16.msra.mxu0 %v1164
  %1436 = vmatprep.subr.bf16.mxu0 0
  %1437 = vmatpush2.bf16.msra.mxu0 %v1179
  %1438 = vmatprep.subr.bf16.mxu0 0
  %1439 = vmatpush2.bf16.msra.mxu0 %v1178
  %1440 = vmatprep.subr.bf16.mxu0 0
  %1441 = vmatpush2.bf16.msra.mxu0 %v1177
  %1442 = vmatprep.subr.bf16.mxu0 0
  %1443 = vmatpush2.bf16.msra.mxu0 %v1176
  %1444 = vmatprep.subr.bf16.mxu0 0
  %1445 = vmatpush2.bf16.msra.mxu0 %v1175
  %1446 = vmatprep.subr.bf16.mxu0 0
  %1447 = vmatpush2.bf16.msra.mxu0 %v1174
  %1448 = vmatprep.subr.bf16.mxu0 0
  %1449 = vmatpush2.bf16.msra.mxu0 %v1173
  %1450 = vmatprep.subr.bf16.mxu0 0
  %1451 = vmatpush2.bf16.msra.mxu0 %v1172
  %1452 = vmatprep.mubr.bf16.mxu0 %v525
  %1453 = vmatmul.mubr.bf16.gmra.mxu0 %v524
  %v1454 = vpop.f32.mrf.mxu0
  %v1455 = vadd.f32 0.0, %v1454
  %v1456 = vpop.f32.mrf.mxu0
  %v1457 = vpop.f32.mrf.mxu0
  %v1458 = vadd.f32 0.0, %v1457
  %v1459 = vpop.f32.mrf.mxu0
  %1460 = vmatprep.mubr.bf16.mxu0 %v541
  %1461 = vmatmul.mubr.bf16.gmra.mxu0 %v540
  %v1462 = vpop.f32.mrf.mxu0
  %v1463 = vadd.f32 0.0, %v1462
  %v1464 = vpop.f32.mrf.mxu0
  %v1465 = vpop.f32.mrf.mxu0
  %v1466 = vadd.f32 0.0, %v1465
  %v1467 = vpop.f32.mrf.mxu0
  %1468 = vmatprep.mubr.bf16.mxu0 %v557
  %1469 = vmatmul.mubr.bf16.gmra.mxu0 %v556
  %v1470 = vpop.f32.mrf.mxu0
  %v1471 = vadd.f32 0.0, %v1470
  %v1472 = vpop.f32.mrf.mxu0
  %v1473 = vpop.f32.mrf.mxu0
  %v1474 = vadd.f32 0.0, %v1473
  %v1475 = vpop.f32.mrf.mxu0
  %1476 = vmatprep.mubr.bf16.mxu0 %v573
  %1477 = vmatmul.mubr.bf16.gmra.mxu0 %v572
  %v1478 = vpop.f32.mrf.mxu0
  %v1479 = vadd.f32 0.0, %v1478
  %v1480 = vpop.f32.mrf.mxu0
  %v1481 = vpop.f32.mrf.mxu0
  %v1482 = vadd.f32 0.0, %v1481
  %v1483 = vpop.f32.mrf.mxu0
  %1484 = vdwg.mxu0
  %1485 = vmatprep.subr.bf16.mxu0 0
  %1486 = vmatpush1.bf16.msra.mxu0 %v1187
  %1487 = vmatprep.subr.bf16.mxu0 0
  %1488 = vmatpush1.bf16.msra.mxu0 %v1186
  %1489 = vmatprep.subr.bf16.mxu0 0
  %1490 = vmatpush1.bf16.msra.mxu0 %v1185
  %1491 = vmatprep.subr.bf16.mxu0 0
  %1492 = vmatpush1.bf16.msra.mxu0 %v1184
  %1493 = vmatprep.subr.bf16.mxu0 0
  %1494 = vmatpush1.bf16.msra.mxu0 %v1183
  %1495 = vmatprep.subr.bf16.mxu0 0
  %1496 = vmatpush1.bf16.msra.mxu0 %v1182
  %1497 = vmatprep.subr.bf16.mxu0 0
  %1498 = vmatpush1.bf16.msra.mxu0 %v1181
  %1499 = vmatprep.subr.bf16.mxu0 0
  %1500 = vmatpush1.bf16.msra.mxu0 %v1180
  %1501 = vmatprep.subr.bf16.mxu0 0
  %1502 = vmatpush2.bf16.msra.mxu0 %v1195
  %1503 = vmatprep.subr.bf16.mxu0 0
  %1504 = vmatpush2.bf16.msra.mxu0 %v1194
  %1505 = vmatprep.subr.bf16.mxu0 0
  %1506 = vmatpush2.bf16.msra.mxu0 %v1193
  %1507 = vmatprep.subr.bf16.mxu0 0
  %1508 = vmatpush2.bf16.msra.mxu0 %v1192
  %1509 = vmatprep.subr.bf16.mxu0 0
  %1510 = vmatpush2.bf16.msra.mxu0 %v1191
  %1511 = vmatprep.subr.bf16.mxu0 0
  %1512 = vmatpush2.bf16.msra.mxu0 %v1190
  %1513 = vmatprep.subr.bf16.mxu0 0
  %1514 = vmatpush2.bf16.msra.mxu0 %v1189
  %1515 = vmatprep.subr.bf16.mxu0 0
  %1516 = vmatpush2.bf16.msra.mxu0 %v1188
  %1517 = vmatprep.mubr.bf16.mxu0 %v527
  %1518 = vmatmul.mubr.bf16.gmra.mxu0 %v526
  %v1519 = vpop.f32.mrf.mxu0
  %v1520 = vadd.f32 %v1455, %v1519
  %v1521 = vpop.f32.mrf.mxu0
  %v1522 = vpop.f32.mrf.mxu0
  %v1523 = vadd.f32 %v1458, %v1522
  %v1524 = vpop.f32.mrf.mxu0
  %1525 = vmatprep.mubr.bf16.mxu0 %v543
  %1526 = vmatmul.mubr.bf16.gmra.mxu0 %v542
  %v1527 = vpop.f32.mrf.mxu0
  %v1528 = vadd.f32 %v1463, %v1527
  %v1529 = vpop.f32.mrf.mxu0
  %v1530 = vpop.f32.mrf.mxu0
  %v1531 = vadd.f32 %v1466, %v1530
  %v1532 = vpop.f32.mrf.mxu0
  %1533 = vmatprep.mubr.bf16.mxu0 %v559
  %1534 = vmatmul.mubr.bf16.gmra.mxu0 %v558
  %v1535 = vpop.f32.mrf.mxu0
  %v1536 = vadd.f32 %v1471, %v1535
  %v1537 = vpop.f32.mrf.mxu0
  %v1538 = vpop.f32.mrf.mxu0
  %v1539 = vadd.f32 %v1474, %v1538
  %v1540 = vpop.f32.mrf.mxu0
  %1541 = vmatprep.mubr.bf16.mxu0 %v575
  %1542 = vmatmul.mubr.bf16.gmra.mxu0 %v574
  %v1543 = vpop.f32.mrf.mxu0
  %v1544 = vadd.f32 %v1479, %v1543
  %v1545 = vpop.f32.mrf.mxu0
  %v1546 = vpop.f32.mrf.mxu0
  %v1547 = vadd.f32 %v1482, %v1546
  %v1548 = vpop.f32.mrf.mxu0
  %1549 = vdwg.mxu0
  %1550 = vmatprep.subr.bf16.mxu0 0
  %1551 = vmatpush1.bf16.msra.mxu0 %v1203
  %1552 = vmatprep.subr.bf16.mxu0 0
  %1553 = vmatpush1.bf16.msra.mxu0 %v1202
  %1554 = vmatprep.subr.bf16.mxu0 0
  %1555 = vmatpush1.bf16.msra.mxu0 %v1201
  %1556 = vmatprep.subr.bf16.mxu0 0
  %1557 = vmatpush1.bf16.msra.mxu0 %v1200
  %1558 = vmatprep.subr.bf16.mxu0 0
  %1559 = vmatpush1.bf16.msra.mxu0 %v1199
  %1560 = vmatprep.subr.bf16.mxu0 0
  %1561 = vmatpush1.bf16.msra.mxu0 %v1198
  %1562 = vmatprep.subr.bf16.mxu0 0
  %1563 = vmatpush1.bf16.msra.mxu0 %v1197
  %1564 = vmatprep.subr.bf16.mxu0 0
  %1565 = vmatpush1.bf16.msra.mxu0 %v1196
  %1566 = vmatprep.subr.bf16.mxu0 0
  %1567 = vmatpush2.bf16.msra.mxu0 %v1211
  %1568 = vmatprep.subr.bf16.mxu0 0
  %1569 = vmatpush2.bf16.msra.mxu0 %v1210
  %1570 = vmatprep.subr.bf16.mxu0 0
  %1571 = vmatpush2.bf16.msra.mxu0 %v1209
  %1572 = vmatprep.subr.bf16.mxu0 0
  %1573 = vmatpush2.bf16.msra.mxu0 %v1208
  %1574 = vmatprep.subr.bf16.mxu0 0
  %1575 = vmatpush2.bf16.msra.mxu0 %v1207
  %1576 = vmatprep.subr.bf16.mxu0 0
  %1577 = vmatpush2.bf16.msra.mxu0 %v1206
  %1578 = vmatprep.subr.bf16.mxu0 0
  %1579 = vmatpush2.bf16.msra.mxu0 %v1205
  %1580 = vmatprep.subr.bf16.mxu0 0
  %1581 = vmatpush2.bf16.msra.mxu0 %v1204
  %1582 = vmatprep.mubr.bf16.mxu0 %v529
  %1583 = vmatmul.mubr.bf16.gmra.mxu0 %v528
  %v1584 = vpop.f32.mrf.mxu0
  %v1585 = vadd.f32 %v1520, %v1584
  %v1586 = vpop.f32.mrf.mxu0
  %v1587 = vpop.f32.mrf.mxu0
  %v1588 = vadd.f32 %v1523, %v1587
  %v1589 = vpop.f32.mrf.mxu0
  %1590 = vmatprep.mubr.bf16.mxu0 %v545
  %1591 = vmatmul.mubr.bf16.gmra.mxu0 %v544
  %v1592 = vpop.f32.mrf.mxu0
  %v1593 = vadd.f32 %v1528, %v1592
  %v1594 = vpop.f32.mrf.mxu0
  %v1595 = vpop.f32.mrf.mxu0
  %v1596 = vadd.f32 %v1531, %v1595
  %v1597 = vpop.f32.mrf.mxu0
  %1598 = vmatprep.mubr.bf16.mxu0 %v561
  %1599 = vmatmul.mubr.bf16.gmra.mxu0 %v560
  %v1600 = vpop.f32.mrf.mxu0
  %v1601 = vadd.f32 %v1536, %v1600
  %v1602 = vpop.f32.mrf.mxu0
  %v1603 = vpop.f32.mrf.mxu0
  %v1604 = vadd.f32 %v1539, %v1603
  %v1605 = vpop.f32.mrf.mxu0
  %1606 = vmatprep.mubr.bf16.mxu0 %v577
  %1607 = vmatmul.mubr.bf16.gmra.mxu0 %v576
  %v1608 = vpop.f32.mrf.mxu0
  %v1609 = vadd.f32 %v1544, %v1608
  %v1610 = vpop.f32.mrf.mxu0
  %v1611 = vpop.f32.mrf.mxu0
  %v1612 = vadd.f32 %v1547, %v1611
  %v1613 = vpop.f32.mrf.mxu0
  %1614 = vdwg.mxu0
  %1615 = vmatprep.subr.bf16.mxu0 0
  %1616 = vmatpush1.bf16.msra.mxu0 %v1219
  %1617 = vmatprep.subr.bf16.mxu0 0
  %1618 = vmatpush1.bf16.msra.mxu0 %v1218
  %1619 = vmatprep.subr.bf16.mxu0 0
  %1620 = vmatpush1.bf16.msra.mxu0 %v1217
  %1621 = vmatprep.subr.bf16.mxu0 0
  %1622 = vmatpush1.bf16.msra.mxu0 %v1216
  %1623 = vmatprep.subr.bf16.mxu0 0
  %1624 = vmatpush1.bf16.msra.mxu0 %v1215
  %1625 = vmatprep.subr.bf16.mxu0 0
  %1626 = vmatpush1.bf16.msra.mxu0 %v1214
  %1627 = vmatprep.subr.bf16.mxu0 0
  %1628 = vmatpush1.bf16.msra.mxu0 %v1213
  %1629 = vmatprep.subr.bf16.mxu0 0
  %1630 = vmatpush1.bf16.msra.mxu0 %v1212
  %1631 = vmatprep.subr.bf16.mxu0 0
  %1632 = vmatpush2.bf16.msra.mxu0 %v1227
  %1633 = vmatprep.subr.bf16.mxu0 0
  %1634 = vmatpush2.bf16.msra.mxu0 %v1226
  %1635 = vmatprep.subr.bf16.mxu0 0
  %1636 = vmatpush2.bf16.msra.mxu0 %v1225
  %1637 = vmatprep.subr.bf16.mxu0 0
  %1638 = vmatpush2.bf16.msra.mxu0 %v1224
  %1639 = vmatprep.subr.bf16.mxu0 0
  %1640 = vmatpush2.bf16.msra.mxu0 %v1223
  %1641 = vmatprep.subr.bf16.mxu0 0
  %1642 = vmatpush2.bf16.msra.mxu0 %v1222
  %1643 = vmatprep.subr.bf16.mxu0 0
  %1644 = vmatpush2.bf16.msra.mxu0 %v1221
  %1645 = vmatprep.subr.bf16.mxu0 0
  %1646 = vmatpush2.bf16.msra.mxu0 %v1220
  %1647 = vmatprep.mubr.bf16.mxu0 %v531
  %1648 = vmatmul.mubr.bf16.gmra.mxu0 %v530
  %v1649 = vpop.f32.mrf.mxu0
  %v1650 = vadd.f32 %v1585, %v1649
  %v1651 = vpop.f32.mrf.mxu0
  %v1652 = vpop.f32.mrf.mxu0
  %v1653 = vadd.f32 %v1588, %v1652
  %v1654 = vpop.f32.mrf.mxu0
  %1655 = vmatprep.mubr.bf16.mxu0 %v547
  %1656 = vmatmul.mubr.bf16.gmra.mxu0 %v546
  %v1657 = vpop.f32.mrf.mxu0
  %v1658 = vadd.f32 %v1593, %v1657
  %v1659 = vpop.f32.mrf.mxu0
  %v1660 = vpop.f32.mrf.mxu0
  %v1661 = vadd.f32 %v1596, %v1660
  %v1662 = vpop.f32.mrf.mxu0
  %1663 = vmatprep.mubr.bf16.mxu0 %v563
  %1664 = vmatmul.mubr.bf16.gmra.mxu0 %v562
  %v1665 = vpop.f32.mrf.mxu0
  %v1666 = vadd.f32 %v1601, %v1665
  %v1667 = vpop.f32.mrf.mxu0
  %v1668 = vpop.f32.mrf.mxu0
  %v1669 = vadd.f32 %v1604, %v1668
  %v1670 = vpop.f32.mrf.mxu0
  %1671 = vmatprep.mubr.bf16.mxu0 %v579
  %1672 = vmatmul.mubr.bf16.gmra.mxu0 %v578
  %v1673 = vpop.f32.mrf.mxu0
  %v1674 = vadd.f32 %v1609, %v1673
  %v1675 = vpop.f32.mrf.mxu0
  %v1676 = vpop.f32.mrf.mxu0
  %v1677 = vadd.f32 %v1612, %v1676
  %v1678 = vpop.f32.mrf.mxu0
  %1679 = vdwg.mxu0
  %1680 = vmatprep.subr.bf16.mxu0 0
  %1681 = vmatpush1.bf16.msra.mxu0 %v1235
  %1682 = vmatprep.subr.bf16.mxu0 0
  %1683 = vmatpush1.bf16.msra.mxu0 %v1234
  %1684 = vmatprep.subr.bf16.mxu0 0
  %1685 = vmatpush1.bf16.msra.mxu0 %v1233
  %1686 = vmatprep.subr.bf16.mxu0 0
  %1687 = vmatpush1.bf16.msra.mxu0 %v1232
  %1688 = vmatprep.subr.bf16.mxu0 0
  %1689 = vmatpush1.bf16.msra.mxu0 %v1231
  %1690 = vmatprep.subr.bf16.mxu0 0
  %1691 = vmatpush1.bf16.msra.mxu0 %v1230
  %1692 = vmatprep.subr.bf16.mxu0 0
  %1693 = vmatpush1.bf16.msra.mxu0 %v1229
  %1694 = vmatprep.subr.bf16.mxu0 0
  %1695 = vmatpush1.bf16.msra.mxu0 %v1228
  %1696 = vmatprep.subr.bf16.mxu0 0
  %1697 = vmatpush2.bf16.msra.mxu0 %v1243
  %1698 = vmatprep.subr.bf16.mxu0 0
  %1699 = vmatpush2.bf16.msra.mxu0 %v1242
  %1700 = vmatprep.subr.bf16.mxu0 0
  %1701 = vmatpush2.bf16.msra.mxu0 %v1241
  %1702 = vmatprep.subr.bf16.mxu0 0
  %1703 = vmatpush2.bf16.msra.mxu0 %v1240
  %1704 = vmatprep.subr.bf16.mxu0 0
  %1705 = vmatpush2.bf16.msra.mxu0 %v1239
  %1706 = vmatprep.subr.bf16.mxu0 0
  %1707 = vmatpush2.bf16.msra.mxu0 %v1238
  %1708 = vmatprep.subr.bf16.mxu0 0
  %1709 = vmatpush2.bf16.msra.mxu0 %v1237
  %1710 = vmatprep.subr.bf16.mxu0 0
  %1711 = vmatpush2.bf16.msra.mxu0 %v1236
  %1712 = vmatprep.mubr.bf16.mxu0 %v533
  %1713 = vmatmul.mubr.bf16.gmra.mxu0 %v532
  %v1714 = vpop.f32.mrf.mxu0
  %v1715 = vadd.f32 %v1650, %v1714
  %v1716 = vpop.f32.mrf.mxu0
  %v1717 = vpop.f32.mrf.mxu0
  %v1718 = vadd.f32 %v1653, %v1717
  %v1719 = vpop.f32.mrf.mxu0
  %1720 = vmatprep.mubr.bf16.mxu0 %v549
  %1721 = vmatmul.mubr.bf16.gmra.mxu0 %v548
  %v1722 = vpop.f32.mrf.mxu0
  %v1723 = vadd.f32 %v1658, %v1722
  %v1724 = vpop.f32.mrf.mxu0
  %v1725 = vpop.f32.mrf.mxu0
  %v1726 = vadd.f32 %v1661, %v1725
  %v1727 = vpop.f32.mrf.mxu0
  %1728 = vmatprep.mubr.bf16.mxu0 %v565
  %1729 = vmatmul.mubr.bf16.gmra.mxu0 %v564
  %v1730 = vpop.f32.mrf.mxu0
  %v1731 = vadd.f32 %v1666, %v1730
  %v1732 = vpop.f32.mrf.mxu0
  %v1733 = vpop.f32.mrf.mxu0
  %v1734 = vadd.f32 %v1669, %v1733
  %v1735 = vpop.f32.mrf.mxu0
  %1736 = vmatprep.mubr.bf16.mxu0 %v581
  %1737 = vmatmul.mubr.bf16.gmra.mxu0 %v580
  %v1738 = vpop.f32.mrf.mxu0
  %v1739 = vadd.f32 %v1674, %v1738
  %v1740 = vpop.f32.mrf.mxu0
  %v1741 = vpop.f32.mrf.mxu0
  %v1742 = vadd.f32 %v1677, %v1741
  %v1743 = vpop.f32.mrf.mxu0
  %1744 = vdwg.mxu0
  %1745 = vmatprep.subr.bf16.mxu0 0
  %1746 = vmatpush1.bf16.msra.mxu0 %v1251
  %1747 = vmatprep.subr.bf16.mxu0 0
  %1748 = vmatpush1.bf16.msra.mxu0 %v1250
  %1749 = vmatprep.subr.bf16.mxu0 0
  %1750 = vmatpush1.bf16.msra.mxu0 %v1249
  %1751 = vmatprep.subr.bf16.mxu0 0
  %1752 = vmatpush1.bf16.msra.mxu0 %v1248
  %1753 = vmatprep.subr.bf16.mxu0 0
  %1754 = vmatpush1.bf16.msra.mxu0 %v1247
  %1755 = vmatprep.subr.bf16.mxu0 0
  %1756 = vmatpush1.bf16.msra.mxu0 %v1246
  %1757 = vmatprep.subr.bf16.mxu0 0
  %1758 = vmatpush1.bf16.msra.mxu0 %v1245
  %1759 = vmatprep.subr.bf16.mxu0 0
  %1760 = vmatpush1.bf16.msra.mxu0 %v1244
  %1761 = vmatprep.subr.bf16.mxu0 0
  %1762 = vmatpush2.bf16.msra.mxu0 %v1259
  %1763 = vmatprep.subr.bf16.mxu0 0
  %1764 = vmatpush2.bf16.msra.mxu0 %v1258
  %1765 = vmatprep.subr.bf16.mxu0 0
  %1766 = vmatpush2.bf16.msra.mxu0 %v1257
  %1767 = vmatprep.subr.bf16.mxu0 0
  %1768 = vmatpush2.bf16.msra.mxu0 %v1256
  %1769 = vmatprep.subr.bf16.mxu0 0
  %1770 = vmatpush2.bf16.msra.mxu0 %v1255
  %1771 = vmatprep.subr.bf16.mxu0 0
  %1772 = vmatpush2.bf16.msra.mxu0 %v1254
  %1773 = vmatprep.subr.bf16.mxu0 0
  %1774 = vmatpush2.bf16.msra.mxu0 %v1253
  %1775 = vmatprep.subr.bf16.mxu0 0
  %1776 = vmatpush2.bf16.msra.mxu0 %v1252
  %1777 = vmatprep.mubr.bf16.mxu0 %v535
  %1778 = vmatmul.mubr.bf16.gmra.mxu0 %v534
  %v1779 = vpop.f32.mrf.mxu0
  %v1780 = vadd.f32 %v1715, %v1779
  %v1781 = vpop.f32.mrf.mxu0
  %v1782 = vpop.f32.mrf.mxu0
  %v1783 = vadd.f32 %v1718, %v1782
  %v1784 = vpop.f32.mrf.mxu0
  %1785 = vmatprep.mubr.bf16.mxu0 %v551
  %1786 = vmatmul.mubr.bf16.gmra.mxu0 %v550
  %v1787 = vpop.f32.mrf.mxu0
  %v1788 = vadd.f32 %v1723, %v1787
  %v1789 = vpop.f32.mrf.mxu0
  %v1790 = vpop.f32.mrf.mxu0
  %v1791 = vadd.f32 %v1726, %v1790
  %v1792 = vpop.f32.mrf.mxu0
  %1793 = vmatprep.mubr.bf16.mxu0 %v567
  %1794 = vmatmul.mubr.bf16.gmra.mxu0 %v566
  %v1795 = vpop.f32.mrf.mxu0
  %v1796 = vadd.f32 %v1731, %v1795
  %v1797 = vpop.f32.mrf.mxu0
  %v1798 = vpop.f32.mrf.mxu0
  %v1799 = vadd.f32 %v1734, %v1798
  %v1800 = vpop.f32.mrf.mxu0
  %1801 = vmatprep.mubr.bf16.mxu0 %v583
  %1802 = vmatmul.mubr.bf16.gmra.mxu0 %v582
  %v1803 = vpop.f32.mrf.mxu0
  %v1804 = vadd.f32 %v1739, %v1803
  %v1805 = vpop.f32.mrf.mxu0
  %v1806 = vpop.f32.mrf.mxu0
  %v1807 = vadd.f32 %v1742, %v1806
  %v1808 = vpop.f32.mrf.mxu0
  %1809 = vdwg.mxu0
  %1810 = vmatprep.subr.bf16.mxu0 0
  %1811 = vmatpush1.bf16.msra.mxu0 %v1267
  %1812 = vmatprep.subr.bf16.mxu0 0
  %1813 = vmatpush1.bf16.msra.mxu0 %v1266
  %1814 = vmatprep.subr.bf16.mxu0 0
  %1815 = vmatpush1.bf16.msra.mxu0 %v1265
  %1816 = vmatprep.subr.bf16.mxu0 0
  %1817 = vmatpush1.bf16.msra.mxu0 %v1264
  %1818 = vmatprep.subr.bf16.mxu0 0
  %1819 = vmatpush1.bf16.msra.mxu0 %v1263
  %1820 = vmatprep.subr.bf16.mxu0 0
  %1821 = vmatpush1.bf16.msra.mxu0 %v1262
  %1822 = vmatprep.subr.bf16.mxu0 0
  %1823 = vmatpush1.bf16.msra.mxu0 %v1261
  %1824 = vmatprep.subr.bf16.mxu0 0
  %1825 = vmatpush1.bf16.msra.mxu0 %v1260
  %1826 = vmatprep.subr.bf16.mxu0 0
  %1827 = vmatpush2.bf16.msra.mxu0 %v1275
  %1828 = vmatprep.subr.bf16.mxu0 0
  %1829 = vmatpush2.bf16.msra.mxu0 %v1274
  %1830 = vmatprep.subr.bf16.mxu0 0
  %1831 = vmatpush2.bf16.msra.mxu0 %v1273
  %1832 = vmatprep.subr.bf16.mxu0 0
  %1833 = vmatpush2.bf16.msra.mxu0 %v1272
  %1834 = vmatprep.subr.bf16.mxu0 0
  %1835 = vmatpush2.bf16.msra.mxu0 %v1271
  %1836 = vmatprep.subr.bf16.mxu0 0
  %1837 = vmatpush2.bf16.msra.mxu0 %v1270
  %1838 = vmatprep.subr.bf16.mxu0 0
  %1839 = vmatpush2.bf16.msra.mxu0 %v1269
  %1840 = vmatprep.subr.bf16.mxu0 0
  %1841 = vmatpush2.bf16.msra.mxu0 %v1268
  %1842 = vmatprep.mubr.bf16.mxu0 %v537
  %1843 = vmatmul.mubr.bf16.gmra.mxu0 %v536
  %v1844 = vpop.f32.mrf.mxu0
  %v1845 = vadd.f32 %v1780, %v1844
  %v1846 = vpop.f32.mrf.mxu0
  %v1847 = vpop.f32.mrf.mxu0
  %v1848 = vadd.f32 %v1783, %v1847
  %v1849 = vpop.f32.mrf.mxu0
  %1850 = vmatprep.mubr.bf16.mxu0 %v553
  %1851 = vmatmul.mubr.bf16.gmra.mxu0 %v552
  %v1852 = vpop.f32.mrf.mxu0
  %v1853 = vadd.f32 %v1788, %v1852
  %v1854 = vpop.f32.mrf.mxu0
  %v1855 = vpop.f32.mrf.mxu0
  %v1856 = vadd.f32 %v1791, %v1855
  %v1857 = vpop.f32.mrf.mxu0
  %1858 = vmatprep.mubr.bf16.mxu0 %v569
  %1859 = vmatmul.mubr.bf16.gmra.mxu0 %v568
  %v1860 = vpop.f32.mrf.mxu0
  %v1861 = vadd.f32 %v1796, %v1860
  %v1862 = vpop.f32.mrf.mxu0
  %v1863 = vpop.f32.mrf.mxu0
  %v1864 = vadd.f32 %v1799, %v1863
  %v1865 = vpop.f32.mrf.mxu0
  %1866 = vmatprep.mubr.bf16.mxu0 %v585
  %1867 = vmatmul.mubr.bf16.gmra.mxu0 %v584
  %v1868 = vpop.f32.mrf.mxu0
  %v1869 = vadd.f32 %v1804, %v1868
  %v1870 = vpop.f32.mrf.mxu0
  %v1871 = vpop.f32.mrf.mxu0
  %v1872 = vadd.f32 %v1807, %v1871
  %v1873 = vpop.f32.mrf.mxu0
  %1874 = vdwg.mxu0
  %1875 = vmatprep.subr.bf16.mxu0 0
  %1876 = vmatpush1.bf16.msra.mxu0 %v1283
  %1877 = vmatprep.subr.bf16.mxu0 0
  %1878 = vmatpush1.bf16.msra.mxu0 %v1282
  %1879 = vmatprep.subr.bf16.mxu0 0
  %1880 = vmatpush1.bf16.msra.mxu0 %v1281
  %1881 = vmatprep.subr.bf16.mxu0 0
  %1882 = vmatpush1.bf16.msra.mxu0 %v1280
  %1883 = vmatprep.subr.bf16.mxu0 0
  %1884 = vmatpush1.bf16.msra.mxu0 %v1279
  %1885 = vmatprep.subr.bf16.mxu0 0
  %1886 = vmatpush1.bf16.msra.mxu0 %v1278
  %1887 = vmatprep.subr.bf16.mxu0 0
  %1888 = vmatpush1.bf16.msra.mxu0 %v1277
  %1889 = vmatprep.subr.bf16.mxu0 0
  %1890 = vmatpush1.bf16.msra.mxu0 %v1276
  %1891 = vmatprep.subr.bf16.mxu0 0
  %1892 = vmatpush2.bf16.msra.mxu0 %v1291
  %1893 = vmatprep.subr.bf16.mxu0 0
  %1894 = vmatpush2.bf16.msra.mxu0 %v1290
  %1895 = vmatprep.subr.bf16.mxu0 0
  %1896 = vmatpush2.bf16.msra.mxu0 %v1289
  %1897 = vmatprep.subr.bf16.mxu0 0
  %1898 = vmatpush2.bf16.msra.mxu0 %v1288
  %1899 = vmatprep.subr.bf16.mxu0 0
  %1900 = vmatpush2.bf16.msra.mxu0 %v1287
  %1901 = vmatprep.subr.bf16.mxu0 0
  %1902 = vmatpush2.bf16.msra.mxu0 %v1286
  %1903 = vmatprep.subr.bf16.mxu0 0
  %1904 = vmatpush2.bf16.msra.mxu0 %v1285
  %1905 = vmatprep.subr.bf16.mxu0 0
  %1906 = vmatpush2.bf16.msra.mxu0 %v1284
  %1907 = vmatprep.mubr.bf16.mxu0 %v539
  %1908 = vmatmul.mubr.bf16.gmra.mxu0 %v538
  %v1909 = vpop.f32.mrf.mxu0
  %v1910 = vadd.f32 %v1845, %v1909
  %v1911 = vpop.f32.mrf.mxu0
  %v1912 = vpop.f32.mrf.mxu0
  %v1913 = vadd.f32 %v1848, %v1912
  %v1914 = vpop.f32.mrf.mxu0
  %1915 = vmatprep.mubr.bf16.mxu0 %v555
  %1916 = vmatmul.mubr.bf16.gmra.mxu0 %v554
  %v1917 = vpop.f32.mrf.mxu0
  %v1918 = vadd.f32 %v1853, %v1917
  %v1919 = vpop.f32.mrf.mxu0
  %v1920 = vpop.f32.mrf.mxu0
  %v1921 = vadd.f32 %v1856, %v1920
  %v1922 = vpop.f32.mrf.mxu0
  %1923 = vmatprep.mubr.bf16.mxu0 %v571
  %1924 = vmatmul.mubr.bf16.gmra.mxu0 %v570
  %v1925 = vpop.f32.mrf.mxu0
  %v1926 = vadd.f32 %v1861, %v1925
  %v1927 = vpop.f32.mrf.mxu0
  %v1928 = vpop.f32.mrf.mxu0
  %v1929 = vadd.f32 %v1864, %v1928
  %v1930 = vpop.f32.mrf.mxu0
  %1931 = vmatprep.mubr.bf16.mxu0 %v587
  %1932 = vmatmul.mubr.bf16.gmra.mxu0 %v586
  %v1933 = vpop.f32.mrf.mxu0
  %v1934 = vadd.f32 %v1869, %v1933
  %v1935 = vpop.f32.mrf.mxu0
  %v1936 = vpop.f32.mrf.mxu0
  %v1937 = vadd.f32 %v1872, %v1936
  %v1938 = vpop.f32.mrf.mxu0
  %1939 = vdwg.mxu0
  %1940 = vst [vmem:[%s2] sm:$0xff] %v1910
  %1941 = vst [vmem:[%s2 + $0x8] sm:$0xff] %v1913
  %1942 = vst [vmem:[%s2 + $0x10] sm:$0xff] %v1918
  %1943 = vst [vmem:[%s2 + $0x18] sm:$0xff] %v1921
  %1944 = vst [vmem:[%s2 + $0x20] sm:$0xff] %v1926
  %1945 = vst [vmem:[%s2 + $0x28] sm:$0xff] %v1929
  %1946 = vst [vmem:[%s2 + $0x30] sm:$0xff] %v1934
  %1947 = vst [vmem:[%s2 + $0x38] sm:$0xff] %v1937
  // Predicated region
  $region10: #{voxel_vae_forward.12} parent=0 // pred_check
    _
  $region11: #{voxel_vae_forward.12} parent=0 // pred_check_branch
    %1949 = sbr.rel (0) target = $region13
  $region12: #{voxel_vae_forward.12} parent=0 // pred_region
    _
  $region13: #{voxel_vae_forward.12} parent=0 // pred_fallthru
    _
  // Predicated region
  $region14: #{voxel_vae_forward.12} parent=0 // pred_check
    _
  $region15: #{voxel_vae_forward.12} parent=0 // pred_check_branch
    %1951 = sbr.rel (0) target = $region17
  $region16: #{voxel_vae_forward.12} parent=0 // pred_region
    _
  $region17: #{voxel_vae_forward.12} parent=0 // pred_fallthru
    _

// kernel: voxel_vae_forward.13
$region0: #{voxel_vae_forward.13}
  #allocation0 [shape = 'u32[]', space=smem, size = 0x4, offset = 0x4, fixed_abs, tag = 'smem constant byte address 0x4 - core index']
  #allocation1 [shape = 'u32[144,128]{1,0:T(1,128)}', space=vmem, size = 0x12000, scoped, tag = 'internal scratch']
  %s0 = inlined_call_operand.vmem [shape: f32[64,128], index: 0, kind: input, shape index: {}]
  %s1 = inlined_call_operand.vmem [shape: f32[64,1], index: 1, kind: input, shape index: {}]
  %s2 = inlined_call_operand.vmem [shape: f32[64,1], index: 2, kind: input, shape index: {}]
  %s3 = inlined_call_operand.vmem [shape: bf16[64,128], index: 3, kind: output, shape index: {}]
  %s4 = sld [smem:[#allocation0]]
  $region45: #{voxel_vae_forward.13} parent=0
    _
  %s6 = ssub.s32 1, %s4
  %s7 = scalar_select 0, %s6, %s4
  loop: start=0, step=1, limit=6
  $region2: #{voxel_vae_forward.13} parent=0 // loop_pre_header
    _
  $region3: #{voxel_vae_forward.13} parent=0 // loop_header
    %s9 = sphi 0, %s13
    %p10 = scmp.ge.s32.totalorder %s9, 6
    %s19 = sphi 0, %s21
    %s22 = sphi 0, %s19
    %s23 = sphi 0, %s22
    %s39 = sphi 0, %s23
    %s45 = sphi 0, %s47
    %s48 = sphi 0, %s45
    %s49 = sphi 0, %s48
    %s65 = sphi 0, %s49
    %s71 = sphi 0, %s73
    %s74 = sphi 0, %s71
    %s75 = sphi 0, %s74
    %s91 = sphi 0, %s75
    %s97 = sphi 0, %s99
    %s100 = sphi 0, %s97
    %s101 = sphi 0, %s100
    %s117 = sphi 0, %s101
  $region4: #{voxel_vae_forward.13} parent=0 // loop_header_branch
    %12 = sbr.rel (%p10) target = $region8
  $region5: #{voxel_vae_forward.13} parent=0 // loop_body
    %s14 = ssub.s32 %s9, 1
    %s15 = ssub.s32 %s9, 2
    %s16 = sadd.s32 %s9, 1
    %s17 = ssub.s32 %s9, %s16
    %p18 = scmp.eq.s32.totalorder %s17, 0
    %s20 = sadd.s32 %s19, 1
    %s21 = scalar_select %p18, %s19, %s20
    %p24 = pneg %p18
    %p25 = scmp.eq.s32.totalorder %s9, 3
    %p26 = por %p24, %p25
    %p27 = scmp.ne.s32.totalorder %s19, %s22
    %p28 = scmp.eq.s32.totalorder %s9, 0
    %p29 = por %p27, %p28
    %p30 = scmp.ne.s32.totalorder %s19, %s22
    %p31 = scmp.eq.s32.totalorder %s14, 3
    %p32 = por %p30, %p31
    %p33 = scmp.ne.s32.totalorder %s22, %s23
    %p34 = scmp.eq.s32.totalorder %s14, 0
    %p35 = por %p33, %p34
    %p36 = scmp.ne.s32.totalorder %s22, %s23
    %p37 = scmp.eq.s32.totalorder %s15, 3
    %p38 = por %p36, %p37
    %p40 = scmp.ne.s32.totalorder %s23, %s39
    %p41 = scmp.eq.s32.totalorder %s15, 0
    %p42 = por %p40, %p41
    %s43 = ssub.s32 %s9, %s16
    %p44 = scmp.eq.s32.totalorder %s43, 0
    %s46 = sadd.s32 %s45, 1
    %s47 = scalar_select %p44, %s45, %s46
    %p50 = pneg %p44
    %p51 = scmp.eq.s32.totalorder %s9, 3
    %p52 = por %p50, %p51
    %p53 = scmp.ne.s32.totalorder %s45, %s48
    %p54 = scmp.eq.s32.totalorder %s9, 0
    %p55 = por %p53, %p54
    %p56 = scmp.ne.s32.totalorder %s45, %s48
    %p57 = scmp.eq.s32.totalorder %s14, 3
    %p58 = por %p56, %p57
    %p59 = scmp.ne.s32.totalorder %s48, %s49
    %p60 = scmp.eq.s32.totalorder %s14, 0
    %p61 = por %p59, %p60
    %p62 = scmp.ne.s32.totalorder %s48, %s49
    %p63 = scmp.eq.s32.totalorder %s15, 3
    %p64 = por %p62, %p63
    %p66 = scmp.ne.s32.totalorder %s49, %s65
    %p67 = scmp.eq.s32.totalorder %s15, 0
    %p68 = por %p66, %p67
    %s69 = ssub.s32 %s9, %s16
    %p70 = scmp.eq.s32.totalorder %s69, 0
    %s72 = sadd.s32 %s71, 1
    %s73 = scalar_select %p70, %s71, %s72
    %p76 = pneg %p70
    %p77 = scmp.eq.s32.totalorder %s9, 3
    %p78 = por %p76, %p77
    %p79 = scmp.ne.s32.totalorder %s71, %s74
    %p80 = scmp.eq.s32.totalorder %s9, 0
    %p81 = por %p79, %p80
    %p82 = scmp.ne.s32.totalorder %s71, %s74
    %p83 = scmp.eq.s32.totalorder %s14, 3
    %p84 = por %p82, %p83
    %p85 = scmp.ne.s32.totalorder %s74, %s75
    %p86 = scmp.eq.s32.totalorder %s14, 0
    %p87 = por %p85, %p86
    %p88 = scmp.ne.s32.totalorder %s74, %s75
    %p89 = scmp.eq.s32.totalorder %s15, 3
    %p90 = por %p88, %p89
    %p92 = scmp.ne.s32.totalorder %s75, %s91
    %p93 = scmp.eq.s32.totalorder %s15, 0
    %p94 = por %p92, %p93
    %s95 = ssub.s32 %s9, %s16
    %p96 = scmp.eq.s32.totalorder %s95, 0
    %s98 = sadd.s32 %s97, 1
    %s99 = scalar_select %p96, %s97, %s98
    %p102 = pneg %p96
    %p103 = scmp.eq.s32.totalorder %s9, 3
    %p104 = por %p102, %p103
    %p105 = scmp.ne.s32.totalorder %s97, %s100
    %p106 = scmp.eq.s32.totalorder %s9, 0
    %p107 = por %p105, %p106
    %p108 = scmp.ne.s32.totalorder %s97, %s100
    %p109 = scmp.eq.s32.totalorder %s14, 3
    %p110 = por %p108, %p109
    %p111 = scmp.ne.s32.totalorder %s100, %s101
    %p112 = scmp.eq.s32.totalorder %s14, 0
    %p113 = por %p111, %p112
    %p114 = scmp.ne.s32.totalorder %s100, %s101
    %p115 = scmp.eq.s32.totalorder %s15, 3
    %p116 = por %p114, %p115
    %p118 = scmp.ne.s32.totalorder %s101, %s117
    %p119 = scmp.eq.s32.totalorder %s15, 0
    %p120 = por %p118, %p119
    %p121 = scmp.le.s32.totalorder 1, %s9
    %p122 = scmp.lt.s32.totalorder %s9, 5
    %p123 = pnand %p121, %p122
    %p124 = pneg %p123
    // Predicated region
    $region9: #{voxel_vae_forward.13} parent=5 // pred_check
      _
    $region10: #{voxel_vae_forward.13} parent=5 // pred_check_branch
      %126 = sbr.rel (%p123) target = $region12
    $region11: #{voxel_vae_forward.13} parent=5 // pred_region
      %s127 = ssub.s32 %s9, 1
    $region12: #{voxel_vae_forward.13} parent=5 // pred_fallthru
      _
    %p128 = scmp.lt.s32.totalorder %s9, 4
    // Predicated region
    $region13: #{voxel_vae_forward.13} parent=5 // pred_check
      %p129 = pneg %p128
    $region14: #{voxel_vae_forward.13} parent=5 // pred_check_branch
      %131 = sbr.rel (%p129) target = $region16
    $region15: #{voxel_vae_forward.13} parent=5 // pred_region
      // Predicated region
      $region17: #{voxel_vae_forward.13} parent=15 // pred_check
        %p132 = pneg %p29
      $region18: #{voxel_vae_forward.13} parent=15 // pred_check_branch
        %134 = sbr.rel (%p132) target = $region20
      $region19: #{voxel_vae_forward.13} parent=15 // pred_region
        %s135 = smul.u32 2, %s9
        %p136 = scmp.lt.s32.totalorder %s135, 7
        %s137 = scalar_select %p136, %s135, 7
        %s138 = smul.addr %s137, 8
        %s139 = scalar_lea.vmem %s0, %s138
        %s140 = smul.u32 2, %s9
      $region20: #{voxel_vae_forward.13} parent=15 // pred_fallthru
        _
      // Predicated region
      $region21: #{voxel_vae_forward.13} parent=15 // pred_check
        %p141 = pneg %p55
      $region22: #{voxel_vae_forward.13} parent=15 // pred_check_branch
        %143 = sbr.rel (%p141) target = $region24
      $region23: #{voxel_vae_forward.13} parent=15 // pred_region
        %s144 = smul.u32 2, %s9
        %p145 = scmp.lt.s32.totalorder %s144, 7
        %s146 = scalar_select %p145, %s144, 7
        %s147 = smul.addr %s146, 8
        %s148 = scalar_lea.vmem %s1, %s147
        %s149 = smul.u32 2, %s9
      $region24: #{voxel_vae_forward.13} parent=15 // pred_fallthru
        _
      // Predicated region
      $region25: #{voxel_vae_forward.13} parent=15 // pred_check
        %p150 = pneg %p81
      $region26: #{voxel_vae_forward.13} parent=15 // pred_check_branch
        %152 = sbr.rel (%p150) target = $region28
      $region27: #{voxel_vae_forward.13} parent=15 // pred_region
        %s153 = smul.u32 2, %s9
        %p154 = scmp.lt.s32.totalorder %s153, 7
        %s155 = scalar_select %p154, %s153, 7
        %s156 = smul.addr %s155, 8
        %s157 = scalar_lea.vmem %s2, %s156
        %s158 = smul.u32 2, %s9
      $region28: #{voxel_vae_forward.13} parent=15 // pred_fallthru
        _
    $region16: #{voxel_vae_forward.13} parent=5 // pred_fallthru
      _
    %p159 = scmp.le.s32.totalorder 1, %s9
    %p160 = scmp.lt.s32.totalorder %s9, 5
    %p161 = pnand %p159, %p160
    %p162 = pneg %p161
    // Predicated region
    $region29: #{voxel_vae_forward.13} parent=5 // pred_check
      _
    $region30: #{voxel_vae_forward.13} parent=5 // pred_check_branch
      %164 = sbr.rel (%p161) target = $region32
    $region31: #{voxel_vae_forward.13} parent=5 // pred_region
      %s165 = ssub.s32 %s9, 1
      %s166 = smul.u32 2, %s14
      %p167 = scmp.lt.s32.totalorder %s166, 7
      %s168 = scalar_select %p167, %s166, 7
      %s169 = smul.addr %s168, 8
      %s170 = scalar_lea.vmem %s0, %s169
      %p171 = pneg %p35
      %p172 = pneg %p32
      %s173 = smul.u32 2, %s14
      %p174 = scmp.lt.s32.totalorder %s173, 7
      %s175 = scalar_select %p174, %s173, 7
      %s176 = smul.addr %s175, 8
      %s177 = scalar_lea.vmem %s1, %s176
      %p178 = pneg %p61
      %p179 = pneg %p58
      %s180 = smul.u32 2, %s14
      %p181 = scmp.lt.s32.totalorder %s180, 7
      %s182 = scalar_select %p181, %s180, 7
      %s183 = smul.addr %s182, 8
      %s184 = scalar_lea.vmem %s2, %s183
      %p185 = pneg %p87
      %p186 = pneg %p84
      %p187 = pneg %p113
      %p188 = pneg %p110
      %s189 = smul.u32 2, %s14
      %p190 = scmp.lt.s32.totalorder %s189, 7
      %s191 = scalar_select %p190, %s189, 7
      %s192 = smul.addr %s191, 4
      %s193 = scalar_lea.vmem %s3, %s192
      %s194 = smul.u32 2, %s14
      %p195 = scmp.lt.s32.totalorder %s194, 7
      %s196 = scalar_select %p195, %s194, 7
      %s197 = smul.addr %s196, 8
      %s198 = scalar_lea.vmem %s0, %s197
      %s199 = smul.u32 2, %s14
      %s200 = smul.u32 2, %s14
      %p201 = scmp.lt.s32.totalorder %s200, 7
      %s202 = scalar_select %p201, %s200, 7
      %s203 = smul.addr %s202, 8
      %s204 = scalar_lea.vmem %s1, %s203
      %s205 = smul.u32 2, %s14
      %s206 = smul.u32 2, %s14
      %p207 = scmp.lt.s32.totalorder %s206, 7
      %s208 = scalar_select %p207, %s206, 7
      %s209 = smul.addr %s208, 8
      %s210 = scalar_lea.vmem %s2, %s209
      %s211 = smul.u32 2, %s14
      %s212 = smul.u32 2, %s14
      %p213 = scmp.lt.s32.totalorder %s212, 7
      %s214 = scalar_select %p213, %s212, 7
      %s215 = smul.addr %s214, 4
      %s216 = scalar_lea.vmem %s3, %s215
      %s217 = smul.u32 2, %s14
      %v218 = vld [vmem:[%s198] sm:$0xff]
      %v219 = vld [vmem:[%s198 + $0x8] sm:$0xff]
      %220 = vadd.xlane.f32.xlu0 %v218
      %v221 = vpop.xlane.xlu0 %220
      %222 = vadd.xlane.f32.xlu0 %v219
      %v223 = vpop.xlane.xlu0 %222
      %v224 = vrcp.pop 128.0
      %v225 = vmul.f32 %v221, %v224
      %v226 = vmul.f32 %v223, %v224
      %v227 = vsub.f32 %v218, %v225
      %v228 = vsub.f32 %v219, %v226
      %v229 = vmul.f32 %v227, %v227
      %v230 = vmul.f32 %v228, %v228
      %231 = vadd.xlane.f32.xlu0 %v229
      %v232 = vpop.xlane.xlu0 %231
      %233 = vadd.xlane.f32.xlu0 %v230
      %v234 = vpop.xlane.xlu0 %233
      %v235 = vmul.f32 %v232, %v224
      %v236 = vmul.f32 %v234, %v224
      %v237 = vadd.f32 %v235, 1e-05
      %v238 = vadd.f32 %v236, 1e-05
      %v239 = vrsqrt.pop %v237
      %v240 = vrsqrt.pop %v238
      %v241 = vmul.f32 %v227, %v239
      %v242 = vmul.f32 %v228, %v240
      %v243 = vld [vmem:[%s204] sm:$0xff]
      %v244 = vld [vmem:[%s204 + $0x8] sm:$0xff]
      %246 = vset.pattern.permute.xlu0 0
      %247 = vperm.xlu0 %246, %v243
      %v248 = vpop.permute.xlu0 %247
      %251 = vset.pattern.permute.xlu0 0
      %252 = vperm.xlu0 %251, %v244
      %v253 = vpop.permute.xlu0 %252
      %v255 = vmul.f32 %v241, %v248
      %v256 = vmul.f32 %v242, %v253
      %v257 = vld [vmem:[%s210] sm:$0xff]
      %v258 = vld [vmem:[%s210 + $0x8] sm:$0xff]
      %260 = vset.pattern.permute.xlu0 0
      %261 = vperm.xlu0 %260, %v257
      %v262 = vpop.permute.xlu0 %261
      %265 = vset.pattern.permute.xlu0 0
      %266 = vperm.xlu0 %265, %v258
      %v267 = vpop.permute.xlu0 %266
      %v269 = vadd.f32 %v255, %v262
      %v270 = vadd.f32 %v256, %v267
      %vm271 = vcmp.ge.f32.partialorder %v269, 0.0
      %vm272 = vcmp.ge.f32.partialorder %v270, 0.0
      %v273 = vmul.f32 %v269, 0.2
      %v274 = vmul.f32 %v270, 0.2
      %v275 = vsel %vm271, %v269, %v273
      %v276 = vsel %vm272, %v270, %v274
      %v277 = vpack.c.bf16 %v276, %v275
      %v279 = vunpack.c.l.b16 %v277
      %v280 = vunpack.c.h.b16 %v277
      %v281 = vpack.c.b16 %v279, %v279
      %v282 = vpack.c.b16 %v280, %v280
      %285 = vst [vmem:[%s216] sm:$0xf] %v281
      %286 = vst [vmem:[%s216 + $0x4] sm:$0xf] %v282
      %s287 = smul.u32 2, %s14
      %p288 = scmp.lt.s32.totalorder %s287, 7
      %s289 = scalar_select %p288, %s287, 7
      %s290 = smul.addr %s289, 4
      %s291 = scalar_lea.vmem %s3, %s290
      // Predicated region
      $region33: #{voxel_vae_forward.13} parent=31 // pred_check
        %p292 = pneg %p110
      $region34: #{voxel_vae_forward.13} parent=31 // pred_check_branch
        %294 = sbr.rel (%p292) target = $region36
      $region35: #{voxel_vae_forward.13} parent=31 // pred_region
        %s295 = smul.u32 2, %s14
      $region36: #{voxel_vae_forward.13} parent=31 // pred_fallthru
        _
    $region32: #{voxel_vae_forward.13} parent=5 // pred_fallthru
      _
    %p296 = scmp.le.s32.totalorder 2, %s9
    // Predicated region
    $region37: #{voxel_vae_forward.13} parent=5 // pred_check
      %p297 = pneg %p296
    $region38: #{voxel_vae_forward.13} parent=5 // pred_check_branch
      %299 = sbr.rel (%p297) target = $region40
    $region39: #{voxel_vae_forward.13} parent=5 // pred_region
      %s300 = ssub.s32 %s9, 2
      // Predicated region
      $region41: #{voxel_vae_forward.13} parent=39 // pred_check
        %p301 = pneg %p116
      $region42: #{voxel_vae_forward.13} parent=39 // pred_check_branch
        %303 = sbr.rel (%p301) target = $region44
      $region43: #{voxel_vae_forward.13} parent=39 // pred_region
        %s304 = smul.u32 2, %s15
        %p305 = scmp.lt.s32.totalorder %s304, 7
        %s306 = scalar_select %p305, %s304, 7
        %s307 = smul.addr %s306, 4
        %s308 = scalar_lea.vmem %s3, %s307
      $region44: #{voxel_vae_forward.13} parent=39 // pred_fallthru
        _
    $region40: #{voxel_vae_forward.13} parent=5 // pred_fallthru
      _
  $region6: #{voxel_vae_forward.13} parent=0 // loop_footer
    %s13 = sadd.s32 1, %s9
  $region7: #{voxel_vae_forward.13} parent=0 // loop_footer_branch
    %8 = sbr.rel target = $region3
  $region8: #{voxel_vae_forward.13} parent=0 // loop_exit
    _

// kernel: voxel_vae_forward.15
$region0: #{voxel_vae_forward.15}
  #allocation0 [shape = 'u32[]', space=smem, size = 0x4, offset = 0x4, fixed_abs, tag = 'smem constant byte address 0x4 - core index']
  #allocation1 [shape = 'u32[144,128]{1,0:T(1,128)}', space=vmem, size = 0x12000, scoped, tag = 'internal scratch']
  %s0 = inlined_call_operand.vmem [shape: bf16[1,8,32], index: 0, kind: input, shape index: {}]
  %s1 = inlined_call_operand.vmem [shape: bf16[1,32,4096], index: 1, kind: input, shape index: {}]
  %s2 = inlined_call_operand.vmem [shape: f32[1,4096], index: 2, kind: input, shape index: {}]
  %s3 = inlined_call_operand.vmem [shape: f32[1,8,4096], index: 3, kind: output, shape index: {}]
  %s4 = sld [smem:[#allocation0]]
  $region68: #{voxel_vae_forward.15} parent=0
    _
  %s6 = ssub.s32 1, %s4
  %s7 = scalar_select 0, %s6, %s4
  $region1: #{voxel_vae_forward.15} parent=0
    #allocation2 [shape = 'u8[65536]{0}', space=vmem, size = 0x10000, scoped, tag = 'input window, operand 1']
    loop: start=0, step=1, limit=10
    $region2: #{voxel_vae_forward.15} parent=1 // loop_pre_header
      _
    $region3: #{voxel_vae_forward.15} parent=1 // loop_header
      %s9 = sphi 0, %s13
      %p10 = scmp.ge.s32.totalorder %s9, 10
      %s16 = sphi 0, %s28
      %s17 = sphi 0, %s24
      %s18 = sphi 0, %s16
      %s19 = sphi 0, %s17
      %s20 = sphi 0, %s18
      %s21 = sphi 0, %s19
      %s31 = sphi 0, %s33
      %s34 = sphi 0, %s31
      %s35 = sphi 0, %s34
      %s51 = sphi 0, %s35
      %s59 = sphi 0, %s61
      %s62 = sphi 0, %s59
      %s63 = sphi 0, %s62
      %s79 = sphi 0, %s63
      %s85 = sphi 0, %s87
      %s88 = sphi 0, %s85
      %s89 = sphi 0, %s88
      %s105 = sphi 0, %s89
      %s113 = sphi 0, %s115
      %s116 = sphi 0, %s113
      %s117 = sphi 0, %s116
      %s133 = sphi 0, %s117
    $region4: #{voxel_vae_forward.15} parent=1 // loop_header_branch
      %12 = sbr.rel (%p10) target = $region8
    $region5: #{voxel_vae_forward.15} parent=1 // loop_body
      %s14 = ssub.s32 %s9, 1
      %s15 = ssub.s32 %s9, 2
      %s22 = sadd.s32 1, %s17
      %p23 = scmp.ge.s32.totalorder %s22, 8
      %s24 = scalar_select %p23, 0, %s22
      %s25 = sadd.s32 1, %s16
      %s26 = scalar_select %p23, %s25, %s16
      %p27 = scmp.ge.s32.totalorder %s26, 1
      %s28 = scalar_select %p27, 0, %s26
      %s29 = ssub.s32 %s16, %s28
      %p30 = scmp.eq.s32.totalorder %s29, 0
      %s32 = sadd.s32 %s31, 1
      %s33 = scalar_select %p30, %s31, %s32
      %p36 = pneg %p30
      %p37 = scmp.eq.s32.totalorder %s9, 7
      %p38 = por %p36, %p37
      %p39 = scmp.ne.s32.totalorder %s31, %s34
      %p40 = scmp.eq.s32.totalorder %s9, 0
      %p41 = por %p39, %p40
      %p42 = scmp.ne.s32.totalorder %s31, %s34
      %p43 = scmp.eq.s32.totalorder %s14, 7
      %p44 = por %p42, %p43
      %p45 = scmp.ne.s32.totalorder %s34, %s35
      %p46 = scmp.eq.s32.totalorder %s14, 0
      %p47 = por %p45, %p46
      %p48 = scmp.ne.s32.totalorder %s34, %s35
      %p49 = scmp.eq.s32.totalorder %s15, 7
      %p50 = por %p48, %p49
      %p52 = scmp.ne.s32.totalorder %s35, %s51
      %p53 = scmp.eq.s32.totalorder %s15, 0
      %p54 = por %p52, %p53
      %s55 = ssub.s32 %s16, %s28
      %s56 = ssub.s32 %s17, %s24
      %s57 = sor.u32 %s55, %s56
      %p58 = scmp.eq.s32.totalorder %s57, 0
      %s60 = sadd.s32 %s59, 1
      %s61 = scalar_select %p58, %s59, %s60
      %p64 = pneg %p58
      %p65 = scmp.eq.s32.totalorder %s9, 7
      %p66 = por %p64, %p65
      %p67 = scmp.ne.s32.totalorder %s59, %s62
      %p68 = scmp.eq.s32.totalorder %s9, 0
      %p69 = por %p67, %p68
      %p70 = scmp.ne.s32.totalorder %s59, %s62
      %p71 = scmp.eq.s32.totalorder %s14, 7
      %p72 = por %p70, %p71
      %p73 = scmp.ne.s32.totalorder %s62, %s63
      %p74 = scmp.eq.s32.totalorder %s14, 0
      %p75 = por %p73, %p74
      %p76 = scmp.ne.s32.totalorder %s62, %s63
      %p77 = scmp.eq.s32.totalorder %s15, 7
      %p78 = por %p76, %p77
      %p80 = scmp.ne.s32.totalorder %s63, %s79
      %p81 = scmp.eq.s32.totalorder %s15, 0
      %p82 = por %p80, %p81
      %s83 = ssub.s32 %s17, %s24
      %p84 = scmp.eq.s32.totalorder %s83, 0
      %s86 = sadd.s32 %s85, 1
      %s87 = scalar_select %p84, %s85, %s86
      %p90 = pneg %p84
      %p91 = scmp.eq.s32.totalorder %s9, 7
      %p92 = por %p90, %p91
      %p93 = scmp.ne.s32.totalorder %s85, %s88
      %p94 = scmp.eq.s32.totalorder %s9, 0
      %p95 = por %p93, %p94
      %p96 = scmp.ne.s32.totalorder %s85, %s88
      %p97 = scmp.eq.s32.totalorder %s14, 7
      %p98 = por %p96, %p97
      %p99 = scmp.ne.s32.totalorder %s88, %s89
      %p100 = scmp.eq.s32.totalorder %s14, 0
      %p101 = por %p99, %p100
      %p102 = scmp.ne.s32.totalorder %s88, %s89
      %p103 = scmp.eq.s32.totalorder %s15, 7
      %p104 = por %p102, %p103
      %p106 = scmp.ne.s32.totalorder %s89, %s105
      %p107 = scmp.eq.s32.totalorder %s15, 0
      %p108 = por %p106, %p107
      %s109 = ssub.s32 %s16, %s28
      %s110 = ssub.s32 %s17, %s24
      %s111 = sor.u32 %s109, %s110
      %p112 = scmp.eq.s32.totalorder %s111, 0
      %s114 = sadd.s32 %s113, 1
      %s115 = scalar_select %p112, %s113, %s114
      %p118 = pneg %p112
      %p119 = scmp.eq.s32.totalorder %s9, 7
      %p120 = por %p118, %p119
      %p121 = scmp.ne.s32.totalorder %s113, %s116
      %p122 = scmp.eq.s32.totalorder %s9, 0
      %p123 = por %p121, %p122
      %p124 = scmp.ne.s32.totalorder %s113, %s116
      %p125 = scmp.eq.s32.totalorder %s14, 7
      %p126 = por %p124, %p125
      %p127 = scmp.ne.s32.totalorder %s116, %s117
      %p128 = scmp.eq.s32.totalorder %s14, 0
      %p129 = por %p127, %p128
      %p130 = scmp.ne.s32.totalorder %s116, %s117
      %p131 = scmp.eq.s32.totalorder %s15, 7
      %p132 = por %p130, %p131
      %p134 = scmp.ne.s32.totalorder %s117, %s133
      %p135 = scmp.eq.s32.totalorder %s15, 0
      %p136 = por %p134, %p135
      %p137 = scmp.le.s32.totalorder 1, %s9
      %p138 = scmp.lt.s32.totalorder %s9, 9
      %p139 = pnand %p137, %p138
      %p140 = pneg %p139
      // Predicated region
      $region9: #{voxel_vae_forward.15} parent=5 // pred_check
        _
      $region10: #{voxel_vae_forward.15} parent=5 // pred_check_branch
        %142 = sbr.rel (%p139) target = $region12
      $region11: #{voxel_vae_forward.15} parent=5 // pred_region
        %s143 = ssub.s32 %s9, 1
        // Predicated region
        $region13: #{voxel_vae_forward.15} parent=11 // pred_check
          %p144 = pneg %p47
        $region14: #{voxel_vae_forward.15} parent=11 // pred_check_branch
          %146 = sbr.rel (%p144) target = $region16
        $region15: #{voxel_vae_forward.15} parent=11 // pred_region
          %p147 = scmp.lt.s32.totalorder %s18, 0
          %s148 = scalar_select %p147, %s18, 0
          %s149 = smul.addr %s148, 4
          %s150 = scalar_lea.vmem %s0, %s149
        $region16: #{voxel_vae_forward.15} parent=11 // pred_fallthru
          _
      $region12: #{voxel_vae_forward.15} parent=5 // pred_fallthru
        _
      %p151 = scmp.lt.s32.totalorder %s9, 8
      // Predicated region
      $region17: #{voxel_vae_forward.15} parent=5 // pred_check
        %p152 = pneg %p151
      $region18: #{voxel_vae_forward.15} parent=5 // pred_check_branch
        %154 = sbr.rel (%p152) target = $region20
      $region19: #{voxel_vae_forward.15} parent=5 // pred_region
        // Predicated region
        $region21: #{voxel_vae_forward.15} parent=19 // pred_check
          %p155 = pneg %p69
        $region22: #{voxel_vae_forward.15} parent=19 // pred_check_branch
          %157 = sbr.rel (%p155) target = $region24
        $region23: #{voxel_vae_forward.15} parent=19 // pred_region
          %s158 = sand.u32 %s59, 1
          %s159 = sand.u32 %s59, 1
          %s160 = smul.addr %s159, 64
          %s161 = scalar_lea.vmem [#allocation2], %s160
          %s162 = smul.u32 4, %s17
          %s163 = smul.addr %s16, 128
          %s164 = sadd.s32 %s162, %s163
          %s165 = smul.addr %s164, 4
          %s166 = scalar_lea.vmem %s1, %s165
          // Predicated region
          $region25: #{voxel_vae_forward.15} parent=23 // pred_check
            _
          $region26: #{voxel_vae_forward.15} parent=23 // pred_check_branch
            %168 = sbr.rel (0) target = $region28
          $region27: #{voxel_vae_forward.15} parent=23 // pred_region
            // Predicated region
            $region29: #{voxel_vae_forward.15} parent=27 // pred_check
              _
            $region30: #{voxel_vae_forward.15} parent=27 // pred_check_branch
              %170 = sbr.rel (0) target = $region32
            $region31: #{voxel_vae_forward.15} parent=27 // pred_region
              loop: start=0, step=1, limit=1
              $region33: #{voxel_vae_forward.15} parent=31 // loop_pre_header
                _
              $region34: #{voxel_vae_forward.15} parent=31 // loop_header
                %s172 = sphi 0, %s176
                %p173 = scmp.ge.s32.totalorder %s172, 1
                %s177 = sphi %s166, %s166
                %s178 = sphi %s161, %s161
              $region35: #{voxel_vae_forward.15} parent=31 // loop_header_branch
                %175 = sbr.rel (%p173) target = $region39
              $region36: #{voxel_vae_forward.15} parent=31 // loop_body
                %v179 = vld [vmem:[%s177] sm:$0xff]
                %180 = vst [vmem:[%s178] sm:$0xff] %v179
                %v181 = vld [vmem:[%s177 + $0x8] sm:$0xff]
                %182 = vst [vmem:[%s178 + $0x8] sm:$0xff] %v181
                %v183 = vld [vmem:[%s177 + $0x80] sm:$0xff]
                %184 = vst [vmem:[%s178 + $0x10] sm:$0xff] %v183
                %v185 = vld [vmem:[%s177 + $0x88] sm:$0xff]
                %186 = vst [vmem:[%s178 + $0x18] sm:$0xff] %v185
                %v187 = vld [vmem:[%s177 + $0x100] sm:$0xff]
                %188 = vst [vmem:[%s178 + $0x20] sm:$0xff] %v187
                %v189 = vld [vmem:[%s177 + $0x108] sm:$0xff]
                %190 = vst [vmem:[%s178 + $0x28] sm:$0xff] %v189
                %v191 = vld [vmem:[%s177 + $0x180] sm:$0xff]
                %192 = vst [vmem:[%s178 + $0x30] sm:$0xff] %v191
                %v193 = vld [vmem:[%s177 + $0x188] sm:$0xff]
                %194 = vst [vmem:[%s178 + $0x38] sm:$0xff] %v193
              $region37: #{voxel_vae_forward.15} parent=31 // loop_footer
                %s176 = sadd.s32 1, %s172
              $region38: #{voxel_vae_forward.15} parent=31 // loop_footer_branch
                %171 = sbr.rel target = $region34
              $region39: #{voxel_vae_forward.15} parent=31 // loop_exit
                _
            $region32: #{voxel_vae_forward.15} parent=27 // pred_fallthru
              _
            // Predicated region
            $region40: #{voxel_vae_forward.15} parent=27 // pred_check
              _
            $region41: #{voxel_vae_forward.15} parent=27 // pred_check_branch
              %196 = sbr.rel target = $region43
            $region42: #{voxel_vae_forward.15} parent=27 // pred_region
              _
            $region43: #{voxel_vae_forward.15} parent=27 // pred_fallthru
              _
          $region28: #{voxel_vae_forward.15} parent=23 // pred_fallthru
            _
          %197 = vnop
        $region24: #{voxel_vae_forward.15} parent=19 // pred_fallthru
          _
        // Predicated region
        $region44: #{voxel_vae_forward.15} parent=19 // pred_check
          %p198 = pneg %p95
        $region45: #{voxel_vae_forward.15} parent=19 // pred_check_branch
          %200 = sbr.rel (%p198) target = $region47
        $region46: #{voxel_vae_forward.15} parent=19 // pred_region
          %s201 = smul.u32 4, %s17
          %p202 = scmp.lt.s32.totalorder %s201, 31
          %s203 = scalar_select %p202, %s201, 31
          %s204 = scalar_lea.vmem %s2, %s203
          %s205 = smul.u32 4, %s17
        $region47: #{voxel_vae_forward.15} parent=19 // pred_fallthru
          _
      $region20: #{voxel_vae_forward.15} parent=5 // pred_fallthru
        _
      %p206 = scmp.le.s32.totalorder 1, %s9
      %p207 = scmp.lt.s32.totalorder %s9, 9
      %p208 = pnand %p206, %p207
      %p209 = pneg %p208
      // Predicated region
      $region48: #{voxel_vae_forward.15} parent=5 // pred_check
        _
      $region49: #{voxel_vae_forward.15} parent=5 // pred_check_branch
        %211 = sbr.rel (%p208) target = $region51
      $region50: #{voxel_vae_forward.15} parent=5 // pred_region
        %s212 = ssub.s32 %s9, 1
        %s213 = sand.u32 %s62, 1
        %s214 = sand.u32 %s62, 1
        %s215 = smul.addr %s214, 64
        %s216 = scalar_lea.vmem [#allocation2], %s215
        // Predicated region
        $region52: #{voxel_vae_forward.15} parent=50 // pred_check
          %p217 = pneg %p75
        $region53: #{voxel_vae_forward.15} parent=50 // pred_check_branch
          %219 = sbr.rel (%p217) target = $region55
        $region54: #{voxel_vae_forward.15} parent=50 // pred_region
          _
        $region55: #{voxel_vae_forward.15} parent=50 // pred_fallthru
          _
        %p220 = scmp.lt.s32.totalorder %s18, 0
        %s221 = scalar_select %p220, %s18, 0
        %s222 = smul.addr %s221, 4
        %s223 = scalar_lea.vmem %s0, %s222
        %p224 = pneg %p47
        %p225 = pneg %p44
        %s226 = sand.u32 %s62, 1
        %s227 = sand.u32 %s62, 1
        %s228 = smul.addr %s227, 64
        %s229 = scalar_lea.vmem [#allocation2], %s228
        %p230 = pneg %p75
        %p231 = pneg %p72
        %s232 = smul.u32 4, %s19
        %p233 = scmp.lt.s32.totalorder %s232, 31
        %s234 = scalar_select %p233, %s232, 31
        %s235 = scalar_lea.vmem %s2, %s234
        %p236 = pneg %p101
        %p237 = pneg %p98
        %p238 = pneg %p129
        %p239 = pneg %p126
        %s240 = smul.u32 4, %s19
        %p241 = scmp.lt.s32.totalorder %s18, 0
        %s242 = scalar_select %p241, %s18, 0
        %p243 = scmp.lt.s32.totalorder %s240, 31
        %s244 = scalar_select %p243, %s240, 31
        %s245 = smul.addr %s242, 32
        %s246 = sadd.s32 %s244, %s245
        %s247 = smul.addr %s246, 8
        %s248 = scalar_lea.vmem %s3, %s247
        %p249 = scmp.lt.s32.totalorder %s18, 0
        %s250 = scalar_select %p249, %s18, 0
        %s251 = smul.addr %s250, 4
        %s252 = scalar_lea.vmem %s0, %s251
        %s253 = smul.u32 4, %s19
        %s254 = smul.u32 4, %s19
        %p255 = scmp.lt.s32.totalorder %s254, 31
        %s256 = scalar_select %p255, %s254, 31
        %s257 = scalar_lea.vmem %s2, %s256
        %s258 = smul.u32 4, %s19
        %s259 = smul.u32 4, %s19
        %p260 = scmp.lt.s32.totalorder %s18, 0
        %s261 = scalar_select %p260, %s18, 0
        %p262 = scmp.lt.s32.totalorder %s259, 31
        %s263 = scalar_select %p262, %s259, 31
        %s264 = smul.addr %s261, 32
        %s265 = sadd.s32 %s263, %s264
        %s266 = smul.addr %s265, 8
        %s267 = scalar_lea.vmem %s3, %s266
        %s268 = smul.u32 4, %s19
        %v270 = vld [vmem:[%s252] sm:$0xf]
        %v271 = vld [vmem:[%s216] sm:$0xff]
        %v272 = vld [vmem:[%s216 + $0x8] sm:$0xff]
        %v273 = vld [vmem:[%s216 + $0x10] sm:$0xff]
        %v274 = vld [vmem:[%s216 + $0x18] sm:$0xff]
        %v275 = vld [vmem:[%s216 + $0x20] sm:$0xff]
        %v276 = vld [vmem:[%s216 + $0x28] sm:$0xff]
        %v277 = vld [vmem:[%s216 + $0x30] sm:$0xff]
        %v278 = vld [vmem:[%s216 + $0x38] sm:$0xff]
        %v279 = vld [vmem:[%s257] sm:$0xf]
        %v281 = vlaneseq
        %v282 = vshrl.u32 %v281, 7
        %v283 = vsub.s32 0, %v282
        %v284 = vrot.slane %v279, %v283
        %v285 = vlaneseq
        %v286 = vshrl.u32 %v285, 7
        %v287 = vsub.s32 1, %v286
        %v288 = vrot.slane %v279, %v287
        %v289 = vlaneseq
        %v290 = vshrl.u32 %v289, 7
        %v291 = vsub.s32 2, %v290
        %v292 = vrot.slane %v279, %v291
        %v293 = vlaneseq
        %v294 = vshrl.u32 %v293, 7
        %v295 = vsub.s32 3, %v294
        %v296 = vrot.slane %v279, %v295
        %v309 = vunpack.c.l.b16 %v271
        %v310 = vunpack.c.h.b16 %v271
        %v311 = vunpack.c.l.b16 %v272
        %v312 = vunpack.c.h.b16 %v272
        %v313 = vunpack.c.l.b16 %v273
        %v314 = vunpack.c.h.b16 %v273
        %v315 = vunpack.c.l.b16 %v274
        %v316 = vunpack.c.h.b16 %v274
        %v317 = vunpack.c.l.b16 %v275
        %v318 = vunpack.c.h.b16 %v275
        %v319 = vunpack.c.l.b16 %v276
        %v320 = vunpack.c.h.b16 %v276
        %v321 = vunpack.c.l.b16 %v277
        %v322 = vunpack.c.h.b16 %v277
        %v323 = vunpack.c.l.b16 %v278
        %v324 = vunpack.c.h.b16 %v278
        %v325 = vpack.c.b16 %v313, %v309
        %v326 = vpack.c.b16 %v314, %v310
        %v327 = vpack.c.b16 %v315, %v311
        %v328 = vpack.c.b16 %v316, %v312
        %v329 = vpack.c.b16 %v321, %v317
        %v330 = vpack.c.b16 %v322, %v318
        %v331 = vpack.c.b16 %v323, %v319
        %v332 = vpack.c.b16 %v324, %v320
        %vm341 = vcmask 261120
        %v343 = vsel %vm341, %v270, 0
        %345 = vmatprep.subr.bf16.mxu0 0
        %346 = vmatpush1.bf16.msra.mxu0 0
        %347 = vmatprep.subr.bf16.mxu0 0
        %348 = vmatpush1.bf16.msra.mxu0 0
        %349 = vmatprep.subr.bf16.mxu0 0
        %350 = vmatpush1.bf16.msra.mxu0 0
        %351 = vmatprep.subr.bf16.mxu0 0
        %352 = vmatpush1.bf16.msra.mxu0 0
        %353 = vmatprep.subr.bf16.mxu0 0
        %354 = vmatpush1.bf16.msra.mxu0 0
        %355 = vmatprep.subr.bf16.mxu0 0
        %356 = vmatpush1.bf16.msra.mxu0 0
        %357 = vmatprep.subr.bf16.mxu0 %v330
        %358 = vmatpush1.bf16.msra.mxu0 %v329
        %359 = vmatprep.subr.bf16.mxu0 %v326
        %360 = vmatpush1.bf16.msra.mxu0 %v325
        %361 = vmatprep.subr.bf16.mxu0 0
        %362 = vmatpush2.bf16.msra.mxu0 0
        %363 = vmatprep.subr.bf16.mxu0 0
        %364 = vmatpush2.bf16.msra.mxu0 0
        %365 = vmatprep.subr.bf16.mxu0 0
        %366 = vmatpush2.bf16.msra.mxu0 0
        %367 = vmatprep.subr.bf16.mxu0 0
        %368 = vmatpush2.bf16.msra.mxu0 0
        %369 = vmatprep.subr.bf16.mxu0 0
        %370 = vmatpush2.bf16.msra.mxu0 0
        %371 = vmatprep.subr.bf16.mxu0 0
        %372 = vmatpush2.bf16.msra.mxu0 0
        %373 = vmatprep.subr.bf16.mxu0 0
        %374 = vmatpush2.bf16.msra.mxu0 0
        %375 = vmatprep.subr.bf16.mxu0 0
        %376 = vmatpush2.bf16.msra.mxu0 0
        %377 = vmatprep.mubr.bf16.mxu0 0
        %378 = vmatmul.mubr.bf16.gmra.mxu0 %v343
        %v379 = vpop.f32.mrf.mxu0
        %v380 = vadd.f32 %v284, %v379
        %v381 = vpop.f32.mrf.mxu0
        %v382 = vadd.f32 %v288, %v381
        %v383 = vpop.f32.mrf.mxu0
        %v384 = vpop.f32.mrf.mxu0
        %385 = vdwg.mxu0
        %386 = vmatprep.subr.bf16.mxu0 0
        %387 = vmatpush1.bf16.msra.mxu0 0
        %388 = vmatprep.subr.bf16.mxu0 0
        %389 = vmatpush1.bf16.msra.mxu0 0
        %390 = vmatprep.subr.bf16.mxu0 0
        %391 = vmatpush1.bf16.msra.mxu0 0
        %392 = vmatprep.subr.bf16.mxu0 0
        %393 = vmatpush1.bf16.msra.mxu0 0
        %394 = vmatprep.subr.bf16.mxu0 0
        %395 = vmatpush1.bf16.msra.mxu0 0
        %396 = vmatprep.subr.bf16.mxu0 0
        %397 = vmatpush1.bf16.msra.mxu0 0
        %398 = vmatprep.subr.bf16.mxu0 %v332
        %399 = vmatpush1.bf16.msra.mxu0 %v331
        %400 = vmatprep.subr.bf16.mxu0 %v328
        %401 = vmatpush1.bf16.msra.mxu0 %v327
        %402 = vmatprep.subr.bf16.mxu0 0
        %403 = vmatpush2.bf16.msra.mxu0 0
        %404 = vmatprep.subr.bf16.mxu0 0
        %405 = vmatpush2.bf16.msra.mxu0 0
        %406 = vmatprep.subr.bf16.mxu0 0
        %407 = vmatpush2.bf16.msra.mxu0 0
        %408 = vmatprep.subr.bf16.mxu0 0
        %409 = vmatpush2.bf16.msra.mxu0 0
        %410 = vmatprep.subr.bf16.mxu0 0
        %411 = vmatpush2.bf16.msra.mxu0 0
        %412 = vmatprep.subr.bf16.mxu0 0
        %413 = vmatpush2.bf16.msra.mxu0 0
        %414 = vmatprep.subr.bf16.mxu0 0
        %415 = vmatpush2.bf16.msra.mxu0 0
        %416 = vmatprep.subr.bf16.mxu0 0
        %417 = vmatpush2.bf16.msra.mxu0 0
        %418 = vmatprep.mubr.bf16.mxu0 0
        %419 = vmatmul.mubr.bf16.gmra.mxu0 %v343
        %v420 = vpop.f32.mrf.mxu0
        %v421 = vadd.f32 %v292, %v420
        %v422 = vpop.f32.mrf.mxu0
        %v423 = vadd.f32 %v296, %v422
        %v424 = vpop.f32.mrf.mxu0
        %v425 = vpop.f32.mrf.mxu0
        %426 = vdwg.mxu0
        %427 = vst [vmem:[%s267] sm:$0xff] %v380
        %428 = vst [vmem:[%s267 + $0x8] sm:$0xff] %v382
        %429 = vst [vmem:[%s267 + $0x10] sm:$0xff] %v421
        %430 = vst [vmem:[%s267 + $0x18] sm:$0xff] %v423
        %s431 = smul.u32 4, %s19
        %p432 = scmp.lt.s32.totalorder %s18, 0
        %s433 = scalar_select %p432, %s18, 0
        %p434 = scmp.lt.s32.totalorder %s431, 31
        %s435 = scalar_select %p434, %s431, 31
        %s436 = smul.addr %s433, 32
        %s437 = sadd.s32 %s435, %s436
        %s438 = smul.addr %s437, 8
        %s439 = scalar_lea.vmem %s3, %s438
        // Predicated region
        $region56: #{voxel_vae_forward.15} parent=50 // pred_check
          %p440 = pneg %p126
        $region57: #{voxel_vae_forward.15} parent=50 // pred_check_branch
          %442 = sbr.rel (%p440) target = $region59
        $region58: #{voxel_vae_forward.15} parent=50 // pred_region
          %s443 = smul.u32 4, %s19
        $region59: #{voxel_vae_forward.15} parent=50 // pred_fallthru
          _
      $region51: #{voxel_vae_forward.15} parent=5 // pred_fallthru
        _
      %p444 = scmp.le.s32.totalorder 2, %s9
      // Predicated region
      $region60: #{voxel_vae_forward.15} parent=5 // pred_check
        %p445 = pneg %p444
      $region61: #{voxel_vae_forward.15} parent=5 // pred_check_branch
        %447 = sbr.rel (%p445) target = $region63
      $region62: #{voxel_vae_forward.15} parent=5 // pred_region
        %s448 = ssub.s32 %s9, 2
        // Predicated region
        $region64: #{voxel_vae_forward.15} parent=62 // pred_check
          %p449 = pneg %p132
        $region65: #{voxel_vae_forward.15} parent=62 // pred_check_branch
          %451 = sbr.rel (%p449) target = $region67
        $region66: #{voxel_vae_forward.15} parent=62 // pred_region
          %s452 = smul.u32 4, %s21
          %p453 = scmp.lt.s32.totalorder %s20, 0
          %s454 = scalar_select %p453, %s20, 0
          %p455 = scmp.lt.s32.totalorder %s452, 31
          %s456 = scalar_select %p455, %s452, 31
          %s457 = smul.addr %s454, 32
          %s458 = sadd.s32 %s456, %s457
          %s459 = smul.addr %s458, 8
          %s460 = scalar_lea.vmem %s3, %s459
        $region67: #{voxel_vae_forward.15} parent=62 // pred_fallthru
          _
      $region63: #{voxel_vae_forward.15} parent=5 // pred_fallthru
        _
    $region6: #{voxel_vae_forward.15} parent=1 // loop_footer
      %s13 = sadd.s32 1, %s9
    $region7: #{voxel_vae_forward.15} parent=1 // loop_footer_branch
      %8 = sbr.rel target = $region3
    $region8: #{voxel_vae_forward.15} parent=1 // loop_exit
      _

// kernel: voxel_vae_forward.14
$region0: #{voxel_vae_forward.14}
  #allocation0 [shape = 'u32[]', space=smem, size = 0x4, offset = 0x4, fixed_abs, tag = 'smem constant byte address 0x4 - core index']
  #allocation1 [shape = 'u32[144,128]{1,0:T(1,128)}', space=vmem, size = 0x12000, scoped, tag = 'internal scratch']
  %s0 = inlined_call_operand.vmem [shape: bf16[1,8,4096], index: 0, kind: input, shape index: {}]
  %s1 = inlined_call_operand.vmem [shape: bf16[1,4096,64], index: 1, kind: input, shape index: {}]
  %s2 = inlined_call_operand.vmem [shape: f32[1,64], index: 2, kind: input, shape index: {}]
  %s3 = inlined_call_operand.vmem [shape: f32[1,8,64], index: 3, kind: output, shape index: {}]
  %s4 = sld [smem:[#allocation0]]
  $region22: #{voxel_vae_forward.14} parent=0
    _
  %s6 = ssub.s32 1, %s4
  %s7 = scalar_select 0, %s6, %s4
  // Predicated region
  $region2: #{voxel_vae_forward.14} parent=0 // pred_check
    _
  $region3: #{voxel_vae_forward.14} parent=0 // pred_check_branch
    %9 = sbr.rel (0) target = $region5
  $region4: #{voxel_vae_forward.14} parent=0 // pred_region
    _
  $region5: #{voxel_vae_forward.14} parent=0 // pred_fallthru
    _
  // Predicated region
  $region6: #{voxel_vae_forward.14} parent=0 // pred_check
    _
  $region7: #{voxel_vae_forward.14} parent=0 // pred_check_branch
    %11 = sbr.rel (0) target = $region9
  $region8: #{voxel_vae_forward.14} parent=0 // pred_region
    _
  $region9: #{voxel_vae_forward.14} parent=0 // pred_fallthru
    _
  // Predicated region
  $region10: #{voxel_vae_forward.14} parent=0 // pred_check
    _
  $region11: #{voxel_vae_forward.14} parent=0 // pred_check_branch
    %13 = sbr.rel (0) target = $region13
  $region12: #{voxel_vae_forward.14} parent=0 // pred_region
    _
  $region13: #{voxel_vae_forward.14} parent=0 // pred_fallthru
    _
  %v15 = vld [vmem:[%s0] sm:$0xff]
  %v16 = vld [vmem:[%s0 + $0x8] sm:$0xff]
  %v17 = vld [vmem:[%s0 + $0x10] sm:$0xff]
  %v18 = vld [vmem:[%s0 + $0x18] sm:$0xff]
  %v19 = vld [vmem:[%s0 + $0x20] sm:$0xff]
  %v20 = vld [vmem:[%s0 + $0x28] sm:$0xff]
  %v21 = vld [vmem:[%s0 + $0x30] sm:$0xff]
  %v22 = vld [vmem:[%s0 + $0x38] sm:$0xff]
  %v23 = vld [vmem:[%s0 + $0x40] sm:$0xff]
  %v24 = vld [vmem:[%s0 + $0x48] sm:$0xff]
  %v25 = vld [vmem:[%s0 + $0x50] sm:$0xff]
  %v26 = vld [vmem:[%s0 + $0x58] sm:$0xff]
  %v27 = vld [vmem:[%s0 + $0x60] sm:$0xff]
  %v28 = vld [vmem:[%s0 + $0x68] sm:$0xff]
  %v29 = vld [vmem:[%s0 + $0x70] sm:$0xff]
  %v30 = vld [vmem:[%s0 + $0x78] sm:$0xff]
  %v31 = vld [vmem:[%s1] sm:$0xf]
  %v32 = vld [vmem:[%s1 + $0x4] sm:$0xf]
  %v33 = vld [vmem:[%s1 + $0x8] sm:$0xf]
  %v34 = vld [vmem:[%s1 + $0xc] sm:$0xf]
  %v35 = vld [vmem:[%s1 + $0x10] sm:$0xf]
  %v36 = vld [vmem:[%s1 + $0x14] sm:$0xf]
  %v37 = vld [vmem:[%s1 + $0x18] sm:$0xf]
  %v38 = vld [vmem:[%s1 + $0x1c] sm:$0xf]
  %v39 = vld [vmem:[%s1 + $0x20] sm:$0xf]
  %v40 = vld [vmem:[%s1 + $0x24] sm:$0xf]
  %v41 = vld [vmem:[%s1 + $0x28] sm:$0xf]
  %v42 = vld [vmem:[%s1 + $0x2c] sm:$0xf]
  %v43 = vld [vmem:[%s1 + $0x30] sm:$0xf]
  %v44 = vld [vmem:[%s1 + $0x34] sm:$0xf]
  %v45 = vld [vmem:[%s1 + $0x38] sm:$0xf]
  %v46 = vld [vmem:[%s1 + $0x3c] sm:$0xf]
  %v47 = vld [vmem:[%s1 + $0x40] sm:$0xf]
  %v48 = vld [vmem:[%s1 + $0x44] sm:$0xf]
  %v49 = vld [vmem:[%s1 + $0x48] sm:$0xf]
  %v50 = vld [vmem:[%s1 + $0x4c] sm:$0xf]
  %v51 = vld [vmem:[%s1 + $0x50] sm:$0xf]
  %v52 = vld [vmem:[%s1 + $0x54] sm:$0xf]
  %v53 = vld [vmem:[%s1 + $0x58] sm:$0xf]
  %v54 = vld [vmem:[%s1 + $0x5c] sm:$0xf]
  %v55 = vld [vmem:[%s1 + $0x60] sm:$0xf]
  %v56 = vld [vmem:[%s1 + $0x64] sm:$0xf]
  %v57 = vld [vmem:[%s1 + $0x68] sm:$0xf]
  %v58 = vld [vmem:[%s1 + $0x6c] sm:$0xf]
  %v59 = vld [vmem:[%s1 + $0x70] sm:$0xf]
  %v60 = vld [vmem:[%s1 + $0x74] sm:$0xf]
  %v61 = vld [vmem:[%s1 + $0x78] sm:$0xf]
  %v62 = vld [vmem:[%s1 + $0x7c] sm:$0xf]
  %v63 = vld [vmem:[%s1 + $0x80] sm:$0xf]
  %v64 = vld [vmem:[%s1 + $0x84] sm:$0xf]
  %v65 = vld [vmem:[%s1 + $0x88] sm:$0xf]
  %v66 = vld [vmem:[%s1 + $0x8c] sm:$0xf]
  %v67 = vld [vmem:[%s1 + $0x90] sm:$0xf]
  %v68 = vld [vmem:[%s1 + $0x94] sm:$0xf]
  %v69 = vld [vmem:[%s1 + $0x98] sm:$0xf]
  %v70 = vld [vmem:[%s1 + $0x9c] sm:$0xf]
  %v71 = vld [vmem:[%s1 + $0xa0] sm:$0xf]
  %v72 = vld [vmem:[%s1 + $0xa4] sm:$0xf]
  %v73 = vld [vmem:[%s1 + $0xa8] sm:$0xf]
  %v74 = vld [vmem:[%s1 + $0xac] sm:$0xf]
  %v75 = vld [vmem:[%s1 + $0xb0] sm:$0xf]
  %v76 = vld [vmem:[%s1 + $0xb4] sm:$0xf]
  %v77 = vld [vmem:[%s1 + $0xb8] sm:$0xf]
  %v78 = vld [vmem:[%s1 + $0xbc] sm:$0xf]
  %v79 = vld [vmem:[%s1 + $0xc0] sm:$0xf]
  %v80 = vld [vmem:[%s1 + $0xc4] sm:$0xf]
  %v81 = vld [vmem:[%s1 + $0xc8] sm:$0xf]
  %v82 = vld [vmem:[%s1 + $0xcc] sm:$0xf]
  %v83 = vld [vmem:[%s1 + $0xd0] sm:$0xf]
  %v84 = vld [vmem:[%s1 + $0xd4] sm:$0xf]
  %v85 = vld [vmem:[%s1 + $0xd8] sm:$0xf]
  %v86 = vld [vmem:[%s1 + $0xdc] sm:$0xf]
  %v87 = vld [vmem:[%s1 + $0xe0] sm:$0xf]
  %v88 = vld [vmem:[%s1 + $0xe4] sm:$0xf]
  %v89 = vld [vmem:[%s1 + $0xe8] sm:$0xf]
  %v90 = vld [vmem:[%s1 + $0xec] sm:$0xf]
  %v91 = vld [vmem:[%s1 + $0xf0] sm:$0xf]
  %v92 = vld [vmem:[%s1 + $0xf4] sm:$0xf]
  %v93 = vld [vmem:[%s1 + $0xf8] sm:$0xf]
  %v94 = vld [vmem:[%s1 + $0xfc] sm:$0xf]
  %v95 = vld [vmem:[%s1 + $0x100] sm:$0xf]
  %v96 = vld [vmem:[%s1 + $0x104] sm:$0xf]
  %v97 = vld [vmem:[%s1 + $0x108] sm:$0xf]
  %v98 = vld [vmem:[%s1 + $0x10c] sm:$0xf]
  %v99 = vld [vmem:[%s1 + $0x110] sm:$0xf]
  %v100 = vld [vmem:[%s1 + $0x114] sm:$0xf]
  %v101 = vld [vmem:[%s1 + $0x118] sm:$0xf]
  %v102 = vld [vmem:[%s1 + $0x11c] sm:$0xf]
  %v103 = vld [vmem:[%s1 + $0x120] sm:$0xf]
  %v104 = vld [vmem:[%s1 + $0x124] sm:$0xf]
  %v105 = vld [vmem:[%s1 + $0x128] sm:$0xf]
  %v106 = vld [vmem:[%s1 + $0x12c] sm:$0xf]
  %v107 = vld [vmem:[%s1 + $0x130] sm:$0xf]
  %v108 = vld [vmem:[%s1 + $0x134] sm:$0xf]
  %v109 = vld [vmem:[%s1 + $0x138] sm:$0xf]
  %v110 = vld [vmem:[%s1 + $0x13c] sm:$0xf]
  %v111 = vld [vmem:[%s1 + $0x140] sm:$0xf]
  %v112 = vld [vmem:[%s1 + $0x144] sm:$0xf]
  %v113 = vld [vmem:[%s1 + $0x148] sm:$0xf]
  %v114 = vld [vmem:[%s1 + $0x14c] sm:$0xf]
  %v115 = vld [vmem:[%s1 + $0x150] sm:$0xf]
  %v116 = vld [vmem:[%s1 + $0x154] sm:$0xf]
  %v117 = vld [vmem:[%s1 + $0x158] sm:$0xf]
  %v118 = vld [vmem:[%s1 + $0x15c] sm:$0xf]
  %v119 = vld [vmem:[%s1 + $0x160] sm:$0xf]
  %v120 = vld [vmem:[%s1 + $0x164] sm:$0xf]
  %v121 = vld [vmem:[%s1 + $0x168] sm:$0xf]
  %v122 = vld [vmem:[%s1 + $0x16c] sm:$0xf]
  %v123 = vld [vmem:[%s1 + $0x170] sm:$0xf]
  %v124 = vld [vmem:[%s1 + $0x174] sm:$0xf]
  %v125 = vld [vmem:[%s1 + $0x178] sm:$0xf]
  %v126 = vld [vmem:[%s1 + $0x17c] sm:$0xf]
  %v127 = vld [vmem:[%s1 + $0x180] sm:$0xf]
  %v128 = vld [vmem:[%s1 + $0x184] sm:$0xf]
  %v129 = vld [vmem:[%s1 + $0x188] sm:$0xf]
  %v130 = vld [vmem:[%s1 + $0x18c] sm:$0xf]
  %v131 = vld [vmem:[%s1 + $0x190] sm:$0xf]
  %v132 = vld [vmem:[%s1 + $0x194] sm:$0xf]
  %v133 = vld [vmem:[%s1 + $0x198] sm:$0xf]
  %v134 = vld [vmem:[%s1 + $0x19c] sm:$0xf]
  %v135 = vld [vmem:[%s1 + $0x1a0] sm:$0xf]
  %v136 = vld [vmem:[%s1 + $0x1a4] sm:$0xf]
  %v137 = vld [vmem:[%s1 + $0x1a8] sm:$0xf]
  %v138 = vld [vmem:[%s1 + $0x1ac] sm:$0xf]
  %v139 = vld [vmem:[%s1 + $0x1b0] sm:$0xf]
  %v140 = vld [vmem:[%s1 + $0x1b4] sm:$0xf]
  %v141 = vld [vmem:[%s1 + $0x1b8] sm:$0xf]
  %v142 = vld [vmem:[%s1 + $0x1bc] sm:$0xf]
  %v143 = vld [vmem:[%s1 + $0x1c0] sm:$0xf]
  %v144 = vld [vmem:[%s1 + $0x1c4] sm:$0xf]
  %v145 = vld [vmem:[%s1 + $0x1c8] sm:$0xf]
  %v146 = vld [vmem:[%s1 + $0x1cc] sm:$0xf]
  %v147 = vld [vmem:[%s1 + $0x1d0] sm:$0xf]
  %v148 = vld [vmem:[%s1 + $0x1d4] sm:$0xf]
  %v149 = vld [vmem:[%s1 + $0x1d8] sm:$0xf]
  %v150 = vld [vmem:[%s1 + $0x1dc] sm:$0xf]
  %v151 = vld [vmem:[%s1 + $0x1e0] sm:$0xf]
  %v152 = vld [vmem:[%s1 + $0x1e4] sm:$0xf]
  %v153 = vld [vmem:[%s1 + $0x1e8] sm:$0xf]
  %v154 = vld [vmem:[%s1 + $0x1ec] sm:$0xf]
  %v155 = vld [vmem:[%s1 + $0x1f0] sm:$0xf]
  %v156 = vld [vmem:[%s1 + $0x1f4] sm:$0xf]
  %v157 = vld [vmem:[%s1 + $0x1f8] sm:$0xf]
  %v158 = vld [vmem:[%s1 + $0x1fc] sm:$0xf]
  %v159 = vld [vmem:[%s1 + $0x200] sm:$0xf]
  %v160 = vld [vmem:[%s1 + $0x204] sm:$0xf]
  %v161 = vld [vmem:[%s1 + $0x208] sm:$0xf]
  %v162 = vld [vmem:[%s1 + $0x20c] sm:$0xf]
  %v163 = vld [vmem:[%s1 + $0x210] sm:$0xf]
  %v164 = vld [vmem:[%s1 + $0x214] sm:$0xf]
  %v165 = vld [vmem:[%s1 + $0x218] sm:$0xf]
  %v166 = vld [vmem:[%s1 + $0x21c] sm:$0xf]
  %v167 = vld [vmem:[%s1 + $0x220] sm:$0xf]
  %v168 = vld [vmem:[%s1 + $0x224] sm:$0xf]
  %v169 = vld [vmem:[%s1 + $0x228] sm:$0xf]
  %v170 = vld [vmem:[%s1 + $0x22c] sm:$0xf]
  %v171 = vld [vmem:[%s1 + $0x230] sm:$0xf]
  %v172 = vld [vmem:[%s1 + $0x234] sm:$0xf]
  %v173 = vld [vmem:[%s1 + $0x238] sm:$0xf]
  %v174 = vld [vmem:[%s1 + $0x23c] sm:$0xf]
  %v175 = vld [vmem:[%s1 + $0x240] sm:$0xf]
  %v176 = vld [vmem:[%s1 + $0x244] sm:$0xf]
  %v177 = vld [vmem:[%s1 + $0x248] sm:$0xf]
  %v178 = vld [vmem:[%s1 + $0x24c] sm:$0xf]
  %v179 = vld [vmem:[%s1 + $0x250] sm:$0xf]
  %v180 = vld [vmem:[%s1 + $0x254] sm:$0xf]
  %v181 = vld [vmem:[%s1 + $0x258] sm:$0xf]
  %v182 = vld [vmem:[%s1 + $0x25c] sm:$0xf]
  %v183 = vld [vmem:[%s1 + $0x260] sm:$0xf]
  %v184 = vld [vmem:[%s1 + $0x264] sm:$0xf]
  %v185 = vld [vmem:[%s1 + $0x268] sm:$0xf]
  %v186 = vld [vmem:[%s1 + $0x26c] sm:$0xf]
  %v187 = vld [vmem:[%s1 + $0x270] sm:$0xf]
  %v188 = vld [vmem:[%s1 + $0x274] sm:$0xf]
  %v189 = vld [vmem:[%s1 + $0x278] sm:$0xf]
  %v190 = vld [vmem:[%s1 + $0x27c] sm:$0xf]
  %v191 = vld [vmem:[%s1 + $0x280] sm:$0xf]
  %v192 = vld [vmem:[%s1 + $0x284] sm:$0xf]
  %v193 = vld [vmem:[%s1 + $0x288] sm:$0xf]
  %v194 = vld [vmem:[%s1 + $0x28c] sm:$0xf]
  %v195 = vld [vmem:[%s1 + $0x290] sm:$0xf]
  %v196 = vld [vmem:[%s1 + $0x294] sm:$0xf]
  %v197 = vld [vmem:[%s1 + $0x298] sm:$0xf]
  %v198 = vld [vmem:[%s1 + $0x29c] sm:$0xf]
  %v199 = vld [vmem:[%s1 + $0x2a0] sm:$0xf]
  %v200 = vld [vmem:[%s1 + $0x2a4] sm:$0xf]
  %v201 = vld [vmem:[%s1 + $0x2a8] sm:$0xf]
  %v202 = vld [vmem:[%s1 + $0x2ac] sm:$0xf]
  %v203 = vld [vmem:[%s1 + $0x2b0] sm:$0xf]
  %v204 = vld [vmem:[%s1 + $0x2b4] sm:$0xf]
  %v205 = vld [vmem:[%s1 + $0x2b8] sm:$0xf]
  %v206 = vld [vmem:[%s1 + $0x2bc] sm:$0xf]
  %v207 = vld [vmem:[%s1 + $0x2c0] sm:$0xf]
  %v208 = vld [vmem:[%s1 + $0x2c4] sm:$0xf]
  %v209 = vld [vmem:[%s1 + $0x2c8] sm:$0xf]
  %v210 = vld [vmem:[%s1 + $0x2cc] sm:$0xf]
  %v211 = vld [vmem:[%s1 + $0x2d0] sm:$0xf]
  %v212 = vld [vmem:[%s1 + $0x2d4] sm:$0xf]
  %v213 = vld [vmem:[%s1 + $0x2d8] sm:$0xf]
  %v214 = vld [vmem:[%s1 + $0x2dc] sm:$0xf]
  %v215 = vld [vmem:[%s1 + $0x2e0] sm:$0xf]
  %v216 = vld [vmem:[%s1 + $0x2e4] sm:$0xf]
  %v217 = vld [vmem:[%s1 + $0x2e8] sm:$0xf]
  %v218 = vld [vmem:[%s1 + $0x2ec] sm:$0xf]
  %v219 = vld [vmem:[%s1 + $0x2f0] sm:$0xf]
  %v220 = vld [vmem:[%s1 + $0x2f4] sm:$0xf]
  %v221 = vld [vmem:[%s1 + $0x2f8] sm:$0xf]
  %v222 = vld [vmem:[%s1 + $0x2fc] sm:$0xf]
  %v223 = vld [vmem:[%s1 + $0x300] sm:$0xf]
  %v224 = vld [vmem:[%s1 + $0x304] sm:$0xf]
  %v225 = vld [vmem:[%s1 + $0x308] sm:$0xf]
  %v226 = vld [vmem:[%s1 + $0x30c] sm:$0xf]
  %v227 = vld [vmem:[%s1 + $0x310] sm:$0xf]
  %v228 = vld [vmem:[%s1 + $0x314] sm:$0xf]
  %v229 = vld [vmem:[%s1 + $0x318] sm:$0xf]
  %v230 = vld [vmem:[%s1 + $0x31c] sm:$0xf]
  %v231 = vld [vmem:[%s1 + $0x320] sm:$0xf]
  %v232 = vld [vmem:[%s1 + $0x324] sm:$0xf]
  %v233 = vld [vmem:[%s1 + $0x328] sm:$0xf]
  %v234 = vld [vmem:[%s1 + $0x32c] sm:$0xf]
  %v235 = vld [vmem:[%s1 + $0x330] sm:$0xf]
  %v236 = vld [vmem:[%s1 + $0x334] sm:$0xf]
  %v237 = vld [vmem:[%s1 + $0x338] sm:$0xf]
  %v238 = vld [vmem:[%s1 + $0x33c] sm:$0xf]
  %v239 = vld [vmem:[%s1 + $0x340] sm:$0xf]
  %v240 = vld [vmem:[%s1 + $0x344] sm:$0xf]
  %v241 = vld [vmem:[%s1 + $0x348] sm:$0xf]
  %v242 = vld [vmem:[%s1 + $0x34c] sm:$0xf]
  %v243 = vld [vmem:[%s1 + $0x350] sm:$0xf]
  %v244 = vld [vmem:[%s1 + $0x354] sm:$0xf]
  %v245 = vld [vmem:[%s1 + $0x358] sm:$0xf]
  %v246 = vld [vmem:[%s1 + $0x35c] sm:$0xf]
  %v247 = vld [vmem:[%s1 + $0x360] sm:$0xf]
  %v248 = vld [vmem:[%s1 + $0x364] sm:$0xf]
  %v249 = vld [vmem:[%s1 + $0x368] sm:$0xf]
  %v250 = vld [vmem:[%s1 + $0x36c] sm:$0xf]
  %v251 = vld [vmem:[%s1 + $0x370] sm:$0xf]
  %v252 = vld [vmem:[%s1 + $0x374] sm:$0xf]
  %v253 = vld [vmem:[%s1 + $0x378] sm:$0xf]
  %v254 = vld [vmem:[%s1 + $0x37c] sm:$0xf]
  %v255 = vld [vmem:[%s1 + $0x380] sm:$0xf]
  %v256 = vld [vmem:[%s1 + $0x384] sm:$0xf]
  %v257 = vld [vmem:[%s1 + $0x388] sm:$0xf]
  %v258 = vld [vmem:[%s1 + $0x38c] sm:$0xf]
  %v259 = vld [vmem:[%s1 + $0x390] sm:$0xf]
  %v260 = vld [vmem:[%s1 + $0x394] sm:$0xf]
  %v261 = vld [vmem:[%s1 + $0x398] sm:$0xf]
  %v262 = vld [vmem:[%s1 + $0x39c] sm:$0xf]
  %v263 = vld [vmem:[%s1 + $0x3a0] sm:$0xf]
  %v264 = vld [vmem:[%s1 + $0x3a4] sm:$0xf]
  %v265 = vld [vmem:[%s1 + $0x3a8] sm:$0xf]
  %v266 = vld [vmem:[%s1 + $0x3ac] sm:$0xf]
  %v267 = vld [vmem:[%s1 + $0x3b0] sm:$0xf]
  %v268 = vld [vmem:[%s1 + $0x3b4] sm:$0xf]
  %v269 = vld [vmem:[%s1 + $0x3b8] sm:$0xf]
  %v270 = vld [vmem:[%s1 + $0x3bc] sm:$0xf]
  %v271 = vld [vmem:[%s1 + $0x3c0] sm:$0xf]
  %v272 = vld [vmem:[%s1 + $0x3c4] sm:$0xf]
  %v273 = vld [vmem:[%s1 + $0x3c8] sm:$0xf]
  %v274 = vld [vmem:[%s1 + $0x3cc] sm:$0xf]
  %v275 = vld [vmem:[%s1 + $0x3d0] sm:$0xf]
  %v276 = vld [vmem:[%s1 + $0x3d4] sm:$0xf]
  %v277 = vld [vmem:[%s1 + $0x3d8] sm:$0xf]
  %v278 = vld [vmem:[%s1 + $0x3dc] sm:$0xf]
  %v279 = vld [vmem:[%s1 + $0x3e0] sm:$0xf]
  %v280 = vld [vmem:[%s1 + $0x3e4] sm:$0xf]
  %v281 = vld [vmem:[%s1 + $0x3e8] sm:$0xf]
  %v282 = vld [vmem:[%s1 + $0x3ec] sm:$0xf]
  %v283 = vld [vmem:[%s1 + $0x3f0] sm:$0xf]
  %v284 = vld [vmem:[%s1 + $0x3f4] sm:$0xf]
  %v285 = vld [vmem:[%s1 + $0x3f8] sm:$0xf]
  %v286 = vld [vmem:[%s1 + $0x3fc] sm:$0xf]
  %v287 = vld [vmem:[%s1 + $0x400] sm:$0xf]
  %v288 = vld [vmem:[%s1 + $0x404] sm:$0xf]
  %v289 = vld [vmem:[%s1 + $0x408] sm:$0xf]
  %v290 = vld [vmem:[%s1 + $0x40c] sm:$0xf]
  %v291 = vld [vmem:[%s1 + $0x410] sm:$0xf]
  %v292 = vld [vmem:[%s1 + $0x414] sm:$0xf]
  %v293 = vld [vmem:[%s1 + $0x418] sm:$0xf]
  %v294 = vld [vmem:[%s1 + $0x41c] sm:$0xf]
  %v295 = vld [vmem:[%s1 + $0x420] sm:$0xf]
  %v296 = vld [vmem:[%s1 + $0x424] sm:$0xf]
  %v297 = vld [vmem:[%s1 + $0x428] sm:$0xf]
  %v298 = vld [vmem:[%s1 + $0x42c] sm:$0xf]
  %v299 = vld [vmem:[%s1 + $0x430] sm:$0xf]
  %v300 = vld [vmem:[%s1 + $0x434] sm:$0xf]
  %v301 = vld [vmem:[%s1 + $0x438] sm:$0xf]
  %v302 = vld [vmem:[%s1 + $0x43c] sm:$0xf]
  %v303 = vld [vmem:[%s1 + $0x440] sm:$0xf]
  %v304 = vld [vmem:[%s1 + $0x444] sm:$0xf]
  %v305 = vld [vmem:[%s1 + $0x448] sm:$0xf]
  %v306 = vld [vmem:[%s1 + $0x44c] sm:$0xf]
  %v307 = vld [vmem:[%s1 + $0x450] sm:$0xf]
  %v308 = vld [vmem:[%s1 + $0x454] sm:$0xf]
  %v309 = vld [vmem:[%s1 + $0x458] sm:$0xf]
  %v310 = vld [vmem:[%s1 + $0x45c] sm:$0xf]
  %v311 = vld [vmem:[%s1 + $0x460] sm:$0xf]
  %v312 = vld [vmem:[%s1 + $0x464] sm:$0xf]
  %v313 = vld [vmem:[%s1 + $0x468] sm:$0xf]
  %v314 = vld [vmem:[%s1 + $0x46c] sm:$0xf]
  %v315 = vld [vmem:[%s1 + $0x470] sm:$0xf]
  %v316 = vld [vmem:[%s1 + $0x474] sm:$0xf]
  %v317 = vld [vmem:[%s1 + $0x478] sm:$0xf]
  %v318 = vld [vmem:[%s1 + $0x47c] sm:$0xf]
  %v319 = vld [vmem:[%s1 + $0x480] sm:$0xf]
  %v320 = vld [vmem:[%s1 + $0x484] sm:$0xf]
  %v321 = vld [vmem:[%s1 + $0x488] sm:$0xf]
  %v322 = vld [vmem:[%s1 + $0x48c] sm:$0xf]
  %v323 = vld [vmem:[%s1 + $0x490] sm:$0xf]
  %v324 = vld [vmem:[%s1 + $0x494] sm:$0xf]
  %v325 = vld [vmem:[%s1 + $0x498] sm:$0xf]
  %v326 = vld [vmem:[%s1 + $0x49c] sm:$0xf]
  %v327 = vld [vmem:[%s1 + $0x4a0] sm:$0xf]
  %v328 = vld [vmem:[%s1 + $0x4a4] sm:$0xf]
  %v329 = vld [vmem:[%s1 + $0x4a8] sm:$0xf]
  %v330 = vld [vmem:[%s1 + $0x4ac] sm:$0xf]
  %v331 = vld [vmem:[%s1 + $0x4b0] sm:$0xf]
  %v332 = vld [vmem:[%s1 + $0x4b4] sm:$0xf]
  %v333 = vld [vmem:[%s1 + $0x4b8] sm:$0xf]
  %v334 = vld [vmem:[%s1 + $0x4bc] sm:$0xf]
  %v335 = vld [vmem:[%s1 + $0x4c0] sm:$0xf]
  %v336 = vld [vmem:[%s1 + $0x4c4] sm:$0xf]
  %v337 = vld [vmem:[%s1 + $0x4c8] sm:$0xf]
  %v338 = vld [vmem:[%s1 + $0x4cc] sm:$0xf]
  %v339 = vld [vmem:[%s1 + $0x4d0] sm:$0xf]
  %v340 = vld [vmem:[%s1 + $0x4d4] sm:$0xf]
  %v341 = vld [vmem:[%s1 + $0x4d8] sm:$0xf]
  %v342 = vld [vmem:[%s1 + $0x4dc] sm:$0xf]
  %v343 = vld [vmem:[%s1 + $0x4e0] sm:$0xf]
  %v344 = vld [vmem:[%s1 + $0x4e4] sm:$0xf]
  %v345 = vld [vmem:[%s1 + $0x4e8] sm:$0xf]
  %v346 = vld [vmem:[%s1 + $0x4ec] sm:$0xf]
  %v347 = vld [vmem:[%s1 + $0x4f0] sm:$0xf]
  %v348 = vld [vmem:[%s1 + $0x4f4] sm:$0xf]
  %v349 = vld [vmem:[%s1 + $0x4f8] sm:$0xf]
  %v350 = vld [vmem:[%s1 + $0x4fc] sm:$0xf]
  %v351 = vld [vmem:[%s1 + $0x500] sm:$0xf]
  %v352 = vld [vmem:[%s1 + $0x504] sm:$0xf]
  %v353 = vld [vmem:[%s1 + $0x508] sm:$0xf]
  %v354 = vld [vmem:[%s1 + $0x50c] sm:$0xf]
  %v355 = vld [vmem:[%s1 + $0x510] sm:$0xf]
  %v356 = vld [vmem:[%s1 + $0x514] sm:$0xf]
  %v357 = vld [vmem:[%s1 + $0x518] sm:$0xf]
  %v358 = vld [vmem:[%s1 + $0x51c] sm:$0xf]
  %v359 = vld [vmem:[%s1 + $0x520] sm:$0xf]
  %v360 = vld [vmem:[%s1 + $0x524] sm:$0xf]
  %v361 = vld [vmem:[%s1 + $0x528] sm:$0xf]
  %v362 = vld [vmem:[%s1 + $0x52c] sm:$0xf]
  %v363 = vld [vmem:[%s1 + $0x530] sm:$0xf]
  %v364 = vld [vmem:[%s1 + $0x534] sm:$0xf]
  %v365 = vld [vmem:[%s1 + $0x538] sm:$0xf]
  %v366 = vld [vmem:[%s1 + $0x53c] sm:$0xf]
  %v367 = vld [vmem:[%s1 + $0x540] sm:$0xf]
  %v368 = vld [vmem:[%s1 + $0x544] sm:$0xf]
  %v369 = vld [vmem:[%s1 + $0x548] sm:$0xf]
  %v370 = vld [vmem:[%s1 + $0x54c] sm:$0xf]
  %v371 = vld [vmem:[%s1 + $0x550] sm:$0xf]
  %v372 = vld [vmem:[%s1 + $0x554] sm:$0xf]
  %v373 = vld [vmem:[%s1 + $0x558] sm:$0xf]
  %v374 = vld [vmem:[%s1 + $0x55c] sm:$0xf]
  %v375 = vld [vmem:[%s1 + $0x560] sm:$0xf]
  %v376 = vld [vmem:[%s1 + $0x564] sm:$0xf]
  %v377 = vld [vmem:[%s1 + $0x568] sm:$0xf]
  %v378 = vld [vmem:[%s1 + $0x56c] sm:$0xf]
  %v379 = vld [vmem:[%s1 + $0x570] sm:$0xf]
  %v380 = vld [vmem:[%s1 + $0x574] sm:$0xf]
  %v381 = vld [vmem:[%s1 + $0x578] sm:$0xf]
  %v382 = vld [vmem:[%s1 + $0x57c] sm:$0xf]
  %v383 = vld [vmem:[%s1 + $0x580] sm:$0xf]
  %v384 = vld [vmem:[%s1 + $0x584] sm:$0xf]
  %v385 = vld [vmem:[%s1 + $0x588] sm:$0xf]
  %v386 = vld [vmem:[%s1 + $0x58c] sm:$0xf]
  %v387 = vld [vmem:[%s1 + $0x590] sm:$0xf]
  %v388 = vld [vmem:[%s1 + $0x594] sm:$0xf]
  %v389 = vld [vmem:[%s1 + $0x598] sm:$0xf]
  %v390 = vld [vmem:[%s1 + $0x59c] sm:$0xf]
  %v391 = vld [vmem:[%s1 + $0x5a0] sm:$0xf]
  %v392 = vld [vmem:[%s1 + $0x5a4] sm:$0xf]
  %v393 = vld [vmem:[%s1 + $0x5a8] sm:$0xf]
  %v394 = vld [vmem:[%s1 + $0x5ac] sm:$0xf]
  %v395 = vld [vmem:[%s1 + $0x5b0] sm:$0xf]
  %v396 = vld [vmem:[%s1 + $0x5b4] sm:$0xf]
  %v397 = vld [vmem:[%s1 + $0x5b8] sm:$0xf]
  %v398 = vld [vmem:[%s1 + $0x5bc] sm:$0xf]
  %v399 = vld [vmem:[%s1 + $0x5c0] sm:$0xf]
  %v400 = vld [vmem:[%s1 + $0x5c4] sm:$0xf]
  %v401 = vld [vmem:[%s1 + $0x5c8] sm:$0xf]
  %v402 = vld [vmem:[%s1 + $0x5cc] sm:$0xf]
  %v403 = vld [vmem:[%s1 + $0x5d0] sm:$0xf]
  %v404 = vld [vmem:[%s1 + $0x5d4] sm:$0xf]
  %v405 = vld [vmem:[%s1 + $0x5d8] sm:$0xf]
  %v406 = vld [vmem:[%s1 + $0x5dc] sm:$0xf]
  %v407 = vld [vmem:[%s1 + $0x5e0] sm:$0xf]
  %v408 = vld [vmem:[%s1 + $0x5e4] sm:$0xf]
  %v409 = vld [vmem:[%s1 + $0x5e8] sm:$0xf]
  %v410 = vld [vmem:[%s1 + $0x5ec] sm:$0xf]
  %v411 = vld [vmem:[%s1 + $0x5f0] sm:$0xf]
  %v412 = vld [vmem:[%s1 + $0x5f4] sm:$0xf]
  %v413 = vld [vmem:[%s1 + $0x5f8] sm:$0xf]
  %v414 = vld [vmem:[%s1 + $0x5fc] sm:$0xf]
  %v415 = vld [vmem:[%s1 + $0x600] sm:$0xf]
  %v416 = vld [vmem:[%s1 + $0x604] sm:$0xf]
  %v417 = vld [vmem:[%s1 + $0x608] sm:$0xf]
  %v418 = vld [vmem:[%s1 + $0x60c] sm:$0xf]
  %v419 = vld [vmem:[%s1 + $0x610] sm:$0xf]
  %v420 = vld [vmem:[%s1 + $0x614] sm:$0xf]
  %v421 = vld [vmem:[%s1 + $0x618] sm:$0xf]
  %v422 = vld [vmem:[%s1 + $0x61c] sm:$0xf]
  %v423 = vld [vmem:[%s1 + $0x620] sm:$0xf]
  %v424 = vld [vmem:[%s1 + $0x624] sm:$0xf]
  %v425 = vld [vmem:[%s1 + $0x628] sm:$0xf]
  %v426 = vld [vmem:[%s1 + $0x62c] sm:$0xf]
  %v427 = vld [vmem:[%s1 + $0x630] sm:$0xf]
  %v428 = vld [vmem:[%s1 + $0x634] sm:$0xf]
  %v429 = vld [vmem:[%s1 + $0x638] sm:$0xf]
  %v430 = vld [vmem:[%s1 + $0x63c] sm:$0xf]
  %v431 = vld [vmem:[%s1 + $0x640] sm:$0xf]
  %v432 = vld [vmem:[%s1 + $0x644] sm:$0xf]
  %v433 = vld [vmem:[%s1 + $0x648] sm:$0xf]
  %v434 = vld [vmem:[%s1 + $0x64c] sm:$0xf]
  %v435 = vld [vmem:[%s1 + $0x650] sm:$0xf]
  %v436 = vld [vmem:[%s1 + $0x654] sm:$0xf]
  %v437 = vld [vmem:[%s1 + $0x658] sm:$0xf]
  %v438 = vld [vmem:[%s1 + $0x65c] sm:$0xf]
  %v439 = vld [vmem:[%s1 + $0x660] sm:$0xf]
  %v440 = vld [vmem:[%s1 + $0x664] sm:$0xf]
  %v441 = vld [vmem:[%s1 + $0x668] sm:$0xf]
  %v442 = vld [vmem:[%s1 + $0x66c] sm:$0xf]
  %v443 = vld [vmem:[%s1 + $0x670] sm:$0xf]
  %v444 = vld [vmem:[%s1 + $0x674] sm:$0xf]
  %v445 = vld [vmem:[%s1 + $0x678] sm:$0xf]
  %v446 = vld [vmem:[%s1 + $0x67c] sm:$0xf]
  %v447 = vld [vmem:[%s1 + $0x680] sm:$0xf]
  %v448 = vld [vmem:[%s1 + $0x684] sm:$0xf]
  %v449 = vld [vmem:[%s1 + $0x688] sm:$0xf]
  %v450 = vld [vmem:[%s1 + $0x68c] sm:$0xf]
  %v451 = vld [vmem:[%s1 + $0x690] sm:$0xf]
  %v452 = vld [vmem:[%s1 + $0x694] sm:$0xf]
  %v453 = vld [vmem:[%s1 + $0x698] sm:$0xf]
  %v454 = vld [vmem:[%s1 + $0x69c] sm:$0xf]
  %v455 = vld [vmem:[%s1 + $0x6a0] sm:$0xf]
  %v456 = vld [vmem:[%s1 + $0x6a4] sm:$0xf]
  %v457 = vld [vmem:[%s1 + $0x6a8] sm:$0xf]
  %v458 = vld [vmem:[%s1 + $0x6ac] sm:$0xf]
  %v459 = vld [vmem:[%s1 + $0x6b0] sm:$0xf]
  %v460 = vld [vmem:[%s1 + $0x6b4] sm:$0xf]
  %v461 = vld [vmem:[%s1 + $0x6b8] sm:$0xf]
  %v462 = vld [vmem:[%s1 + $0x6bc] sm:$0xf]
  %v463 = vld [vmem:[%s1 + $0x6c0] sm:$0xf]
  %v464 = vld [vmem:[%s1 + $0x6c4] sm:$0xf]
  %v465 = vld [vmem:[%s1 + $0x6c8] sm:$0xf]
  %v466 = vld [vmem:[%s1 + $0x6cc] sm:$0xf]
  %v467 = vld [vmem:[%s1 + $0x6d0] sm:$0xf]
  %v468 = vld [vmem:[%s1 + $0x6d4] sm:$0xf]
  %v469 = vld [vmem:[%s1 + $0x6d8] sm:$0xf]
  %v470 = vld [vmem:[%s1 + $0x6dc] sm:$0xf]
  %v471 = vld [vmem:[%s1 + $0x6e0] sm:$0xf]
  %v472 = vld [vmem:[%s1 + $0x6e4] sm:$0xf]
  %v473 = vld [vmem:[%s1 + $0x6e8] sm:$0xf]
  %v474 = vld [vmem:[%s1 + $0x6ec] sm:$0xf]
  %v475 = vld [vmem:[%s1 + $0x6f0] sm:$0xf]
  %v476 = vld [vmem:[%s1 + $0x6f4] sm:$0xf]
  %v477 = vld [vmem:[%s1 + $0x6f8] sm:$0xf]
  %v478 = vld [vmem:[%s1 + $0x6fc] sm:$0xf]
  %v479 = vld [vmem:[%s1 + $0x700] sm:$0xf]
  %v480 = vld [vmem:[%s1 + $0x704] sm:$0xf]
  %v481 = vld [vmem:[%s1 + $0x708] sm:$0xf]
  %v482 = vld [vmem:[%s1 + $0x70c] sm:$0xf]
  %v483 = vld [vmem:[%s1 + $0x710] sm:$0xf]
  %v484 = vld [vmem:[%s1 + $0x714] sm:$0xf]
  %v485 = vld [vmem:[%s1 + $0x718] sm:$0xf]
  %v486 = vld [vmem:[%s1 + $0x71c] sm:$0xf]
  %v487 = vld [vmem:[%s1 + $0x720] sm:$0xf]
  %v488 = vld [vmem:[%s1 + $0x724] sm:$0xf]
  %v489 = vld [vmem:[%s1 + $0x728] sm:$0xf]
  %v490 = vld [vmem:[%s1 + $0x72c] sm:$0xf]
  %v491 = vld [vmem:[%s1 + $0x730] sm:$0xf]
  %v492 = vld [vmem:[%s1 + $0x734] sm:$0xf]
  %v493 = vld [vmem:[%s1 + $0x738] sm:$0xf]
  %v494 = vld [vmem:[%s1 + $0x73c] sm:$0xf]
  %v495 = vld [vmem:[%s1 + $0x740] sm:$0xf]
  %v496 = vld [vmem:[%s1 + $0x744] sm:$0xf]
  %v497 = vld [vmem:[%s1 + $0x748] sm:$0xf]
  %v498 = vld [vmem:[%s1 + $0x74c] sm:$0xf]
  %v499 = vld [vmem:[%s1 + $0x750] sm:$0xf]
  %v500 = vld [vmem:[%s1 + $0x754] sm:$0xf]
  %v501 = vld [vmem:[%s1 + $0x758] sm:$0xf]
  %v502 = vld [vmem:[%s1 + $0x75c] sm:$0xf]
  %v503 = vld [vmem:[%s1 + $0x760] sm:$0xf]
  %v504 = vld [vmem:[%s1 + $0x764] sm:$0xf]
  %v505 = vld [vmem:[%s1 + $0x768] sm:$0xf]
  %v506 = vld [vmem:[%s1 + $0x76c] sm:$0xf]
  %v507 = vld [vmem:[%s1 + $0x770] sm:$0xf]
  %v508 = vld [vmem:[%s1 + $0x774] sm:$0xf]
  %v509 = vld [vmem:[%s1 + $0x778] sm:$0xf]
  %v510 = vld [vmem:[%s1 + $0x77c] sm:$0xf]
  %v511 = vld [vmem:[%s1 + $0x780] sm:$0xf]
  %v512 = vld [vmem:[%s1 + $0x784] sm:$0xf]
  %v513 = vld [vmem:[%s1 + $0x788] sm:$0xf]
  %v514 = vld [vmem:[%s1 + $0x78c] sm:$0xf]
  %v515 = vld [vmem:[%s1 + $0x790] sm:$0xf]
  %v516 = vld [vmem:[%s1 + $0x794] sm:$0xf]
  %v517 = vld [vmem:[%s1 + $0x798] sm:$0xf]
  %v518 = vld [vmem:[%s1 + $0x79c] sm:$0xf]
  %v519 = vld [vmem:[%s1 + $0x7a0] sm:$0xf]
  %v520 = vld [vmem:[%s1 + $0x7a4] sm:$0xf]
  %v521 = vld [vmem:[%s1 + $0x7a8] sm:$0xf]
  %v522 = vld [vmem:[%s1 + $0x7ac] sm:$0xf]
  %v523 = vld [vmem:[%s1 + $0x7b0] sm:$0xf]
  %v524 = vld [vmem:[%s1 + $0x7b4] sm:$0xf]
  %v525 = vld [vmem:[%s1 + $0x7b8] sm:$0xf]
  %v526 = vld [vmem:[%s1 + $0x7bc] sm:$0xf]
  %v527 = vld [vmem:[%s1 + $0x7c0] sm:$0xf]
  %v528 = vld [vmem:[%s1 + $0x7c4] sm:$0xf]
  %v529 = vld [vmem:[%s1 + $0x7c8] sm:$0xf]
  %v530 = vld [vmem:[%s1 + $0x7cc] sm:$0xf]
  %v531 = vld [vmem:[%s1 + $0x7d0] sm:$0xf]
  %v532 = vld [vmem:[%s1 + $0x7d4] sm:$0xf]
  %v533 = vld [vmem:[%s1 + $0x7d8] sm:$0xf]
  %v534 = vld [vmem:[%s1 + $0x7dc] sm:$0xf]
  %v535 = vld [vmem:[%s1 + $0x7e0] sm:$0xf]
  %v536 = vld [vmem:[%s1 + $0x7e4] sm:$0xf]
  %v537 = vld [vmem:[%s1 + $0x7e8] sm:$0xf]
  %v538 = vld [vmem:[%s1 + $0x7ec] sm:$0xf]
  %v539 = vld [vmem:[%s1 + $0x7f0] sm:$0xf]
  %v540 = vld [vmem:[%s1 + $0x7f4] sm:$0xf]
  %v541 = vld [vmem:[%s1 + $0x7f8] sm:$0xf]
  %v542 = vld [vmem:[%s1 + $0x7fc] sm:$0xf]
  %v543 = vld [vmem:[%s2] sm:$0x1]
  %v545 = vlaneseq
  %v546 = vshrl.u32 %v545, 7
  %v547 = vsub.s32 0, %v546
  %v548 = vrot.slane %v543, %v547
  %v566 = vunpack.c.l.b16 %v15
  %v567 = vunpack.c.h.b16 %v15
  %v568 = vunpack.c.l.b16 %v16
  %v569 = vunpack.c.h.b16 %v16
  %v570 = vunpack.c.l.b16 %v17
  %v571 = vunpack.c.h.b16 %v17
  %v572 = vunpack.c.l.b16 %v18
  %v573 = vunpack.c.h.b16 %v18
  %v574 = vunpack.c.l.b16 %v19
  %v575 = vunpack.c.h.b16 %v19
  %v576 = vunpack.c.l.b16 %v20
  %v577 = vunpack.c.h.b16 %v20
  %v578 = vunpack.c.l.b16 %v21
  %v579 = vunpack.c.h.b16 %v21
  %v580 = vunpack.c.l.b16 %v22
  %v581 = vunpack.c.h.b16 %v22
  %v582 = vunpack.c.l.b16 %v23
  %v583 = vunpack.c.h.b16 %v23
  %v584 = vunpack.c.l.b16 %v24
  %v585 = vunpack.c.h.b16 %v24
  %v586 = vunpack.c.l.b16 %v25
  %v587 = vunpack.c.h.b16 %v25
  %v588 = vunpack.c.l.b16 %v26
  %v589 = vunpack.c.h.b16 %v26
  %v590 = vunpack.c.l.b16 %v27
  %v591 = vunpack.c.h.b16 %v27
  %v592 = vunpack.c.l.b16 %v28
  %v593 = vunpack.c.h.b16 %v28
  %v594 = vunpack.c.l.b16 %v29
  %v595 = vunpack.c.h.b16 %v29
  %v596 = vunpack.c.l.b16 %v30
  %v597 = vunpack.c.h.b16 %v30
  %v598 = vpack.c.b16 %v566, %v566
  %v599 = vpack.c.b16 %v567, %v567
  %v600 = vpack.c.b16 %v568, %v568
  %v601 = vpack.c.b16 %v569, %v569
  %v602 = vpack.c.b16 %v570, %v570
  %v603 = vpack.c.b16 %v571, %v571
  %v604 = vpack.c.b16 %v572, %v572
  %v605 = vpack.c.b16 %v573, %v573
  %v606 = vpack.c.b16 %v574, %v574
  %v607 = vpack.c.b16 %v575, %v575
  %v608 = vpack.c.b16 %v576, %v576
  %v609 = vpack.c.b16 %v577, %v577
  %v610 = vpack.c.b16 %v578, %v578
  %v611 = vpack.c.b16 %v579, %v579
  %v612 = vpack.c.b16 %v580, %v580
  %v613 = vpack.c.b16 %v581, %v581
  %v614 = vpack.c.b16 %v582, %v582
  %v615 = vpack.c.b16 %v583, %v583
  %v616 = vpack.c.b16 %v584, %v584
  %v617 = vpack.c.b16 %v585, %v585
  %v618 = vpack.c.b16 %v586, %v586
  %v619 = vpack.c.b16 %v587, %v587
  %v620 = vpack.c.b16 %v588, %v588
  %v621 = vpack.c.b16 %v589, %v589
  %v622 = vpack.c.b16 %v590, %v590
  %v623 = vpack.c.b16 %v591, %v591
  %v624 = vpack.c.b16 %v592, %v592
  %v625 = vpack.c.b16 %v593, %v593
  %v626 = vpack.c.b16 %v594, %v594
  %v627 = vpack.c.b16 %v595, %v595
  %v628 = vpack.c.b16 %v596, %v596
  %v629 = vpack.c.b16 %v597, %v597
  %v1174 = vunpack.c.l.b16 %v31
  %v1175 = vunpack.c.l.b16 %v32
  %v1176 = vunpack.c.l.b16 %v33
  %v1177 = vunpack.c.l.b16 %v34
  %v1178 = vunpack.c.l.b16 %v35
  %v1179 = vunpack.c.l.b16 %v36
  %v1180 = vunpack.c.l.b16 %v37
  %v1181 = vunpack.c.l.b16 %v38
  %v1182 = vunpack.c.l.b16 %v39
  %v1183 = vunpack.c.l.b16 %v40
  %v1184 = vunpack.c.l.b16 %v41
  %v1185 = vunpack.c.l.b16 %v42
  %v1186 = vunpack.c.l.b16 %v43
  %v1187 = vunpack.c.l.b16 %v44
  %v1188 = vunpack.c.l.b16 %v45
  %v1189 = vunpack.c.l.b16 %v46
  %v1190 = vunpack.c.l.b16 %v47
  %v1191 = vunpack.c.l.b16 %v48
  %v1192 = vunpack.c.l.b16 %v49
  %v1193 = vunpack.c.l.b16 %v50
  %v1194 = vunpack.c.l.b16 %v51
  %v1195 = vunpack.c.l.b16 %v52
  %v1196 = vunpack.c.l.b16 %v53
  %v1197 = vunpack.c.l.b16 %v54
  %v1198 = vunpack.c.l.b16 %v55
  %v1199 = vunpack.c.l.b16 %v56
  %v1200 = vunpack.c.l.b16 %v57
  %v1201 = vunpack.c.l.b16 %v58
  %v1202 = vunpack.c.l.b16 %v59
  %v1203 = vunpack.c.l.b16 %v60
  %v1204 = vunpack.c.l.b16 %v61
  %v1205 = vunpack.c.l.b16 %v62
  %v1206 = vunpack.c.l.b16 %v63
  %v1207 = vunpack.c.l.b16 %v64
  %v1208 = vunpack.c.l.b16 %v65
  %v1209 = vunpack.c.l.b16 %v66
  %v1210 = vunpack.c.l.b16 %v67
  %v1211 = vunpack.c.l.b16 %v68
  %v1212 = vunpack.c.l.b16 %v69
  %v1213 = vunpack.c.l.b16 %v70
  %v1214 = vunpack.c.l.b16 %v71
  %v1215 = vunpack.c.l.b16 %v72
  %v1216 = vunpack.c.l.b16 %v73
  %v1217 = vunpack.c.l.b16 %v74
  %v1218 = vunpack.c.l.b16 %v75
  %v1219 = vunpack.c.l.b16 %v76
  %v1220 = vunpack.c.l.b16 %v77
  %v1221 = vunpack.c.l.b16 %v78
  %v1222 = vunpack.c.l.b16 %v79
  %v1223 = vunpack.c.l.b16 %v80
  %v1224 = vunpack.c.l.b16 %v81
  %v1225 = vunpack.c.l.b16 %v82
  %v1226 = vunpack.c.l.b16 %v83
  %v1227 = vunpack.c.l.b16 %v84
  %v1228 = vunpack.c.l.b16 %v85
  %v1229 = vunpack.c.l.b16 %v86
  %v1230 = vunpack.c.l.b16 %v87
  %v1231 = vunpack.c.l.b16 %v88
  %v1232 = vunpack.c.l.b16 %v89
  %v1233 = vunpack.c.l.b16 %v90
  %v1234 = vunpack.c.l.b16 %v91
  %v1235 = vunpack.c.l.b16 %v92
  %v1236 = vunpack.c.l.b16 %v93
  %v1237 = vunpack.c.l.b16 %v94
  %v1238 = vunpack.c.l.b16 %v95
  %v1239 = vunpack.c.l.b16 %v96
  %v1240 = vunpack.c.l.b16 %v97
  %v1241 = vunpack.c.l.b16 %v98
  %v1242 = vunpack.c.l.b16 %v99
  %v1243 = vunpack.c.l.b16 %v100
  %v1244 = vunpack.c.l.b16 %v101
  %v1245 = vunpack.c.l.b16 %v102
  %v1246 = vunpack.c.l.b16 %v103
  %v1247 = vunpack.c.l.b16 %v104
  %v1248 = vunpack.c.l.b16 %v105
  %v1249 = vunpack.c.l.b16 %v106
  %v1250 = vunpack.c.l.b16 %v107
  %v1251 = vunpack.c.l.b16 %v108
  %v1252 = vunpack.c.l.b16 %v109
  %v1253 = vunpack.c.l.b16 %v110
  %v1254 = vunpack.c.l.b16 %v111
  %v1255 = vunpack.c.l.b16 %v112
  %v1256 = vunpack.c.l.b16 %v113
  %v1257 = vunpack.c.l.b16 %v114
  %v1258 = vunpack.c.l.b16 %v115
  %v1259 = vunpack.c.l.b16 %v116
  %v1260 = vunpack.c.l.b16 %v117
  %v1261 = vunpack.c.l.b16 %v118
  %v1262 = vunpack.c.l.b16 %v119
  %v1263 = vunpack.c.l.b16 %v120
  %v1264 = vunpack.c.l.b16 %v121
  %v1265 = vunpack.c.l.b16 %v122
  %v1266 = vunpack.c.l.b16 %v123
  %v1267 = vunpack.c.l.b16 %v124
  %v1268 = vunpack.c.l.b16 %v125
  %v1269 = vunpack.c.l.b16 %v126
  %v1270 = vunpack.c.l.b16 %v127
  %v1271 = vunpack.c.l.b16 %v128
  %v1272 = vunpack.c.l.b16 %v129
  %v1273 = vunpack.c.l.b16 %v130
  %v1274 = vunpack.c.l.b16 %v131
  %v1275 = vunpack.c.l.b16 %v132
  %v1276 = vunpack.c.l.b16 %v133
  %v1277 = vunpack.c.l.b16 %v134
  %v1278 = vunpack.c.l.b16 %v135
  %v1279 = vunpack.c.l.b16 %v136
  %v1280 = vunpack.c.l.b16 %v137
  %v1281 = vunpack.c.l.b16 %v138
  %v1282 = vunpack.c.l.b16 %v139
  %v1283 = vunpack.c.l.b16 %v140
  %v1284 = vunpack.c.l.b16 %v141
  %v1285 = vunpack.c.l.b16 %v142
  %v1286 = vunpack.c.l.b16 %v143
  %v1287 = vunpack.c.l.b16 %v144
  %v1288 = vunpack.c.l.b16 %v145
  %v1289 = vunpack.c.l.b16 %v146
  %v1290 = vunpack.c.l.b16 %v147
  %v1291 = vunpack.c.l.b16 %v148
  %v1292 = vunpack.c.l.b16 %v149
  %v1293 = vunpack.c.l.b16 %v150
  %v1294 = vunpack.c.l.b16 %v151
  %v1295 = vunpack.c.l.b16 %v152
  %v1296 = vunpack.c.l.b16 %v153
  %v1297 = vunpack.c.l.b16 %v154
  %v1298 = vunpack.c.l.b16 %v155
  %v1299 = vunpack.c.l.b16 %v156
  %v1300 = vunpack.c.l.b16 %v157
  %v1301 = vunpack.c.l.b16 %v158
  %v1302 = vunpack.c.l.b16 %v159
  %v1303 = vunpack.c.l.b16 %v160
  %v1304 = vunpack.c.l.b16 %v161
  %v1305 = vunpack.c.l.b16 %v162
  %v1306 = vunpack.c.l.b16 %v163
  %v1307 = vunpack.c.l.b16 %v164
  %v1308 = vunpack.c.l.b16 %v165
  %v1309 = vunpack.c.l.b16 %v166
  %v1310 = vunpack.c.l.b16 %v167
  %v1311 = vunpack.c.l.b16 %v168
  %v1312 = vunpack.c.l.b16 %v169
  %v1313 = vunpack.c.l.b16 %v170
  %v1314 = vunpack.c.l.b16 %v171
  %v1315 = vunpack.c.l.b16 %v172
  %v1316 = vunpack.c.l.b16 %v173
  %v1317 = vunpack.c.l.b16 %v174
  %v1318 = vunpack.c.l.b16 %v175
  %v1319 = vunpack.c.l.b16 %v176
  %v1320 = vunpack.c.l.b16 %v177
  %v1321 = vunpack.c.l.b16 %v178
  %v1322 = vunpack.c.l.b16 %v179
  %v1323 = vunpack.c.l.b16 %v180
  %v1324 = vunpack.c.l.b16 %v181
  %v1325 = vunpack.c.l.b16 %v182
  %v1326 = vunpack.c.l.b16 %v183
  %v1327 = vunpack.c.l.b16 %v184
  %v1328 = vunpack.c.l.b16 %v185
  %v1329 = vunpack.c.l.b16 %v186
  %v1330 = vunpack.c.l.b16 %v187
  %v1331 = vunpack.c.l.b16 %v188
  %v1332 = vunpack.c.l.b16 %v189
  %v1333 = vunpack.c.l.b16 %v190
  %v1334 = vunpack.c.l.b16 %v191
  %v1335 = vunpack.c.l.b16 %v192
  %v1336 = vunpack.c.l.b16 %v193
  %v1337 = vunpack.c.l.b16 %v194
  %v1338 = vunpack.c.l.b16 %v195
  %v1339 = vunpack.c.l.b16 %v196
  %v1340 = vunpack.c.l.b16 %v197
  %v1341 = vunpack.c.l.b16 %v198
  %v1342 = vunpack.c.l.b16 %v199
  %v1343 = vunpack.c.l.b16 %v200
  %v1344 = vunpack.c.l.b16 %v201
  %v1345 = vunpack.c.l.b16 %v202
  %v1346 = vunpack.c.l.b16 %v203
  %v1347 = vunpack.c.l.b16 %v204
  %v1348 = vunpack.c.l.b16 %v205
  %v1349 = vunpack.c.l.b16 %v206
  %v1350 = vunpack.c.l.b16 %v207
  %v1351 = vunpack.c.l.b16 %v208
  %v1352 = vunpack.c.l.b16 %v209
  %v1353 = vunpack.c.l.b16 %v210
  %v1354 = vunpack.c.l.b16 %v211
  %v1355 = vunpack.c.l.b16 %v212
  %v1356 = vunpack.c.l.b16 %v213
  %v1357 = vunpack.c.l.b16 %v214
  %v1358 = vunpack.c.l.b16 %v215
  %v1359 = vunpack.c.l.b16 %v216
  %v1360 = vunpack.c.l.b16 %v217
  %v1361 = vunpack.c.l.b16 %v218
  %v1362 = vunpack.c.l.b16 %v219
  %v1363 = vunpack.c.l.b16 %v220
  %v1364 = vunpack.c.l.b16 %v221
  %v1365 = vunpack.c.l.b16 %v222
  %v1366 = vunpack.c.l.b16 %v223
  %v1367 = vunpack.c.l.b16 %v224
  %v1368 = vunpack.c.l.b16 %v225
  %v1369 = vunpack.c.l.b16 %v226
  %v1370 = vunpack.c.l.b16 %v227
  %v1371 = vunpack.c.l.b16 %v228
  %v1372 = vunpack.c.l.b16 %v229
  %v1373 = vunpack.c.l.b16 %v230
  %v1374 = vunpack.c.l.b16 %v231
  %v1375 = vunpack.c.l.b16 %v232
  %v1376 = vunpack.c.l.b16 %v233
  %v1377 = vunpack.c.l.b16 %v234
  %v1378 = vunpack.c.l.b16 %v235
  %v1379 = vunpack.c.l.b16 %v236
  %v1380 = vunpack.c.l.b16 %v237
  %v1381 = vunpack.c.l.b16 %v238
  %v1382 = vunpack.c.l.b16 %v239
  %v1383 = vunpack.c.l.b16 %v240
  %v1384 = vunpack.c.l.b16 %v241
  %v1385 = vunpack.c.l.b16 %v242
  %v1386 = vunpack.c.l.b16 %v243
  %v1387 = vunpack.c.l.b16 %v244
  %v1388 = vunpack.c.l.b16 %v245
  %v1389 = vunpack.c.l.b16 %v246
  %v1390 = vunpack.c.l.b16 %v247
  %v1391 = vunpack.c.l.b16 %v248
  %v1392 = vunpack.c.l.b16 %v249
  %v1393 = vunpack.c.l.b16 %v250
  %v1394 = vunpack.c.l.b16 %v251
  %v1395 = vunpack.c.l.b16 %v252
  %v1396 = vunpack.c.l.b16 %v253
  %v1397 = vunpack.c.l.b16 %v254
  %v1398 = vunpack.c.l.b16 %v255
  %v1399 = vunpack.c.l.b16 %v256
  %v1400 = vunpack.c.l.b16 %v257
  %v1401 = vunpack.c.l.b16 %v258
  %v1402 = vunpack.c.l.b16 %v259
  %v1403 = vunpack.c.l.b16 %v260
  %v1404 = vunpack.c.l.b16 %v261
  %v1405 = vunpack.c.l.b16 %v262
  %v1406 = vunpack.c.l.b16 %v263
  %v1407 = vunpack.c.l.b16 %v264
  %v1408 = vunpack.c.l.b16 %v265
  %v1409 = vunpack.c.l.b16 %v266
  %v1410 = vunpack.c.l.b16 %v267
  %v1411 = vunpack.c.l.b16 %v268
  %v1412 = vunpack.c.l.b16 %v269
  %v1413 = vunpack.c.l.b16 %v270
  %v1414 = vunpack.c.l.b16 %v271
  %v1415 = vunpack.c.l.b16 %v272
  %v1416 = vunpack.c.l.b16 %v273
  %v1417 = vunpack.c.l.b16 %v274
  %v1418 = vunpack.c.l.b16 %v275
  %v1419 = vunpack.c.l.b16 %v276
  %v1420 = vunpack.c.l.b16 %v277
  %v1421 = vunpack.c.l.b16 %v278
  %v1422 = vunpack.c.l.b16 %v279
  %v1423 = vunpack.c.l.b16 %v280
  %v1424 = vunpack.c.l.b16 %v281
  %v1425 = vunpack.c.l.b16 %v282
  %v1426 = vunpack.c.l.b16 %v283
  %v1427 = vunpack.c.l.b16 %v284
  %v1428 = vunpack.c.l.b16 %v285
  %v1429 = vunpack.c.l.b16 %v286
  %v1430 = vunpack.c.l.b16 %v287
  %v1431 = vunpack.c.l.b16 %v288
  %v1432 = vunpack.c.l.b16 %v289
  %v1433 = vunpack.c.l.b16 %v290
  %v1434 = vunpack.c.l.b16 %v291
  %v1435 = vunpack.c.l.b16 %v292
  %v1436 = vunpack.c.l.b16 %v293
  %v1437 = vunpack.c.l.b16 %v294
  %v1438 = vunpack.c.l.b16 %v295
  %v1439 = vunpack.c.l.b16 %v296
  %v1440 = vunpack.c.l.b16 %v297
  %v1441 = vunpack.c.l.b16 %v298
  %v1442 = vunpack.c.l.b16 %v299
  %v1443 = vunpack.c.l.b16 %v300
  %v1444 = vunpack.c.l.b16 %v301
  %v1445 = vunpack.c.l.b16 %v302
  %v1446 = vunpack.c.l.b16 %v303
  %v1447 = vunpack.c.l.b16 %v304
  %v1448 = vunpack.c.l.b16 %v305
  %v1449 = vunpack.c.l.b16 %v306
  %v1450 = vunpack.c.l.b16 %v307
  %v1451 = vunpack.c.l.b16 %v308
  %v1452 = vunpack.c.l.b16 %v309
  %v1453 = vunpack.c.l.b16 %v310
  %v1454 = vunpack.c.l.b16 %v311
  %v1455 = vunpack.c.l.b16 %v312
  %v1456 = vunpack.c.l.b16 %v313
  %v1457 = vunpack.c.l.b16 %v314
  %v1458 = vunpack.c.l.b16 %v315
  %v1459 = vunpack.c.l.b16 %v316
  %v1460 = vunpack.c.l.b16 %v317
  %v1461 = vunpack.c.l.b16 %v318
  %v1462 = vunpack.c.l.b16 %v319
  %v1463 = vunpack.c.l.b16 %v320
  %v1464 = vunpack.c.l.b16 %v321
  %v1465 = vunpack.c.l.b16 %v322
  %v1466 = vunpack.c.l.b16 %v323
  %v1467 = vunpack.c.l.b16 %v324
  %v1468 = vunpack.c.l.b16 %v325
  %v1469 = vunpack.c.l.b16 %v326
  %v1470 = vunpack.c.l.b16 %v327
  %v1471 = vunpack.c.l.b16 %v328
  %v1472 = vunpack.c.l.b16 %v329
  %v1473 = vunpack.c.l.b16 %v330
  %v1474 = vunpack.c.l.b16 %v331
  %v1475 = vunpack.c.l.b16 %v332
  %v1476 = vunpack.c.l.b16 %v333
  %v1477 = vunpack.c.l.b16 %v334
  %v1478 = vunpack.c.l.b16 %v335
  %v1479 = vunpack.c.l.b16 %v336
  %v1480 = vunpack.c.l.b16 %v337
  %v1481 = vunpack.c.l.b16 %v338
  %v1482 = vunpack.c.l.b16 %v339
  %v1483 = vunpack.c.l.b16 %v340
  %v1484 = vunpack.c.l.b16 %v341
  %v1485 = vunpack.c.l.b16 %v342
  %v1486 = vunpack.c.l.b16 %v343
  %v1487 = vunpack.c.l.b16 %v344
  %v1488 = vunpack.c.l.b16 %v345
  %v1489 = vunpack.c.l.b16 %v346
  %v1490 = vunpack.c.l.b16 %v347
  %v1491 = vunpack.c.l.b16 %v348
  %v1492 = vunpack.c.l.b16 %v349
  %v1493 = vunpack.c.l.b16 %v350
  %v1494 = vunpack.c.l.b16 %v351
  %v1495 = vunpack.c.l.b16 %v352
  %v1496 = vunpack.c.l.b16 %v353
  %v1497 = vunpack.c.l.b16 %v354
  %v1498 = vunpack.c.l.b16 %v355
  %v1499 = vunpack.c.l.b16 %v356
  %v1500 = vunpack.c.l.b16 %v357
  %v1501 = vunpack.c.l.b16 %v358
  %v1502 = vunpack.c.l.b16 %v359
  %v1503 = vunpack.c.l.b16 %v360
  %v1504 = vunpack.c.l.b16 %v361
  %v1505 = vunpack.c.l.b16 %v362
  %v1506 = vunpack.c.l.b16 %v363
  %v1507 = vunpack.c.l.b16 %v364
  %v1508 = vunpack.c.l.b16 %v365
  %v1509 = vunpack.c.l.b16 %v366
  %v1510 = vunpack.c.l.b16 %v367
  %v1511 = vunpack.c.l.b16 %v368
  %v1512 = vunpack.c.l.b16 %v369
  %v1513 = vunpack.c.l.b16 %v370
  %v1514 = vunpack.c.l.b16 %v371
  %v1515 = vunpack.c.l.b16 %v372
  %v1516 = vunpack.c.l.b16 %v373
  %v1517 = vunpack.c.l.b16 %v374
  %v1518 = vunpack.c.l.b16 %v375
  %v1519 = vunpack.c.l.b16 %v376
  %v1520 = vunpack.c.l.b16 %v377
  %v1521 = vunpack.c.l.b16 %v378
  %v1522 = vunpack.c.l.b16 %v379
  %v1523 = vunpack.c.l.b16 %v380
  %v1524 = vunpack.c.l.b16 %v381
  %v1525 = vunpack.c.l.b16 %v382
  %v1526 = vunpack.c.l.b16 %v383
  %v1527 = vunpack.c.l.b16 %v384
  %v1528 = vunpack.c.l.b16 %v385
  %v1529 = vunpack.c.l.b16 %v386
  %v1530 = vunpack.c.l.b16 %v387
  %v1531 = vunpack.c.l.b16 %v388
  %v1532 = vunpack.c.l.b16 %v389
  %v1533 = vunpack.c.l.b16 %v390
  %v1534 = vunpack.c.l.b16 %v391
  %v1535 = vunpack.c.l.b16 %v392
  %v1536 = vunpack.c.l.b16 %v393
  %v1537 = vunpack.c.l.b16 %v394
  %v1538 = vunpack.c.l.b16 %v395
  %v1539 = vunpack.c.l.b16 %v396
  %v1540 = vunpack.c.l.b16 %v397
  %v1541 = vunpack.c.l.b16 %v398
  %v1542 = vunpack.c.l.b16 %v399
  %v1543 = vunpack.c.l.b16 %v400
  %v1544 = vunpack.c.l.b16 %v401
  %v1545 = vunpack.c.l.b16 %v402
  %v1546 = vunpack.c.l.b16 %v403
  %v1547 = vunpack.c.l.b16 %v404
  %v1548 = vunpack.c.l.b16 %v405
  %v1549 = vunpack.c.l.b16 %v406
  %v1550 = vunpack.c.l.b16 %v407
  %v1551 = vunpack.c.l.b16 %v408
  %v1552 = vunpack.c.l.b16 %v409
  %v1553 = vunpack.c.l.b16 %v410
  %v1554 = vunpack.c.l.b16 %v411
  %v1555 = vunpack.c.l.b16 %v412
  %v1556 = vunpack.c.l.b16 %v413
  %v1557 = vunpack.c.l.b16 %v414
  %v1558 = vunpack.c.l.b16 %v415
  %v1559 = vunpack.c.l.b16 %v416
  %v1560 = vunpack.c.l.b16 %v417
  %v1561 = vunpack.c.l.b16 %v418
  %v1562 = vunpack.c.l.b16 %v419
  %v1563 = vunpack.c.l.b16 %v420
  %v1564 = vunpack.c.l.b16 %v421
  %v1565 = vunpack.c.l.b16 %v422
  %v1566 = vunpack.c.l.b16 %v423
  %v1567 = vunpack.c.l.b16 %v424
  %v1568 = vunpack.c.l.b16 %v425
  %v1569 = vunpack.c.l.b16 %v426
  %v1570 = vunpack.c.l.b16 %v427
  %v1571 = vunpack.c.l.b16 %v428
  %v1572 = vunpack.c.l.b16 %v429
  %v1573 = vunpack.c.l.b16 %v430
  %v1574 = vunpack.c.l.b16 %v431
  %v1575 = vunpack.c.l.b16 %v432
  %v1576 = vunpack.c.l.b16 %v433
  %v1577 = vunpack.c.l.b16 %v434
  %v1578 = vunpack.c.l.b16 %v435
  %v1579 = vunpack.c.l.b16 %v436
  %v1580 = vunpack.c.l.b16 %v437
  %v1581 = vunpack.c.l.b16 %v438
  %v1582 = vunpack.c.l.b16 %v439
  %v1583 = vunpack.c.l.b16 %v440
  %v1584 = vunpack.c.l.b16 %v441
  %v1585 = vunpack.c.l.b16 %v442
  %v1586 = vunpack.c.l.b16 %v443
  %v1587 = vunpack.c.l.b16 %v444
  %v1588 = vunpack.c.l.b16 %v445
  %v1589 = vunpack.c.l.b16 %v446
  %v1590 = vunpack.c.l.b16 %v447
  %v1591 = vunpack.c.l.b16 %v448
  %v1592 = vunpack.c.l.b16 %v449
  %v1593 = vunpack.c.l.b16 %v450
  %v1594 = vunpack.c.l.b16 %v451
  %v1595 = vunpack.c.l.b16 %v452
  %v1596 = vunpack.c.l.b16 %v453
  %v1597 = vunpack.c.l.b16 %v454
  %v1598 = vunpack.c.l.b16 %v455
  %v1599 = vunpack.c.l.b16 %v456
  %v1600 = vunpack.c.l.b16 %v457
  %v1601 = vunpack.c.l.b16 %v458
  %v1602 = vunpack.c.l.b16 %v459
  %v1603 = vunpack.c.l.b16 %v460
  %v1604 = vunpack.c.l.b16 %v461
  %v1605 = vunpack.c.l.b16 %v462
  %v1606 = vunpack.c.l.b16 %v463
  %v1607 = vunpack.c.l.b16 %v464
  %v1608 = vunpack.c.l.b16 %v465
  %v1609 = vunpack.c.l.b16 %v466
  %v1610 = vunpack.c.l.b16 %v467
  %v1611 = vunpack.c.l.b16 %v468
  %v1612 = vunpack.c.l.b16 %v469
  %v1613 = vunpack.c.l.b16 %v470
  %v1614 = vunpack.c.l.b16 %v471
  %v1615 = vunpack.c.l.b16 %v472
  %v1616 = vunpack.c.l.b16 %v473
  %v1617 = vunpack.c.l.b16 %v474
  %v1618 = vunpack.c.l.b16 %v475
  %v1619 = vunpack.c.l.b16 %v476
  %v1620 = vunpack.c.l.b16 %v477
  %v1621 = vunpack.c.l.b16 %v478
  %v1622 = vunpack.c.l.b16 %v479
  %v1623 = vunpack.c.l.b16 %v480
  %v1624 = vunpack.c.l.b16 %v481
  %v1625 = vunpack.c.l.b16 %v482
  %v1626 = vunpack.c.l.b16 %v483
  %v1627 = vunpack.c.l.b16 %v484
  %v1628 = vunpack.c.l.b16 %v485
  %v1629 = vunpack.c.l.b16 %v486
  %v1630 = vunpack.c.l.b16 %v487
  %v1631 = vunpack.c.l.b16 %v488
  %v1632 = vunpack.c.l.b16 %v489
  %v1633 = vunpack.c.l.b16 %v490
  %v1634 = vunpack.c.l.b16 %v491
  %v1635 = vunpack.c.l.b16 %v492
  %v1636 = vunpack.c.l.b16 %v493
  %v1637 = vunpack.c.l.b16 %v494
  %v1638 = vunpack.c.l.b16 %v495
  %v1639 = vunpack.c.l.b16 %v496
  %v1640 = vunpack.c.l.b16 %v497
  %v1641 = vunpack.c.l.b16 %v498
  %v1642 = vunpack.c.l.b16 %v499
  %v1643 = vunpack.c.l.b16 %v500
  %v1644 = vunpack.c.l.b16 %v501
  %v1645 = vunpack.c.l.b16 %v502
  %v1646 = vunpack.c.l.b16 %v503
  %v1647 = vunpack.c.l.b16 %v504
  %v1648 = vunpack.c.l.b16 %v505
  %v1649 = vunpack.c.l.b16 %v506
  %v1650 = vunpack.c.l.b16 %v507
  %v1651 = vunpack.c.l.b16 %v508
  %v1652 = vunpack.c.l.b16 %v509
  %v1653 = vunpack.c.l.b16 %v510
  %v1654 = vunpack.c.l.b16 %v511
  %v1655 = vunpack.c.l.b16 %v512
  %v1656 = vunpack.c.l.b16 %v513
  %v1657 = vunpack.c.l.b16 %v514
  %v1658 = vunpack.c.l.b16 %v515
  %v1659 = vunpack.c.l.b16 %v516
  %v1660 = vunpack.c.l.b16 %v517
  %v1661 = vunpack.c.l.b16 %v518
  %v1662 = vunpack.c.l.b16 %v519
  %v1663 = vunpack.c.l.b16 %v520
  %v1664 = vunpack.c.l.b16 %v521
  %v1665 = vunpack.c.l.b16 %v522
  %v1666 = vunpack.c.l.b16 %v523
  %v1667 = vunpack.c.l.b16 %v524
  %v1668 = vunpack.c.l.b16 %v525
  %v1669 = vunpack.c.l.b16 %v526
  %v1670 = vunpack.c.l.b16 %v527
  %v1671 = vunpack.c.l.b16 %v528
  %v1672 = vunpack.c.l.b16 %v529
  %v1673 = vunpack.c.l.b16 %v530
  %v1674 = vunpack.c.l.b16 %v531
  %v1675 = vunpack.c.l.b16 %v532
  %v1676 = vunpack.c.l.b16 %v533
  %v1677 = vunpack.c.l.b16 %v534
  %v1678 = vunpack.c.l.b16 %v535
  %v1679 = vunpack.c.l.b16 %v536
  %v1680 = vunpack.c.l.b16 %v537
  %v1681 = vunpack.c.l.b16 %v538
  %v1682 = vunpack.c.l.b16 %v539
  %v1683 = vunpack.c.l.b16 %v540
  %v1684 = vunpack.c.l.b16 %v541
  %v1685 = vunpack.c.l.b16 %v542
  %v1686 = vpack.c.b16 %v1175, %v1174
  %v1687 = vpack.c.b16 %v1177, %v1176
  %v1688 = vpack.c.b16 %v1179, %v1178
  %v1689 = vpack.c.b16 %v1181, %v1180
  %v1690 = vpack.c.b16 %v1183, %v1182
  %v1691 = vpack.c.b16 %v1185, %v1184
  %v1692 = vpack.c.b16 %v1187, %v1186
  %v1693 = vpack.c.b16 %v1189, %v1188
  %v1694 = vpack.c.b16 %v1191, %v1190
  %v1695 = vpack.c.b16 %v1193, %v1192
  %v1696 = vpack.c.b16 %v1195, %v1194
  %v1697 = vpack.c.b16 %v1197, %v1196
  %v1698 = vpack.c.b16 %v1199, %v1198
  %v1699 = vpack.c.b16 %v1201, %v1200
  %v1700 = vpack.c.b16 %v1203, %v1202
  %v1701 = vpack.c.b16 %v1205, %v1204
  %v1702 = vpack.c.b16 %v1207, %v1206
  %v1703 = vpack.c.b16 %v1209, %v1208
  %v1704 = vpack.c.b16 %v1211, %v1210
  %v1705 = vpack.c.b16 %v1213, %v1212
  %v1706 = vpack.c.b16 %v1215, %v1214
  %v1707 = vpack.c.b16 %v1217, %v1216
  %v1708 = vpack.c.b16 %v1219, %v1218
  %v1709 = vpack.c.b16 %v1221, %v1220
  %v1710 = vpack.c.b16 %v1223, %v1222
  %v1711 = vpack.c.b16 %v1225, %v1224
  %v1712 = vpack.c.b16 %v1227, %v1226
  %v1713 = vpack.c.b16 %v1229, %v1228
  %v1714 = vpack.c.b16 %v1231, %v1230
  %v1715 = vpack.c.b16 %v1233, %v1232
  %v1716 = vpack.c.b16 %v1235, %v1234
  %v1717 = vpack.c.b16 %v1237, %v1236
  %v1718 = vpack.c.b16 %v1239, %v1238
  %v1719 = vpack.c.b16 %v1241, %v1240
  %v1720 = vpack.c.b16 %v1243, %v1242
  %v1721 = vpack.c.b16 %v1245, %v1244
  %v1722 = vpack.c.b16 %v1247, %v1246
  %v1723 = vpack.c.b16 %v1249, %v1248
  %v1724 = vpack.c.b16 %v1251, %v1250
  %v1725 = vpack.c.b16 %v1253, %v1252
  %v1726 = vpack.c.b16 %v1255, %v1254
  %v1727 = vpack.c.b16 %v1257, %v1256
  %v1728 = vpack.c.b16 %v1259, %v1258
  %v1729 = vpack.c.b16 %v1261, %v1260
  %v1730 = vpack.c.b16 %v1263, %v1262
  %v1731 = vpack.c.b16 %v1265, %v1264
  %v1732 = vpack.c.b16 %v1267, %v1266
  %v1733 = vpack.c.b16 %v1269, %v1268
  %v1734 = vpack.c.b16 %v1271, %v1270
  %v1735 = vpack.c.b16 %v1273, %v1272
  %v1736 = vpack.c.b16 %v1275, %v1274
  %v1737 = vpack.c.b16 %v1277, %v1276
  %v1738 = vpack.c.b16 %v1279, %v1278
  %v1739 = vpack.c.b16 %v1281, %v1280
  %v1740 = vpack.c.b16 %v1283, %v1282
  %v1741 = vpack.c.b16 %v1285, %v1284
  %v1742 = vpack.c.b16 %v1287, %v1286
  %v1743 = vpack.c.b16 %v1289, %v1288
  %v1744 = vpack.c.b16 %v1291, %v1290
  %v1745 = vpack.c.b16 %v1293, %v1292
  %v1746 = vpack.c.b16 %v1295, %v1294
  %v1747 = vpack.c.b16 %v1297, %v1296
  %v1748 = vpack.c.b16 %v1299, %v1298
  %v1749 = vpack.c.b16 %v1301, %v1300
  %v1750 = vpack.c.b16 %v1303, %v1302
  %v1751 = vpack.c.b16 %v1305, %v1304
  %v1752 = vpack.c.b16 %v1307, %v1306
  %v1753 = vpack.c.b16 %v1309, %v1308
  %v1754 = vpack.c.b16 %v1311, %v1310
  %v1755 = vpack.c.b16 %v1313, %v1312
  %v1756 = vpack.c.b16 %v1315, %v1314
  %v1757 = vpack.c.b16 %v1317, %v1316
  %v1758 = vpack.c.b16 %v1319, %v1318
  %v1759 = vpack.c.b16 %v1321, %v1320
  %v1760 = vpack.c.b16 %v1323, %v1322
  %v1761 = vpack.c.b16 %v1325, %v1324
  %v1762 = vpack.c.b16 %v1327, %v1326
  %v1763 = vpack.c.b16 %v1329, %v1328
  %v1764 = vpack.c.b16 %v1331, %v1330
  %v1765 = vpack.c.b16 %v1333, %v1332
  %v1766 = vpack.c.b16 %v1335, %v1334
  %v1767 = vpack.c.b16 %v1337, %v1336
  %v1768 = vpack.c.b16 %v1339, %v1338
  %v1769 = vpack.c.b16 %v1341, %v1340
  %v1770 = vpack.c.b16 %v1343, %v1342
  %v1771 = vpack.c.b16 %v1345, %v1344
  %v1772 = vpack.c.b16 %v1347, %v1346
  %v1773 = vpack.c.b16 %v1349, %v1348
  %v1774 = vpack.c.b16 %v1351, %v1350
  %v1775 = vpack.c.b16 %v1353, %v1352
  %v1776 = vpack.c.b16 %v1355, %v1354
  %v1777 = vpack.c.b16 %v1357, %v1356
  %v1778 = vpack.c.b16 %v1359, %v1358
  %v1779 = vpack.c.b16 %v1361, %v1360
  %v1780 = vpack.c.b16 %v1363, %v1362
  %v1781 = vpack.c.b16 %v1365, %v1364
  %v1782 = vpack.c.b16 %v1367, %v1366
  %v1783 = vpack.c.b16 %v1369, %v1368
  %v1784 = vpack.c.b16 %v1371, %v1370
  %v1785 = vpack.c.b16 %v1373, %v1372
  %v1786 = vpack.c.b16 %v1375, %v1374
  %v1787 = vpack.c.b16 %v1377, %v1376
  %v1788 = vpack.c.b16 %v1379, %v1378
  %v1789 = vpack.c.b16 %v1381, %v1380
  %v1790 = vpack.c.b16 %v1383, %v1382
  %v1791 = vpack.c.b16 %v1385, %v1384
  %v1792 = vpack.c.b16 %v1387, %v1386
  %v1793 = vpack.c.b16 %v1389, %v1388
  %v1794 = vpack.c.b16 %v1391, %v1390
  %v1795 = vpack.c.b16 %v1393, %v1392
  %v1796 = vpack.c.b16 %v1395, %v1394
  %v1797 = vpack.c.b16 %v1397, %v1396
  %v1798 = vpack.c.b16 %v1399, %v1398
  %v1799 = vpack.c.b16 %v1401, %v1400
  %v1800 = vpack.c.b16 %v1403, %v1402
  %v1801 = vpack.c.b16 %v1405, %v1404
  %v1802 = vpack.c.b16 %v1407, %v1406
  %v1803 = vpack.c.b16 %v1409, %v1408
  %v1804 = vpack.c.b16 %v1411, %v1410
  %v1805 = vpack.c.b16 %v1413, %v1412
  %v1806 = vpack.c.b16 %v1415, %v1414
  %v1807 = vpack.c.b16 %v1417, %v1416
  %v1808 = vpack.c.b16 %v1419, %v1418
  %v1809 = vpack.c.b16 %v1421, %v1420
  %v1810 = vpack.c.b16 %v1423, %v1422
  %v1811 = vpack.c.b16 %v1425, %v1424
  %v1812 = vpack.c.b16 %v1427, %v1426
  %v1813 = vpack.c.b16 %v1429, %v1428
  %v1814 = vpack.c.b16 %v1431, %v1430
  %v1815 = vpack.c.b16 %v1433, %v1432
  %v1816 = vpack.c.b16 %v1435, %v1434
  %v1817 = vpack.c.b16 %v1437, %v1436
  %v1818 = vpack.c.b16 %v1439, %v1438
  %v1819 = vpack.c.b16 %v1441, %v1440
  %v1820 = vpack.c.b16 %v1443, %v1442
  %v1821 = vpack.c.b16 %v1445, %v1444
  %v1822 = vpack.c.b16 %v1447, %v1446
  %v1823 = vpack.c.b16 %v1449, %v1448
  %v1824 = vpack.c.b16 %v1451, %v1450
  %v1825 = vpack.c.b16 %v1453, %v1452
  %v1826 = vpack.c.b16 %v1455, %v1454
  %v1827 = vpack.c.b16 %v1457, %v1456
  %v1828 = vpack.c.b16 %v1459, %v1458
  %v1829 = vpack.c.b16 %v1461, %v1460
  %v1830 = vpack.c.b16 %v1463, %v1462
  %v1831 = vpack.c.b16 %v1465, %v1464
  %v1832 = vpack.c.b16 %v1467, %v1466
  %v1833 = vpack.c.b16 %v1469, %v1468
  %v1834 = vpack.c.b16 %v1471, %v1470
  %v1835 = vpack.c.b16 %v1473, %v1472
  %v1836 = vpack.c.b16 %v1475, %v1474
  %v1837 = vpack.c.b16 %v1477, %v1476
  %v1838 = vpack.c.b16 %v1479, %v1478
  %v1839 = vpack.c.b16 %v1481, %v1480
  %v1840 = vpack.c.b16 %v1483, %v1482
  %v1841 = vpack.c.b16 %v1485, %v1484
  %v1842 = vpack.c.b16 %v1487, %v1486
  %v1843 = vpack.c.b16 %v1489, %v1488
  %v1844 = vpack.c.b16 %v1491, %v1490
  %v1845 = vpack.c.b16 %v1493, %v1492
  %v1846 = vpack.c.b16 %v1495, %v1494
  %v1847 = vpack.c.b16 %v1497, %v1496
  %v1848 = vpack.c.b16 %v1499, %v1498
  %v1849 = vpack.c.b16 %v1501, %v1500
  %v1850 = vpack.c.b16 %v1503, %v1502
  %v1851 = vpack.c.b16 %v1505, %v1504
  %v1852 = vpack.c.b16 %v1507, %v1506
  %v1853 = vpack.c.b16 %v1509, %v1508
  %v1854 = vpack.c.b16 %v1511, %v1510
  %v1855 = vpack.c.b16 %v1513, %v1512
  %v1856 = vpack.c.b16 %v1515, %v1514
  %v1857 = vpack.c.b16 %v1517, %v1516
  %v1858 = vpack.c.b16 %v1519, %v1518
  %v1859 = vpack.c.b16 %v1521, %v1520
  %v1860 = vpack.c.b16 %v1523, %v1522
  %v1861 = vpack.c.b16 %v1525, %v1524
  %v1862 = vpack.c.b16 %v1527, %v1526
  %v1863 = vpack.c.b16 %v1529, %v1528
  %v1864 = vpack.c.b16 %v1531, %v1530
  %v1865 = vpack.c.b16 %v1533, %v1532
  %v1866 = vpack.c.b16 %v1535, %v1534
  %v1867 = vpack.c.b16 %v1537, %v1536
  %v1868 = vpack.c.b16 %v1539, %v1538
  %v1869 = vpack.c.b16 %v1541, %v1540
  %v1870 = vpack.c.b16 %v1543, %v1542
  %v1871 = vpack.c.b16 %v1545, %v1544
  %v1872 = vpack.c.b16 %v1547, %v1546
  %v1873 = vpack.c.b16 %v1549, %v1548
  %v1874 = vpack.c.b16 %v1551, %v1550
  %v1875 = vpack.c.b16 %v1553, %v1552
  %v1876 = vpack.c.b16 %v1555, %v1554
  %v1877 = vpack.c.b16 %v1557, %v1556
  %v1878 = vpack.c.b16 %v1559, %v1558
  %v1879 = vpack.c.b16 %v1561, %v1560
  %v1880 = vpack.c.b16 %v1563, %v1562
  %v1881 = vpack.c.b16 %v1565, %v1564
  %v1882 = vpack.c.b16 %v1567, %v1566
  %v1883 = vpack.c.b16 %v1569, %v1568
  %v1884 = vpack.c.b16 %v1571, %v1570
  %v1885 = vpack.c.b16 %v1573, %v1572
  %v1886 = vpack.c.b16 %v1575, %v1574
  %v1887 = vpack.c.b16 %v1577, %v1576
  %v1888 = vpack.c.b16 %v1579, %v1578
  %v1889 = vpack.c.b16 %v1581, %v1580
  %v1890 = vpack.c.b16 %v1583, %v1582
  %v1891 = vpack.c.b16 %v1585, %v1584
  %v1892 = vpack.c.b16 %v1587, %v1586
  %v1893 = vpack.c.b16 %v1589, %v1588
  %v1894 = vpack.c.b16 %v1591, %v1590
  %v1895 = vpack.c.b16 %v1593, %v1592
  %v1896 = vpack.c.b16 %v1595, %v1594
  %v1897 = vpack.c.b16 %v1597, %v1596
  %v1898 = vpack.c.b16 %v1599, %v1598
  %v1899 = vpack.c.b16 %v1601, %v1600
  %v1900 = vpack.c.b16 %v1603, %v1602
  %v1901 = vpack.c.b16 %v1605, %v1604
  %v1902 = vpack.c.b16 %v1607, %v1606
  %v1903 = vpack.c.b16 %v1609, %v1608
  %v1904 = vpack.c.b16 %v1611, %v1610
  %v1905 = vpack.c.b16 %v1613, %v1612
  %v1906 = vpack.c.b16 %v1615, %v1614
  %v1907 = vpack.c.b16 %v1617, %v1616
  %v1908 = vpack.c.b16 %v1619, %v1618
  %v1909 = vpack.c.b16 %v1621, %v1620
  %v1910 = vpack.c.b16 %v1623, %v1622
  %v1911 = vpack.c.b16 %v1625, %v1624
  %v1912 = vpack.c.b16 %v1627, %v1626
  %v1913 = vpack.c.b16 %v1629, %v1628
  %v1914 = vpack.c.b16 %v1631, %v1630
  %v1915 = vpack.c.b16 %v1633, %v1632
  %v1916 = vpack.c.b16 %v1635, %v1634
  %v1917 = vpack.c.b16 %v1637, %v1636
  %v1918 = vpack.c.b16 %v1639, %v1638
  %v1919 = vpack.c.b16 %v1641, %v1640
  %v1920 = vpack.c.b16 %v1643, %v1642
  %v1921 = vpack.c.b16 %v1645, %v1644
  %v1922 = vpack.c.b16 %v1647, %v1646
  %v1923 = vpack.c.b16 %v1649, %v1648
  %v1924 = vpack.c.b16 %v1651, %v1650
  %v1925 = vpack.c.b16 %v1653, %v1652
  %v1926 = vpack.c.b16 %v1655, %v1654
  %v1927 = vpack.c.b16 %v1657, %v1656
  %v1928 = vpack.c.b16 %v1659, %v1658
  %v1929 = vpack.c.b16 %v1661, %v1660
  %v1930 = vpack.c.b16 %v1663, %v1662
  %v1931 = vpack.c.b16 %v1665, %v1664
  %v1932 = vpack.c.b16 %v1667, %v1666
  %v1933 = vpack.c.b16 %v1669, %v1668
  %v1934 = vpack.c.b16 %v1671, %v1670
  %v1935 = vpack.c.b16 %v1673, %v1672
  %v1936 = vpack.c.b16 %v1675, %v1674
  %v1937 = vpack.c.b16 %v1677, %v1676
  %v1938 = vpack.c.b16 %v1679, %v1678
  %v1939 = vpack.c.b16 %v1681, %v1680
  %v1940 = vpack.c.b16 %v1683, %v1682
  %v1941 = vpack.c.b16 %v1685, %v1684
  %2198 = vmatprep.subr.bf16.mxu0 0
  %2199 = vmatpush1.bf16.msra.mxu0 %v1693
  %2200 = vmatprep.subr.bf16.mxu0 0
  %2201 = vmatpush1.bf16.msra.mxu0 %v1692
  %2202 = vmatprep.subr.bf16.mxu0 0
  %2203 = vmatpush1.bf16.msra.mxu0 %v1691
  %2204 = vmatprep.subr.bf16.mxu0 0
  %2205 = vmatpush1.bf16.msra.mxu0 %v1690
  %2206 = vmatprep.subr.bf16.mxu0 0
  %2207 = vmatpush1.bf16.msra.mxu0 %v1689
  %2208 = vmatprep.subr.bf16.mxu0 0
  %2209 = vmatpush1.bf16.msra.mxu0 %v1688
  %2210 = vmatprep.subr.bf16.mxu0 0
  %2211 = vmatpush1.bf16.msra.mxu0 %v1687
  %2212 = vmatprep.subr.bf16.mxu0 0
  %2213 = vmatpush1.bf16.msra.mxu0 %v1686
  %2214 = vmatprep.subr.bf16.mxu0 0
  %2215 = vmatpush2.bf16.msra.mxu0 %v1701
  %2216 = vmatprep.subr.bf16.mxu0 0
  %2217 = vmatpush2.bf16.msra.mxu0 %v1700
  %2218 = vmatprep.subr.bf16.mxu0 0
  %2219 = vmatpush2.bf16.msra.mxu0 %v1699
  %2220 = vmatprep.subr.bf16.mxu0 0
  %2221 = vmatpush2.bf16.msra.mxu0 %v1698
  %2222 = vmatprep.subr.bf16.mxu0 0
  %2223 = vmatpush2.bf16.msra.mxu0 %v1697
  %2224 = vmatprep.subr.bf16.mxu0 0
  %2225 = vmatpush2.bf16.msra.mxu0 %v1696
  %2226 = vmatprep.subr.bf16.mxu0 0
  %2227 = vmatpush2.bf16.msra.mxu0 %v1695
  %2228 = vmatprep.subr.bf16.mxu0 0
  %2229 = vmatpush2.bf16.msra.mxu0 %v1694
  %2230 = vmatprep.mubr.bf16.mxu0 %v599
  %2231 = vmatmul.mubr.bf16.gmra.mxu0 %v598
  %v2232 = vpop.f32.mrf.mxu0
  %v2233 = vadd.f32 %v548, %v2232
  %v2234 = vpop.f32.mrf.mxu0
  %v2235 = vpop.f32.mrf.mxu0
  %v2236 = vpop.f32.mrf.mxu0
  %2237 = vdwg.mxu0
  %2238 = vmatprep.subr.bf16.mxu0 0
  %2239 = vmatpush1.bf16.msra.mxu0 %v1709
  %2240 = vmatprep.subr.bf16.mxu0 0
  %2241 = vmatpush1.bf16.msra.mxu0 %v1708
  %2242 = vmatprep.subr.bf16.mxu0 0
  %2243 = vmatpush1.bf16.msra.mxu0 %v1707
  %2244 = vmatprep.subr.bf16.mxu0 0
  %2245 = vmatpush1.bf16.msra.mxu0 %v1706
  %2246 = vmatprep.subr.bf16.mxu0 0
  %2247 = vmatpush1.bf16.msra.mxu0 %v1705
  %2248 = vmatprep.subr.bf16.mxu0 0
  %2249 = vmatpush1.bf16.msra.mxu0 %v1704
  %2250 = vmatprep.subr.bf16.mxu0 0
  %2251 = vmatpush1.bf16.msra.mxu0 %v1703
  %2252 = vmatprep.subr.bf16.mxu0 0
  %2253 = vmatpush1.bf16.msra.mxu0 %v1702
  %2254 = vmatprep.subr.bf16.mxu0 0
  %2255 = vmatpush2.bf16.msra.mxu0 %v1717
  %2256 = vmatprep.subr.bf16.mxu0 0
  %2257 = vmatpush2.bf16.msra.mxu0 %v1716
  %2258 = vmatprep.subr.bf16.mxu0 0
  %2259 = vmatpush2.bf16.msra.mxu0 %v1715
  %2260 = vmatprep.subr.bf16.mxu0 0
  %2261 = vmatpush2.bf16.msra.mxu0 %v1714
  %2262 = vmatprep.subr.bf16.mxu0 0
  %2263 = vmatpush2.bf16.msra.mxu0 %v1713
  %2264 = vmatprep.subr.bf16.mxu0 0
  %2265 = vmatpush2.bf16.msra.mxu0 %v1712
  %2266 = vmatprep.subr.bf16.mxu0 0
  %2267 = vmatpush2.bf16.msra.mxu0 %v1711
  %2268 = vmatprep.subr.bf16.mxu0 0
  %2269 = vmatpush2.bf16.msra.mxu0 %v1710
  %2270 = vmatprep.mubr.bf16.mxu0 %v601
  %2271 = vmatmul.mubr.bf16.gmra.mxu0 %v600
  %v2272 = vpop.f32.mrf.mxu0
  %v2273 = vadd.f32 %v2233, %v2272
  %v2274 = vpop.f32.mrf.mxu0
  %v2275 = vpop.f32.mrf.mxu0
  %v2276 = vpop.f32.mrf.mxu0
  %2277 = vdwg.mxu0
  %2278 = vmatprep.subr.bf16.mxu0 0
  %2279 = vmatpush1.bf16.msra.mxu0 %v1725
  %2280 = vmatprep.subr.bf16.mxu0 0
  %2281 = vmatpush1.bf16.msra.mxu0 %v1724
  %2282 = vmatprep.subr.bf16.mxu0 0
  %2283 = vmatpush1.bf16.msra.mxu0 %v1723
  %2284 = vmatprep.subr.bf16.mxu0 0
  %2285 = vmatpush1.bf16.msra.mxu0 %v1722
  %2286 = vmatprep.subr.bf16.mxu0 0
  %2287 = vmatpush1.bf16.msra.mxu0 %v1721
  %2288 = vmatprep.subr.bf16.mxu0 0
  %2289 = vmatpush1.bf16.msra.mxu0 %v1720
  %2290 = vmatprep.subr.bf16.mxu0 0
  %2291 = vmatpush1.bf16.msra.mxu0 %v1719
  %2292 = vmatprep.subr.bf16.mxu0 0
  %2293 = vmatpush1.bf16.msra.mxu0 %v1718
  %2294 = vmatprep.subr.bf16.mxu0 0
  %2295 = vmatpush2.bf16.msra.mxu0 %v1733
  %2296 = vmatprep.subr.bf16.mxu0 0
  %2297 = vmatpush2.bf16.msra.mxu0 %v1732
  %2298 = vmatprep.subr.bf16.mxu0 0
  %2299 = vmatpush2.bf16.msra.mxu0 %v1731
  %2300 = vmatprep.subr.bf16.mxu0 0
  %2301 = vmatpush2.bf16.msra.mxu0 %v1730
  %2302 = vmatprep.subr.bf16.mxu0 0
  %2303 = vmatpush2.bf16.msra.mxu0 %v1729
  %2304 = vmatprep.subr.bf16.mxu0 0
  %2305 = vmatpush2.bf16.msra.mxu0 %v1728
  %2306 = vmatprep.subr.bf16.mxu0 0
  %2307 = vmatpush2.bf16.msra.mxu0 %v1727
  %2308 = vmatprep.subr.bf16.mxu0 0
  %2309 = vmatpush2.bf16.msra.mxu0 %v1726
  %2310 = vmatprep.mubr.bf16.mxu0 %v603
  %2311 = vmatmul.mubr.bf16.gmra.mxu0 %v602
  %v2312 = vpop.f32.mrf.mxu0
  %v2313 = vadd.f32 %v2273, %v2312
  %v2314 = vpop.f32.mrf.mxu0
  %v2315 = vpop.f32.mrf.mxu0
  %v2316 = vpop.f32.mrf.mxu0
  %2317 = vdwg.mxu0
  %2318 = vmatprep.subr.bf16.mxu0 0
  %2319 = vmatpush1.bf16.msra.mxu0 %v1741
  %2320 = vmatprep.subr.bf16.mxu0 0
  %2321 = vmatpush1.bf16.msra.mxu0 %v1740
  %2322 = vmatprep.subr.bf16.mxu0 0
  %2323 = vmatpush1.bf16.msra.mxu0 %v1739
  %2324 = vmatprep.subr.bf16.mxu0 0
  %2325 = vmatpush1.bf16.msra.mxu0 %v1738
  %2326 = vmatprep.subr.bf16.mxu0 0
  %2327 = vmatpush1.bf16.msra.mxu0 %v1737
  %2328 = vmatprep.subr.bf16.mxu0 0
  %2329 = vmatpush1.bf16.msra.mxu0 %v1736
  %2330 = vmatprep.subr.bf16.mxu0 0
  %2331 = vmatpush1.bf16.msra.mxu0 %v1735
  %2332 = vmatprep.subr.bf16.mxu0 0
  %2333 = vmatpush1.bf16.msra.mxu0 %v1734
  %2334 = vmatprep.subr.bf16.mxu0 0
  %2335 = vmatpush2.bf16.msra.mxu0 %v1749
  %2336 = vmatprep.subr.bf16.mxu0 0
  %2337 = vmatpush2.bf16.msra.mxu0 %v1748
  %2338 = vmatprep.subr.bf16.mxu0 0
  %2339 = vmatpush2.bf16.msra.mxu0 %v1747
  %2340 = vmatprep.subr.bf16.mxu0 0
  %2341 = vmatpush2.bf16.msra.mxu0 %v1746
  %2342 = vmatprep.subr.bf16.mxu0 0
  %2343 = vmatpush2.bf16.msra.mxu0 %v1745
  %2344 = vmatprep.subr.bf16.mxu0 0
  %2345 = vmatpush2.bf16.msra.mxu0 %v1744
  %2346 = vmatprep.subr.bf16.mxu0 0
  %2347 = vmatpush2.bf16.msra.mxu0 %v1743
  %2348 = vmatprep.subr.bf16.mxu0 0
  %2349 = vmatpush2.bf16.msra.mxu0 %v1742
  %2350 = vmatprep.mubr.bf16.mxu0 %v605
  %2351 = vmatmul.mubr.bf16.gmra.mxu0 %v604
  %v2352 = vpop.f32.mrf.mxu0
  %v2353 = vadd.f32 %v2313, %v2352
  %v2354 = vpop.f32.mrf.mxu0
  %v2355 = vpop.f32.mrf.mxu0
  %v2356 = vpop.f32.mrf.mxu0
  %2357 = vdwg.mxu0
  %2358 = vmatprep.subr.bf16.mxu0 0
  %2359 = vmatpush1.bf16.msra.mxu0 %v1757
  %2360 = vmatprep.subr.bf16.mxu0 0
  %2361 = vmatpush1.bf16.msra.mxu0 %v1756
  %2362 = vmatprep.subr.bf16.mxu0 0
  %2363 = vmatpush1.bf16.msra.mxu0 %v1755
  %2364 = vmatprep.subr.bf16.mxu0 0
  %2365 = vmatpush1.bf16.msra.mxu0 %v1754
  %2366 = vmatprep.subr.bf16.mxu0 0
  %2367 = vmatpush1.bf16.msra.mxu0 %v1753
  %2368 = vmatprep.subr.bf16.mxu0 0
  %2369 = vmatpush1.bf16.msra.mxu0 %v1752
  %2370 = vmatprep.subr.bf16.mxu0 0
  %2371 = vmatpush1.bf16.msra.mxu0 %v1751
  %2372 = vmatprep.subr.bf16.mxu0 0
  %2373 = vmatpush1.bf16.msra.mxu0 %v1750
  %2374 = vmatprep.subr.bf16.mxu0 0
  %2375 = vmatpush2.bf16.msra.mxu0 %v1765
  %2376 = vmatprep.subr.bf16.mxu0 0
  %2377 = vmatpush2.bf16.msra.mxu0 %v1764
  %2378 = vmatprep.subr.bf16.mxu0 0
  %2379 = vmatpush2.bf16.msra.mxu0 %v1763
  %2380 = vmatprep.subr.bf16.mxu0 0
  %2381 = vmatpush2.bf16.msra.mxu0 %v1762
  %2382 = vmatprep.subr.bf16.mxu0 0
  %2383 = vmatpush2.bf16.msra.mxu0 %v1761
  %2384 = vmatprep.subr.bf16.mxu0 0
  %2385 = vmatpush2.bf16.msra.mxu0 %v1760
  %2386 = vmatprep.subr.bf16.mxu0 0
  %2387 = vmatpush2.bf16.msra.mxu0 %v1759
  %2388 = vmatprep.subr.bf16.mxu0 0
  %2389 = vmatpush2.bf16.msra.mxu0 %v1758
  %2390 = vmatprep.mubr.bf16.mxu0 %v607
  %2391 = vmatmul.mubr.bf16.gmra.mxu0 %v606
  %v2392 = vpop.f32.mrf.mxu0
  %v2393 = vadd.f32 %v2353, %v2392
  %v2394 = vpop.f32.mrf.mxu0
  %v2395 = vpop.f32.mrf.mxu0
  %v2396 = vpop.f32.mrf.mxu0
  %2397 = vdwg.mxu0
  %2398 = vmatprep.subr.bf16.mxu0 0
  %2399 = vmatpush1.bf16.msra.mxu0 %v1773
  %2400 = vmatprep.subr.bf16.mxu0 0
  %2401 = vmatpush1.bf16.msra.mxu0 %v1772
  %2402 = vmatprep.subr.bf16.mxu0 0
  %2403 = vmatpush1.bf16.msra.mxu0 %v1771
  %2404 = vmatprep.subr.bf16.mxu0 0
  %2405 = vmatpush1.bf16.msra.mxu0 %v1770
  %2406 = vmatprep.subr.bf16.mxu0 0
  %2407 = vmatpush1.bf16.msra.mxu0 %v1769
  %2408 = vmatprep.subr.bf16.mxu0 0
  %2409 = vmatpush1.bf16.msra.mxu0 %v1768
  %2410 = vmatprep.subr.bf16.mxu0 0
  %2411 = vmatpush1.bf16.msra.mxu0 %v1767
  %2412 = vmatprep.subr.bf16.mxu0 0
  %2413 = vmatpush1.bf16.msra.mxu0 %v1766
  %2414 = vmatprep.subr.bf16.mxu0 0
  %2415 = vmatpush2.bf16.msra.mxu0 %v1781
  %2416 = vmatprep.subr.bf16.mxu0 0
  %2417 = vmatpush2.bf16.msra.mxu0 %v1780
  %2418 = vmatprep.subr.bf16.mxu0 0
  %2419 = vmatpush2.bf16.msra.mxu0 %v1779
  %2420 = vmatprep.subr.bf16.mxu0 0
  %2421 = vmatpush2.bf16.msra.mxu0 %v1778
  %2422 = vmatprep.subr.bf16.mxu0 0
  %2423 = vmatpush2.bf16.msra.mxu0 %v1777
  %2424 = vmatprep.subr.bf16.mxu0 0
  %2425 = vmatpush2.bf16.msra.mxu0 %v1776
  %2426 = vmatprep.subr.bf16.mxu0 0
  %2427 = vmatpush2.bf16.msra.mxu0 %v1775
  %2428 = vmatprep.subr.bf16.mxu0 0
  %2429 = vmatpush2.bf16.msra.mxu0 %v1774
  %2430 = vmatprep.mubr.bf16.mxu0 %v609
  %2431 = vmatmul.mubr.bf16.gmra.mxu0 %v608
  %v2432 = vpop.f32.mrf.mxu0
  %v2433 = vadd.f32 %v2393, %v2432
  %v2434 = vpop.f32.mrf.mxu0
  %v2435 = vpop.f32.mrf.mxu0
  %v2436 = vpop.f32.mrf.mxu0
  %2437 = vdwg.mxu0
  %2438 = vmatprep.subr.bf16.mxu0 0
  %2439 = vmatpush1.bf16.msra.mxu0 %v1789
  %2440 = vmatprep.subr.bf16.mxu0 0
  %2441 = vmatpush1.bf16.msra.mxu0 %v1788
  %2442 = vmatprep.subr.bf16.mxu0 0
  %2443 = vmatpush1.bf16.msra.mxu0 %v1787
  %2444 = vmatprep.subr.bf16.mxu0 0
  %2445 = vmatpush1.bf16.msra.mxu0 %v1786
  %2446 = vmatprep.subr.bf16.mxu0 0
  %2447 = vmatpush1.bf16.msra.mxu0 %v1785
  %2448 = vmatprep.subr.bf16.mxu0 0
  %2449 = vmatpush1.bf16.msra.mxu0 %v1784
  %2450 = vmatprep.subr.bf16.mxu0 0
  %2451 = vmatpush1.bf16.msra.mxu0 %v1783
  %2452 = vmatprep.subr.bf16.mxu0 0
  %2453 = vmatpush1.bf16.msra.mxu0 %v1782
  %2454 = vmatprep.subr.bf16.mxu0 0
  %2455 = vmatpush2.bf16.msra.mxu0 %v1797
  %2456 = vmatprep.subr.bf16.mxu0 0
  %2457 = vmatpush2.bf16.msra.mxu0 %v1796
  %2458 = vmatprep.subr.bf16.mxu0 0
  %2459 = vmatpush2.bf16.msra.mxu0 %v1795
  %2460 = vmatprep.subr.bf16.mxu0 0
  %2461 = vmatpush2.bf16.msra.mxu0 %v1794
  %2462 = vmatprep.subr.bf16.mxu0 0
  %2463 = vmatpush2.bf16.msra.mxu0 %v1793
  %2464 = vmatprep.subr.bf16.mxu0 0
  %2465 = vmatpush2.bf16.msra.mxu0 %v1792
  %2466 = vmatprep.subr.bf16.mxu0 0
  %2467 = vmatpush2.bf16.msra.mxu0 %v1791
  %2468 = vmatprep.subr.bf16.mxu0 0
  %2469 = vmatpush2.bf16.msra.mxu0 %v1790
  %2470 = vmatprep.mubr.bf16.mxu0 %v611
  %2471 = vmatmul.mubr.bf16.gmra.mxu0 %v610
  %v2472 = vpop.f32.mrf.mxu0
  %v2473 = vadd.f32 %v2433, %v2472
  %v2474 = vpop.f32.mrf.mxu0
  %v2475 = vpop.f32.mrf.mxu0
  %v2476 = vpop.f32.mrf.mxu0
  %2477 = vdwg.mxu0
  %2478 = vmatprep.subr.bf16.mxu0 0
  %2479 = vmatpush1.bf16.msra.mxu0 %v1805
  %2480 = vmatprep.subr.bf16.mxu0 0
  %2481 = vmatpush1.bf16.msra.mxu0 %v1804
  %2482 = vmatprep.subr.bf16.mxu0 0
  %2483 = vmatpush1.bf16.msra.mxu0 %v1803
  %2484 = vmatprep.subr.bf16.mxu0 0
  %2485 = vmatpush1.bf16.msra.mxu0 %v1802
  %2486 = vmatprep.subr.bf16.mxu0 0
  %2487 = vmatpush1.bf16.msra.mxu0 %v1801
  %2488 = vmatprep.subr.bf16.mxu0 0
  %2489 = vmatpush1.bf16.msra.mxu0 %v1800
  %2490 = vmatprep.subr.bf16.mxu0 0
  %2491 = vmatpush1.bf16.msra.mxu0 %v1799
  %2492 = vmatprep.subr.bf16.mxu0 0
  %2493 = vmatpush1.bf16.msra.mxu0 %v1798
  %2494 = vmatprep.subr.bf16.mxu0 0
  %2495 = vmatpush2.bf16.msra.mxu0 %v1813
  %2496 = vmatprep.subr.bf16.mxu0 0
  %2497 = vmatpush2.bf16.msra.mxu0 %v1812
  %2498 = vmatprep.subr.bf16.mxu0 0
  %2499 = vmatpush2.bf16.msra.mxu0 %v1811
  %2500 = vmatprep.subr.bf16.mxu0 0
  %2501 = vmatpush2.bf16.msra.mxu0 %v1810
  %2502 = vmatprep.subr.bf16.mxu0 0
  %2503 = vmatpush2.bf16.msra.mxu0 %v1809
  %2504 = vmatprep.subr.bf16.mxu0 0
  %2505 = vmatpush2.bf16.msra.mxu0 %v1808
  %2506 = vmatprep.subr.bf16.mxu0 0
  %2507 = vmatpush2.bf16.msra.mxu0 %v1807
  %2508 = vmatprep.subr.bf16.mxu0 0
  %2509 = vmatpush2.bf16.msra.mxu0 %v1806
  %2510 = vmatprep.mubr.bf16.mxu0 %v613
  %2511 = vmatmul.mubr.bf16.gmra.mxu0 %v612
  %v2512 = vpop.f32.mrf.mxu0
  %v2513 = vadd.f32 %v2473, %v2512
  %v2514 = vpop.f32.mrf.mxu0
  %v2515 = vpop.f32.mrf.mxu0
  %v2516 = vpop.f32.mrf.mxu0
  %2517 = vdwg.mxu0
  %2518 = vmatprep.subr.bf16.mxu0 0
  %2519 = vmatpush1.bf16.msra.mxu0 %v1821
  %2520 = vmatprep.subr.bf16.mxu0 0
  %2521 = vmatpush1.bf16.msra.mxu0 %v1820
  %2522 = vmatprep.subr.bf16.mxu0 0
  %2523 = vmatpush1.bf16.msra.mxu0 %v1819
  %2524 = vmatprep.subr.bf16.mxu0 0
  %2525 = vmatpush1.bf16.msra.mxu0 %v1818
  %2526 = vmatprep.subr.bf16.mxu0 0
  %2527 = vmatpush1.bf16.msra.mxu0 %v1817
  %2528 = vmatprep.subr.bf16.mxu0 0
  %2529 = vmatpush1.bf16.msra.mxu0 %v1816
  %2530 = vmatprep.subr.bf16.mxu0 0
  %2531 = vmatpush1.bf16.msra.mxu0 %v1815
  %2532 = vmatprep.subr.bf16.mxu0 0
  %2533 = vmatpush1.bf16.msra.mxu0 %v1814
  %2534 = vmatprep.subr.bf16.mxu0 0
  %2535 = vmatpush2.bf16.msra.mxu0 %v1829
  %2536 = vmatprep.subr.bf16.mxu0 0
  %2537 = vmatpush2.bf16.msra.mxu0 %v1828
  %2538 = vmatprep.subr.bf16.mxu0 0
  %2539 = vmatpush2.bf16.msra.mxu0 %v1827
  %2540 = vmatprep.subr.bf16.mxu0 0
  %2541 = vmatpush2.bf16.msra.mxu0 %v1826
  %2542 = vmatprep.subr.bf16.mxu0 0
  %2543 = vmatpush2.bf16.msra.mxu0 %v1825
  %2544 = vmatprep.subr.bf16.mxu0 0
  %2545 = vmatpush2.bf16.msra.mxu0 %v1824
  %2546 = vmatprep.subr.bf16.mxu0 0
  %2547 = vmatpush2.bf16.msra.mxu0 %v1823
  %2548 = vmatprep.subr.bf16.mxu0 0
  %2549 = vmatpush2.bf16.msra.mxu0 %v1822
  %2550 = vmatprep.mubr.bf16.mxu0 %v615
  %2551 = vmatmul.mubr.bf16.gmra.mxu0 %v614
  %v2552 = vpop.f32.mrf.mxu0
  %v2553 = vadd.f32 %v2513, %v2552
  %v2554 = vpop.f32.mrf.mxu0
  %v2555 = vpop.f32.mrf.mxu0
  %v2556 = vpop.f32.mrf.mxu0
  %2557 = vdwg.mxu0
  %2558 = vmatprep.subr.bf16.mxu0 0
  %2559 = vmatpush1.bf16.msra.mxu0 %v1837
  %2560 = vmatprep.subr.bf16.mxu0 0
  %2561 = vmatpush1.bf16.msra.mxu0 %v1836
  %2562 = vmatprep.subr.bf16.mxu0 0
  %2563 = vmatpush1.bf16.msra.mxu0 %v1835
  %2564 = vmatprep.subr.bf16.mxu0 0
  %2565 = vmatpush1.bf16.msra.mxu0 %v1834
  %2566 = vmatprep.subr.bf16.mxu0 0
  %2567 = vmatpush1.bf16.msra.mxu0 %v1833
  %2568 = vmatprep.subr.bf16.mxu0 0
  %2569 = vmatpush1.bf16.msra.mxu0 %v1832
  %2570 = vmatprep.subr.bf16.mxu0 0
  %2571 = vmatpush1.bf16.msra.mxu0 %v1831
  %2572 = vmatprep.subr.bf16.mxu0 0
  %2573 = vmatpush1.bf16.msra.mxu0 %v1830
  %2574 = vmatprep.subr.bf16.mxu0 0
  %2575 = vmatpush2.bf16.msra.mxu0 %v1845
  %2576 = vmatprep.subr.bf16.mxu0 0
  %2577 = vmatpush2.bf16.msra.mxu0 %v1844
  %2578 = vmatprep.subr.bf16.mxu0 0
  %2579 = vmatpush2.bf16.msra.mxu0 %v1843
  %2580 = vmatprep.subr.bf16.mxu0 0
  %2581 = vmatpush2.bf16.msra.mxu0 %v1842
  %2582 = vmatprep.subr.bf16.mxu0 0
  %2583 = vmatpush2.bf16.msra.mxu0 %v1841
  %2584 = vmatprep.subr.bf16.mxu0 0
  %2585 = vmatpush2.bf16.msra.mxu0 %v1840
  %2586 = vmatprep.subr.bf16.mxu0 0
  %2587 = vmatpush2.bf16.msra.mxu0 %v1839
  %2588 = vmatprep.subr.bf16.mxu0 0
  %2589 = vmatpush2.bf16.msra.mxu0 %v1838
  %2590 = vmatprep.mubr.bf16.mxu0 %v617
  %2591 = vmatmul.mubr.bf16.gmra.mxu0 %v616
  %v2592 = vpop.f32.mrf.mxu0
  %v2593 = vadd.f32 %v2553, %v2592
  %v2594 = vpop.f32.mrf.mxu0
  %v2595 = vpop.f32.mrf.mxu0
  %v2596 = vpop.f32.mrf.mxu0
  %2597 = vdwg.mxu0
  %2598 = vmatprep.subr.bf16.mxu0 0
  %2599 = vmatpush1.bf16.msra.mxu0 %v1853
  %2600 = vmatprep.subr.bf16.mxu0 0
  %2601 = vmatpush1.bf16.msra.mxu0 %v1852
  %2602 = vmatprep.subr.bf16.mxu0 0
  %2603 = vmatpush1.bf16.msra.mxu0 %v1851
  %2604 = vmatprep.subr.bf16.mxu0 0
  %2605 = vmatpush1.bf16.msra.mxu0 %v1850
  %2606 = vmatprep.subr.bf16.mxu0 0
  %2607 = vmatpush1.bf16.msra.mxu0 %v1849
  %2608 = vmatprep.subr.bf16.mxu0 0
  %2609 = vmatpush1.bf16.msra.mxu0 %v1848
  %2610 = vmatprep.subr.bf16.mxu0 0
  %2611 = vmatpush1.bf16.msra.mxu0 %v1847
  %2612 = vmatprep.subr.bf16.mxu0 0
  %2613 = vmatpush1.bf16.msra.mxu0 %v1846
  %2614 = vmatprep.subr.bf16.mxu0 0
  %2615 = vmatpush2.bf16.msra.mxu0 %v1861
  %2616 = vmatprep.subr.bf16.mxu0 0
  %2617 = vmatpush2.bf16.msra.mxu0 %v1860
  %2618 = vmatprep.subr.bf16.mxu0 0
  %2619 = vmatpush2.bf16.msra.mxu0 %v1859
  %2620 = vmatprep.subr.bf16.mxu0 0
  %2621 = vmatpush2.bf16.msra.mxu0 %v1858
  %2622 = vmatprep.subr.bf16.mxu0 0
  %2623 = vmatpush2.bf16.msra.mxu0 %v1857
  %2624 = vmatprep.subr.bf16.mxu0 0
  %2625 = vmatpush2.bf16.msra.mxu0 %v1856
  %2626 = vmatprep.subr.bf16.mxu0 0
  %2627 = vmatpush2.bf16.msra.mxu0 %v1855
  %2628 = vmatprep.subr.bf16.mxu0 0
  %2629 = vmatpush2.bf16.msra.mxu0 %v1854
  %2630 = vmatprep.mubr.bf16.mxu0 %v619
  %2631 = vmatmul.mubr.bf16.gmra.mxu0 %v618
  %v2632 = vpop.f32.mrf.mxu0
  %v2633 = vadd.f32 %v2593, %v2632
  %v2634 = vpop.f32.mrf.mxu0
  %v2635 = vpop.f32.mrf.mxu0
  %v2636 = vpop.f32.mrf.mxu0
  %2637 = vdwg.mxu0
  %2638 = vmatprep.subr.bf16.mxu0 0
  %2639 = vmatpush1.bf16.msra.mxu0 %v1869
  %2640 = vmatprep.subr.bf16.mxu0 0
  %2641 = vmatpush1.bf16.msra.mxu0 %v1868
  %2642 = vmatprep.subr.bf16.mxu0 0
  %2643 = vmatpush1.bf16.msra.mxu0 %v1867
  %2644 = vmatprep.subr.bf16.mxu0 0
  %2645 = vmatpush1.bf16.msra.mxu0 %v1866
  %2646 = vmatprep.subr.bf16.mxu0 0
  %2647 = vmatpush1.bf16.msra.mxu0 %v1865
  %2648 = vmatprep.subr.bf16.mxu0 0
  %2649 = vmatpush1.bf16.msra.mxu0 %v1864
  %2650 = vmatprep.subr.bf16.mxu0 0
  %2651 = vmatpush1.bf16.msra.mxu0 %v1863
  %2652 = vmatprep.subr.bf16.mxu0 0
  %2653 = vmatpush1.bf16.msra.mxu0 %v1862
  %2654 = vmatprep.subr.bf16.mxu0 0
  %2655 = vmatpush2.bf16.msra.mxu0 %v1877
  %2656 = vmatprep.subr.bf16.mxu0 0
  %2657 = vmatpush2.bf16.msra.mxu0 %v1876
  %2658 = vmatprep.subr.bf16.mxu0 0
  %2659 = vmatpush2.bf16.msra.mxu0 %v1875
  %2660 = vmatprep.subr.bf16.mxu0 0
  %2661 = vmatpush2.bf16.msra.mxu0 %v1874
  %2662 = vmatprep.subr.bf16.mxu0 0
  %2663 = vmatpush2.bf16.msra.mxu0 %v1873
  %2664 = vmatprep.subr.bf16.mxu0 0
  %2665 = vmatpush2.bf16.msra.mxu0 %v1872
  %2666 = vmatprep.subr.bf16.mxu0 0
  %2667 = vmatpush2.bf16.msra.mxu0 %v1871
  %2668 = vmatprep.subr.bf16.mxu0 0
  %2669 = vmatpush2.bf16.msra.mxu0 %v1870
  %2670 = vmatprep.mubr.bf16.mxu0 %v621
  %2671 = vmatmul.mubr.bf16.gmra.mxu0 %v620
  %v2672 = vpop.f32.mrf.mxu0
  %v2673 = vadd.f32 %v2633, %v2672
  %v2674 = vpop.f32.mrf.mxu0
  %v2675 = vpop.f32.mrf.mxu0
  %v2676 = vpop.f32.mrf.mxu0
  %2677 = vdwg.mxu0
  %2678 = vmatprep.subr.bf16.mxu0 0
  %2679 = vmatpush1.bf16.msra.mxu0 %v1885
  %2680 = vmatprep.subr.bf16.mxu0 0
  %2681 = vmatpush1.bf16.msra.mxu0 %v1884
  %2682 = vmatprep.subr.bf16.mxu0 0
  %2683 = vmatpush1.bf16.msra.mxu0 %v1883
  %2684 = vmatprep.subr.bf16.mxu0 0
  %2685 = vmatpush1.bf16.msra.mxu0 %v1882
  %2686 = vmatprep.subr.bf16.mxu0 0
  %2687 = vmatpush1.bf16.msra.mxu0 %v1881
  %2688 = vmatprep.subr.bf16.mxu0 0
  %2689 = vmatpush1.bf16.msra.mxu0 %v1880
  %2690 = vmatprep.subr.bf16.mxu0 0
  %2691 = vmatpush1.bf16.msra.mxu0 %v1879
  %2692 = vmatprep.subr.bf16.mxu0 0
  %2693 = vmatpush1.bf16.msra.mxu0 %v1878
  %2694 = vmatprep.subr.bf16.mxu0 0
  %2695 = vmatpush2.bf16.msra.mxu0 %v1893
  %2696 = vmatprep.subr.bf16.mxu0 0
  %2697 = vmatpush2.bf16.msra.mxu0 %v1892
  %2698 = vmatprep.subr.bf16.mxu0 0
  %2699 = vmatpush2.bf16.msra.mxu0 %v1891
  %2700 = vmatprep.subr.bf16.mxu0 0
  %2701 = vmatpush2.bf16.msra.mxu0 %v1890
  %2702 = vmatprep.subr.bf16.mxu0 0
  %2703 = vmatpush2.bf16.msra.mxu0 %v1889
  %2704 = vmatprep.subr.bf16.mxu0 0
  %2705 = vmatpush2.bf16.msra.mxu0 %v1888
  %2706 = vmatprep.subr.bf16.mxu0 0
  %2707 = vmatpush2.bf16.msra.mxu0 %v1887
  %2708 = vmatprep.subr.bf16.mxu0 0
  %2709 = vmatpush2.bf16.msra.mxu0 %v1886
  %2710 = vmatprep.mubr.bf16.mxu0 %v623
  %2711 = vmatmul.mubr.bf16.gmra.mxu0 %v622
  %v2712 = vpop.f32.mrf.mxu0
  %v2713 = vadd.f32 %v2673, %v2712
  %v2714 = vpop.f32.mrf.mxu0
  %v2715 = vpop.f32.mrf.mxu0
  %v2716 = vpop.f32.mrf.mxu0
  %2717 = vdwg.mxu0
  %2718 = vmatprep.subr.bf16.mxu0 0
  %2719 = vmatpush1.bf16.msra.mxu0 %v1901
  %2720 = vmatprep.subr.bf16.mxu0 0
  %2721 = vmatpush1.bf16.msra.mxu0 %v1900
  %2722 = vmatprep.subr.bf16.mxu0 0
  %2723 = vmatpush1.bf16.msra.mxu0 %v1899
  %2724 = vmatprep.subr.bf16.mxu0 0
  %2725 = vmatpush1.bf16.msra.mxu0 %v1898
  %2726 = vmatprep.subr.bf16.mxu0 0
  %2727 = vmatpush1.bf16.msra.mxu0 %v1897
  %2728 = vmatprep.subr.bf16.mxu0 0
  %2729 = vmatpush1.bf16.msra.mxu0 %v1896
  %2730 = vmatprep.subr.bf16.mxu0 0
  %2731 = vmatpush1.bf16.msra.mxu0 %v1895
  %2732 = vmatprep.subr.bf16.mxu0 0
  %2733 = vmatpush1.bf16.msra.mxu0 %v1894
  %2734 = vmatprep.subr.bf16.mxu0 0
  %2735 = vmatpush2.bf16.msra.mxu0 %v1909
  %2736 = vmatprep.subr.bf16.mxu0 0
  %2737 = vmatpush2.bf16.msra.mxu0 %v1908
  %2738 = vmatprep.subr.bf16.mxu0 0
  %2739 = vmatpush2.bf16.msra.mxu0 %v1907
  %2740 = vmatprep.subr.bf16.mxu0 0
  %2741 = vmatpush2.bf16.msra.mxu0 %v1906
  %2742 = vmatprep.subr.bf16.mxu0 0
  %2743 = vmatpush2.bf16.msra.mxu0 %v1905
  %2744 = vmatprep.subr.bf16.mxu0 0
  %2745 = vmatpush2.bf16.msra.mxu0 %v1904
  %2746 = vmatprep.subr.bf16.mxu0 0
  %2747 = vmatpush2.bf16.msra.mxu0 %v1903
  %2748 = vmatprep.subr.bf16.mxu0 0
  %2749 = vmatpush2.bf16.msra.mxu0 %v1902
  %2750 = vmatprep.mubr.bf16.mxu0 %v625
  %2751 = vmatmul.mubr.bf16.gmra.mxu0 %v624
  %v2752 = vpop.f32.mrf.mxu0
  %v2753 = vadd.f32 %v2713, %v2752
  %v2754 = vpop.f32.mrf.mxu0
  %v2755 = vpop.f32.mrf.mxu0
  %v2756 = vpop.f32.mrf.mxu0
  %2757 = vdwg.mxu0
  %2758 = vmatprep.subr.bf16.mxu0 0
  %2759 = vmatpush1.bf16.msra.mxu0 %v1917
  %2760 = vmatprep.subr.bf16.mxu0 0
  %2761 = vmatpush1.bf16.msra.mxu0 %v1916
  %2762 = vmatprep.subr.bf16.mxu0 0
  %2763 = vmatpush1.bf16.msra.mxu0 %v1915
  %2764 = vmatprep.subr.bf16.mxu0 0
  %2765 = vmatpush1.bf16.msra.mxu0 %v1914
  %2766 = vmatprep.subr.bf16.mxu0 0
  %2767 = vmatpush1.bf16.msra.mxu0 %v1913
  %2768 = vmatprep.subr.bf16.mxu0 0
  %2769 = vmatpush1.bf16.msra.mxu0 %v1912
  %2770 = vmatprep.subr.bf16.mxu0 0
  %2771 = vmatpush1.bf16.msra.mxu0 %v1911
  %2772 = vmatprep.subr.bf16.mxu0 0
  %2773 = vmatpush1.bf16.msra.mxu0 %v1910
  %2774 = vmatprep.subr.bf16.mxu0 0
  %2775 = vmatpush2.bf16.msra.mxu0 %v1925
  %2776 = vmatprep.subr.bf16.mxu0 0
  %2777 = vmatpush2.bf16.msra.mxu0 %v1924
  %2778 = vmatprep.subr.bf16.mxu0 0
  %2779 = vmatpush2.bf16.msra.mxu0 %v1923
  %2780 = vmatprep.subr.bf16.mxu0 0
  %2781 = vmatpush2.bf16.msra.mxu0 %v1922
  %2782 = vmatprep.subr.bf16.mxu0 0
  %2783 = vmatpush2.bf16.msra.mxu0 %v1921
  %2784 = vmatprep.subr.bf16.mxu0 0
  %2785 = vmatpush2.bf16.msra.mxu0 %v1920
  %2786 = vmatprep.subr.bf16.mxu0 0
  %2787 = vmatpush2.bf16.msra.mxu0 %v1919
  %2788 = vmatprep.subr.bf16.mxu0 0
  %2789 = vmatpush2.bf16.msra.mxu0 %v1918
  %2790 = vmatprep.mubr.bf16.mxu0 %v627
  %2791 = vmatmul.mubr.bf16.gmra.mxu0 %v626
  %v2792 = vpop.f32.mrf.mxu0
  %v2793 = vadd.f32 %v2753, %v2792
  %v2794 = vpop.f32.mrf.mxu0
  %v2795 = vpop.f32.mrf.mxu0
  %v2796 = vpop.f32.mrf.mxu0
  %2797 = vdwg.mxu0
  %2798 = vmatprep.subr.bf16.mxu0 0
  %2799 = vmatpush1.bf16.msra.mxu0 %v1933
  %2800 = vmatprep.subr.bf16.mxu0 0
  %2801 = vmatpush1.bf16.msra.mxu0 %v1932
  %2802 = vmatprep.subr.bf16.mxu0 0
  %2803 = vmatpush1.bf16.msra.mxu0 %v1931
  %2804 = vmatprep.subr.bf16.mxu0 0
  %2805 = vmatpush1.bf16.msra.mxu0 %v1930
  %2806 = vmatprep.subr.bf16.mxu0 0
  %2807 = vmatpush1.bf16.msra.mxu0 %v1929
  %2808 = vmatprep.subr.bf16.mxu0 0
  %2809 = vmatpush1.bf16.msra.mxu0 %v1928
  %2810 = vmatprep.subr.bf16.mxu0 0
  %2811 = vmatpush1.bf16.msra.mxu0 %v1927
  %2812 = vmatprep.subr.bf16.mxu0 0
  %2813 = vmatpush1.bf16.msra.mxu0 %v1926
  %2814 = vmatprep.subr.bf16.mxu0 0
  %2815 = vmatpush2.bf16.msra.mxu0 %v1941
  %2816 = vmatprep.subr.bf16.mxu0 0
  %2817 = vmatpush2.bf16.msra.mxu0 %v1940
  %2818 = vmatprep.subr.bf16.mxu0 0
  %2819 = vmatpush2.bf16.msra.mxu0 %v1939
  %2820 = vmatprep.subr.bf16.mxu0 0
  %2821 = vmatpush2.bf16.msra.mxu0 %v1938
  %2822 = vmatprep.subr.bf16.mxu0 0
  %2823 = vmatpush2.bf16.msra.mxu0 %v1937
  %2824 = vmatprep.subr.bf16.mxu0 0
  %2825 = vmatpush2.bf16.msra.mxu0 %v1936
  %2826 = vmatprep.subr.bf16.mxu0 0
  %2827 = vmatpush2.bf16.msra.mxu0 %v1935
  %2828 = vmatprep.subr.bf16.mxu0 0
  %2829 = vmatpush2.bf16.msra.mxu0 %v1934
  %2830 = vmatprep.mubr.bf16.mxu0 %v629
  %2831 = vmatmul.mubr.bf16.gmra.mxu0 %v628
  %v2832 = vpop.f32.mrf.mxu0
  %v2833 = vadd.f32 %v2793, %v2832
  %v2834 = vpop.f32.mrf.mxu0
  %v2835 = vpop.f32.mrf.mxu0
  %v2836 = vpop.f32.mrf.mxu0
  %2837 = vdwg.mxu0
  %vm2838 = vcmask 523264
  %2839 = vst.msk [vmem:[%s3] sm:$0xff] %vm2838, %v2833
  // Predicated region
  $region14: #{voxel_vae_forward.14} parent=0 // pred_check
    _
  $region15: #{voxel_vae_forward.14} parent=0 // pred_check_branch
    %2841 = sbr.rel (0) target = $region17
  $region16: #{voxel_vae_forward.14} parent=0 // pred_region
    _
  $region17: #{voxel_vae_forward.14} parent=0 // pred_fallthru
    _
  // Predicated region
  $region18: #{voxel_vae_forward.14} parent=0 // pred_check
    _
  $region19: #{voxel_vae_forward.14} parent=0 // pred_check_branch
    %2843 = sbr.rel (0) target = $region21
  $region20: #{voxel_vae_forward.14} parent=0 // pred_region
    _
  $region21: #{voxel_vae_forward.14} parent=0 // pred_fallthru
    _

// kernel: voxel_vae_forward.16
$region0: #{voxel_vae_forward.16}
  #allocation0 [shape = 'u32[]', space=smem, size = 0x4, offset = 0x4, fixed_abs, tag = 'smem constant byte address 0x4 - core index']
  #allocation1 [shape = 'u32[144,128]{1,0:T(1,128)}', space=vmem, size = 0x12000, scoped, tag = 'internal scratch']
  %s0 = inlined_call_operand.vmem [shape: bf16[8,32,512], index: 0, kind: input, shape index: {}]
  %s1 = inlined_call_operand.vmem [shape: bf16[8,512,128], index: 1, kind: input, shape index: {}]
  %s2 = inlined_call_operand.vmem [shape: f32[8,32,128], index: 2, kind: output, shape index: {}]
  %s3 = sld [smem:[#allocation0]]
  $region41: #{voxel_vae_forward.16} parent=0
    _
  %s5 = ssub.s32 1, %s3
  %s6 = scalar_select 0, %s5, %s3
  loop: start=0, step=1, limit=10
  $region2: #{voxel_vae_forward.16} parent=0 // loop_pre_header
    _
  $region3: #{voxel_vae_forward.16} parent=0 // loop_header
    %s8 = sphi 0, %s12
    %p9 = scmp.ge.s32.totalorder %s8, 10
    %s15 = sphi 0, %s27
    %s16 = sphi 0, %s23
    %s17 = sphi 0, %s15
    %s18 = sphi 0, %s16
    %s19 = sphi 0, %s17
    %s20 = sphi 0, %s18
    %s30 = sphi 0, %s32
    %s33 = sphi 0, %s30
    %s34 = sphi 0, %s33
    %s50 = sphi 0, %s34
    %s58 = sphi 0, %s60
    %s61 = sphi 0, %s58
    %s62 = sphi 0, %s61
    %s78 = sphi 0, %s62
    %s86 = sphi 0, %s88
    %s89 = sphi 0, %s86
    %s90 = sphi 0, %s89
    %s106 = sphi 0, %s90
  $region4: #{voxel_vae_forward.16} parent=0 // loop_header_branch
    %11 = sbr.rel (%p9) target = $region8
  $region5: #{voxel_vae_forward.16} parent=0 // loop_body
    %s13 = ssub.s32 %s8, 1
    %s14 = ssub.s32 %s8, 2
    %s21 = sadd.s32 1, %s16
    %p22 = scmp.ge.s32.totalorder %s21, 1
    %s23 = scalar_select %p22, 0, %s21
    %s24 = sadd.s32 1, %s15
    %s25 = scalar_select %p22, %s24, %s15
    %p26 = scmp.ge.s32.totalorder %s25, 8
    %s27 = scalar_select %p26, 0, %s25
    %s28 = ssub.s32 %s15, %s27
    %p29 = scmp.eq.s32.totalorder %s28, 0
    %s31 = sadd.s32 %s30, 1
    %s32 = scalar_select %p29, %s30, %s31
    %p35 = pneg %p29
    %p36 = scmp.eq.s32.totalorder %s8, 7
    %p37 = por %p35, %p36
    %p38 = scmp.ne.s32.totalorder %s30, %s33
    %p39 = scmp.eq.s32.totalorder %s8, 0
    %p40 = por %p38, %p39
    %p41 = scmp.ne.s32.totalorder %s30, %s33
    %p42 = scmp.eq.s32.totalorder %s13, 7
    %p43 = por %p41, %p42
    %p44 = scmp.ne.s32.totalorder %s33, %s34
    %p45 = scmp.eq.s32.totalorder %s13, 0
    %p46 = por %p44, %p45
    %p47 = scmp.ne.s32.totalorder %s33, %s34
    %p48 = scmp.eq.s32.totalorder %s14, 7
    %p49 = por %p47, %p48
    %p51 = scmp.ne.s32.totalorder %s34, %s50
    %p52 = scmp.eq.s32.totalorder %s14, 0
    %p53 = por %p51, %p52
    %s54 = ssub.s32 %s15, %s27
    %s55 = ssub.s32 %s16, %s23
    %s56 = sor.u32 %s54, %s55
    %p57 = scmp.eq.s32.totalorder %s56, 0
    %s59 = sadd.s32 %s58, 1
    %s60 = scalar_select %p57, %s58, %s59
    %p63 = pneg %p57
    %p64 = scmp.eq.s32.totalorder %s8, 7
    %p65 = por %p63, %p64
    %p66 = scmp.ne.s32.totalorder %s58, %s61
    %p67 = scmp.eq.s32.totalorder %s8, 0
    %p68 = por %p66, %p67
    %p69 = scmp.ne.s32.totalorder %s58, %s61
    %p70 = scmp.eq.s32.totalorder %s13, 7
    %p71 = por %p69, %p70
    %p72 = scmp.ne.s32.totalorder %s61, %s62
    %p73 = scmp.eq.s32.totalorder %s13, 0
    %p74 = por %p72, %p73
    %p75 = scmp.ne.s32.totalorder %s61, %s62
    %p76 = scmp.eq.s32.totalorder %s14, 7
    %p77 = por %p75, %p76
    %p79 = scmp.ne.s32.totalorder %s62, %s78
    %p80 = scmp.eq.s32.totalorder %s14, 0
    %p81 = por %p79, %p80
    %s82 = ssub.s32 %s15, %s27
    %s83 = ssub.s32 %s16, %s23
    %s84 = sor.u32 %s82, %s83
    %p85 = scmp.eq.s32.totalorder %s84, 0
    %s87 = sadd.s32 %s86, 1
    %s88 = scalar_select %p85, %s86, %s87
    %p91 = pneg %p85
    %p92 = scmp.eq.s32.totalorder %s8, 7
    %p93 = por %p91, %p92
    %p94 = scmp.ne.s32.totalorder %s86, %s89
    %p95 = scmp.eq.s32.totalorder %s8, 0
    %p96 = por %p94, %p95
    %p97 = scmp.ne.s32.totalorder %s86, %s89
    %p98 = scmp.eq.s32.totalorder %s13, 7
    %p99 = por %p97, %p98
    %p100 = scmp.ne.s32.totalorder %s89, %s90
    %p101 = scmp.eq.s32.totalorder %s13, 0
    %p102 = por %p100, %p101
    %p103 = scmp.ne.s32.totalorder %s89, %s90
    %p104 = scmp.eq.s32.totalorder %s14, 7
    %p105 = por %p103, %p104
    %p107 = scmp.ne.s32.totalorder %s90, %s106
    %p108 = scmp.eq.s32.totalorder %s14, 0
    %p109 = por %p107, %p108
    %p110 = scmp.le.s32.totalorder 1, %s8
    %p111 = scmp.lt.s32.totalorder %s8, 9
    %p112 = pnand %p110, %p111
    %p113 = pneg %p112
    // Predicated region
    $region9: #{voxel_vae_forward.16} parent=5 // pred_check
      _
    $region10: #{voxel_vae_forward.16} parent=5 // pred_check_branch
      %115 = sbr.rel (%p112) target = $region12
    $region11: #{voxel_vae_forward.16} parent=5 // pred_region
      %s116 = ssub.s32 %s8, 1
    $region12: #{voxel_vae_forward.16} parent=5 // pred_fallthru
      _
    %p117 = scmp.lt.s32.totalorder %s8, 8
    // Predicated region
    $region13: #{voxel_vae_forward.16} parent=5 // pred_check
      %p118 = pneg %p117
    $region14: #{voxel_vae_forward.16} parent=5 // pred_check_branch
      %120 = sbr.rel (%p118) target = $region16
    $region15: #{voxel_vae_forward.16} parent=5 // pred_region
      // Predicated region
      $region17: #{voxel_vae_forward.16} parent=15 // pred_check
        %p121 = pneg %p40
      $region18: #{voxel_vae_forward.16} parent=15 // pred_check_branch
        %123 = sbr.rel (%p121) target = $region20
      $region19: #{voxel_vae_forward.16} parent=15 // pred_region
        %p124 = scmp.lt.s32.totalorder %s15, 7
        %s125 = scalar_select %p124, %s15, 7
        %s126 = smul.addr %s125, 16
        %s127 = smul.addr %s126, 4
        %s128 = scalar_lea.vmem %s0, %s127
      $region20: #{voxel_vae_forward.16} parent=15 // pred_fallthru
        _
      // Predicated region
      $region21: #{voxel_vae_forward.16} parent=15 // pred_check
        %p129 = pneg %p68
      $region22: #{voxel_vae_forward.16} parent=15 // pred_check_branch
        %131 = sbr.rel (%p129) target = $region24
      $region23: #{voxel_vae_forward.16} parent=15 // pred_region
        %p132 = scmp.lt.s32.totalorder %s15, 7
        %s133 = scalar_select %p132, %s15, 7
        %p134 = scmp.lt.s32.totalorder %s16, 0
        %s135 = scalar_select %p134, %s16, 0
        %s136 = smul.addr %s133, 64
        %s137 = sadd.s32 %s135, %s136
        %s138 = smul.addr %s137, 4
        %s139 = scalar_lea.vmem %s1, %s138
      $region24: #{voxel_vae_forward.16} parent=15 // pred_fallthru
        _
    $region16: #{voxel_vae_forward.16} parent=5 // pred_fallthru
      _
    %p140 = scmp.le.s32.totalorder 1, %s8
    %p141 = scmp.lt.s32.totalorder %s8, 9
    %p142 = pnand %p140, %p141
    %p143 = pneg %p142
    // Predicated region
    $region25: #{voxel_vae_forward.16} parent=5 // pred_check
      _
    $region26: #{voxel_vae_forward.16} parent=5 // pred_check_branch
      %145 = sbr.rel (%p142) target = $region28
    $region27: #{voxel_vae_forward.16} parent=5 // pred_region
      %s146 = ssub.s32 %s8, 1
      %p147 = scmp.lt.s32.totalorder %s17, 7
      %s148 = scalar_select %p147, %s17, 7
      %s149 = smul.addr %s148, 16
      %s150 = smul.addr %s149, 4
      %s151 = scalar_lea.vmem %s0, %s150
      %p152 = pneg %p46
      %p153 = pneg %p43
      %p154 = scmp.lt.s32.totalorder %s17, 7
      %s155 = scalar_select %p154, %s17, 7
      %p156 = scmp.lt.s32.totalorder %s18, 0
      %s157 = scalar_select %p156, %s18, 0
      %s158 = smul.addr %s155, 64
      %s159 = sadd.s32 %s157, %s158
      %s160 = smul.addr %s159, 4
      %s161 = scalar_lea.vmem %s1, %s160
      %p162 = pneg %p74
      %p163 = pneg %p71
      %p164 = pneg %p102
      %p165 = pneg %p99
      %p166 = scmp.lt.s32.totalorder %s17, 7
      %s167 = scalar_select %p166, %s17, 7
      %p168 = scmp.lt.s32.totalorder %s18, 0
      %s169 = scalar_select %p168, %s18, 0
      %s170 = smul.addr %s167, 4
      %s171 = sadd.s32 %s169, %s170
      %s172 = smul.addr %s171, 8
      %s173 = scalar_lea.vmem %s2, %s172
      %p174 = scmp.lt.s32.totalorder %s17, 7
      %s175 = scalar_select %p174, %s17, 7
      %s176 = smul.addr %s175, 16
      %s177 = smul.addr %s176, 4
      %s178 = scalar_lea.vmem %s0, %s177
      %p179 = scmp.lt.s32.totalorder %s17, 7
      %s180 = scalar_select %p179, %s17, 7
      %p181 = scmp.lt.s32.totalorder %s18, 0
      %s182 = scalar_select %p181, %s18, 0
      %s183 = smul.addr %s180, 64
      %s184 = sadd.s32 %s182, %s183
      %s185 = smul.addr %s184, 4
      %s186 = scalar_lea.vmem %s1, %s185
      %p187 = scmp.lt.s32.totalorder %s17, 7
      %s188 = scalar_select %p187, %s17, 7
      %p189 = scmp.lt.s32.totalorder %s18, 0
      %s190 = scalar_select %p189, %s18, 0
      %s191 = smul.addr %s188, 4
      %s192 = sadd.s32 %s190, %s191
      %s193 = smul.addr %s192, 8
      %s194 = scalar_lea.vmem %s2, %s193
      %v196 = vld [vmem:[%s178] sm:$0xff]
      %v197 = vld [vmem:[%s178 + $0x8] sm:$0xff]
      %v198 = vld [vmem:[%s178 + $0x10] sm:$0xff]
      %v199 = vld [vmem:[%s178 + $0x18] sm:$0xff]
      %v200 = vld [vmem:[%s178 + $0x20] sm:$0xff]
      %v201 = vld [vmem:[%s178 + $0x28] sm:$0xff]
      %v202 = vld [vmem:[%s178 + $0x30] sm:$0xff]
      %v203 = vld [vmem:[%s178 + $0x38] sm:$0xff]
      %v204 = vld [vmem:[%s186] sm:$0xf]
      %v205 = vld [vmem:[%s186 + $0x4] sm:$0xf]
      %v206 = vld [vmem:[%s186 + $0x8] sm:$0xf]
      %v207 = vld [vmem:[%s186 + $0xc] sm:$0xf]
      %v208 = vld [vmem:[%s186 + $0x10] sm:$0xf]
      %v209 = vld [vmem:[%s186 + $0x14] sm:$0xf]
      %v210 = vld [vmem:[%s186 + $0x18] sm:$0xf]
      %v211 = vld [vmem:[%s186 + $0x1c] sm:$0xf]
      %v212 = vld [vmem:[%s186 + $0x20] sm:$0xf]
      %v213 = vld [vmem:[%s186 + $0x24] sm:$0xf]
      %v214 = vld [vmem:[%s186 + $0x28] sm:$0xf]
      %v215 = vld [vmem:[%s186 + $0x2c] sm:$0xf]
      %v216 = vld [vmem:[%s186 + $0x30] sm:$0xf]
      %v217 = vld [vmem:[%s186 + $0x34] sm:$0xf]
      %v218 = vld [vmem:[%s186 + $0x38] sm:$0xf]
      %v219 = vld [vmem:[%s186 + $0x3c] sm:$0xf]
      %v220 = vld [vmem:[%s186 + $0x40] sm:$0xf]
      %v221 = vld [vmem:[%s186 + $0x44] sm:$0xf]
      %v222 = vld [vmem:[%s186 + $0x48] sm:$0xf]
      %v223 = vld [vmem:[%s186 + $0x4c] sm:$0xf]
      %v224 = vld [vmem:[%s186 + $0x50] sm:$0xf]
      %v225 = vld [vmem:[%s186 + $0x54] sm:$0xf]
      %v226 = vld [vmem:[%s186 + $0x58] sm:$0xf]
      %v227 = vld [vmem:[%s186 + $0x5c] sm:$0xf]
      %v228 = vld [vmem:[%s186 + $0x60] sm:$0xf]
      %v229 = vld [vmem:[%s186 + $0x64] sm:$0xf]
      %v230 = vld [vmem:[%s186 + $0x68] sm:$0xf]
      %v231 = vld [vmem:[%s186 + $0x6c] sm:$0xf]
      %v232 = vld [vmem:[%s186 + $0x70] sm:$0xf]
      %v233 = vld [vmem:[%s186 + $0x74] sm:$0xf]
      %v234 = vld [vmem:[%s186 + $0x78] sm:$0xf]
      %v235 = vld [vmem:[%s186 + $0x7c] sm:$0xf]
      %v236 = vld [vmem:[%s186 + $0x80] sm:$0xf]
      %v237 = vld [vmem:[%s186 + $0x84] sm:$0xf]
      %v238 = vld [vmem:[%s186 + $0x88] sm:$0xf]
      %v239 = vld [vmem:[%s186 + $0x8c] sm:$0xf]
      %v240 = vld [vmem:[%s186 + $0x90] sm:$0xf]
      %v241 = vld [vmem:[%s186 + $0x94] sm:$0xf]
      %v242 = vld [vmem:[%s186 + $0x98] sm:$0xf]
      %v243 = vld [vmem:[%s186 + $0x9c] sm:$0xf]
      %v244 = vld [vmem:[%s186 + $0xa0] sm:$0xf]
      %v245 = vld [vmem:[%s186 + $0xa4] sm:$0xf]
      %v246 = vld [vmem:[%s186 + $0xa8] sm:$0xf]
      %v247 = vld [vmem:[%s186 + $0xac] sm:$0xf]
      %v248 = vld [vmem:[%s186 + $0xb0] sm:$0xf]
      %v249 = vld [vmem:[%s186 + $0xb4] sm:$0xf]
      %v250 = vld [vmem:[%s186 + $0xb8] sm:$0xf]
      %v251 = vld [vmem:[%s186 + $0xbc] sm:$0xf]
      %v252 = vld [vmem:[%s186 + $0xc0] sm:$0xf]
      %v253 = vld [vmem:[%s186 + $0xc4] sm:$0xf]
      %v254 = vld [vmem:[%s186 + $0xc8] sm:$0xf]
      %v255 = vld [vmem:[%s186 + $0xcc] sm:$0xf]
      %v256 = vld [vmem:[%s186 + $0xd0] sm:$0xf]
      %v257 = vld [vmem:[%s186 + $0xd4] sm:$0xf]
      %v258 = vld [vmem:[%s186 + $0xd8] sm:$0xf]
      %v259 = vld [vmem:[%s186 + $0xdc] sm:$0xf]
      %v260 = vld [vmem:[%s186 + $0xe0] sm:$0xf]
      %v261 = vld [vmem:[%s186 + $0xe4] sm:$0xf]
      %v262 = vld [vmem:[%s186 + $0xe8] sm:$0xf]
      %v263 = vld [vmem:[%s186 + $0xec] sm:$0xf]
      %v264 = vld [vmem:[%s186 + $0xf0] sm:$0xf]
      %v265 = vld [vmem:[%s186 + $0xf4] sm:$0xf]
      %v266 = vld [vmem:[%s186 + $0xf8] sm:$0xf]
      %v267 = vld [vmem:[%s186 + $0xfc] sm:$0xf]
      %v276 = vunpack.c.l.b16 %v196
      %v277 = vunpack.c.h.b16 %v196
      %v278 = vunpack.c.l.b16 %v197
      %v279 = vunpack.c.h.b16 %v197
      %v280 = vunpack.c.l.b16 %v198
      %v281 = vunpack.c.h.b16 %v198
      %v282 = vunpack.c.l.b16 %v199
      %v283 = vunpack.c.h.b16 %v199
      %v284 = vunpack.c.l.b16 %v200
      %v285 = vunpack.c.h.b16 %v200
      %v286 = vunpack.c.l.b16 %v201
      %v287 = vunpack.c.h.b16 %v201
      %v288 = vunpack.c.l.b16 %v202
      %v289 = vunpack.c.h.b16 %v202
      %v290 = vunpack.c.l.b16 %v203
      %v291 = vunpack.c.h.b16 %v203
      %v292 = vpack.c.b16 %v280, %v276
      %v293 = vpack.c.b16 %v281, %v277
      %v294 = vpack.c.b16 %v282, %v278
      %v295 = vpack.c.b16 %v283, %v279
      %v296 = vpack.c.b16 %v288, %v284
      %v297 = vpack.c.b16 %v289, %v285
      %v298 = vpack.c.b16 %v290, %v286
      %v299 = vpack.c.b16 %v291, %v287
      %v372 = vunpack.c.l.b16 %v204
      %v373 = vunpack.c.l.b16 %v205
      %v374 = vunpack.c.l.b16 %v206
      %v375 = vunpack.c.l.b16 %v207
      %v376 = vunpack.c.l.b16 %v208
      %v377 = vunpack.c.l.b16 %v209
      %v378 = vunpack.c.l.b16 %v210
      %v379 = vunpack.c.l.b16 %v211
      %v380 = vunpack.c.l.b16 %v212
      %v381 = vunpack.c.l.b16 %v213
      %v382 = vunpack.c.l.b16 %v214
      %v383 = vunpack.c.l.b16 %v215
      %v384 = vunpack.c.l.b16 %v216
      %v385 = vunpack.c.l.b16 %v217
      %v386 = vunpack.c.l.b16 %v218
      %v387 = vunpack.c.l.b16 %v219
      %v388 = vunpack.c.l.b16 %v220
      %v389 = vunpack.c.l.b16 %v221
      %v390 = vunpack.c.l.b16 %v222
      %v391 = vunpack.c.l.b16 %v223
      %v392 = vunpack.c.l.b16 %v224
      %v393 = vunpack.c.l.b16 %v225
      %v394 = vunpack.c.l.b16 %v226
      %v395 = vunpack.c.l.b16 %v227
      %v396 = vunpack.c.l.b16 %v228
      %v397 = vunpack.c.l.b16 %v229
      %v398 = vunpack.c.l.b16 %v230
      %v399 = vunpack.c.l.b16 %v231
      %v400 = vunpack.c.l.b16 %v232
      %v401 = vunpack.c.l.b16 %v233
      %v402 = vunpack.c.l.b16 %v234
      %v403 = vunpack.c.l.b16 %v235
      %v404 = vunpack.c.l.b16 %v236
      %v405 = vunpack.c.l.b16 %v237
      %v406 = vunpack.c.l.b16 %v238
      %v407 = vunpack.c.l.b16 %v239
      %v408 = vunpack.c.l.b16 %v240
      %v409 = vunpack.c.l.b16 %v241
      %v410 = vunpack.c.l.b16 %v242
      %v411 = vunpack.c.l.b16 %v243
      %v412 = vunpack.c.l.b16 %v244
      %v413 = vunpack.c.l.b16 %v245
      %v414 = vunpack.c.l.b16 %v246
      %v415 = vunpack.c.l.b16 %v247
      %v416 = vunpack.c.l.b16 %v248
      %v417 = vunpack.c.l.b16 %v249
      %v418 = vunpack.c.l.b16 %v250
      %v419 = vunpack.c.l.b16 %v251
      %v420 = vunpack.c.l.b16 %v252
      %v421 = vunpack.c.l.b16 %v253
      %v422 = vunpack.c.l.b16 %v254
      %v423 = vunpack.c.l.b16 %v255
      %v424 = vunpack.c.l.b16 %v256
      %v425 = vunpack.c.l.b16 %v257
      %v426 = vunpack.c.l.b16 %v258
      %v427 = vunpack.c.l.b16 %v259
      %v428 = vunpack.c.l.b16 %v260
      %v429 = vunpack.c.l.b16 %v261
      %v430 = vunpack.c.l.b16 %v262
      %v431 = vunpack.c.l.b16 %v263
      %v432 = vunpack.c.l.b16 %v264
      %v433 = vunpack.c.l.b16 %v265
      %v434 = vunpack.c.l.b16 %v266
      %v435 = vunpack.c.l.b16 %v267
      %v436 = vpack.c.b16 %v373, %v372
      %v437 = vpack.c.b16 %v375, %v374
      %v438 = vpack.c.b16 %v377, %v376
      %v439 = vpack.c.b16 %v379, %v378
      %v440 = vpack.c.b16 %v381, %v380
      %v441 = vpack.c.b16 %v383, %v382
      %v442 = vpack.c.b16 %v385, %v384
      %v443 = vpack.c.b16 %v387, %v386
      %v444 = vpack.c.b16 %v389, %v388
      %v445 = vpack.c.b16 %v391, %v390
      %v446 = vpack.c.b16 %v393, %v392
      %v447 = vpack.c.b16 %v395, %v394
      %v448 = vpack.c.b16 %v397, %v396
      %v449 = vpack.c.b16 %v399, %v398
      %v450 = vpack.c.b16 %v401, %v400
      %v451 = vpack.c.b16 %v403, %v402
      %v452 = vpack.c.b16 %v405, %v404
      %v453 = vpack.c.b16 %v407, %v406
      %v454 = vpack.c.b16 %v409, %v408
      %v455 = vpack.c.b16 %v411, %v410
      %v456 = vpack.c.b16 %v413, %v412
      %v457 = vpack.c.b16 %v415, %v414
      %v458 = vpack.c.b16 %v417, %v416
      %v459 = vpack.c.b16 %v419, %v418
      %v460 = vpack.c.b16 %v421, %v420
      %v461 = vpack.c.b16 %v423, %v422
      %v462 = vpack.c.b16 %v425, %v424
      %v463 = vpack.c.b16 %v427, %v426
      %v464 = vpack.c.b16 %v429, %v428
      %v465 = vpack.c.b16 %v431, %v430
      %v466 = vpack.c.b16 %v433, %v432
      %v467 = vpack.c.b16 %v435, %v434
      %500 = vmatprep.subr.bf16.mxu0 0
      %501 = vmatpush1.bf16.msra.mxu0 %v443
      %502 = vmatprep.subr.bf16.mxu0 0
      %503 = vmatpush1.bf16.msra.mxu0 %v442
      %504 = vmatprep.subr.bf16.mxu0 0
      %505 = vmatpush1.bf16.msra.mxu0 %v441
      %506 = vmatprep.subr.bf16.mxu0 0
      %507 = vmatpush1.bf16.msra.mxu0 %v440
      %508 = vmatprep.subr.bf16.mxu0 0
      %509 = vmatpush1.bf16.msra.mxu0 %v439
      %510 = vmatprep.subr.bf16.mxu0 0
      %511 = vmatpush1.bf16.msra.mxu0 %v438
      %512 = vmatprep.subr.bf16.mxu0 0
      %513 = vmatpush1.bf16.msra.mxu0 %v437
      %514 = vmatprep.subr.bf16.mxu0 0
      %515 = vmatpush1.bf16.msra.mxu0 %v436
      %516 = vmatprep.subr.bf16.mxu0 0
      %517 = vmatpush2.bf16.msra.mxu0 %v451
      %518 = vmatprep.subr.bf16.mxu0 0
      %519 = vmatpush2.bf16.msra.mxu0 %v450
      %520 = vmatprep.subr.bf16.mxu0 0
      %521 = vmatpush2.bf16.msra.mxu0 %v449
      %522 = vmatprep.subr.bf16.mxu0 0
      %523 = vmatpush2.bf16.msra.mxu0 %v448
      %524 = vmatprep.subr.bf16.mxu0 0
      %525 = vmatpush2.bf16.msra.mxu0 %v447
      %526 = vmatprep.subr.bf16.mxu0 0
      %527 = vmatpush2.bf16.msra.mxu0 %v446
      %528 = vmatprep.subr.bf16.mxu0 0
      %529 = vmatpush2.bf16.msra.mxu0 %v445
      %530 = vmatprep.subr.bf16.mxu0 0
      %531 = vmatpush2.bf16.msra.mxu0 %v444
      %532 = vmatprep.mubr.bf16.mxu0 %v293
      %533 = vmatmul.mubr.bf16.gmra.mxu0 %v292
      %v534 = vpop.f32.mrf.mxu0
      %v535 = vadd.f32 0.0, %v534
      %v536 = vpop.f32.mrf.mxu0
      %v537 = vpop.f32.mrf.mxu0
      %v538 = vadd.f32 0.0, %v537
      %v539 = vpop.f32.mrf.mxu0
      %540 = vmatprep.mubr.bf16.mxu0 %v297
      %541 = vmatmul.mubr.bf16.gmra.mxu0 %v296
      %v542 = vpop.f32.mrf.mxu0
      %v543 = vadd.f32 0.0, %v542
      %v544 = vpop.f32.mrf.mxu0
      %v545 = vpop.f32.mrf.mxu0
      %v546 = vadd.f32 0.0, %v545
      %v547 = vpop.f32.mrf.mxu0
      %548 = vdwg.mxu0
      %549 = vmatprep.subr.bf16.mxu0 0
      %550 = vmatpush1.bf16.msra.mxu0 %v459
      %551 = vmatprep.subr.bf16.mxu0 0
      %552 = vmatpush1.bf16.msra.mxu0 %v458
      %553 = vmatprep.subr.bf16.mxu0 0
      %554 = vmatpush1.bf16.msra.mxu0 %v457
      %555 = vmatprep.subr.bf16.mxu0 0
      %556 = vmatpush1.bf16.msra.mxu0 %v456
      %557 = vmatprep.subr.bf16.mxu0 0
      %558 = vmatpush1.bf16.msra.mxu0 %v455
      %559 = vmatprep.subr.bf16.mxu0 0
      %560 = vmatpush1.bf16.msra.mxu0 %v454
      %561 = vmatprep.subr.bf16.mxu0 0
      %562 = vmatpush1.bf16.msra.mxu0 %v453
      %563 = vmatprep.subr.bf16.mxu0 0
      %564 = vmatpush1.bf16.msra.mxu0 %v452
      %565 = vmatprep.subr.bf16.mxu0 0
      %566 = vmatpush2.bf16.msra.mxu0 %v467
      %567 = vmatprep.subr.bf16.mxu0 0
      %568 = vmatpush2.bf16.msra.mxu0 %v466
      %569 = vmatprep.subr.bf16.mxu0 0
      %570 = vmatpush2.bf16.msra.mxu0 %v465
      %571 = vmatprep.subr.bf16.mxu0 0
      %572 = vmatpush2.bf16.msra.mxu0 %v464
      %573 = vmatprep.subr.bf16.mxu0 0
      %574 = vmatpush2.bf16.msra.mxu0 %v463
      %575 = vmatprep.subr.bf16.mxu0 0
      %576 = vmatpush2.bf16.msra.mxu0 %v462
      %577 = vmatprep.subr.bf16.mxu0 0
      %578 = vmatpush2.bf16.msra.mxu0 %v461
      %579 = vmatprep.subr.bf16.mxu0 0
      %580 = vmatpush2.bf16.msra.mxu0 %v460
      %581 = vmatprep.mubr.bf16.mxu0 %v295
      %582 = vmatmul.mubr.bf16.gmra.mxu0 %v294
      %v583 = vpop.f32.mrf.mxu0
      %v584 = vadd.f32 %v535, %v583
      %v585 = vpop.f32.mrf.mxu0
      %v586 = vpop.f32.mrf.mxu0
      %v587 = vadd.f32 %v538, %v586
      %v588 = vpop.f32.mrf.mxu0
      %589 = vmatprep.mubr.bf16.mxu0 %v299
      %590 = vmatmul.mubr.bf16.gmra.mxu0 %v298
      %v591 = vpop.f32.mrf.mxu0
      %v592 = vadd.f32 %v543, %v591
      %v593 = vpop.f32.mrf.mxu0
      %v594 = vpop.f32.mrf.mxu0
      %v595 = vadd.f32 %v546, %v594
      %v596 = vpop.f32.mrf.mxu0
      %597 = vdwg.mxu0
      %598 = vst [vmem:[%s194] sm:$0xff] %v584
      %599 = vst [vmem:[%s194 + $0x8] sm:$0xff] %v587
      %600 = vst [vmem:[%s194 + $0x10] sm:$0xff] %v592
      %601 = vst [vmem:[%s194 + $0x18] sm:$0xff] %v595
      %p602 = scmp.lt.s32.totalorder %s17, 7
      %s603 = scalar_select %p602, %s17, 7
      %p604 = scmp.lt.s32.totalorder %s18, 0
      %s605 = scalar_select %p604, %s18, 0
      %s606 = smul.addr %s603, 4
      %s607 = sadd.s32 %s605, %s606
      %s608 = smul.addr %s607, 8
      %s609 = scalar_lea.vmem %s2, %s608
      // Predicated region
      $region29: #{voxel_vae_forward.16} parent=27 // pred_check
        %p610 = pneg %p99
      $region30: #{voxel_vae_forward.16} parent=27 // pred_check_branch
        %612 = sbr.rel (%p610) target = $region32
      $region31: #{voxel_vae_forward.16} parent=27 // pred_region
        _
      $region32: #{voxel_vae_forward.16} parent=27 // pred_fallthru
        _
    $region28: #{voxel_vae_forward.16} parent=5 // pred_fallthru
      _
    %p613 = scmp.le.s32.totalorder 2, %s8
    // Predicated region
    $region33: #{voxel_vae_forward.16} parent=5 // pred_check
      %p614 = pneg %p613
    $region34: #{voxel_vae_forward.16} parent=5 // pred_check_branch
      %616 = sbr.rel (%p614) target = $region36
    $region35: #{voxel_vae_forward.16} parent=5 // pred_region
      %s617 = ssub.s32 %s8, 2
      // Predicated region
      $region37: #{voxel_vae_forward.16} parent=35 // pred_check
        %p618 = pneg %p105
      $region38: #{voxel_vae_forward.16} parent=35 // pred_check_branch
        %620 = sbr.rel (%p618) target = $region40
      $region39: #{voxel_vae_forward.16} parent=35 // pred_region
        %p621 = scmp.lt.s32.totalorder %s19, 7
        %s622 = scalar_select %p621, %s19, 7
        %p623 = scmp.lt.s32.totalorder %s20, 0
        %s624 = scalar_select %p623, %s20, 0
        %s625 = smul.addr %s622, 4
        %s626 = sadd.s32 %s624, %s625
        %s627 = smul.addr %s626, 8
        %s628 = scalar_lea.vmem %s2, %s627
      $region40: #{voxel_vae_forward.16} parent=35 // pred_fallthru
        _
    $region36: #{voxel_vae_forward.16} parent=5 // pred_fallthru
      _
  $region6: #{voxel_vae_forward.16} parent=0 // loop_footer
    %s12 = sadd.s32 1, %s8
  $region7: #{voxel_vae_forward.16} parent=0 // loop_footer_branch
    %7 = sbr.rel target = $region3
  $region8: #{voxel_vae_forward.16} parent=0 // loop_exit
    _

// kernel: voxel_vae_forward.18
$region0: #{voxel_vae_forward.18}
  #allocation0 [shape = 'u32[]', space=smem, size = 0x4, offset = 0x4, fixed_abs, tag = 'smem constant byte address 0x4 - core index']
  #allocation1 [shape = 'u32[144,128]{1,0:T(1,128)}', space=vmem, size = 0x12000, scoped, tag = 'internal scratch']
  %s0 = inlined_call_operand.vmem [shape: bf16[8,8,256], index: 0, kind: input, shape index: {}]
  %s1 = inlined_call_operand.vmem [shape: bf16[8,256,1024], index: 1, kind: input, shape index: {}]
  %s2 = inlined_call_operand.vmem [shape: f32[8,8,1024], index: 2, kind: output, shape index: {}]
  %s3 = sld [smem:[#allocation0]]
  $region64: #{voxel_vae_forward.18} parent=0
    _
  %s5 = ssub.s32 1, %s3
  %s6 = scalar_select 0, %s5, %s3
  $region1: #{voxel_vae_forward.18} parent=0
    #allocation2 [shape = 'u8[524288]{0}', space=vmem, size = 0x80000, scoped, tag = 'input window, operand 1']
    loop: start=0, step=1, limit=18
    $region2: #{voxel_vae_forward.18} parent=1 // loop_pre_header
      _
    $region3: #{voxel_vae_forward.18} parent=1 // loop_header
      %s8 = sphi 0, %s12
      %p9 = scmp.ge.s32.totalorder %s8, 18
      %s15 = sphi 0, %s27
      %s16 = sphi 0, %s23
      %s17 = sphi 0, %s15
      %s18 = sphi 0, %s16
      %s19 = sphi 0, %s17
      %s20 = sphi 0, %s18
      %s30 = sphi 0, %s32
      %s33 = sphi 0, %s30
      %s34 = sphi 0, %s33
      %s50 = sphi 0, %s34
      %s58 = sphi 0, %s60
      %s61 = sphi 0, %s58
      %s62 = sphi 0, %s61
      %s78 = sphi 0, %s62
      %s86 = sphi 0, %s88
      %s89 = sphi 0, %s86
      %s90 = sphi 0, %s89
      %s106 = sphi 0, %s90
    $region4: #{voxel_vae_forward.18} parent=1 // loop_header_branch
      %11 = sbr.rel (%p9) target = $region8
    $region5: #{voxel_vae_forward.18} parent=1 // loop_body
      %s13 = ssub.s32 %s8, 1
      %s14 = ssub.s32 %s8, 2
      %s21 = sadd.s32 1, %s16
      %p22 = scmp.ge.s32.totalorder %s21, 2
      %s23 = scalar_select %p22, 0, %s21
      %s24 = sadd.s32 1, %s15
      %s25 = scalar_select %p22, %s24, %s15
      %p26 = scmp.ge.s32.totalorder %s25, 8
      %s27 = scalar_select %p26, 0, %s25
      %s28 = ssub.s32 %s15, %s27
      %p29 = scmp.eq.s32.totalorder %s28, 0
      %s31 = sadd.s32 %s30, 1
      %s32 = scalar_select %p29, %s30, %s31
      %p35 = pneg %p29
      %p36 = scmp.eq.s32.totalorder %s8, 15
      %p37 = por %p35, %p36
      %p38 = scmp.ne.s32.totalorder %s30, %s33
      %p39 = scmp.eq.s32.totalorder %s8, 0
      %p40 = por %p38, %p39
      %p41 = scmp.ne.s32.totalorder %s30, %s33
      %p42 = scmp.eq.s32.totalorder %s13, 15
      %p43 = por %p41, %p42
      %p44 = scmp.ne.s32.totalorder %s33, %s34
      %p45 = scmp.eq.s32.totalorder %s13, 0
      %p46 = por %p44, %p45
      %p47 = scmp.ne.s32.totalorder %s33, %s34
      %p48 = scmp.eq.s32.totalorder %s14, 15
      %p49 = por %p47, %p48
      %p51 = scmp.ne.s32.totalorder %s34, %s50
      %p52 = scmp.eq.s32.totalorder %s14, 0
      %p53 = por %p51, %p52
      %s54 = ssub.s32 %s15, %s27
      %s55 = ssub.s32 %s16, %s23
      %s56 = sor.u32 %s54, %s55
      %p57 = scmp.eq.s32.totalorder %s56, 0
      %s59 = sadd.s32 %s58, 1
      %s60 = scalar_select %p57, %s58, %s59
      %p63 = pneg %p57
      %p64 = scmp.eq.s32.totalorder %s8, 15
      %p65 = por %p63, %p64
      %p66 = scmp.ne.s32.totalorder %s58, %s61
      %p67 = scmp.eq.s32.totalorder %s8, 0
      %p68 = por %p66, %p67
      %p69 = scmp.ne.s32.totalorder %s58, %s61
      %p70 = scmp.eq.s32.totalorder %s13, 15
      %p71 = por %p69, %p70
      %p72 = scmp.ne.s32.totalorder %s61, %s62
      %p73 = scmp.eq.s32.totalorder %s13, 0
      %p74 = por %p72, %p73
      %p75 = scmp.ne.s32.totalorder %s61, %s62
      %p76 = scmp.eq.s32.totalorder %s14, 15
      %p77 = por %p75, %p76
      %p79 = scmp.ne.s32.totalorder %s62, %s78
      %p80 = scmp.eq.s32.totalorder %s14, 0
      %p81 = por %p79, %p80
      %s82 = ssub.s32 %s15, %s27
      %s83 = ssub.s32 %s16, %s23
      %s84 = sor.u32 %s82, %s83
      %p85 = scmp.eq.s32.totalorder %s84, 0
      %s87 = sadd.s32 %s86, 1
      %s88 = scalar_select %p85, %s86, %s87
      %p91 = pneg %p85
      %p92 = scmp.eq.s32.totalorder %s8, 15
      %p93 = por %p91, %p92
      %p94 = scmp.ne.s32.totalorder %s86, %s89
      %p95 = scmp.eq.s32.totalorder %s8, 0
      %p96 = por %p94, %p95
      %p97 = scmp.ne.s32.totalorder %s86, %s89
      %p98 = scmp.eq.s32.totalorder %s13, 15
      %p99 = por %p97, %p98
      %p100 = scmp.ne.s32.totalorder %s89, %s90
      %p101 = scmp.eq.s32.totalorder %s13, 0
      %p102 = por %p100, %p101
      %p103 = scmp.ne.s32.totalorder %s89, %s90
      %p104 = scmp.eq.s32.totalorder %s14, 15
      %p105 = por %p103, %p104
      %p107 = scmp.ne.s32.totalorder %s90, %s106
      %p108 = scmp.eq.s32.totalorder %s14, 0
      %p109 = por %p107, %p108
      %p110 = scmp.le.s32.totalorder 1, %s8
      %p111 = scmp.lt.s32.totalorder %s8, 17
      %p112 = pnand %p110, %p111
      %p113 = pneg %p112
      // Predicated region
      $region9: #{voxel_vae_forward.18} parent=5 // pred_check
        _
      $region10: #{voxel_vae_forward.18} parent=5 // pred_check_branch
        %115 = sbr.rel (%p112) target = $region12
      $region11: #{voxel_vae_forward.18} parent=5 // pred_region
        %s116 = ssub.s32 %s8, 1
      $region12: #{voxel_vae_forward.18} parent=5 // pred_fallthru
        _
      %p117 = scmp.lt.s32.totalorder %s8, 16
      // Predicated region
      $region13: #{voxel_vae_forward.18} parent=5 // pred_check
        %p118 = pneg %p117
      $region14: #{voxel_vae_forward.18} parent=5 // pred_check_branch
        %120 = sbr.rel (%p118) target = $region16
      $region15: #{voxel_vae_forward.18} parent=5 // pred_region
        // Predicated region
        $region17: #{voxel_vae_forward.18} parent=15 // pred_check
          %p121 = pneg %p40
        $region18: #{voxel_vae_forward.18} parent=15 // pred_check_branch
          %123 = sbr.rel (%p121) target = $region20
        $region19: #{voxel_vae_forward.18} parent=15 // pred_region
          %p124 = scmp.lt.s32.totalorder %s15, 7
          %s125 = scalar_select %p124, %s15, 7
          %s126 = smul.addr %s125, 2
          %s127 = smul.addr %s126, 4
          %s128 = scalar_lea.vmem %s0, %s127
        $region20: #{voxel_vae_forward.18} parent=15 // pred_fallthru
          _
        // Predicated region
        $region21: #{voxel_vae_forward.18} parent=15 // pred_check
          %p129 = pneg %p68
        $region22: #{voxel_vae_forward.18} parent=15 // pred_check_branch
          %131 = sbr.rel (%p129) target = $region24
        $region23: #{voxel_vae_forward.18} parent=15 // pred_region
          %s132 = sand.u32 %s58, 1
          %s133 = sand.u32 %s58, 1
          %s134 = smul.addr %s133, 512
          %s135 = scalar_lea.vmem [#allocation2], %s134
          %s136 = smul.u32 4, %s16
          %s137 = smul.addr %s15, 256
          %s138 = sadd.s32 %s136, %s137
          %s139 = smul.addr %s138, 4
          %s140 = scalar_lea.vmem %s1, %s139
          // Predicated region
          $region25: #{voxel_vae_forward.18} parent=23 // pred_check
            _
          $region26: #{voxel_vae_forward.18} parent=23 // pred_check_branch
            %142 = sbr.rel (0) target = $region28
          $region27: #{voxel_vae_forward.18} parent=23 // pred_region
            // Predicated region
            $region29: #{voxel_vae_forward.18} parent=27 // pred_check
              _
            $region30: #{voxel_vae_forward.18} parent=27 // pred_check_branch
              %144 = sbr.rel (0) target = $region32
            $region31: #{voxel_vae_forward.18} parent=27 // pred_region
              loop: start=0, step=1, limit=1
              $region33: #{voxel_vae_forward.18} parent=31 // loop_pre_header
                _
              $region34: #{voxel_vae_forward.18} parent=31 // loop_header
                %s146 = sphi 0, %s150
                %p147 = scmp.ge.s32.totalorder %s146, 1
                %s151 = sphi %s140, %s140
                %s152 = sphi %s135, %s135
              $region35: #{voxel_vae_forward.18} parent=31 // loop_header_branch
                %149 = sbr.rel (%p147) target = $region39
              $region36: #{voxel_vae_forward.18} parent=31 // loop_body
                %v153 = vld [vmem:[%s151] sm:$0xff]
                %154 = vst [vmem:[%s152] sm:$0xff] %v153
                %v155 = vld [vmem:[%s151 + $0x8] sm:$0xff]
                %156 = vst [vmem:[%s152 + $0x8] sm:$0xff] %v155
                %v157 = vld [vmem:[%s151 + $0x20] sm:$0xff]
                %158 = vst [vmem:[%s152 + $0x10] sm:$0xff] %v157
                %v159 = vld [vmem:[%s151 + $0x28] sm:$0xff]
                %160 = vst [vmem:[%s152 + $0x18] sm:$0xff] %v159
                %v161 = vld [vmem:[%s151 + $0x40] sm:$0xff]
                %162 = vst [vmem:[%s152 + $0x20] sm:$0xff] %v161
                %v163 = vld [vmem:[%s151 + $0x48] sm:$0xff]
                %164 = vst [vmem:[%s152 + $0x28] sm:$0xff] %v163
                %v165 = vld [vmem:[%s151 + $0x60] sm:$0xff]
                %166 = vst [vmem:[%s152 + $0x30] sm:$0xff] %v165
                %v167 = vld [vmem:[%s151 + $0x68] sm:$0xff]
                %168 = vst [vmem:[%s152 + $0x38] sm:$0xff] %v167
                %v169 = vld [vmem:[%s151 + $0x80] sm:$0xff]
                %170 = vst [vmem:[%s152 + $0x40] sm:$0xff] %v169
                %v171 = vld [vmem:[%s151 + $0x88] sm:$0xff]
                %172 = vst [vmem:[%s152 + $0x48] sm:$0xff] %v171
                %v173 = vld [vmem:[%s151 + $0xa0] sm:$0xff]
                %174 = vst [vmem:[%s152 + $0x50] sm:$0xff] %v173
                %v175 = vld [vmem:[%s151 + $0xa8] sm:$0xff]
                %176 = vst [vmem:[%s152 + $0x58] sm:$0xff] %v175
                %v177 = vld [vmem:[%s151 + $0xc0] sm:$0xff]
                %178 = vst [vmem:[%s152 + $0x60] sm:$0xff] %v177
                %v179 = vld [vmem:[%s151 + $0xc8] sm:$0xff]
                %180 = vst [vmem:[%s152 + $0x68] sm:$0xff] %v179
                %v181 = vld [vmem:[%s151 + $0xe0] sm:$0xff]
                %182 = vst [vmem:[%s152 + $0x70] sm:$0xff] %v181
                %v183 = vld [vmem:[%s151 + $0xe8] sm:$0xff]
                %184 = vst [vmem:[%s152 + $0x78] sm:$0xff] %v183
                %v185 = vld [vmem:[%s151 + $0x100] sm:$0xff]
                %186 = vst [vmem:[%s152 + $0x80] sm:$0xff] %v185
                %v187 = vld [vmem:[%s151 + $0x108] sm:$0xff]
                %188 = vst [vmem:[%s152 + $0x88] sm:$0xff] %v187
                %v189 = vld [vmem:[%s151 + $0x120] sm:$0xff]
                %190 = vst [vmem:[%s152 + $0x90] sm:$0xff] %v189
                %v191 = vld [vmem:[%s151 + $0x128] sm:$0xff]
                %192 = vst [vmem:[%s152 + $0x98] sm:$0xff] %v191
                %v193 = vld [vmem:[%s151 + $0x140] sm:$0xff]
                %194 = vst [vmem:[%s152 + $0xa0] sm:$0xff] %v193
                %v195 = vld [vmem:[%s151 + $0x148] sm:$0xff]
                %196 = vst [vmem:[%s152 + $0xa8] sm:$0xff] %v195
                %v197 = vld [vmem:[%s151 + $0x160] sm:$0xff]
                %198 = vst [vmem:[%s152 + $0xb0] sm:$0xff] %v197
                %v199 = vld [vmem:[%s151 + $0x168] sm:$0xff]
                %200 = vst [vmem:[%s152 + $0xb8] sm:$0xff] %v199
                %v201 = vld [vmem:[%s151 + $0x180] sm:$0xff]
                %202 = vst [vmem:[%s152 + $0xc0] sm:$0xff] %v201
                %v203 = vld [vmem:[%s151 + $0x188] sm:$0xff]
                %204 = vst [vmem:[%s152 + $0xc8] sm:$0xff] %v203
                %v205 = vld [vmem:[%s151 + $0x1a0] sm:$0xff]
                %206 = vst [vmem:[%s152 + $0xd0] sm:$0xff] %v205
                %v207 = vld [vmem:[%s151 + $0x1a8] sm:$0xff]
                %208 = vst [vmem:[%s152 + $0xd8] sm:$0xff] %v207
                %v209 = vld [vmem:[%s151 + $0x1c0] sm:$0xff]
                %210 = vst [vmem:[%s152 + $0xe0] sm:$0xff] %v209
                %v211 = vld [vmem:[%s151 + $0x1c8] sm:$0xff]
                %212 = vst [vmem:[%s152 + $0xe8] sm:$0xff] %v211
                %v213 = vld [vmem:[%s151 + $0x1e0] sm:$0xff]
                %214 = vst [vmem:[%s152 + $0xf0] sm:$0xff] %v213
                %v215 = vld [vmem:[%s151 + $0x1e8] sm:$0xff]
                %216 = vst [vmem:[%s152 + $0xf8] sm:$0xff] %v215
                %v217 = vld [vmem:[%s151 + $0x200] sm:$0xff]
                %218 = vst [vmem:[%s152 + $0x100] sm:$0xff] %v217
                %v219 = vld [vmem:[%s151 + $0x208] sm:$0xff]
                %220 = vst [vmem:[%s152 + $0x108] sm:$0xff] %v219
                %v221 = vld [vmem:[%s151 + $0x220] sm:$0xff]
                %222 = vst [vmem:[%s152 + $0x110] sm:$0xff] %v221
                %v223 = vld [vmem:[%s151 + $0x228] sm:$0xff]
                %224 = vst [vmem:[%s152 + $0x118] sm:$0xff] %v223
                %v225 = vld [vmem:[%s151 + $0x240] sm:$0xff]
                %226 = vst [vmem:[%s152 + $0x120] sm:$0xff] %v225
                %v227 = vld [vmem:[%s151 + $0x248] sm:$0xff]
                %228 = vst [vmem:[%s152 + $0x128] sm:$0xff] %v227
                %v229 = vld [vmem:[%s151 + $0x260] sm:$0xff]
                %230 = vst [vmem:[%s152 + $0x130] sm:$0xff] %v229
                %v231 = vld [vmem:[%s151 + $0x268] sm:$0xff]
                %232 = vst [vmem:[%s152 + $0x138] sm:$0xff] %v231
                %v233 = vld [vmem:[%s151 + $0x280] sm:$0xff]
                %234 = vst [vmem:[%s152 + $0x140] sm:$0xff] %v233
                %v235 = vld [vmem:[%s151 + $0x288] sm:$0xff]
                %236 = vst [vmem:[%s152 + $0x148] sm:$0xff] %v235
                %v237 = vld [vmem:[%s151 + $0x2a0] sm:$0xff]
                %238 = vst [vmem:[%s152 + $0x150] sm:$0xff] %v237
                %v239 = vld [vmem:[%s151 + $0x2a8] sm:$0xff]
                %240 = vst [vmem:[%s152 + $0x158] sm:$0xff] %v239
                %v241 = vld [vmem:[%s151 + $0x2c0] sm:$0xff]
                %242 = vst [vmem:[%s152 + $0x160] sm:$0xff] %v241
                %v243 = vld [vmem:[%s151 + $0x2c8] sm:$0xff]
                %244 = vst [vmem:[%s152 + $0x168] sm:$0xff] %v243
                %v245 = vld [vmem:[%s151 + $0x2e0] sm:$0xff]
                %246 = vst [vmem:[%s152 + $0x170] sm:$0xff] %v245
                %v247 = vld [vmem:[%s151 + $0x2e8] sm:$0xff]
                %248 = vst [vmem:[%s152 + $0x178] sm:$0xff] %v247
                %v249 = vld [vmem:[%s151 + $0x300] sm:$0xff]
                %250 = vst [vmem:[%s152 + $0x180] sm:$0xff] %v249
                %v251 = vld [vmem:[%s151 + $0x308] sm:$0xff]
                %252 = vst [vmem:[%s152 + $0x188] sm:$0xff] %v251
                %v253 = vld [vmem:[%s151 + $0x320] sm:$0xff]
                %254 = vst [vmem:[%s152 + $0x190] sm:$0xff] %v253
                %v255 = vld [vmem:[%s151 + $0x328] sm:$0xff]
                %256 = vst [vmem:[%s152 + $0x198] sm:$0xff] %v255
                %v257 = vld [vmem:[%s151 + $0x340] sm:$0xff]
                %258 = vst [vmem:[%s152 + $0x1a0] sm:$0xff] %v257
                %v259 = vld [vmem:[%s151 + $0x348] sm:$0xff]
                %260 = vst [vmem:[%s152 + $0x1a8] sm:$0xff] %v259
                %v261 = vld [vmem:[%s151 + $0x360] sm:$0xff]
                %262 = vst [vmem:[%s152 + $0x1b0] sm:$0xff] %v261
                %v263 = vld [vmem:[%s151 + $0x368] sm:$0xff]
                %264 = vst [vmem:[%s152 + $0x1b8] sm:$0xff] %v263
                %v265 = vld [vmem:[%s151 + $0x380] sm:$0xff]
                %266 = vst [vmem:[%s152 + $0x1c0] sm:$0xff] %v265
                %v267 = vld [vmem:[%s151 + $0x388] sm:$0xff]
                %268 = vst [vmem:[%s152 + $0x1c8] sm:$0xff] %v267
                %v269 = vld [vmem:[%s151 + $0x3a0] sm:$0xff]
                %270 = vst [vmem:[%s152 + $0x1d0] sm:$0xff] %v269
                %v271 = vld [vmem:[%s151 + $0x3a8] sm:$0xff]
                %272 = vst [vmem:[%s152 + $0x1d8] sm:$0xff] %v271
                %v273 = vld [vmem:[%s151 + $0x3c0] sm:$0xff]
                %274 = vst [vmem:[%s152 + $0x1e0] sm:$0xff] %v273
                %v275 = vld [vmem:[%s151 + $0x3c8] sm:$0xff]
                %276 = vst [vmem:[%s152 + $0x1e8] sm:$0xff] %v275
                %v277 = vld [vmem:[%s151 + $0x3e0] sm:$0xff]
                %278 = vst [vmem:[%s152 + $0x1f0] sm:$0xff] %v277
                %v279 = vld [vmem:[%s151 + $0x3e8] sm:$0xff]
                %280 = vst [vmem:[%s152 + $0x1f8] sm:$0xff] %v279
              $region37: #{voxel_vae_forward.18} parent=31 // loop_footer
                %s150 = sadd.s32 1, %s146
              $region38: #{voxel_vae_forward.18} parent=31 // loop_footer_branch
                %145 = sbr.rel target = $region34
              $region39: #{voxel_vae_forward.18} parent=31 // loop_exit
                _
            $region32: #{voxel_vae_forward.18} parent=27 // pred_fallthru
              _
            // Predicated region
            $region40: #{voxel_vae_forward.18} parent=27 // pred_check
              _
            $region41: #{voxel_vae_forward.18} parent=27 // pred_check_branch
              %282 = sbr.rel target = $region43
            $region42: #{voxel_vae_forward.18} parent=27 // pred_region
              _
            $region43: #{voxel_vae_forward.18} parent=27 // pred_fallthru
              _
          $region28: #{voxel_vae_forward.18} parent=23 // pred_fallthru
            _
          %283 = vnop
        $region24: #{voxel_vae_forward.18} parent=15 // pred_fallthru
          _
      $region16: #{voxel_vae_forward.18} parent=5 // pred_fallthru
        _
      %p284 = scmp.le.s32.totalorder 1, %s8
      %p285 = scmp.lt.s32.totalorder %s8, 17
      %p286 = pnand %p284, %p285
      %p287 = pneg %p286
      // Predicated region
      $region44: #{voxel_vae_forward.18} parent=5 // pred_check
        _
      $region45: #{voxel_vae_forward.18} parent=5 // pred_check_branch
        %289 = sbr.rel (%p286) target = $region47
      $region46: #{voxel_vae_forward.18} parent=5 // pred_region
        %s290 = ssub.s32 %s8, 1
        %s291 = sand.u32 %s61, 1
        %s292 = sand.u32 %s61, 1
        %s293 = smul.addr %s292, 512
        %s294 = scalar_lea.vmem [#allocation2], %s293
        // Predicated region
        $region48: #{voxel_vae_forward.18} parent=46 // pred_check
          %p295 = pneg %p74
        $region49: #{voxel_vae_forward.18} parent=46 // pred_check_branch
          %297 = sbr.rel (%p295) target = $region51
        $region50: #{voxel_vae_forward.18} parent=46 // pred_region
          _
        $region51: #{voxel_vae_forward.18} parent=46 // pred_fallthru
          _
        %p298 = scmp.lt.s32.totalorder %s17, 7
        %s299 = scalar_select %p298, %s17, 7
        %s300 = smul.addr %s299, 2
        %s301 = smul.addr %s300, 4
        %s302 = scalar_lea.vmem %s0, %s301
        %p303 = pneg %p46
        %p304 = pneg %p43
        %s305 = sand.u32 %s61, 1
        %s306 = sand.u32 %s61, 1
        %s307 = smul.addr %s306, 512
        %s308 = scalar_lea.vmem [#allocation2], %s307
        %p309 = pneg %p74
        %p310 = pneg %p71
        %p311 = pneg %p102
        %p312 = pneg %p99
        %s313 = smul.u32 4, %s18
        %p314 = scmp.lt.s32.totalorder %s17, 7
        %s315 = scalar_select %p314, %s17, 7
        %p316 = scmp.lt.s32.totalorder %s313, 7
        %s317 = scalar_select %p316, %s313, 7
        %s318 = smul.addr %s315, 8
        %s319 = sadd.s32 %s317, %s318
        %s320 = smul.addr %s319, 8
        %s321 = scalar_lea.vmem %s2, %s320
        %p322 = scmp.lt.s32.totalorder %s17, 7
        %s323 = scalar_select %p322, %s17, 7
        %s324 = smul.addr %s323, 2
        %s325 = smul.addr %s324, 4
        %s326 = scalar_lea.vmem %s0, %s325
        %s327 = smul.u32 4, %s18
        %s328 = smul.u32 4, %s18
        %p329 = scmp.lt.s32.totalorder %s17, 7
        %s330 = scalar_select %p329, %s17, 7
        %p331 = scmp.lt.s32.totalorder %s328, 7
        %s332 = scalar_select %p331, %s328, 7
        %s333 = smul.addr %s330, 8
        %s334 = sadd.s32 %s332, %s333
        %s335 = smul.addr %s334, 8
        %s336 = scalar_lea.vmem %s2, %s335
        %s337 = smul.u32 4, %s18
        %v338 = vld [vmem:[%s326] sm:$0xff]
        %v339 = vld [vmem:[%s294] sm:$0xff]
        %v340 = vld [vmem:[%s294 + $0x8] sm:$0xff]
        %v341 = vld [vmem:[%s294 + $0x10] sm:$0xff]
        %v342 = vld [vmem:[%s294 + $0x18] sm:$0xff]
        %v343 = vld [vmem:[%s294 + $0x20] sm:$0xff]
        %v344 = vld [vmem:[%s294 + $0x28] sm:$0xff]
        %v345 = vld [vmem:[%s294 + $0x30] sm:$0xff]
        %v346 = vld [vmem:[%s294 + $0x38] sm:$0xff]
        %v347 = vld [vmem:[%s294 + $0x40] sm:$0xff]
        %v348 = vld [vmem:[%s294 + $0x48] sm:$0xff]
        %v349 = vld [vmem:[%s294 + $0x50] sm:$0xff]
        %v350 = vld [vmem:[%s294 + $0x58] sm:$0xff]
        %v351 = vld [vmem:[%s294 + $0x60] sm:$0xff]
        %v352 = vld [vmem:[%s294 + $0x68] sm:$0xff]
        %v353 = vld [vmem:[%s294 + $0x70] sm:$0xff]
        %v354 = vld [vmem:[%s294 + $0x78] sm:$0xff]
        %v355 = vld [vmem:[%s294 + $0x80] sm:$0xff]
        %v356 = vld [vmem:[%s294 + $0x88] sm:$0xff]
        %v357 = vld [vmem:[%s294 + $0x90] sm:$0xff]
        %v358 = vld [vmem:[%s294 + $0x98] sm:$0xff]
        %v359 = vld [vmem:[%s294 + $0xa0] sm:$0xff]
        %v360 = vld [vmem:[%s294 + $0xa8] sm:$0xff]
        %v361 = vld [vmem:[%s294 + $0xb0] sm:$0xff]
        %v362 = vld [vmem:[%s294 + $0xb8] sm:$0xff]
        %v363 = vld [vmem:[%s294 + $0xc0] sm:$0xff]
        %v364 = vld [vmem:[%s294 + $0xc8] sm:$0xff]
        %v365 = vld [vmem:[%s294 + $0xd0] sm:$0xff]
        %v366 = vld [vmem:[%s294 + $0xd8] sm:$0xff]
        %v367 = vld [vmem:[%s294 + $0xe0] sm:$0xff]
        %v368 = vld [vmem:[%s294 + $0xe8] sm:$0xff]
        %v369 = vld [vmem:[%s294 + $0xf0] sm:$0xff]
        %v370 = vld [vmem:[%s294 + $0xf8] sm:$0xff]
        %v371 = vld [vmem:[%s294 + $0x100] sm:$0xff]
        %v372 = vld [vmem:[%s294 + $0x108] sm:$0xff]
        %v373 = vld [vmem:[%s294 + $0x110] sm:$0xff]
        %v374 = vld [vmem:[%s294 + $0x118] sm:$0xff]
        %v375 = vld [vmem:[%s294 + $0x120] sm:$0xff]
        %v376 = vld [vmem:[%s294 + $0x128] sm:$0xff]
        %v377 = vld [vmem:[%s294 + $0x130] sm:$0xff]
        %v378 = vld [vmem:[%s294 + $0x138] sm:$0xff]
        %v379 = vld [vmem:[%s294 + $0x140] sm:$0xff]
        %v380 = vld [vmem:[%s294 + $0x148] sm:$0xff]
        %v381 = vld [vmem:[%s294 + $0x150] sm:$0xff]
        %v382 = vld [vmem:[%s294 + $0x158] sm:$0xff]
        %v383 = vld [vmem:[%s294 + $0x160] sm:$0xff]
        %v384 = vld [vmem:[%s294 + $0x168] sm:$0xff]
        %v385 = vld [vmem:[%s294 + $0x170] sm:$0xff]
        %v386 = vld [vmem:[%s294 + $0x178] sm:$0xff]
        %v387 = vld [vmem:[%s294 + $0x180] sm:$0xff]
        %v388 = vld [vmem:[%s294 + $0x188] sm:$0xff]
        %v389 = vld [vmem:[%s294 + $0x190] sm:$0xff]
        %v390 = vld [vmem:[%s294 + $0x198] sm:$0xff]
        %v391 = vld [vmem:[%s294 + $0x1a0] sm:$0xff]
        %v392 = vld [vmem:[%s294 + $0x1a8] sm:$0xff]
        %v393 = vld [vmem:[%s294 + $0x1b0] sm:$0xff]
        %v394 = vld [vmem:[%s294 + $0x1b8] sm:$0xff]
        %v395 = vld [vmem:[%s294 + $0x1c0] sm:$0xff]
        %v396 = vld [vmem:[%s294 + $0x1c8] sm:$0xff]
        %v397 = vld [vmem:[%s294 + $0x1d0] sm:$0xff]
        %v398 = vld [vmem:[%s294 + $0x1d8] sm:$0xff]
        %v399 = vld [vmem:[%s294 + $0x1e0] sm:$0xff]
        %v400 = vld [vmem:[%s294 + $0x1e8] sm:$0xff]
        %v401 = vld [vmem:[%s294 + $0x1f0] sm:$0xff]
        %v402 = vld [vmem:[%s294 + $0x1f8] sm:$0xff]
        %v404 = vunpack.c.l.b16 %v338
        %v405 = vunpack.c.h.b16 %v338
        %v406 = vpack.c.b16 %v404, %v404
        %v407 = vpack.c.b16 %v405, %v405
        %v474 = vunpack.c.l.b16 %v339
        %v475 = vunpack.c.h.b16 %v339
        %v476 = vunpack.c.l.b16 %v340
        %v477 = vunpack.c.h.b16 %v340
        %v478 = vunpack.c.l.b16 %v341
        %v479 = vunpack.c.h.b16 %v341
        %v480 = vunpack.c.l.b16 %v342
        %v481 = vunpack.c.h.b16 %v342
        %v482 = vunpack.c.l.b16 %v343
        %v483 = vunpack.c.h.b16 %v343
        %v484 = vunpack.c.l.b16 %v344
        %v485 = vunpack.c.h.b16 %v344
        %v486 = vunpack.c.l.b16 %v345
        %v487 = vunpack.c.h.b16 %v345
        %v488 = vunpack.c.l.b16 %v346
        %v489 = vunpack.c.h.b16 %v346
        %v490 = vunpack.c.l.b16 %v347
        %v491 = vunpack.c.h.b16 %v347
        %v492 = vunpack.c.l.b16 %v348
        %v493 = vunpack.c.h.b16 %v348
        %v494 = vunpack.c.l.b16 %v349
        %v495 = vunpack.c.h.b16 %v349
        %v496 = vunpack.c.l.b16 %v350
        %v497 = vunpack.c.h.b16 %v350
        %v498 = vunpack.c.l.b16 %v351
        %v499 = vunpack.c.h.b16 %v351
        %v500 = vunpack.c.l.b16 %v352
        %v501 = vunpack.c.h.b16 %v352
        %v502 = vunpack.c.l.b16 %v353
        %v503 = vunpack.c.h.b16 %v353
        %v504 = vunpack.c.l.b16 %v354
        %v505 = vunpack.c.h.b16 %v354
        %v506 = vunpack.c.l.b16 %v355
        %v507 = vunpack.c.h.b16 %v355
        %v508 = vunpack.c.l.b16 %v356
        %v509 = vunpack.c.h.b16 %v356
        %v510 = vunpack.c.l.b16 %v357
        %v511 = vunpack.c.h.b16 %v357
        %v512 = vunpack.c.l.b16 %v358
        %v513 = vunpack.c.h.b16 %v358
        %v514 = vunpack.c.l.b16 %v359
        %v515 = vunpack.c.h.b16 %v359
        %v516 = vunpack.c.l.b16 %v360
        %v517 = vunpack.c.h.b16 %v360
        %v518 = vunpack.c.l.b16 %v361
        %v519 = vunpack.c.h.b16 %v361
        %v520 = vunpack.c.l.b16 %v362
        %v521 = vunpack.c.h.b16 %v362
        %v522 = vunpack.c.l.b16 %v363
        %v523 = vunpack.c.h.b16 %v363
        %v524 = vunpack.c.l.b16 %v364
        %v525 = vunpack.c.h.b16 %v364
        %v526 = vunpack.c.l.b16 %v365
        %v527 = vunpack.c.h.b16 %v365
        %v528 = vunpack.c.l.b16 %v366
        %v529 = vunpack.c.h.b16 %v366
        %v530 = vunpack.c.l.b16 %v367
        %v531 = vunpack.c.h.b16 %v367
        %v532 = vunpack.c.l.b16 %v368
        %v533 = vunpack.c.h.b16 %v368
        %v534 = vunpack.c.l.b16 %v369
        %v535 = vunpack.c.h.b16 %v369
        %v536 = vunpack.c.l.b16 %v370
        %v537 = vunpack.c.h.b16 %v370
        %v538 = vunpack.c.l.b16 %v371
        %v539 = vunpack.c.h.b16 %v371
        %v540 = vunpack.c.l.b16 %v372
        %v541 = vunpack.c.h.b16 %v372
        %v542 = vunpack.c.l.b16 %v373
        %v543 = vunpack.c.h.b16 %v373
        %v544 = vunpack.c.l.b16 %v374
        %v545 = vunpack.c.h.b16 %v374
        %v546 = vunpack.c.l.b16 %v375
        %v547 = vunpack.c.h.b16 %v375
        %v548 = vunpack.c.l.b16 %v376
        %v549 = vunpack.c.h.b16 %v376
        %v550 = vunpack.c.l.b16 %v377
        %v551 = vunpack.c.h.b16 %v377
        %v552 = vunpack.c.l.b16 %v378
        %v553 = vunpack.c.h.b16 %v378
        %v554 = vunpack.c.l.b16 %v379
        %v555 = vunpack.c.h.b16 %v379
        %v556 = vunpack.c.l.b16 %v380
        %v557 = vunpack.c.h.b16 %v380
        %v558 = vunpack.c.l.b16 %v381
        %v559 = vunpack.c.h.b16 %v381
        %v560 = vunpack.c.l.b16 %v382
        %v561 = vunpack.c.h.b16 %v382
        %v562 = vunpack.c.l.b16 %v383
        %v563 = vunpack.c.h.b16 %v383
        %v564 = vunpack.c.l.b16 %v384
        %v565 = vunpack.c.h.b16 %v384
        %v566 = vunpack.c.l.b16 %v385
        %v567 = vunpack.c.h.b16 %v385
        %v568 = vunpack.c.l.b16 %v386
        %v569 = vunpack.c.h.b16 %v386
        %v570 = vunpack.c.l.b16 %v387
        %v571 = vunpack.c.h.b16 %v387
        %v572 = vunpack.c.l.b16 %v388
        %v573 = vunpack.c.h.b16 %v388
        %v574 = vunpack.c.l.b16 %v389
        %v575 = vunpack.c.h.b16 %v389
        %v576 = vunpack.c.l.b16 %v390
        %v577 = vunpack.c.h.b16 %v390
        %v578 = vunpack.c.l.b16 %v391
        %v579 = vunpack.c.h.b16 %v391
        %v580 = vunpack.c.l.b16 %v392
        %v581 = vunpack.c.h.b16 %v392
        %v582 = vunpack.c.l.b16 %v393
        %v583 = vunpack.c.h.b16 %v393
        %v584 = vunpack.c.l.b16 %v394
        %v585 = vunpack.c.h.b16 %v394
        %v586 = vunpack.c.l.b16 %v395
        %v587 = vunpack.c.h.b16 %v395
        %v588 = vunpack.c.l.b16 %v396
        %v589 = vunpack.c.h.b16 %v396
        %v590 = vunpack.c.l.b16 %v397
        %v591 = vunpack.c.h.b16 %v397
        %v592 = vunpack.c.l.b16 %v398
        %v593 = vunpack.c.h.b16 %v398
        %v594 = vunpack.c.l.b16 %v399
        %v595 = vunpack.c.h.b16 %v399
        %v596 = vunpack.c.l.b16 %v400
        %v597 = vunpack.c.h.b16 %v400
        %v598 = vunpack.c.l.b16 %v401
        %v599 = vunpack.c.h.b16 %v401
        %v600 = vunpack.c.l.b16 %v402
        %v601 = vunpack.c.h.b16 %v402
        %v602 = vpack.c.b16 %v478, %v474
        %v603 = vpack.c.b16 %v479, %v475
        %v604 = vpack.c.b16 %v480, %v476
        %v605 = vpack.c.b16 %v481, %v477
        %v606 = vpack.c.b16 %v486, %v482
        %v607 = vpack.c.b16 %v487, %v483
        %v608 = vpack.c.b16 %v488, %v484
        %v609 = vpack.c.b16 %v489, %v485
        %v610 = vpack.c.b16 %v494, %v490
        %v611 = vpack.c.b16 %v495, %v491
        %v612 = vpack.c.b16 %v496, %v492
        %v613 = vpack.c.b16 %v497, %v493
        %v614 = vpack.c.b16 %v502, %v498
        %v615 = vpack.c.b16 %v503, %v499
        %v616 = vpack.c.b16 %v504, %v500
        %v617 = vpack.c.b16 %v505, %v501
        %v618 = vpack.c.b16 %v510, %v506
        %v619 = vpack.c.b16 %v511, %v507
        %v620 = vpack.c.b16 %v512, %v508
        %v621 = vpack.c.b16 %v513, %v509
        %v622 = vpack.c.b16 %v518, %v514
        %v623 = vpack.c.b16 %v519, %v515
        %v624 = vpack.c.b16 %v520, %v516
        %v625 = vpack.c.b16 %v521, %v517
        %v626 = vpack.c.b16 %v526, %v522
        %v627 = vpack.c.b16 %v527, %v523
        %v628 = vpack.c.b16 %v528, %v524
        %v629 = vpack.c.b16 %v529, %v525
        %v630 = vpack.c.b16 %v534, %v530
        %v631 = vpack.c.b16 %v535, %v531
        %v632 = vpack.c.b16 %v536, %v532
        %v633 = vpack.c.b16 %v537, %v533
        %v634 = vpack.c.b16 %v542, %v538
        %v635 = vpack.c.b16 %v543, %v539
        %v636 = vpack.c.b16 %v544, %v540
        %v637 = vpack.c.b16 %v545, %v541
        %v638 = vpack.c.b16 %v550, %v546
        %v639 = vpack.c.b16 %v551, %v547
        %v640 = vpack.c.b16 %v552, %v548
        %v641 = vpack.c.b16 %v553, %v549
        %v642 = vpack.c.b16 %v558, %v554
        %v643 = vpack.c.b16 %v559, %v555
        %v644 = vpack.c.b16 %v560, %v556
        %v645 = vpack.c.b16 %v561, %v557
        %v646 = vpack.c.b16 %v566, %v562
        %v647 = vpack.c.b16 %v567, %v563
        %v648 = vpack.c.b16 %v568, %v564
        %v649 = vpack.c.b16 %v569, %v565
        %v650 = vpack.c.b16 %v574, %v570
        %v651 = vpack.c.b16 %v575, %v571
        %v652 = vpack.c.b16 %v576, %v572
        %v653 = vpack.c.b16 %v577, %v573
        %v654 = vpack.c.b16 %v582, %v578
        %v655 = vpack.c.b16 %v583, %v579
        %v656 = vpack.c.b16 %v584, %v580
        %v657 = vpack.c.b16 %v585, %v581
        %v658 = vpack.c.b16 %v590, %v586
        %v659 = vpack.c.b16 %v591, %v587
        %v660 = vpack.c.b16 %v592, %v588
        %v661 = vpack.c.b16 %v593, %v589
        %v662 = vpack.c.b16 %v598, %v594
        %v663 = vpack.c.b16 %v599, %v595
        %v664 = vpack.c.b16 %v600, %v596
        %v665 = vpack.c.b16 %v601, %v597
        %730 = vmatprep.subr.bf16.mxu0 %v631
        %731 = vmatpush1.bf16.msra.mxu0 %v630
        %732 = vmatprep.subr.bf16.mxu0 %v627
        %733 = vmatpush1.bf16.msra.mxu0 %v626
        %734 = vmatprep.subr.bf16.mxu0 %v623
        %735 = vmatpush1.bf16.msra.mxu0 %v622
        %736 = vmatprep.subr.bf16.mxu0 %v619
        %737 = vmatpush1.bf16.msra.mxu0 %v618
        %738 = vmatprep.subr.bf16.mxu0 %v615
        %739 = vmatpush1.bf16.msra.mxu0 %v614
        %740 = vmatprep.subr.bf16.mxu0 %v611
        %741 = vmatpush1.bf16.msra.mxu0 %v610
        %742 = vmatprep.subr.bf16.mxu0 %v607
        %743 = vmatpush1.bf16.msra.mxu0 %v606
        %744 = vmatprep.subr.bf16.mxu0 %v603
        %745 = vmatpush1.bf16.msra.mxu0 %v602
        %746 = vmatprep.subr.bf16.mxu0 %v663
        %747 = vmatpush2.bf16.msra.mxu0 %v662
        %748 = vmatprep.subr.bf16.mxu0 %v659
        %749 = vmatpush2.bf16.msra.mxu0 %v658
        %750 = vmatprep.subr.bf16.mxu0 %v655
        %751 = vmatpush2.bf16.msra.mxu0 %v654
        %752 = vmatprep.subr.bf16.mxu0 %v651
        %753 = vmatpush2.bf16.msra.mxu0 %v650
        %754 = vmatprep.subr.bf16.mxu0 %v647
        %755 = vmatpush2.bf16.msra.mxu0 %v646
        %756 = vmatprep.subr.bf16.mxu0 %v643
        %757 = vmatpush2.bf16.msra.mxu0 %v642
        %758 = vmatprep.subr.bf16.mxu0 %v639
        %759 = vmatpush2.bf16.msra.mxu0 %v638
        %760 = vmatprep.subr.bf16.mxu0 %v635
        %761 = vmatpush2.bf16.msra.mxu0 %v634
        %762 = vmatprep.mubr.bf16.mxu0 %v407
        %763 = vmatmul.mubr.bf16.gmra.mxu0 %v406
        %v764 = vpop.f32.mrf.mxu0
        %v765 = vadd.f32 0.0, %v764
        %v766 = vpop.f32.mrf.mxu0
        %v767 = vadd.f32 0.0, %v766
        %v768 = vpop.f32.mrf.mxu0
        %v769 = vpop.f32.mrf.mxu0
        %770 = vdwg.mxu0
        %771 = vmatprep.subr.bf16.mxu0 %v633
        %772 = vmatpush1.bf16.msra.mxu0 %v632
        %773 = vmatprep.subr.bf16.mxu0 %v629
        %774 = vmatpush1.bf16.msra.mxu0 %v628
        %775 = vmatprep.subr.bf16.mxu0 %v625
        %776 = vmatpush1.bf16.msra.mxu0 %v624
        %777 = vmatprep.subr.bf16.mxu0 %v621
        %778 = vmatpush1.bf16.msra.mxu0 %v620
        %779 = vmatprep.subr.bf16.mxu0 %v617
        %780 = vmatpush1.bf16.msra.mxu0 %v616
        %781 = vmatprep.subr.bf16.mxu0 %v613
        %782 = vmatpush1.bf16.msra.mxu0 %v612
        %783 = vmatprep.subr.bf16.mxu0 %v609
        %784 = vmatpush1.bf16.msra.mxu0 %v608
        %785 = vmatprep.subr.bf16.mxu0 %v605
        %786 = vmatpush1.bf16.msra.mxu0 %v604
        %787 = vmatprep.subr.bf16.mxu0 %v665
        %788 = vmatpush2.bf16.msra.mxu0 %v664
        %789 = vmatprep.subr.bf16.mxu0 %v661
        %790 = vmatpush2.bf16.msra.mxu0 %v660
        %791 = vmatprep.subr.bf16.mxu0 %v657
        %792 = vmatpush2.bf16.msra.mxu0 %v656
        %793 = vmatprep.subr.bf16.mxu0 %v653
        %794 = vmatpush2.bf16.msra.mxu0 %v652
        %795 = vmatprep.subr.bf16.mxu0 %v649
        %796 = vmatpush2.bf16.msra.mxu0 %v648
        %797 = vmatprep.subr.bf16.mxu0 %v645
        %798 = vmatpush2.bf16.msra.mxu0 %v644
        %799 = vmatprep.subr.bf16.mxu0 %v641
        %800 = vmatpush2.bf16.msra.mxu0 %v640
        %801 = vmatprep.subr.bf16.mxu0 %v637
        %802 = vmatpush2.bf16.msra.mxu0 %v636
        %803 = vmatprep.mubr.bf16.mxu0 %v407
        %804 = vmatmul.mubr.bf16.gmra.mxu0 %v406
        %v805 = vpop.f32.mrf.mxu0
        %v806 = vadd.f32 0.0, %v805
        %v807 = vpop.f32.mrf.mxu0
        %v808 = vadd.f32 0.0, %v807
        %v809 = vpop.f32.mrf.mxu0
        %v810 = vpop.f32.mrf.mxu0
        %811 = vdwg.mxu0
        %812 = vst [vmem:[%s336] sm:$0xff] %v765
        %813 = vst [vmem:[%s336 + $0x8] sm:$0xff] %v767
        %814 = vst [vmem:[%s336 + $0x10] sm:$0xff] %v806
        %815 = vst [vmem:[%s336 + $0x18] sm:$0xff] %v808
        %s816 = smul.u32 4, %s18
        %p817 = scmp.lt.s32.totalorder %s17, 7
        %s818 = scalar_select %p817, %s17, 7
        %p819 = scmp.lt.s32.totalorder %s816, 7
        %s820 = scalar_select %p819, %s816, 7
        %s821 = smul.addr %s818, 8
        %s822 = sadd.s32 %s820, %s821
        %s823 = smul.addr %s822, 8
        %s824 = scalar_lea.vmem %s2, %s823
        // Predicated region
        $region52: #{voxel_vae_forward.18} parent=46 // pred_check
          %p825 = pneg %p99
        $region53: #{voxel_vae_forward.18} parent=46 // pred_check_branch
          %827 = sbr.rel (%p825) target = $region55
        $region54: #{voxel_vae_forward.18} parent=46 // pred_region
          %s828 = smul.u32 4, %s18
        $region55: #{voxel_vae_forward.18} parent=46 // pred_fallthru
          _
      $region47: #{voxel_vae_forward.18} parent=5 // pred_fallthru
        _
      %p829 = scmp.le.s32.totalorder 2, %s8
      // Predicated region
      $region56: #{voxel_vae_forward.18} parent=5 // pred_check
        %p830 = pneg %p829
      $region57: #{voxel_vae_forward.18} parent=5 // pred_check_branch
        %832 = sbr.rel (%p830) target = $region59
      $region58: #{voxel_vae_forward.18} parent=5 // pred_region
        %s833 = ssub.s32 %s8, 2
        // Predicated region
        $region60: #{voxel_vae_forward.18} parent=58 // pred_check
          %p834 = pneg %p105
        $region61: #{voxel_vae_forward.18} parent=58 // pred_check_branch
          %836 = sbr.rel (%p834) target = $region63
        $region62: #{voxel_vae_forward.18} parent=58 // pred_region
          %s837 = smul.u32 4, %s20
          %p838 = scmp.lt.s32.totalorder %s19, 7
          %s839 = scalar_select %p838, %s19, 7
          %p840 = scmp.lt.s32.totalorder %s837, 7
          %s841 = scalar_select %p840, %s837, 7
          %s842 = smul.addr %s839, 8
          %s843 = sadd.s32 %s841, %s842
          %s844 = smul.addr %s843, 8
          %s845 = scalar_lea.vmem %s2, %s844
        $region63: #{voxel_vae_forward.18} parent=58 // pred_fallthru
          _
      $region59: #{voxel_vae_forward.18} parent=5 // pred_fallthru
        _
    $region6: #{voxel_vae_forward.18} parent=1 // loop_footer
      %s12 = sadd.s32 1, %s8
    $region7: #{voxel_vae_forward.18} parent=1 // loop_footer_branch
      %7 = sbr.rel target = $region3
    $region8: #{voxel_vae_forward.18} parent=1 // loop_exit
      _

// kernel: voxel_vae_forward.19
$region0: #{voxel_vae_forward.19}
  #allocation0 [shape = 'u32[]', space=smem, size = 0x4, offset = 0x4, fixed_abs, tag = 'smem constant byte address 0x4 - core index']
  #allocation1 [shape = 'u32[144,128]{1,0:T(1,128)}', space=vmem, size = 0x12000, scoped, tag = 'internal scratch']
  #allocation2 [shape = 'f32[1,1]{1,0:T(1,128)S(1)}', space=vmem, size = 0x200, scoped, tag = 'scoped memory for voxel_vae_forward.19']
  #allocation3 [shape = 'f32[1,1]{1,0:T(1,128)S(1)}', space=vmem, size = 0x200, scoped, tag = 'scoped memory for voxel_vae_forward.19']
  %s0 = inlined_call_operand.vmem [shape: f32[1,8192], index: 0, kind: input, shape index: {}]
  %s1 = inlined_call_operand.<no memory space> [shape: f32[1,1], index: 1, kind: input, shape index: {}]
  %s2 = inlined_call_operand.<no memory space> [shape: f32[1,1], index: 2, kind: input, shape index: {}]
  %s3 = inlined_call_operand.vmem [shape: f32[1,8192], index: 3, kind: output, shape index: {}]
  %s4 = sld [smem:[#allocation0]]
  $region22: #{voxel_vae_forward.19} parent=0
    _
  %s6 = ssub.s32 1, %s4
  %s7 = scalar_select 0, %s6, %s4
  %v8 = vstv %s1
  %9 = vst [vmem:[#allocation2] sm:$0x1] %v8
  %v10 = vstv %s2
  %11 = vst [vmem:[#allocation3] sm:$0x1] %v10
  // Predicated region
  $region2: #{voxel_vae_forward.19} parent=0 // pred_check
    _
  $region3: #{voxel_vae_forward.19} parent=0 // pred_check_branch
    %13 = sbr.rel (0) target = $region5
  $region4: #{voxel_vae_forward.19} parent=0 // pred_region
    _
  $region5: #{voxel_vae_forward.19} parent=0 // pred_fallthru
    _
  // Predicated region
  $region6: #{voxel_vae_forward.19} parent=0 // pred_check
    _
  $region7: #{voxel_vae_forward.19} parent=0 // pred_check_branch
    %15 = sbr.rel (0) target = $region9
  $region8: #{voxel_vae_forward.19} parent=0 // pred_region
    _
  $region9: #{voxel_vae_forward.19} parent=0 // pred_fallthru
    _
  // Predicated region
  $region10: #{voxel_vae_forward.19} parent=0 // pred_check
    _
  $region11: #{voxel_vae_forward.19} parent=0 // pred_check_branch
    %17 = sbr.rel (0) target = $region13
  $region12: #{voxel_vae_forward.19} parent=0 // pred_region
    _
  $region13: #{voxel_vae_forward.19} parent=0 // pred_fallthru
    _
  %v18 = vld [vmem:[%s0] sm:$0xff]
  %v19 = vld [vmem:[%s0 + $0x8] sm:$0xff]
  %v20 = vld [vmem:[%s0 + $0x10] sm:$0xff]
  %v21 = vld [vmem:[%s0 + $0x18] sm:$0xff]
  %v22 = vld [vmem:[%s0 + $0x20] sm:$0xff]
  %v23 = vld [vmem:[%s0 + $0x28] sm:$0xff]
  %v24 = vld [vmem:[%s0 + $0x30] sm:$0xff]
  %v25 = vld [vmem:[%s0 + $0x38] sm:$0xff]
  %v34 = vlaneseq
  %v35 = vshrl.u32 %v34, 7
  %v36 = vsub.s32 0, %v35
  %v37 = vrot.slane %v18, %v36
  %v38 = vlaneseq
  %v39 = vshrl.u32 %v38, 7
  %v40 = vsub.s32 1, %v39
  %v41 = vrot.slane %v18, %v40
  %v42 = vlaneseq
  %v43 = vshrl.u32 %v42, 7
  %v44 = vsub.s32 2, %v43
  %v45 = vrot.slane %v18, %v44
  %v46 = vlaneseq
  %v47 = vshrl.u32 %v46, 7
  %v48 = vsub.s32 3, %v47
  %v49 = vrot.slane %v18, %v48
  %v50 = vlaneseq
  %v51 = vshrl.u32 %v50, 7
  %v52 = vsub.s32 4, %v51
  %v53 = vrot.slane %v18, %v52
  %v54 = vlaneseq
  %v55 = vshrl.u32 %v54, 7
  %v56 = vsub.s32 5, %v55
  %v57 = vrot.slane %v18, %v56
  %v58 = vlaneseq
  %v59 = vshrl.u32 %v58, 7
  %v60 = vsub.s32 6, %v59
  %v61 = vrot.slane %v18, %v60
  %v62 = vlaneseq
  %v63 = vshrl.u32 %v62, 7
  %v64 = vsub.s32 7, %v63
  %v65 = vrot.slane %v18, %v64
  %v66 = vlaneseq
  %v67 = vshrl.u32 %v66, 7
  %v68 = vsub.s32 0, %v67
  %v69 = vrot.slane %v19, %v68
  %v70 = vlaneseq
  %v71 = vshrl.u32 %v70, 7
  %v72 = vsub.s32 1, %v71
  %v73 = vrot.slane %v19, %v72
  %v74 = vlaneseq
  %v75 = vshrl.u32 %v74, 7
  %v76 = vsub.s32 2, %v75
  %v77 = vrot.slane %v19, %v76
  %v78 = vlaneseq
  %v79 = vshrl.u32 %v78, 7
  %v80 = vsub.s32 3, %v79
  %v81 = vrot.slane %v19, %v80
  %v82 = vlaneseq
  %v83 = vshrl.u32 %v82, 7
  %v84 = vsub.s32 4, %v83
  %v85 = vrot.slane %v19, %v84
  %v86 = vlaneseq
  %v87 = vshrl.u32 %v86, 7
  %v88 = vsub.s32 5, %v87
  %v89 = vrot.slane %v19, %v88
  %v90 = vlaneseq
  %v91 = vshrl.u32 %v90, 7
  %v92 = vsub.s32 6, %v91
  %v93 = vrot.slane %v19, %v92
  %v94 = vlaneseq
  %v95 = vshrl.u32 %v94, 7
  %v96 = vsub.s32 7, %v95
  %v97 = vrot.slane %v19, %v96
  %v98 = vlaneseq
  %v99 = vshrl.u32 %v98, 7
  %v100 = vsub.s32 0, %v99
  %v101 = vrot.slane %v20, %v100
  %v102 = vlaneseq
  %v103 = vshrl.u32 %v102, 7
  %v104 = vsub.s32 1, %v103
  %v105 = vrot.slane %v20, %v104
  %v106 = vlaneseq
  %v107 = vshrl.u32 %v106, 7
  %v108 = vsub.s32 2, %v107
  %v109 = vrot.slane %v20, %v108
  %v110 = vlaneseq
  %v111 = vshrl.u32 %v110, 7
  %v112 = vsub.s32 3, %v111
  %v113 = vrot.slane %v20, %v112
  %v114 = vlaneseq
  %v115 = vshrl.u32 %v114, 7
  %v116 = vsub.s32 4, %v115
  %v117 = vrot.slane %v20, %v116
  %v118 = vlaneseq
  %v119 = vshrl.u32 %v118, 7
  %v120 = vsub.s32 5, %v119
  %v121 = vrot.slane %v20, %v120
  %v122 = vlaneseq
  %v123 = vshrl.u32 %v122, 7
  %v124 = vsub.s32 6, %v123
  %v125 = vrot.slane %v20, %v124
  %v126 = vlaneseq
  %v127 = vshrl.u32 %v126, 7
  %v128 = vsub.s32 7, %v127
  %v129 = vrot.slane %v20, %v128
  %v130 = vlaneseq
  %v131 = vshrl.u32 %v130, 7
  %v132 = vsub.s32 0, %v131
  %v133 = vrot.slane %v21, %v132
  %v134 = vlaneseq
  %v135 = vshrl.u32 %v134, 7
  %v136 = vsub.s32 1, %v135
  %v137 = vrot.slane %v21, %v136
  %v138 = vlaneseq
  %v139 = vshrl.u32 %v138, 7
  %v140 = vsub.s32 2, %v139
  %v141 = vrot.slane %v21, %v140
  %v142 = vlaneseq
  %v143 = vshrl.u32 %v142, 7
  %v144 = vsub.s32 3, %v143
  %v145 = vrot.slane %v21, %v144
  %v146 = vlaneseq
  %v147 = vshrl.u32 %v146, 7
  %v148 = vsub.s32 4, %v147
  %v149 = vrot.slane %v21, %v148
  %v150 = vlaneseq
  %v151 = vshrl.u32 %v150, 7
  %v152 = vsub.s32 5, %v151
  %v153 = vrot.slane %v21, %v152
  %v154 = vlaneseq
  %v155 = vshrl.u32 %v154, 7
  %v156 = vsub.s32 6, %v155
  %v157 = vrot.slane %v21, %v156
  %v158 = vlaneseq
  %v159 = vshrl.u32 %v158, 7
  %v160 = vsub.s32 7, %v159
  %v161 = vrot.slane %v21, %v160
  %v162 = vlaneseq
  %v163 = vshrl.u32 %v162, 7
  %v164 = vsub.s32 0, %v163
  %v165 = vrot.slane %v22, %v164
  %v166 = vlaneseq
  %v167 = vshrl.u32 %v166, 7
  %v168 = vsub.s32 1, %v167
  %v169 = vrot.slane %v22, %v168
  %v170 = vlaneseq
  %v171 = vshrl.u32 %v170, 7
  %v172 = vsub.s32 2, %v171
  %v173 = vrot.slane %v22, %v172
  %v174 = vlaneseq
  %v175 = vshrl.u32 %v174, 7
  %v176 = vsub.s32 3, %v175
  %v177 = vrot.slane %v22, %v176
  %v178 = vlaneseq
  %v179 = vshrl.u32 %v178, 7
  %v180 = vsub.s32 4, %v179
  %v181 = vrot.slane %v22, %v180
  %v182 = vlaneseq
  %v183 = vshrl.u32 %v182, 7
  %v184 = vsub.s32 5, %v183
  %v185 = vrot.slane %v22, %v184
  %v186 = vlaneseq
  %v187 = vshrl.u32 %v186, 7
  %v188 = vsub.s32 6, %v187
  %v189 = vrot.slane %v22, %v188
  %v190 = vlaneseq
  %v191 = vshrl.u32 %v190, 7
  %v192 = vsub.s32 7, %v191
  %v193 = vrot.slane %v22, %v192
  %v194 = vlaneseq
  %v195 = vshrl.u32 %v194, 7
  %v196 = vsub.s32 0, %v195
  %v197 = vrot.slane %v23, %v196
  %v198 = vlaneseq
  %v199 = vshrl.u32 %v198, 7
  %v200 = vsub.s32 1, %v199
  %v201 = vrot.slane %v23, %v200
  %v202 = vlaneseq
  %v203 = vshrl.u32 %v202, 7
  %v204 = vsub.s32 2, %v203
  %v205 = vrot.slane %v23, %v204
  %v206 = vlaneseq
  %v207 = vshrl.u32 %v206, 7
  %v208 = vsub.s32 3, %v207
  %v209 = vrot.slane %v23, %v208
  %v210 = vlaneseq
  %v211 = vshrl.u32 %v210, 7
  %v212 = vsub.s32 4, %v211
  %v213 = vrot.slane %v23, %v212
  %v214 = vlaneseq
  %v215 = vshrl.u32 %v214, 7
  %v216 = vsub.s32 5, %v215
  %v217 = vrot.slane %v23, %v216
  %v218 = vlaneseq
  %v219 = vshrl.u32 %v218, 7
  %v220 = vsub.s32 6, %v219
  %v221 = vrot.slane %v23, %v220
  %v222 = vlaneseq
  %v223 = vshrl.u32 %v222, 7
  %v224 = vsub.s32 7, %v223
  %v225 = vrot.slane %v23, %v224
  %v226 = vlaneseq
  %v227 = vshrl.u32 %v226, 7
  %v228 = vsub.s32 0, %v227
  %v229 = vrot.slane %v24, %v228
  %v230 = vlaneseq
  %v231 = vshrl.u32 %v230, 7
  %v232 = vsub.s32 1, %v231
  %v233 = vrot.slane %v24, %v232
  %v234 = vlaneseq
  %v235 = vshrl.u32 %v234, 7
  %v236 = vsub.s32 2, %v235
  %v237 = vrot.slane %v24, %v236
  %v238 = vlaneseq
  %v239 = vshrl.u32 %v238, 7
  %v240 = vsub.s32 3, %v239
  %v241 = vrot.slane %v24, %v240
  %v242 = vlaneseq
  %v243 = vshrl.u32 %v242, 7
  %v244 = vsub.s32 4, %v243
  %v245 = vrot.slane %v24, %v244
  %v246 = vlaneseq
  %v247 = vshrl.u32 %v246, 7
  %v248 = vsub.s32 5, %v247
  %v249 = vrot.slane %v24, %v248
  %v250 = vlaneseq
  %v251 = vshrl.u32 %v250, 7
  %v252 = vsub.s32 6, %v251
  %v253 = vrot.slane %v24, %v252
  %v254 = vlaneseq
  %v255 = vshrl.u32 %v254, 7
  %v256 = vsub.s32 7, %v255
  %v257 = vrot.slane %v24, %v256
  %v258 = vlaneseq
  %v259 = vshrl.u32 %v258, 7
  %v260 = vsub.s32 0, %v259
  %v261 = vrot.slane %v25, %v260
  %v262 = vlaneseq
  %v263 = vshrl.u32 %v262, 7
  %v264 = vsub.s32 1, %v263
  %v265 = vrot.slane %v25, %v264
  %v266 = vlaneseq
  %v267 = vshrl.u32 %v266, 7
  %v268 = vsub.s32 2, %v267
  %v269 = vrot.slane %v25, %v268
  %v270 = vlaneseq
  %v271 = vshrl.u32 %v270, 7
  %v272 = vsub.s32 3, %v271
  %v273 = vrot.slane %v25, %v272
  %v274 = vlaneseq
  %v275 = vshrl.u32 %v274, 7
  %v276 = vsub.s32 4, %v275
  %v277 = vrot.slane %v25, %v276
  %v278 = vlaneseq
  %v279 = vshrl.u32 %v278, 7
  %v280 = vsub.s32 5, %v279
  %v281 = vrot.slane %v25, %v280
  %v282 = vlaneseq
  %v283 = vshrl.u32 %v282, 7
  %v284 = vsub.s32 6, %v283
  %v285 = vrot.slane %v25, %v284
  %v286 = vlaneseq
  %v287 = vshrl.u32 %v286, 7
  %v288 = vsub.s32 7, %v287
  %v289 = vrot.slane %v25, %v288
  %vm354 = vcmask 1040384
  %v355 = vsel %vm354, %v37, 0.0
  %v356 = vsel %vm354, %v41, 0.0
  %v357 = vadd.f32 %v355, %v356
  %v358 = vsel %vm354, %v45, 0.0
  %v359 = vadd.f32 %v357, %v358
  %v360 = vsel %vm354, %v49, 0.0
  %v361 = vadd.f32 %v359, %v360
  %v362 = vsel %vm354, %v53, 0.0
  %v363 = vadd.f32 %v361, %v362
  %v364 = vsel %vm354, %v57, 0.0
  %v365 = vadd.f32 %v363, %v364
  %v366 = vsel %vm354, %v61, 0.0
  %v367 = vadd.f32 %v365, %v366
  %v368 = vsel %vm354, %v65, 0.0
  %v369 = vadd.f32 %v367, %v368
  %v370 = vsel %vm354, %v69, 0.0
  %v371 = vadd.f32 %v369, %v370
  %v372 = vsel %vm354, %v73, 0.0
  %v373 = vadd.f32 %v371, %v372
  %v374 = vsel %vm354, %v77, 0.0
  %v375 = vadd.f32 %v373, %v374
  %v376 = vsel %vm354, %v81, 0.0
  %v377 = vadd.f32 %v375, %v376
  %v378 = vsel %vm354, %v85, 0.0
  %v379 = vadd.f32 %v377, %v378
  %v380 = vsel %vm354, %v89, 0.0
  %v381 = vadd.f32 %v379, %v380
  %v382 = vsel %vm354, %v93, 0.0
  %v383 = vadd.f32 %v381, %v382
  %v384 = vsel %vm354, %v97, 0.0
  %v385 = vadd.f32 %v383, %v384
  %v386 = vsel %vm354, %v101, 0.0
  %v387 = vadd.f32 %v385, %v386
  %v388 = vsel %vm354, %v105, 0.0
  %v389 = vadd.f32 %v387, %v388
  %v390 = vsel %vm354, %v109, 0.0
  %v391 = vadd.f32 %v389, %v390
  %v392 = vsel %vm354, %v113, 0.0
  %v393 = vadd.f32 %v391, %v392
  %v394 = vsel %vm354, %v117, 0.0
  %v395 = vadd.f32 %v393, %v394
  %v396 = vsel %vm354, %v121, 0.0
  %v397 = vadd.f32 %v395, %v396
  %v398 = vsel %vm354, %v125, 0.0
  %v399 = vadd.f32 %v397, %v398
  %v400 = vsel %vm354, %v129, 0.0
  %v401 = vadd.f32 %v399, %v400
  %v402 = vsel %vm354, %v133, 0.0
  %v403 = vadd.f32 %v401, %v402
  %v404 = vsel %vm354, %v137, 0.0
  %v405 = vadd.f32 %v403, %v404
  %v406 = vsel %vm354, %v141, 0.0
  %v407 = vadd.f32 %v405, %v406
  %v408 = vsel %vm354, %v145, 0.0
  %v409 = vadd.f32 %v407, %v408
  %v410 = vsel %vm354, %v149, 0.0
  %v411 = vadd.f32 %v409, %v410
  %v412 = vsel %vm354, %v153, 0.0
  %v413 = vadd.f32 %v411, %v412
  %v414 = vsel %vm354, %v157, 0.0
  %v415 = vadd.f32 %v413, %v414
  %v416 = vsel %vm354, %v161, 0.0
  %v417 = vadd.f32 %v415, %v416
  %v418 = vsel %vm354, %v165, 0.0
  %v419 = vadd.f32 %v417, %v418
  %v420 = vsel %vm354, %v169, 0.0
  %v421 = vadd.f32 %v419, %v420
  %v422 = vsel %vm354, %v173, 0.0
  %v423 = vadd.f32 %v421, %v422
  %v424 = vsel %vm354, %v177, 0.0
  %v425 = vadd.f32 %v423, %v424
  %v426 = vsel %vm354, %v181, 0.0
  %v427 = vadd.f32 %v425, %v426
  %v428 = vsel %vm354, %v185, 0.0
  %v429 = vadd.f32 %v427, %v428
  %v430 = vsel %vm354, %v189, 0.0
  %v431 = vadd.f32 %v429, %v430
  %v432 = vsel %vm354, %v193, 0.0
  %v433 = vadd.f32 %v431, %v432
  %v434 = vsel %vm354, %v197, 0.0
  %v435 = vadd.f32 %v433, %v434
  %v436 = vsel %vm354, %v201, 0.0
  %v437 = vadd.f32 %v435, %v436
  %v438 = vsel %vm354, %v205, 0.0
  %v439 = vadd.f32 %v437, %v438
  %v440 = vsel %vm354, %v209, 0.0
  %v441 = vadd.f32 %v439, %v440
  %v442 = vsel %vm354, %v213, 0.0
  %v443 = vadd.f32 %v441, %v442
  %v444 = vsel %vm354, %v217, 0.0
  %v445 = vadd.f32 %v443, %v444
  %v446 = vsel %vm354, %v221, 0.0
  %v447 = vadd.f32 %v445, %v446
  %v448 = vsel %vm354, %v225, 0.0
  %v449 = vadd.f32 %v447, %v448
  %v450 = vsel %vm354, %v229, 0.0
  %v451 = vadd.f32 %v449, %v450
  %v452 = vsel %vm354, %v233, 0.0
  %v453 = vadd.f32 %v451, %v452
  %v454 = vsel %vm354, %v237, 0.0
  %v455 = vadd.f32 %v453, %v454
  %v456 = vsel %vm354, %v241, 0.0
  %v457 = vadd.f32 %v455, %v456
  %v458 = vsel %vm354, %v245, 0.0
  %v459 = vadd.f32 %v457, %v458
  %v460 = vsel %vm354, %v249, 0.0
  %v461 = vadd.f32 %v459, %v460
  %v462 = vsel %vm354, %v253, 0.0
  %v463 = vadd.f32 %v461, %v462
  %v464 = vsel %vm354, %v257, 0.0
  %v465 = vadd.f32 %v463, %v464
  %v466 = vsel %vm354, %v261, 0.0
  %v467 = vadd.f32 %v465, %v466
  %v468 = vsel %vm354, %v265, 0.0
  %v469 = vadd.f32 %v467, %v468
  %v470 = vsel %vm354, %v269, 0.0
  %v471 = vadd.f32 %v469, %v470
  %v472 = vsel %vm354, %v273, 0.0
  %v473 = vadd.f32 %v471, %v472
  %v474 = vsel %vm354, %v277, 0.0
  %v475 = vadd.f32 %v473, %v474
  %v476 = vsel %vm354, %v281, 0.0
  %v477 = vadd.f32 %v475, %v476
  %v478 = vsel %vm354, %v285, 0.0
  %v479 = vadd.f32 %v477, %v478
  %v480 = vsel %vm354, %v289, 0.0
  %v481 = vadd.f32 %v479, %v480
  %482 = vadd.xlane.f32.xlu0 %v481
  %v483 = vpop.xlane.xlu0 %482
  %v484 = vrcp.pop 8192.0
  %v485 = vmul.f32 %v483, %v484
  %v487 = vlaneseq
  %v488 = vshrl.u32 %v487, 7
  %v489 = vsub.s32 0, %v488
  %v490 = vrot.slane %v485, %v489
  %v492 = vsub.f32 %v18, %v490
  %v493 = vsub.f32 %v19, %v490
  %v494 = vsub.f32 %v20, %v490
  %v495 = vsub.f32 %v21, %v490
  %v496 = vsub.f32 %v22, %v490
  %v497 = vsub.f32 %v23, %v490
  %v498 = vsub.f32 %v24, %v490
  %v499 = vsub.f32 %v25, %v490
  %v500 = vmul.f32 %v492, %v492
  %v501 = vmul.f32 %v493, %v493
  %v502 = vmul.f32 %v494, %v494
  %v503 = vmul.f32 %v495, %v495
  %v504 = vmul.f32 %v496, %v496
  %v505 = vmul.f32 %v497, %v497
  %v506 = vmul.f32 %v498, %v498
  %v507 = vmul.f32 %v499, %v499
  %v516 = vlaneseq
  %v517 = vshrl.u32 %v516, 7
  %v518 = vsub.s32 0, %v517
  %v519 = vrot.slane %v500, %v518
  %v520 = vlaneseq
  %v521 = vshrl.u32 %v520, 7
  %v522 = vsub.s32 1, %v521
  %v523 = vrot.slane %v500, %v522
  %v524 = vlaneseq
  %v525 = vshrl.u32 %v524, 7
  %v526 = vsub.s32 2, %v525
  %v527 = vrot.slane %v500, %v526
  %v528 = vlaneseq
  %v529 = vshrl.u32 %v528, 7
  %v530 = vsub.s32 3, %v529
  %v531 = vrot.slane %v500, %v530
  %v532 = vlaneseq
  %v533 = vshrl.u32 %v532, 7
  %v534 = vsub.s32 4, %v533
  %v535 = vrot.slane %v500, %v534
  %v536 = vlaneseq
  %v537 = vshrl.u32 %v536, 7
  %v538 = vsub.s32 5, %v537
  %v539 = vrot.slane %v500, %v538
  %v540 = vlaneseq
  %v541 = vshrl.u32 %v540, 7
  %v542 = vsub.s32 6, %v541
  %v543 = vrot.slane %v500, %v542
  %v544 = vlaneseq
  %v545 = vshrl.u32 %v544, 7
  %v546 = vsub.s32 7, %v545
  %v547 = vrot.slane %v500, %v546
  %v548 = vlaneseq
  %v549 = vshrl.u32 %v548, 7
  %v550 = vsub.s32 0, %v549
  %v551 = vrot.slane %v501, %v550
  %v552 = vlaneseq
  %v553 = vshrl.u32 %v552, 7
  %v554 = vsub.s32 1, %v553
  %v555 = vrot.slane %v501, %v554
  %v556 = vlaneseq
  %v557 = vshrl.u32 %v556, 7
  %v558 = vsub.s32 2, %v557
  %v559 = vrot.slane %v501, %v558
  %v560 = vlaneseq
  %v561 = vshrl.u32 %v560, 7
  %v562 = vsub.s32 3, %v561
  %v563 = vrot.slane %v501, %v562
  %v564 = vlaneseq
  %v565 = vshrl.u32 %v564, 7
  %v566 = vsub.s32 4, %v565
  %v567 = vrot.slane %v501, %v566
  %v568 = vlaneseq
  %v569 = vshrl.u32 %v568, 7
  %v570 = vsub.s32 5, %v569
  %v571 = vrot.slane %v501, %v570
  %v572 = vlaneseq
  %v573 = vshrl.u32 %v572, 7
  %v574 = vsub.s32 6, %v573
  %v575 = vrot.slane %v501, %v574
  %v576 = vlaneseq
  %v577 = vshrl.u32 %v576, 7
  %v578 = vsub.s32 7, %v577
  %v579 = vrot.slane %v501, %v578
  %v580 = vlaneseq
  %v581 = vshrl.u32 %v580, 7
  %v582 = vsub.s32 0, %v581
  %v583 = vrot.slane %v502, %v582
  %v584 = vlaneseq
  %v585 = vshrl.u32 %v584, 7
  %v586 = vsub.s32 1, %v585
  %v587 = vrot.slane %v502, %v586
  %v588 = vlaneseq
  %v589 = vshrl.u32 %v588, 7
  %v590 = vsub.s32 2, %v589
  %v591 = vrot.slane %v502, %v590
  %v592 = vlaneseq
  %v593 = vshrl.u32 %v592, 7
  %v594 = vsub.s32 3, %v593
  %v595 = vrot.slane %v502, %v594
  %v596 = vlaneseq
  %v597 = vshrl.u32 %v596, 7
  %v598 = vsub.s32 4, %v597
  %v599 = vrot.slane %v502, %v598
  %v600 = vlaneseq
  %v601 = vshrl.u32 %v600, 7
  %v602 = vsub.s32 5, %v601
  %v603 = vrot.slane %v502, %v602
  %v604 = vlaneseq
  %v605 = vshrl.u32 %v604, 7
  %v606 = vsub.s32 6, %v605
  %v607 = vrot.slane %v502, %v606
  %v608 = vlaneseq
  %v609 = vshrl.u32 %v608, 7
  %v610 = vsub.s32 7, %v609
  %v611 = vrot.slane %v502, %v610
  %v612 = vlaneseq
  %v613 = vshrl.u32 %v612, 7
  %v614 = vsub.s32 0, %v613
  %v615 = vrot.slane %v503, %v614
  %v616 = vlaneseq
  %v617 = vshrl.u32 %v616, 7
  %v618 = vsub.s32 1, %v617
  %v619 = vrot.slane %v503, %v618
  %v620 = vlaneseq
  %v621 = vshrl.u32 %v620, 7
  %v622 = vsub.s32 2, %v621
  %v623 = vrot.slane %v503, %v622
  %v624 = vlaneseq
  %v625 = vshrl.u32 %v624, 7
  %v626 = vsub.s32 3, %v625
  %v627 = vrot.slane %v503, %v626
  %v628 = vlaneseq
  %v629 = vshrl.u32 %v628, 7
  %v630 = vsub.s32 4, %v629
  %v631 = vrot.slane %v503, %v630
  %v632 = vlaneseq
  %v633 = vshrl.u32 %v632, 7
  %v634 = vsub.s32 5, %v633
  %v635 = vrot.slane %v503, %v634
  %v636 = vlaneseq
  %v637 = vshrl.u32 %v636, 7
  %v638 = vsub.s32 6, %v637
  %v639 = vrot.slane %v503, %v638
  %v640 = vlaneseq
  %v641 = vshrl.u32 %v640, 7
  %v642 = vsub.s32 7, %v641
  %v643 = vrot.slane %v503, %v642
  %v644 = vlaneseq
  %v645 = vshrl.u32 %v644, 7
  %v646 = vsub.s32 0, %v645
  %v647 = vrot.slane %v504, %v646
  %v648 = vlaneseq
  %v649 = vshrl.u32 %v648, 7
  %v650 = vsub.s32 1, %v649
  %v651 = vrot.slane %v504, %v650
  %v652 = vlaneseq
  %v653 = vshrl.u32 %v652, 7
  %v654 = vsub.s32 2, %v653
  %v655 = vrot.slane %v504, %v654
  %v656 = vlaneseq
  %v657 = vshrl.u32 %v656, 7
  %v658 = vsub.s32 3, %v657
  %v659 = vrot.slane %v504, %v658
  %v660 = vlaneseq
  %v661 = vshrl.u32 %v660, 7
  %v662 = vsub.s32 4, %v661
  %v663 = vrot.slane %v504, %v662
  %v664 = vlaneseq
  %v665 = vshrl.u32 %v664, 7
  %v666 = vsub.s32 5, %v665
  %v667 = vrot.slane %v504, %v666
  %v668 = vlaneseq
  %v669 = vshrl.u32 %v668, 7
  %v670 = vsub.s32 6, %v669
  %v671 = vrot.slane %v504, %v670
  %v672 = vlaneseq
  %v673 = vshrl.u32 %v672, 7
  %v674 = vsub.s32 7, %v673
  %v675 = vrot.slane %v504, %v674
  %v676 = vlaneseq
  %v677 = vshrl.u32 %v676, 7
  %v678 = vsub.s32 0, %v677
  %v679 = vrot.slane %v505, %v678
  %v680 = vlaneseq
  %v681 = vshrl.u32 %v680, 7
  %v682 = vsub.s32 1, %v681
  %v683 = vrot.slane %v505, %v682
  %v684 = vlaneseq
  %v685 = vshrl.u32 %v684, 7
  %v686 = vsub.s32 2, %v685
  %v687 = vrot.slane %v505, %v686
  %v688 = vlaneseq
  %v689 = vshrl.u32 %v688, 7
  %v690 = vsub.s32 3, %v689
  %v691 = vrot.slane %v505, %v690
  %v692 = vlaneseq
  %v693 = vshrl.u32 %v692, 7
  %v694 = vsub.s32 4, %v693
  %v695 = vrot.slane %v505, %v694
  %v696 = vlaneseq
  %v697 = vshrl.u32 %v696, 7
  %v698 = vsub.s32 5, %v697
  %v699 = vrot.slane %v505, %v698
  %v700 = vlaneseq
  %v701 = vshrl.u32 %v700, 7
  %v702 = vsub.s32 6, %v701
  %v703 = vrot.slane %v505, %v702
  %v704 = vlaneseq
  %v705 = vshrl.u32 %v704, 7
  %v706 = vsub.s32 7, %v705
  %v707 = vrot.slane %v505, %v706
  %v708 = vlaneseq
  %v709 = vshrl.u32 %v708, 7
  %v710 = vsub.s32 0, %v709
  %v711 = vrot.slane %v506, %v710
  %v712 = vlaneseq
  %v713 = vshrl.u32 %v712, 7
  %v714 = vsub.s32 1, %v713
  %v715 = vrot.slane %v506, %v714
  %v716 = vlaneseq
  %v717 = vshrl.u32 %v716, 7
  %v718 = vsub.s32 2, %v717
  %v719 = vrot.slane %v506, %v718
  %v720 = vlaneseq
  %v721 = vshrl.u32 %v720, 7
  %v722 = vsub.s32 3, %v721
  %v723 = vrot.slane %v506, %v722
  %v724 = vlaneseq
  %v725 = vshrl.u32 %v724, 7
  %v726 = vsub.s32 4, %v725
  %v727 = vrot.slane %v506, %v726
  %v728 = vlaneseq
  %v729 = vshrl.u32 %v728, 7
  %v730 = vsub.s32 5, %v729
  %v731 = vrot.slane %v506, %v730
  %v732 = vlaneseq
  %v733 = vshrl.u32 %v732, 7
  %v734 = vsub.s32 6, %v733
  %v735 = vrot.slane %v506, %v734
  %v736 = vlaneseq
  %v737 = vshrl.u32 %v736, 7
  %v738 = vsub.s32 7, %v737
  %v739 = vrot.slane %v506, %v738
  %v740 = vlaneseq
  %v741 = vshrl.u32 %v740, 7
  %v742 = vsub.s32 0, %v741
  %v743 = vrot.slane %v507, %v742
  %v744 = vlaneseq
  %v745 = vshrl.u32 %v744, 7
  %v746 = vsub.s32 1, %v745
  %v747 = vrot.slane %v507, %v746
  %v748 = vlaneseq
  %v749 = vshrl.u32 %v748, 7
  %v750 = vsub.s32 2, %v749
  %v751 = vrot.slane %v507, %v750
  %v752 = vlaneseq
  %v753 = vshrl.u32 %v752, 7
  %v754 = vsub.s32 3, %v753
  %v755 = vrot.slane %v507, %v754
  %v756 = vlaneseq
  %v757 = vshrl.u32 %v756, 7
  %v758 = vsub.s32 4, %v757
  %v759 = vrot.slane %v507, %v758
  %v760 = vlaneseq
  %v761 = vshrl.u32 %v760, 7
  %v762 = vsub.s32 5, %v761
  %v763 = vrot.slane %v507, %v762
  %v764 = vlaneseq
  %v765 = vshrl.u32 %v764, 7
  %v766 = vsub.s32 6, %v765
  %v767 = vrot.slane %v507, %v766
  %v768 = vlaneseq
  %v769 = vshrl.u32 %v768, 7
  %v770 = vsub.s32 7, %v769
  %v771 = vrot.slane %v507, %v770
  %v836 = vsel %vm354, %v519, 0.0
  %v837 = vsel %vm354, %v523, 0.0
  %v838 = vadd.f32 %v836, %v837
  %v839 = vsel %vm354, %v527, 0.0
  %v840 = vadd.f32 %v838, %v839
  %v841 = vsel %vm354, %v531, 0.0
  %v842 = vadd.f32 %v840, %v841
  %v843 = vsel %vm354, %v535, 0.0
  %v844 = vadd.f32 %v842, %v843
  %v845 = vsel %vm354, %v539, 0.0
  %v846 = vadd.f32 %v844, %v845
  %v847 = vsel %vm354, %v543, 0.0
  %v848 = vadd.f32 %v846, %v847
  %v849 = vsel %vm354, %v547, 0.0
  %v850 = vadd.f32 %v848, %v849
  %v851 = vsel %vm354, %v551, 0.0
  %v852 = vadd.f32 %v850, %v851
  %v853 = vsel %vm354, %v555, 0.0
  %v854 = vadd.f32 %v852, %v853
  %v855 = vsel %vm354, %v559, 0.0
  %v856 = vadd.f32 %v854, %v855
  %v857 = vsel %vm354, %v563, 0.0
  %v858 = vadd.f32 %v856, %v857
  %v859 = vsel %vm354, %v567, 0.0
  %v860 = vadd.f32 %v858, %v859
  %v861 = vsel %vm354, %v571, 0.0
  %v862 = vadd.f32 %v860, %v861
  %v863 = vsel %vm354, %v575, 0.0
  %v864 = vadd.f32 %v862, %v863
  %v865 = vsel %vm354, %v579, 0.0
  %v866 = vadd.f32 %v864, %v865
  %v867 = vsel %vm354, %v583, 0.0
  %v868 = vadd.f32 %v866, %v867
  %v869 = vsel %vm354, %v587, 0.0
  %v870 = vadd.f32 %v868, %v869
  %v871 = vsel %vm354, %v591, 0.0
  %v872 = vadd.f32 %v870, %v871
  %v873 = vsel %vm354, %v595, 0.0
  %v874 = vadd.f32 %v872, %v873
  %v875 = vsel %vm354, %v599, 0.0
  %v876 = vadd.f32 %v874, %v875
  %v877 = vsel %vm354, %v603, 0.0
  %v878 = vadd.f32 %v876, %v877
  %v879 = vsel %vm354, %v607, 0.0
  %v880 = vadd.f32 %v878, %v879
  %v881 = vsel %vm354, %v611, 0.0
  %v882 = vadd.f32 %v880, %v881
  %v883 = vsel %vm354, %v615, 0.0
  %v884 = vadd.f32 %v882, %v883
  %v885 = vsel %vm354, %v619, 0.0
  %v886 = vadd.f32 %v884, %v885
  %v887 = vsel %vm354, %v623, 0.0
  %v888 = vadd.f32 %v886, %v887
  %v889 = vsel %vm354, %v627, 0.0
  %v890 = vadd.f32 %v888, %v889
  %v891 = vsel %vm354, %v631, 0.0
  %v892 = vadd.f32 %v890, %v891
  %v893 = vsel %vm354, %v635, 0.0
  %v894 = vadd.f32 %v892, %v893
  %v895 = vsel %vm354, %v639, 0.0
  %v896 = vadd.f32 %v894, %v895
  %v897 = vsel %vm354, %v643, 0.0
  %v898 = vadd.f32 %v896, %v897
  %v899 = vsel %vm354, %v647, 0.0
  %v900 = vadd.f32 %v898, %v899
  %v901 = vsel %vm354, %v651, 0.0
  %v902 = vadd.f32 %v900, %v901
  %v903 = vsel %vm354, %v655, 0.0
  %v904 = vadd.f32 %v902, %v903
  %v905 = vsel %vm354, %v659, 0.0
  %v906 = vadd.f32 %v904, %v905
  %v907 = vsel %vm354, %v663, 0.0
  %v908 = vadd.f32 %v906, %v907
  %v909 = vsel %vm354, %v667, 0.0
  %v910 = vadd.f32 %v908, %v909
  %v911 = vsel %vm354, %v671, 0.0
  %v912 = vadd.f32 %v910, %v911
  %v913 = vsel %vm354, %v675, 0.0
  %v914 = vadd.f32 %v912, %v913
  %v915 = vsel %vm354, %v679, 0.0
  %v916 = vadd.f32 %v914, %v915
  %v917 = vsel %vm354, %v683, 0.0
  %v918 = vadd.f32 %v916, %v917
  %v919 = vsel %vm354, %v687, 0.0
  %v920 = vadd.f32 %v918, %v919
  %v921 = vsel %vm354, %v691, 0.0
  %v922 = vadd.f32 %v920, %v921
  %v923 = vsel %vm354, %v695, 0.0
  %v924 = vadd.f32 %v922, %v923
  %v925 = vsel %vm354, %v699, 0.0
  %v926 = vadd.f32 %v924, %v925
  %v927 = vsel %vm354, %v703, 0.0
  %v928 = vadd.f32 %v926, %v927
  %v929 = vsel %vm354, %v707, 0.0
  %v930 = vadd.f32 %v928, %v929
  %v931 = vsel %vm354, %v711, 0.0
  %v932 = vadd.f32 %v930, %v931
  %v933 = vsel %vm354, %v715, 0.0
  %v934 = vadd.f32 %v932, %v933
  %v935 = vsel %vm354, %v719, 0.0
  %v936 = vadd.f32 %v934, %v935
  %v937 = vsel %vm354, %v723, 0.0
  %v938 = vadd.f32 %v936, %v937
  %v939 = vsel %vm354, %v727, 0.0
  %v940 = vadd.f32 %v938, %v939
  %v941 = vsel %vm354, %v731, 0.0
  %v942 = vadd.f32 %v940, %v941
  %v943 = vsel %vm354, %v735, 0.0
  %v944 = vadd.f32 %v942, %v943
  %v945 = vsel %vm354, %v739, 0.0
  %v946 = vadd.f32 %v944, %v945
  %v947 = vsel %vm354, %v743, 0.0
  %v948 = vadd.f32 %v946, %v947
  %v949 = vsel %vm354, %v747, 0.0
  %v950 = vadd.f32 %v948, %v949
  %v951 = vsel %vm354, %v751, 0.0
  %v952 = vadd.f32 %v950, %v951
  %v953 = vsel %vm354, %v755, 0.0
  %v954 = vadd.f32 %v952, %v953
  %v955 = vsel %vm354, %v759, 0.0
  %v956 = vadd.f32 %v954, %v955
  %v957 = vsel %vm354, %v763, 0.0
  %v958 = vadd.f32 %v956, %v957
  %v959 = vsel %vm354, %v767, 0.0
  %v960 = vadd.f32 %v958, %v959
  %v961 = vsel %vm354, %v771, 0.0
  %v962 = vadd.f32 %v960, %v961
  %963 = vadd.xlane.f32.xlu0 %v962
  %v964 = vpop.xlane.xlu0 %963
  %v965 = vmul.f32 %v964, %v484
  %v966 = vadd.f32 %v965, 1e-05
  %v967 = vrsqrt.pop %v966
  %v969 = vlaneseq
  %v970 = vshrl.u32 %v969, 7
  %v971 = vsub.s32 0, %v970
  %v972 = vrot.slane %v967, %v971
  %v974 = vmul.f32 %v492, %v972
  %v975 = vmul.f32 %v493, %v972
  %v976 = vmul.f32 %v494, %v972
  %v977 = vmul.f32 %v495, %v972
  %v978 = vmul.f32 %v496, %v972
  %v979 = vmul.f32 %v497, %v972
  %v980 = vmul.f32 %v498, %v972
  %v981 = vmul.f32 %v499, %v972
  %v982 = vld [vmem:[#allocation2] sm:$0x1]
  %984 = vset.pattern.permute.xlu0 0
  %985 = vperm.xlu0 %984, %v982
  %v986 = vpop.permute.xlu0 %985
  %v988 = vlaneseq
  %v989 = vshrl.u32 %v988, 7
  %v990 = vsub.s32 0, %v989
  %v991 = vrot.slane %v986, %v990
  %v992 = vmul.f32 %v974, %v991
  %v993 = vmul.f32 %v975, %v991
  %v994 = vmul.f32 %v976, %v991
  %v995 = vmul.f32 %v977, %v991
  %v996 = vmul.f32 %v978, %v991
  %v997 = vmul.f32 %v979, %v991
  %v998 = vmul.f32 %v980, %v991
  %v999 = vmul.f32 %v981, %v991
  %v1000 = vld [vmem:[#allocation3] sm:$0x1]
  %1002 = vset.pattern.permute.xlu0 0
  %1003 = vperm.xlu0 %1002, %v1000
  %v1004 = vpop.permute.xlu0 %1003
  %v1006 = vlaneseq
  %v1007 = vshrl.u32 %v1006, 7
  %v1008 = vsub.s32 0, %v1007
  %v1009 = vrot.slane %v1004, %v1008
  %v1010 = vadd.f32 %v992, %v1009
  %v1011 = vadd.f32 %v993, %v1009
  %v1012 = vadd.f32 %v994, %v1009
  %v1013 = vadd.f32 %v995, %v1009
  %v1014 = vadd.f32 %v996, %v1009
  %v1015 = vadd.f32 %v997, %v1009
  %v1016 = vadd.f32 %v998, %v1009
  %v1017 = vadd.f32 %v999, %v1009
  %vm1018 = vcmp.ge.f32.partialorder %v1010, 0.0
  %vm1019 = vcmp.ge.f32.partialorder %v1011, 0.0
  %vm1020 = vcmp.ge.f32.partialorder %v1012, 0.0
  %vm1021 = vcmp.ge.f32.partialorder %v1013, 0.0
  %vm1022 = vcmp.ge.f32.partialorder %v1014, 0.0
  %vm1023 = vcmp.ge.f32.partialorder %v1015, 0.0
  %vm1024 = vcmp.ge.f32.partialorder %v1016, 0.0
  %vm1025 = vcmp.ge.f32.partialorder %v1017, 0.0
  %v1026 = vmul.f32 %v1010, 0.2
  %v1027 = vmul.f32 %v1011, 0.2
  %v1028 = vmul.f32 %v1012, 0.2
  %v1029 = vmul.f32 %v1013, 0.2
  %v1030 = vmul.f32 %v1014, 0.2
  %v1031 = vmul.f32 %v1015, 0.2
  %v1032 = vmul.f32 %v1016, 0.2
  %v1033 = vmul.f32 %v1017, 0.2
  %v1034 = vsel %vm1018, %v1010, %v1026
  %v1035 = vsel %vm1019, %v1011, %v1027
  %v1036 = vsel %vm1020, %v1012, %v1028
  %v1037 = vsel %vm1021, %v1013, %v1029
  %v1038 = vsel %vm1022, %v1014, %v1030
  %v1039 = vsel %vm1023, %v1015, %v1031
  %v1040 = vsel %vm1024, %v1016, %v1032
  %v1041 = vsel %vm1025, %v1017, %v1033
  %v1042 = vxor.u32 %v1034, 2147483648
  %v1043 = vxor.u32 %v1035, 2147483648
  %v1044 = vxor.u32 %v1036, 2147483648
  %v1045 = vxor.u32 %v1037, 2147483648
  %v1046 = vxor.u32 %v1038, 2147483648
  %v1047 = vxor.u32 %v1039, 2147483648
  %v1048 = vxor.u32 %v1040, 2147483648
  %v1049 = vxor.u32 %v1041, 2147483648
  %v1050 = vmul.f32 %v1042, 1.442695
  %v1051 = vpow.pop %v1050
  %v1052 = vmul.f32 %v1043, 1.442695
  %v1053 = vpow.pop %v1052
  %v1054 = vmul.f32 %v1044, 1.442695
  %v1055 = vpow.pop %v1054
  %v1056 = vmul.f32 %v1045, 1.442695
  %v1057 = vpow.pop %v1056
  %v1058 = vmul.f32 %v1046, 1.442695
  %v1059 = vpow.pop %v1058
  %v1060 = vmul.f32 %v1047, 1.442695
  %v1061 = vpow.pop %v1060
  %v1062 = vmul.f32 %v1048, 1.442695
  %v1063 = vpow.pop %v1062
  %v1064 = vmul.f32 %v1049, 1.442695
  %v1065 = vpow.pop %v1064
  %v1066 = vadd.f32 %v1051, 1.0
  %v1067 = vadd.f32 %v1053, 1.0
  %v1068 = vadd.f32 %v1055, 1.0
  %v1069 = vadd.f32 %v1057, 1.0
  %v1070 = vadd.f32 %v1059, 1.0
  %v1071 = vadd.f32 %v1061, 1.0
  %v1072 = vadd.f32 %v1063, 1.0
  %v1073 = vadd.f32 %v1065, 1.0
  %v1074 = vrcp.pop %v1066
  %v1075 = vmul.f32 1.0, %v1074
  %v1076 = vrcp.pop %v1067
  %v1077 = vmul.f32 1.0, %v1076
  %v1078 = vrcp.pop %v1068
  %v1079 = vmul.f32 1.0, %v1078
  %v1080 = vrcp.pop %v1069
  %v1081 = vmul.f32 1.0, %v1080
  %v1082 = vrcp.pop %v1070
  %v1083 = vmul.f32 1.0, %v1082
  %v1084 = vrcp.pop %v1071
  %v1085 = vmul.f32 1.0, %v1084
  %v1086 = vrcp.pop %v1072
  %v1087 = vmul.f32 1.0, %v1086
  %v1088 = vrcp.pop %v1073
  %v1089 = vmul.f32 1.0, %v1088
  %1090 = vst [vmem:[%s3] sm:$0xff] %v1075
  %1091 = vst [vmem:[%s3 + $0x8] sm:$0xff] %v1077
  %1092 = vst [vmem:[%s3 + $0x10] sm:$0xff] %v1079
  %1093 = vst [vmem:[%s3 + $0x18] sm:$0xff] %v1081
  %1094 = vst [vmem:[%s3 + $0x20] sm:$0xff] %v1083
  %1095 = vst [vmem:[%s3 + $0x28] sm:$0xff] %v1085
  %1096 = vst [vmem:[%s3 + $0x30] sm:$0xff] %v1087
  %1097 = vst [vmem:[%s3 + $0x38] sm:$0xff] %v1089
  // Predicated region
  $region14: #{voxel_vae_forward.19} parent=0 // pred_check
    _
  $region15: #{voxel_vae_forward.19} parent=0 // pred_check_branch
    %1099 = sbr.rel (0) target = $region17
  $region16: #{voxel_vae_forward.19} parent=0 // pred_region
    _
  $region17: #{voxel_vae_forward.19} parent=0 // pred_fallthru
    _
  // Predicated region
  $region18: #{voxel_vae_forward.19} parent=0 // pred_check
    _
  $region19: #{voxel_vae_forward.19} parent=0 // pred_check_branch
    %1101 = sbr.rel (0) target = $region21
  $region20: #{voxel_vae_forward.19} parent=0 // pred_region
    _
  $region21: #{voxel_vae_forward.19} parent=0 // pred_fallthru
    _

</llo_original>
